<compile_context>
chip_gen: v7x
topology: tpu7x:2x2x1
jax: 0.10.0
libtpu: 0.0.40
codegen_flags: <defaults>
</compile_context>

<pallas_src>
import jax
import jax.numpy as jnp
import numpy as np
from jax import lax
from jax.experimental import pallas as pl
from jax.experimental.pallas import tpu as pltpu

D = 128      # stand-in for the module's 768 hidden dim
HP = 128     # lane-padded width of the final Linear(D, 2)
NCLS = 2     # number of classes
TR = 32      # text-feature rows of the outer product handled per grid step


# ------------------------------ fused kernel --------------------------------
def _clip_head_kernel(text_ref, image_ref, pw_ref, pb_ref, wc1_ref, bc1_ref,
                      wc2_ref, bc2_ref, wc3_ref, bc3_ref, o_ref,
                      mm_ref, acc_ref):
    k = pl.program_id(0)
    nk = pl.num_programs(0)

    # ---------------- step 0: projection MLPs + cross-modal slabs -----------
    @pl.when(k == 0)
    def _prologue():
        def mlp3(x, base):
            h = x
            for layer in range(3):                      # static unroll
                h = (jnp.dot(h, pw_ref[base + layer],
                             preferred_element_type=jnp.float32)
                     + pb_ref[base + layer])
                if layer < 2:
                    h = jnp.maximum(h, 0.0)             # ReLU (Dropout p=0)
            return h

        tp = mlp3(text_ref[...], 0)      # (B, D) text projection
        ip = mlp3(image_ref[...], 3)     # (B, D) image projection

        # Expansion matrix: expand[r, r*D + j] = 1 (else 0), so that
        # t_chunk @ expand repeats each text feature across a 128-lane group.
        r_e = lax.broadcasted_iota(jnp.int32, (TR, TR * D), 0).astype(jnp.float32)
        c_e = lax.broadcasted_iota(jnp.int32, (TR, TR * D), 1).astype(jnp.float32)
        expand = ((c_e >= r_e * float(D)) &
                  (c_e < r_e * float(D) + float(D))).astype(jnp.float32)

        # Selection matrices: sel[i, r] = 1 iff i == kk*TR + r, so that
        # tp @ sel extracts text features [kk*TR, (kk+1)*TR) without any
        # sub-tile lane slicing.
        r_s = lax.broadcasted_iota(jnp.int32, (D, TR), 0)
        c_s = lax.broadcasted_iota(jnp.int32, (D, TR), 1)

        # image projection repeated TR times along lanes: (B, TR*D)
        ip_tiled = jnp.concatenate([ip] * TR, axis=-1)

        for kk in range(D // TR):        # static unroll (D//TR = 4 chunks)
            sel = (r_s == (c_s + kk * TR)).astype(jnp.float32)          # (D, TR)
            t_chunk = jnp.dot(tp, sel,
                              preferred_element_type=jnp.float32)       # (B, TR)
            # mm[kk, b, r*D + j] = tp[b, kk*TR + r] * ip[b, j]
            mm_ref[kk] = (jnp.dot(t_chunk, expand,
                                  preferred_element_type=jnp.float32)
                          * ip_tiled)

        acc_ref[...] = jnp.zeros_like(acc_ref)

    # --------- every step: stream one Wc1 chunk, single MXU matmul ----------
    acc_ref[...] += jnp.dot(mm_ref[k], wc1_ref[...],
                            preferred_element_type=jnp.float32)

    # ---------------- last step: rest of the classification head ------------
    @pl.when(k == nk - 1)
    def _epilogue():
        h = jnp.maximum(acc_ref[...] + bc1_ref[...], 0.0)
        h = jnp.maximum(jnp.dot(h, wc2_ref[...],
                                preferred_element_type=jnp.float32)
                        + bc2_ref[...], 0.0)
        o_ref[...] = (jnp.dot(h, wc3_ref[...],
                              preferred_element_type=jnp.float32)
                      + bc3_ref[...]).astype(o_ref.dtype)


def clip_head_forward(text_embeds, image_embeds, params):
    pw, pb, wc1, bc1, wc2, bc2, wc3p, bc3p = params
    B = text_embeds.shape[0]
    const2 = lambda shape: pl.BlockSpec(shape, lambda k: (0, 0))
    const3 = lambda shape: pl.BlockSpec(shape, lambda k: (0, 0, 0))

    out = pl.pallas_call(
        _clip_head_kernel,
        out_shape=jax.ShapeDtypeStruct((B, HP), jnp.float32),
        grid=(D // TR,),
        in_specs=[
            const2((B, D)),                                # text embeds
            const2((B, D)),                                # image embeds
            const3((6, D, D)),                             # stacked projection weights
            const3((6, 1, D)),                             # stacked projection biases
            pl.BlockSpec((TR * D, D), lambda k: (k, 0)),   # Wc1 (streamed over k)
            const2((1, D)),                                # bc1
            const2((D, D)),                                # Wc2
            const2((1, D)),                                # bc2
            const2((D, HP)),                               # Wc3 (lane padded)
            const2((1, HP)),                               # bc3 (lane padded)
        ],
        out_specs=const2((B, HP)),
        scratch_shapes=[
            pltpu.VMEM((D // TR, B, TR * D), jnp.float32),  # cross-modal slabs
            pltpu.VMEM((B, D), jnp.float32),                # first-layer accumulator
        ],
        compiler_params=pltpu.CompilerParams(
            dimension_semantics=("arbitrary",)),            # k is a reduction axis
    )(text_embeds, image_embeds, pw, pb, wc1, bc1, wc2, bc2, wc3p, bc3p)
    return out[:, :NCLS]


# ------------------------------- parameters ---------------------------------
def init_linear(key, din, dout, scale=0.05):
    kw, kb = jax.random.split(key)
    w = jax.random.normal(kw, (din, dout), jnp.float32) * scale
    b = jax.random.normal(kb, (1, dout), jnp.float32) * scale
    return w, b


if __name__ == "__main__":
    B = 2
    key = jax.random.PRNGKey(0)
    k_in, k_par = jax.random.split(key)
    kt, ki = jax.random.split(k_in)
    text_embeds = jax.random.normal(kt, (B, D), jnp.float32)
    image_embeds = jax.random.normal(ki, (B, D), jnp.float32)

    keys = jax.random.split(k_par, 9)
    tw1, tb1 = init_linear(keys[0], D, D)
    tw2, tb2 = init_linear(keys[1], D, D)
    tw3, tb3 = init_linear(keys[2], D, D)
    iw1, ib1 = init_linear(keys[3], D, D)
    iw2, ib2 = init_linear(keys[4], D, D)
    iw3, ib3 = init_linear(keys[5], D, D)
    wc1, bc1 = init_linear(keys[6], D * D, D)
    wc2, bc2 = init_linear(keys[7], D, D)
    wc3, bc3 = init_linear(keys[8], D, NCLS)

    pw = jnp.stack([tw1, tw2, tw3, iw1, iw2, iw3])          # (6, D, D)
    pb = jnp.stack([tb1, tb2, tb3, ib1, ib2, ib3])          # (6, 1, D)
    # pad final layer to a lane-dense (D, 128) weight; slice back after kernel
    wc3p = jnp.zeros((D, HP), jnp.float32).at[:, :NCLS].set(wc3)
    bc3p = jnp.zeros((1, HP), jnp.float32).at[:, :NCLS].set(bc3)
    params = (pw, pb, wc1, bc1, wc2, bc2, wc3p, bc3p)

    forward = jax.jit(lambda t, i: clip_head_forward(t, i, params))
    logits = jax.block_until_ready(forward(text_embeds, image_embeds))

    # ----------------------- pure-JAX reference check -----------------------
    def ref_mlp3(x, w1, b1, w2, b2, w3, b3):
        h = jax.nn.relu(x @ w1 + b1)
        h = jax.nn.relu(h @ w2 + b2)
        return h @ w3 + b3

    tp = ref_mlp3(text_embeds, tw1, tb1, tw2, tb2, tw3, tb3)
    ip = ref_mlp3(image_embeds, iw1, ib1, iw2, ib2, iw3, ib3)
    m = (tp[:, :, None] * ip[:, None, :]).reshape(B, D * D)  # bmm outer product, flattened
    h = jax.nn.relu(m @ wc1 + bc1)
    h = jax.nn.relu(h @ wc2 + bc2)
    ref_logits = h @ wc3 + bc3

    np.testing.assert_allclose(np.asarray(logits), np.asarray(ref_logits),
                               rtol=2e-3, atol=2e-3)
    assert logits.shape == (B, NCLS)
    print("KERNEL_OK")
</pallas_src>

<mosaic_0001>
module attributes {stable_mosaic.version = 11 : i64} {
  func.func @_clip_head_kernel(%arg0: i32, %arg1: memref<2x128xf32, #tpu.memory_space<vmem>>, %arg2: memref<2x128xf32, #tpu.memory_space<vmem>>, %arg3: memref<6x128x128xf32, #tpu.memory_space<vmem>>, %arg4: memref<6x1x128xf32, #tpu.memory_space<vmem>>, %arg5: memref<4096x128xf32, #tpu.memory_space<vmem>>, %arg6: memref<1x128xf32, #tpu.memory_space<vmem>>, %arg7: memref<128x128xf32, #tpu.memory_space<vmem>>, %arg8: memref<1x128xf32, #tpu.memory_space<vmem>>, %arg9: memref<128x128xf32, #tpu.memory_space<vmem>>, %arg10: memref<1x128xf32, #tpu.memory_space<vmem>>, %arg11: memref<2x128xf32, #tpu.memory_space<vmem>>, %arg12: memref<4x2x4096xf32, #tpu.memory_space<vmem>>, %arg13: memref<2x128xf32, #tpu.memory_space<vmem>>) attributes {dimension_semantics = [#tpu.dimension_semantics<arbitrary>], iteration_bounds = array<i64: 4>, scalar_prefetch = 0 : i64, scratch_operands = 2 : i64, tpu.core_type = #tpu.core_type<tc>, window_params = [{pipeline_mode = #tpu.pipeline_mode<synchronous>, transform_indices = @transform_0, window_bounds = array<i64: 2, 128>}, {pipeline_mode = #tpu.pipeline_mode<synchronous>, transform_indices = @transform_1, window_bounds = array<i64: 2, 128>}, {pipeline_mode = #tpu.pipeline_mode<synchronous>, transform_indices = @transform_2, window_bounds = array<i64: 6, 128, 128>}, {pipeline_mode = #tpu.pipeline_mode<synchronous>, transform_indices = @transform_3, window_bounds = array<i64: 6, 1, 128>}, {transform_indices = @transform_4, window_bounds = array<i64: 4096, 128>}, {pipeline_mode = #tpu.pipeline_mode<synchronous>, transform_indices = @transform_5, window_bounds = array<i64: 1, 128>}, {pipeline_mode = #tpu.pipeline_mode<synchronous>, transform_indices = @transform_6, window_bounds = array<i64: 128, 128>}, {pipeline_mode = #tpu.pipeline_mode<synchronous>, transform_indices = @transform_7, window_bounds = array<i64: 1, 128>}, {pipeline_mode = #tpu.pipeline_mode<synchronous>, transform_indices = @transform_8, window_bounds = array<i64: 128, 128>}, {pipeline_mode = #tpu.pipeline_mode<synchronous>, transform_indices = @transform_9, window_bounds = array<i64: 1, 128>}, {pipeline_mode = #tpu.pipeline_mode<synchronous>, transform_indices = @transform_10, window_bounds = array<i64: 2, 128>}]} {
    %c0_i32 = arith.constant 0 : i32
    %0 = arith.cmpi eq, %arg0, %c0_i32 : i32
    %1 = arith.extui %0 : i1 to i32
    %c0_i32_0 = arith.constant 0 : i32
    %2 = arith.cmpi ne, %1, %c0_i32_0 : i32
    scf.if %2 {
      %c0_9 = arith.constant 0 : index
      %c0_10 = arith.constant 0 : index
      %14 = vector.load %arg1[%c0_9, %c0_10] : memref<2x128xf32, #tpu.memory_space<vmem>>, vector<2x128xf32>
      %c0_11 = arith.constant 0 : index
      %c0_12 = arith.constant 0 : index
      %c0_13 = arith.constant 0 : index
      %15 = vector.load %arg3[%c0_11, %c0_12, %c0_13] : memref<6x128x128xf32, #tpu.memory_space<vmem>>, vector<1x128x128xf32>
      %16 = vector.shape_cast %15 : vector<1x128x128xf32> to vector<128x128xf32>
      %cst_14 = arith.constant dense<0.000000e+00> : vector<2x128xf32>
      %17 = tpu.matmul %14, %16, %cst_14 {dimension_numbers = #tpu.dot_dimension_numbers<[1], [0], [0], [1], [0, 0, 1, 1], [], []>} : vector<2x128xf32>, vector<128x128xf32>, vector<2x128xf32> -> vector<2x128xf32>
      %c0_15 = arith.constant 0 : index
      %c0_16 = arith.constant 0 : index
      %c0_17 = arith.constant 0 : index
      %18 = vector.load %arg4[%c0_15, %c0_16, %c0_17] : memref<6x1x128xf32, #tpu.memory_space<vmem>>, vector<1x1x128xf32>
      %19 = vector.shape_cast %18 : vector<1x1x128xf32> to vector<1x128xf32>
      %20 = vector.broadcast %19 : vector<1x128xf32> to vector<2x128xf32>
      %21 = arith.addf %17, %20 : vector<2x128xf32>
      %cst_18 = arith.constant 0.000000e+00 : f32
      %22 = vector.broadcast %cst_18 : f32 to vector<2x128xf32>
      %23 = arith.maximumf %21, %22 : vector<2x128xf32>
      %c1 = arith.constant 1 : index
      %c0_19 = arith.constant 0 : index
      %c0_20 = arith.constant 0 : index
      %24 = vector.load %arg3[%c1, %c0_19, %c0_20] : memref<6x128x128xf32, #tpu.memory_space<vmem>>, vector<1x128x128xf32>
      %25 = vector.shape_cast %24 : vector<1x128x128xf32> to vector<128x128xf32>
      %cst_21 = arith.constant dense<0.000000e+00> : vector<2x128xf32>
      %26 = tpu.matmul %23, %25, %cst_21 {dimension_numbers = #tpu.dot_dimension_numbers<[1], [0], [0], [1], [0, 0, 1, 1], [], []>} : vector<2x128xf32>, vector<128x128xf32>, vector<2x128xf32> -> vector<2x128xf32>
      %c1_22 = arith.constant 1 : index
      %c0_23 = arith.constant 0 : index
      %c0_24 = arith.constant 0 : index
      %27 = vector.load %arg4[%c1_22, %c0_23, %c0_24] : memref<6x1x128xf32, #tpu.memory_space<vmem>>, vector<1x1x128xf32>
      %28 = vector.shape_cast %27 : vector<1x1x128xf32> to vector<1x128xf32>
      %29 = vector.broadcast %28 : vector<1x128xf32> to vector<2x128xf32>
      %30 = arith.addf %26, %29 : vector<2x128xf32>
      %cst_25 = arith.constant 0.000000e+00 : f32
      %31 = vector.broadcast %cst_25 : f32 to vector<2x128xf32>
      %32 = arith.maximumf %30, %31 : vector<2x128xf32>
      %c2 = arith.constant 2 : index
      %c0_26 = arith.constant 0 : index
      %c0_27 = arith.constant 0 : index
      %33 = vector.load %arg3[%c2, %c0_26, %c0_27] : memref<6x128x128xf32, #tpu.memory_space<vmem>>, vector<1x128x128xf32>
      %34 = vector.shape_cast %33 : vector<1x128x128xf32> to vector<128x128xf32>
      %cst_28 = arith.constant dense<0.000000e+00> : vector<2x128xf32>
      %35 = tpu.matmul %32, %34, %cst_28 {dimension_numbers = #tpu.dot_dimension_numbers<[1], [0], [0], [1], [0, 0, 1, 1], [], []>} : vector<2x128xf32>, vector<128x128xf32>, vector<2x128xf32> -> vector<2x128xf32>
      %c2_29 = arith.constant 2 : index
      %c0_30 = arith.constant 0 : index
      %c0_31 = arith.constant 0 : index
      %36 = vector.load %arg4[%c2_29, %c0_30, %c0_31] : memref<6x1x128xf32, #tpu.memory_space<vmem>>, vector<1x1x128xf32>
      %37 = vector.shape_cast %36 : vector<1x1x128xf32> to vector<1x128xf32>
      %38 = vector.broadcast %37 : vector<1x128xf32> to vector<2x128xf32>
      %39 = arith.addf %35, %38 : vector<2x128xf32>
      %c0_32 = arith.constant 0 : index
      %c0_33 = arith.constant 0 : index
      %40 = vector.load %arg2[%c0_32, %c0_33] : memref<2x128xf32, #tpu.memory_space<vmem>>, vector<2x128xf32>
      %c3 = arith.constant 3 : index
      %c0_34 = arith.constant 0 : index
      %c0_35 = arith.constant 0 : index
      %41 = vector.load %arg3[%c3, %c0_34, %c0_35] : memref<6x128x128xf32, #tpu.memory_space<vmem>>, vector<1x128x128xf32>
      %42 = vector.shape_cast %41 : vector<1x128x128xf32> to vector<128x128xf32>
      %cst_36 = arith.constant dense<0.000000e+00> : vector<2x128xf32>
      %43 = tpu.matmul %40, %42, %cst_36 {dimension_numbers = #tpu.dot_dimension_numbers<[1], [0], [0], [1], [0, 0, 1, 1], [], []>} : vector<2x128xf32>, vector<128x128xf32>, vector<2x128xf32> -> vector<2x128xf32>
      %c3_37 = arith.constant 3 : index
      %c0_38 = arith.constant 0 : index
      %c0_39 = arith.constant 0 : index
      %44 = vector.load %arg4[%c3_37, %c0_38, %c0_39] : memref<6x1x128xf32, #tpu.memory_space<vmem>>, vector<1x1x128xf32>
      %45 = vector.shape_cast %44 : vector<1x1x128xf32> to vector<1x128xf32>
      %46 = vector.broadcast %45 : vector<1x128xf32> to vector<2x128xf32>
      %47 = arith.addf %43, %46 : vector<2x128xf32>
      %cst_40 = arith.constant 0.000000e+00 : f32
      %48 = vector.broadcast %cst_40 : f32 to vector<2x128xf32>
      %49 = arith.maximumf %47, %48 : vector<2x128xf32>
      %c4 = arith.constant 4 : index
      %c0_41 = arith.constant 0 : index
      %c0_42 = arith.constant 0 : index
      %50 = vector.load %arg3[%c4, %c0_41, %c0_42] : memref<6x128x128xf32, #tpu.memory_space<vmem>>, vector<1x128x128xf32>
      %51 = vector.shape_cast %50 : vector<1x128x128xf32> to vector<128x128xf32>
      %cst_43 = arith.constant dense<0.000000e+00> : vector<2x128xf32>
      %52 = tpu.matmul %49, %51, %cst_43 {dimension_numbers = #tpu.dot_dimension_numbers<[1], [0], [0], [1], [0, 0, 1, 1], [], []>} : vector<2x128xf32>, vector<128x128xf32>, vector<2x128xf32> -> vector<2x128xf32>
      %c4_44 = arith.constant 4 : index
      %c0_45 = arith.constant 0 : index
      %c0_46 = arith.constant 0 : index
      %53 = vector.load %arg4[%c4_44, %c0_45, %c0_46] : memref<6x1x128xf32, #tpu.memory_space<vmem>>, vector<1x1x128xf32>
      %54 = vector.shape_cast %53 : vector<1x1x128xf32> to vector<1x128xf32>
      %55 = vector.broadcast %54 : vector<1x128xf32> to vector<2x128xf32>
      %56 = arith.addf %52, %55 : vector<2x128xf32>
      %cst_47 = arith.constant 0.000000e+00 : f32
      %57 = vector.broadcast %cst_47 : f32 to vector<2x128xf32>
      %58 = arith.maximumf %56, %57 : vector<2x128xf32>
      %c5 = arith.constant 5 : index
      %c0_48 = arith.constant 0 : index
      %c0_49 = arith.constant 0 : index
      %59 = vector.load %arg3[%c5, %c0_48, %c0_49] : memref<6x128x128xf32, #tpu.memory_space<vmem>>, vector<1x128x128xf32>
      %60 = vector.shape_cast %59 : vector<1x128x128xf32> to vector<128x128xf32>
      %cst_50 = arith.constant dense<0.000000e+00> : vector<2x128xf32>
      %61 = tpu.matmul %58, %60, %cst_50 {dimension_numbers = #tpu.dot_dimension_numbers<[1], [0], [0], [1], [0, 0, 1, 1], [], []>} : vector<2x128xf32>, vector<128x128xf32>, vector<2x128xf32> -> vector<2x128xf32>
      %c5_51 = arith.constant 5 : index
      %c0_52 = arith.constant 0 : index
      %c0_53 = arith.constant 0 : index
      %62 = vector.load %arg4[%c5_51, %c0_52, %c0_53] : memref<6x1x128xf32, #tpu.memory_space<vmem>>, vector<1x1x128xf32>
      %63 = vector.shape_cast %62 : vector<1x1x128xf32> to vector<1x128xf32>
      %64 = vector.broadcast %63 : vector<1x128xf32> to vector<2x128xf32>
      %65 = arith.addf %61, %64 : vector<2x128xf32>
      %66 = tpu.iota {dimensions = array<i32: 0>} : vector<32x4096xi32>
      %67 = arith.sitofp %66 : vector<32x4096xi32> to vector<32x4096xf32>
      %68 = tpu.iota {dimensions = array<i32: 1>} : vector<32x4096xi32>
      %69 = arith.sitofp %68 : vector<32x4096xi32> to vector<32x4096xf32>
      %cst_54 = arith.constant 1.280000e+02 : f32
      %70 = vector.broadcast %cst_54 : f32 to vector<32x4096xf32>
      %71 = arith.mulf %67, %70 : vector<32x4096xf32>
      %72 = arith.cmpf oge, %69, %71 : vector<32x4096xf32>
      %cst_55 = arith.constant 1.280000e+02 : f32
      %73 = vector.broadcast %cst_55 : f32 to vector<32x4096xf32>
      %74 = arith.mulf %67, %73 : vector<32x4096xf32>
      %cst_56 = arith.constant 1.280000e+02 : f32
      %75 = vector.broadcast %cst_56 : f32 to vector<32x4096xf32>
      %76 = arith.addf %74, %75 : vector<32x4096xf32>
      %77 = arith.cmpf olt, %69, %76 : vector<32x4096xf32>
      %78 = arith.andi %72, %77 : vector<32x4096xi1>
      %79 = arith.extui %78 : vector<32x4096xi1> to vector<32x4096xi32>
      %80 = arith.sitofp %79 : vector<32x4096xi32> to vector<32x4096xf32>
      %81 = tpu.iota {dimensions = array<i32: 0>} : vector<128x32xi32>
      %82 = tpu.iota {dimensions = array<i32: 1>} : vector<128x32xi32>
      %83 = tpu.concatenate %65, %65, %65, %65, %65, %65, %65, %65, %65, %65, %65, %65, %65, %65, %65, %65 in 1 : vector<2x128xf32>, vector<2x128xf32>, vector<2x128xf32>, vector<2x128xf32>, vector<2x128xf32>, vector<2x128xf32>, vector<2x128xf32>, vector<2x128xf32>, vector<2x128xf32>, vector<2x128xf32>, vector<2x128xf32>, vector<2x128xf32>, vector<2x128xf32>, vector<2x128xf32>, vector<2x128xf32>, vector<2x128xf32> -> vector<2x2048xf32>
      %84 = tpu.concatenate %65, %65, %65, %65, %65, %65, %65, %65, %65, %65, %65, %65, %65, %65, %65, %65 in 1 : vector<2x128xf32>, vector<2x128xf32>, vector<2x128xf32>, vector<2x128xf32>, vector<2x128xf32>, vector<2x128xf32>, vector<2x128xf32>, vector<2x128xf32>, vector<2x128xf32>, vector<2x128xf32>, vector<2x128xf32>, vector<2x128xf32>, vector<2x128xf32>, vector<2x128xf32>, vector<2x128xf32>, vector<2x128xf32> -> vector<2x2048xf32>
      %85 = tpu.concatenate %83, %84 in 1 : vector<2x2048xf32>, vector<2x2048xf32> -> vector<2x4096xf32>
      %c0_i32_57 = arith.constant 0 : i32
      %86 = vector.broadcast %c0_i32_57 : i32 to vector<128x32xi32>
      %87 = arith.addi %82, %86 : vector<128x32xi32>
      %88 = arith.cmpi eq, %81, %87 : vector<128x32xi32>
      %89 = arith.extui %88 : vector<128x32xi1> to vector<128x32xi32>
      %90 = arith.sitofp %89 : vector<128x32xi32> to vector<128x32xf32>
      %cst_58 = arith.constant dense<0.000000e+00> : vector<2x32xf32>
      %91 = tpu.matmul %39, %90, %cst_58 {dimension_numbers = #tpu.dot_dimension_numbers<[1], [0], [0], [1], [0, 0, 1, 1], [], []>} : vector<2x128xf32>, vector<128x32xf32>, vector<2x32xf32> -> vector<2x32xf32>
      %cst_59 = arith.constant dense<0.000000e+00> : vector<2x4096xf32>
      %92 = tpu.matmul %91, %80, %cst_59 {dimension_numbers = #tpu.dot_dimension_numbers<[1], [0], [0], [1], [0, 0, 1, 1], [], []>} : vector<2x32xf32>, vector<32x4096xf32>, vector<2x4096xf32> -> vector<2x4096xf32>
      %93 = arith.mulf %92, %85 : vector<2x4096xf32>
      %c0_60 = arith.constant 0 : index
      %c0_61 = arith.constant 0 : index
      %c0_62 = arith.constant 0 : index
      %94 = vector.load %arg12[%c0_60, %c0_61, %c0_62] : memref<4x2x4096xf32, #tpu.memory_space<vmem>>, vector<1x2x4096xf32>
      %95 = vector.shape_cast %94 : vector<1x2x4096xf32> to vector<2x4096xf32>
      %96 = vector.shape_cast %93 : vector<2x4096xf32> to vector<1x2x4096xf32>
      tpu.vector_store %arg12[%c0_60, %c0_61, %c0_62], %96 {strides = array<i32>} : memref<4x2x4096xf32, #tpu.memory_space<vmem>>, vector<1x2x4096xf32>,
      %c32_i32 = arith.constant 32 : i32
      %97 = vector.broadcast %c32_i32 : i32 to vector<128x32xi32>
      %98 = arith.addi %82, %97 : vector<128x32xi32>
      %99 = arith.cmpi eq, %81, %98 : vector<128x32xi32>
      %100 = arith.extui %99 : vector<128x32xi1> to vector<128x32xi32>
      %101 = arith.sitofp %100 : vector<128x32xi32> to vector<128x32xf32>
      %cst_63 = arith.constant dense<0.000000e+00> : vector<2x32xf32>
      %102 = tpu.matmul %39, %101, %cst_63 {dimension_numbers = #tpu.dot_dimension_numbers<[1], [0], [0], [1], [0, 0, 1, 1], [], []>} : vector<2x128xf32>, vector<128x32xf32>, vector<2x32xf32> -> vector<2x32xf32>
      %cst_64 = arith.constant dense<0.000000e+00> : vector<2x4096xf32>
      %103 = tpu.matmul %102, %80, %cst_64 {dimension_numbers = #tpu.dot_dimension_numbers<[1], [0], [0], [1], [0, 0, 1, 1], [], []>} : vector<2x32xf32>, vector<32x4096xf32>, vector<2x4096xf32> -> vector<2x4096xf32>
      %104 = arith.mulf %103, %85 : vector<2x4096xf32>
      %c1_65 = arith.constant 1 : index
      %c0_66 = arith.constant 0 : index
      %c0_67 = arith.constant 0 : index
      %105 = vector.load %arg12[%c1_65, %c0_66, %c0_67] : memref<4x2x4096xf32, #tpu.memory_space<vmem>>, vector<1x2x4096xf32>
      %106 = vector.shape_cast %105 : vector<1x2x4096xf32> to vector<2x4096xf32>
      %107 = vector.shape_cast %104 : vector<2x4096xf32> to vector<1x2x4096xf32>
      tpu.vector_store %arg12[%c1_65, %c0_66, %c0_67], %107 {strides = array<i32>} : memref<4x2x4096xf32, #tpu.memory_space<vmem>>, vector<1x2x4096xf32>,
      %c64_i32 = arith.constant 64 : i32
      %108 = vector.broadcast %c64_i32 : i32 to vector<128x32xi32>
      %109 = arith.addi %82, %108 : vector<128x32xi32>
      %110 = arith.cmpi eq, %81, %109 : vector<128x32xi32>
      %111 = arith.extui %110 : vector<128x32xi1> to vector<128x32xi32>
      %112 = arith.sitofp %111 : vector<128x32xi32> to vector<128x32xf32>
      %cst_68 = arith.constant dense<0.000000e+00> : vector<2x32xf32>
      %113 = tpu.matmul %39, %112, %cst_68 {dimension_numbers = #tpu.dot_dimension_numbers<[1], [0], [0], [1], [0, 0, 1, 1], [], []>} : vector<2x128xf32>, vector<128x32xf32>, vector<2x32xf32> -> vector<2x32xf32>
      %cst_69 = arith.constant dense<0.000000e+00> : vector<2x4096xf32>
      %114 = tpu.matmul %113, %80, %cst_69 {dimension_numbers = #tpu.dot_dimension_numbers<[1], [0], [0], [1], [0, 0, 1, 1], [], []>} : vector<2x32xf32>, vector<32x4096xf32>, vector<2x4096xf32> -> vector<2x4096xf32>
      %115 = arith.mulf %114, %85 : vector<2x4096xf32>
      %c2_70 = arith.constant 2 : index
      %c0_71 = arith.constant 0 : index
      %c0_72 = arith.constant 0 : index
      %116 = vector.load %arg12[%c2_70, %c0_71, %c0_72] : memref<4x2x4096xf32, #tpu.memory_space<vmem>>, vector<1x2x4096xf32>
      %117 = vector.shape_cast %116 : vector<1x2x4096xf32> to vector<2x4096xf32>
      %118 = vector.shape_cast %115 : vector<2x4096xf32> to vector<1x2x4096xf32>
      tpu.vector_store %arg12[%c2_70, %c0_71, %c0_72], %118 {strides = array<i32>} : memref<4x2x4096xf32, #tpu.memory_space<vmem>>, vector<1x2x4096xf32>,
      %c96_i32 = arith.constant 96 : i32
      %119 = vector.broadcast %c96_i32 : i32 to vector<128x32xi32>
      %120 = arith.addi %82, %119 : vector<128x32xi32>
      %121 = arith.cmpi eq, %81, %120 : vector<128x32xi32>
      %122 = arith.extui %121 : vector<128x32xi1> to vector<128x32xi32>
      %123 = arith.sitofp %122 : vector<128x32xi32> to vector<128x32xf32>
      %cst_73 = arith.constant dense<0.000000e+00> : vector<2x32xf32>
      %124 = tpu.matmul %39, %123, %cst_73 {dimension_numbers = #tpu.dot_dimension_numbers<[1], [0], [0], [1], [0, 0, 1, 1], [], []>} : vector<2x128xf32>, vector<128x32xf32>, vector<2x32xf32> -> vector<2x32xf32>
      %cst_74 = arith.constant dense<0.000000e+00> : vector<2x4096xf32>
      %125 = tpu.matmul %124, %80, %cst_74 {dimension_numbers = #tpu.dot_dimension_numbers<[1], [0], [0], [1], [0, 0, 1, 1], [], []>} : vector<2x32xf32>, vector<32x4096xf32>, vector<2x4096xf32> -> vector<2x4096xf32>
      %126 = arith.mulf %125, %85 : vector<2x4096xf32>
      %c3_75 = arith.constant 3 : index
      %c0_76 = arith.constant 0 : index
      %c0_77 = arith.constant 0 : index
      %127 = vector.load %arg12[%c3_75, %c0_76, %c0_77] : memref<4x2x4096xf32, #tpu.memory_space<vmem>>, vector<1x2x4096xf32>
      %128 = vector.shape_cast %127 : vector<1x2x4096xf32> to vector<2x4096xf32>
      %129 = vector.shape_cast %126 : vector<2x4096xf32> to vector<1x2x4096xf32>
      tpu.vector_store %arg12[%c3_75, %c0_76, %c0_77], %129 {strides = array<i32>} : memref<4x2x4096xf32, #tpu.memory_space<vmem>>, vector<1x2x4096xf32>,
      %cst_78 = arith.constant 0.000000e+00 : f32
      %130 = vector.broadcast %cst_78 : f32 to vector<2x128xf32>
      %c0_79 = arith.constant 0 : index
      %c0_80 = arith.constant 0 : index
      %131 = vector.load %arg13[%c0_79, %c0_80] : memref<2x128xf32, #tpu.memory_space<vmem>>, vector<2x128xf32>
      tpu.vector_store %arg13[%c0_79, %c0_80], %130 {strides = array<i32>} : memref<2x128xf32, #tpu.memory_space<vmem>>, vector<2x128xf32>,
    } else {
    }
    %c0 = arith.constant 0 : index
    %c0_1 = arith.constant 0 : index
    %3 = vector.load %arg13[%c0, %c0_1] : memref<2x128xf32, #tpu.memory_space<vmem>>, vector<2x128xf32>
    %4 = arith.index_cast %arg0 : i32 to index
    %c0_2 = arith.constant 0 : index
    %c0_3 = arith.constant 0 : index
    %5 = vector.load %arg12[%4, %c0_2, %c0_3] : memref<4x2x4096xf32, #tpu.memory_space<vmem>>, vector<1x2x4096xf32>
    %6 = vector.shape_cast %5 : vector<1x2x4096xf32> to vector<2x4096xf32>
    %c0_4 = arith.constant 0 : index
    %c0_5 = arith.constant 0 : index
    %7 = vector.load %arg5[%c0_4, %c0_5] : memref<4096x128xf32, #tpu.memory_space<vmem>>, vector<4096x128xf32>
    %cst = arith.constant dense<0.000000e+00> : vector<2x128xf32>
    %8 = tpu.matmul %6, %7, %cst {dimension_numbers = #tpu.dot_dimension_numbers<[1], [0], [0], [1], [0, 0, 1, 1], [], []>} : vector<2x4096xf32>, vector<4096x128xf32>, vector<2x128xf32> -> vector<2x128xf32>
    %9 = arith.addf %3, %8 : vector<2x128xf32>
    %c0_6 = arith.constant 0 : index
    %c0_7 = arith.constant 0 : index
    %10 = vector.load %arg13[%c0_6, %c0_7] : memref<2x128xf32, #tpu.memory_space<vmem>>, vector<2x128xf32>
    tpu.vector_store %arg13[%c0_6, %c0_7], %9 {strides = array<i32>} : memref<2x128xf32, #tpu.memory_space<vmem>>, vector<2x128xf32>,
    %c3_i32 = arith.constant 3 : i32
    %11 = arith.cmpi eq, %arg0, %c3_i32 : i32
    %12 = arith.extui %11 : i1 to i32
    %c0_i32_8 = arith.constant 0 : i32
    %13 = arith.cmpi ne, %12, %c0_i32_8 : i32
    scf.if %13 {
      %c0_9 = arith.constant 0 : index
      %c0_10 = arith.constant 0 : index
      %14 = vector.load %arg13[%c0_9, %c0_10] : memref<2x128xf32, #tpu.memory_space<vmem>>, vector<2x128xf32>
      %c0_11 = arith.constant 0 : index
      %c0_12 = arith.constant 0 : index
      %15 = vector.load %arg6[%c0_11, %c0_12] : memref<1x128xf32, #tpu.memory_space<vmem>>, vector<1x128xf32>
      %16 = vector.broadcast %15 : vector<1x128xf32> to vector<2x128xf32>
      %17 = arith.addf %14, %16 : vector<2x128xf32>
      %cst_13 = arith.constant 0.000000e+00 : f32
      %18 = vector.broadcast %cst_13 : f32 to vector<2x128xf32>
      %19 = arith.maximumf %17, %18 : vector<2x128xf32>
      %c0_14 = arith.constant 0 : index
      %c0_15 = arith.constant 0 : index
      %20 = vector.load %arg7[%c0_14, %c0_15] : memref<128x128xf32, #tpu.memory_space<vmem>>, vector<128x128xf32>
      %cst_16 = arith.constant dense<0.000000e+00> : vector<2x128xf32>
      %21 = tpu.matmul %19, %20, %cst_16 {dimension_numbers = #tpu.dot_dimension_numbers<[1], [0], [0], [1], [0, 0, 1, 1], [], []>} : vector<2x128xf32>, vector<128x128xf32>, vector<2x128xf32> -> vector<2x128xf32>
      %c0_17 = arith.constant 0 : index
      %c0_18 = arith.constant 0 : index
      %22 = vector.load %arg8[%c0_17, %c0_18] : memref<1x128xf32, #tpu.memory_space<vmem>>, vector<1x128xf32>
      %23 = vector.broadcast %22 : vector<1x128xf32> to vector<2x128xf32>
      %24 = arith.addf %21, %23 : vector<2x128xf32>
      %cst_19 = arith.constant 0.000000e+00 : f32
      %25 = vector.broadcast %cst_19 : f32 to vector<2x128xf32>
      %26 = arith.maximumf %24, %25 : vector<2x128xf32>
      %c0_20 = arith.constant 0 : index
      %c0_21 = arith.constant 0 : index
      %27 = vector.load %arg9[%c0_20, %c0_21] : memref<128x128xf32, #tpu.memory_space<vmem>>, vector<128x128xf32>
      %cst_22 = arith.constant dense<0.000000e+00> : vector<2x128xf32>
      %28 = tpu.matmul %26, %27, %cst_22 {dimension_numbers = #tpu.dot_dimension_numbers<[1], [0], [0], [1], [0, 0, 1, 1], [], []>} : vector<2x128xf32>, vector<128x128xf32>, vector<2x128xf32> -> vector<2x128xf32>
      %c0_23 = arith.constant 0 : index
      %c0_24 = arith.constant 0 : index
      %29 = vector.load %arg10[%c0_23, %c0_24] : memref<1x128xf32, #tpu.memory_space<vmem>>, vector<1x128xf32>
      %30 = vector.broadcast %29 : vector<1x128xf32> to vector<2x128xf32>
      %31 = arith.addf %28, %30 : vector<2x128xf32>
      %c0_25 = arith.constant 0 : index
      %c0_26 = arith.constant 0 : index
      %32 = vector.load %arg11[%c0_25, %c0_26] : memref<2x128xf32, #tpu.memory_space<vmem>>, vector<2x128xf32>
      tpu.vector_store %arg11[%c0_25, %c0_26], %31 {strides = array<i32>} : memref<2x128xf32, #tpu.memory_space<vmem>>, vector<2x128xf32>,
    } else {
    }
    return
  }
  func.func @transform_0(%arg0: i32) -> (i32, i32) {
    %c0_i32 = arith.constant 0 : i32
    %c0_i32_0 = arith.constant 0 : i32
    %c0_i32_1 = arith.constant 0 : i32
    return %c0_i32, %c0_i32_0 : i32, i32
  }
  func.func @transform_1(%arg0: i32) -> (i32, i32) {
    %c0_i32 = arith.constant 0 : i32
    %c0_i32_0 = arith.constant 0 : i32
    %c0_i32_1 = arith.constant 0 : i32
    return %c0_i32, %c0_i32_0 : i32, i32
  }
  func.func @transform_2(%arg0: i32) -> (i32, i32, i32) {
    %c0_i32 = arith.constant 0 : i32
    %c0_i32_0 = arith.constant 0 : i32
    %c0_i32_1 = arith.constant 0 : i32
    %c0_i32_2 = arith.constant 0 : i32
    return %c0_i32, %c0_i32_0, %c0_i32_1 : i32, i32, i32
  }
  func.func @transform_3(%arg0: i32) -> (i32, i32, i32) {
    %c0_i32 = arith.constant 0 : i32
    %c0_i32_0 = arith.constant 0 : i32
    %c0_i32_1 = arith.constant 0 : i32
    %c0_i32_2 = arith.constant 0 : i32
    return %c0_i32, %c0_i32_0, %c0_i32_1 : i32, i32, i32
  }
  func.func @transform_4(%arg0: i32) -> (i32, i32) {
    %c0_i32 = arith.constant 0 : i32
    %c0_i32_0 = arith.constant 0 : i32
    return %arg0, %c0_i32 : i32, i32
  }
  func.func @transform_5(%arg0: i32) -> (i32, i32) {
    %c0_i32 = arith.constant 0 : i32
    %c0_i32_0 = arith.constant 0 : i32
    %c0_i32_1 = arith.constant 0 : i32
    return %c0_i32, %c0_i32_0 : i32, i32
  }
  func.func @transform_6(%arg0: i32) -> (i32, i32) {
    %c0_i32 = arith.constant 0 : i32
    %c0_i32_0 = arith.constant 0 : i32
    %c0_i32_1 = arith.constant 0 : i32
    return %c0_i32, %c0_i32_0 : i32, i32
  }
  func.func @transform_7(%arg0: i32) -> (i32, i32) {
    %c0_i32 = arith.constant 0 : i32
    %c0_i32_0 = arith.constant 0 : i32
    %c0_i32_1 = arith.constant 0 : i32
    return %c0_i32, %c0_i32_0 : i32, i32
  }
  func.func @transform_8(%arg0: i32) -> (i32, i32) {
    %c0_i32 = arith.constant 0 : i32
    %c0_i32_0 = arith.constant 0 : i32
    %c0_i32_1 = arith.constant 0 : i32
    return %c0_i32, %c0_i32_0 : i32, i32
  }
  func.func @transform_9(%arg0: i32) -> (i32, i32) {
    %c0_i32 = arith.constant 0 : i32
    %c0_i32_0 = arith.constant 0 : i32
    %c0_i32_1 = arith.constant 0 : i32
    return %c0_i32, %c0_i32_0 : i32, i32
  }
  func.func @transform_10(%arg0: i32) -> (i32, i32) {
    %c0_i32 = arith.constant 0 : i32
    %c0_i32_0 = arith.constant 0 : i32
    %c0_i32_1 = arith.constant 0 : i32
    return %c0_i32, %c0_i32_0 : i32, i32
  }
}

</mosaic_0001>

<llo_original>
// kernel: _lambda_.1
$region0: #{_lambda_.1}
  #allocation0 [shape = 'u32[]', space=smem, size = 0x4, offset = 0x4, fixed_abs, tag = 'smem constant byte address 0x4 - core index']
  #allocation1 [shape = 'u32[144,128]{1,0:T(1,128)}', space=vmem, size = 0x12000, scoped, tag = 'internal scratch']
  #allocation2 [shape = 'f32[4,2,4096]{2,1,0:T(2,128)}', space=vmem, size = 0x20000, scoped, tag = 'scratch operand']
  #allocation3 [shape = 'f32[2,128]{1,0:T(2,128)}', space=vmem, size = 0x400, scoped, tag = 'scratch operand']
  %s0 = inlined_call_operand.hbm [shape: f32[2,128], index: 0, kind: input, shape index: {}]
  %s1 = inlined_call_operand.hbm [shape: f32[2,128], index: 1, kind: input, shape index: {}]
  %s2 = inlined_call_operand.hbm [shape: f32[6,128,128], index: 2, kind: input, shape index: {}]
  %s3 = inlined_call_operand.hbm [shape: f32[6,1,128], index: 3, kind: input, shape index: {}]
  %s4 = inlined_call_operand.hbm [shape: f32[16384,128], index: 4, kind: input, shape index: {}]
  %s5 = inlined_call_operand.hbm [shape: f32[1,128], index: 5, kind: input, shape index: {}]
  %s6 = inlined_call_operand.hbm [shape: f32[128,128], index: 6, kind: input, shape index: {}]
  %s7 = inlined_call_operand.hbm [shape: f32[1,128], index: 7, kind: input, shape index: {}]
  %s8 = inlined_call_operand.hbm [shape: f32[128,128], index: 8, kind: input, shape index: {}]
  %s9 = inlined_call_operand.hbm [shape: f32[1,128], index: 9, kind: input, shape index: {}]
  %s10 = inlined_call_operand.hbm [shape: f32[2,128], index: 10, kind: output, shape index: {}]
  %s11 = sld [smem:[#allocation0]]
  $region121: #{_lambda_.1} parent=0
    _
  %s13 = ssub.s32 1, %s11
  %s14 = scalar_select 0, %s13, %s11
  $region1: #{_lambda_.1} parent=0
    #allocation4 [shape = 'u8[1024]{0}', space=vmem, size = 0x400, scoped, tag = 'input window, operand 0, single buffered']
    #allocation5 [shape = 's32[2]{0}', space=sflag, size = 0x8, scoped, tag = 'scoped memory for _lambda_.1']
    #allocation6 [shape = 's32[2]{0}', space=sflag, size = 0x8, scoped, tag = 'scoped memory for _lambda_.1']
    #allocation7 [shape = 'u8[1024]{0}', space=vmem, size = 0x400, scoped, tag = 'input window, operand 1, single buffered']
    #allocation8 [shape = 's32[1]{0}', space=sflag, size = 0x4, scoped, tag = 'scoped memory for _lambda_.1']
    #allocation9 [shape = 'u8[393216]{0}', space=vmem, size = 0x60000, scoped, tag = 'input window, operand 2, single buffered']
    #allocation10 [shape = 'u8[3072]{0}', space=vmem, size = 0xc00, scoped, tag = 'input window, operand 3, single buffered']
    #allocation11 [shape = 's32[1]{0}', space=sflag, size = 0x4, scoped, tag = 'scoped memory for _lambda_.1']
    #allocation12 [shape = 'u8[4194304]{0}', space=vmem, size = 0x400000, scoped, tag = 'input window, operand 4']
    #allocation13 [shape = 'u8[512]{0}', space=vmem, size = 0x400, scoped, tag = 'input window, operand 5, single buffered']
    #allocation14 [shape = 'u8[65536]{0}', space=vmem, size = 0x10000, scoped, tag = 'input window, operand 6, single buffered']
    #allocation15 [shape = 'u8[512]{0}', space=vmem, size = 0x400, scoped, tag = 'input window, operand 7, single buffered']
    #allocation16 [shape = 's32[1]{0}', space=sflag, size = 0x4, scoped, tag = 'scoped memory for _lambda_.1']
    #allocation17 [shape = 'u8[65536]{0}', space=vmem, size = 0x10000, scoped, tag = 'input window, operand 8, single buffered']
    #allocation18 [shape = 'u8[512]{0}', space=vmem, size = 0x400, scoped, tag = 'input window, operand 9, single buffered']
    #allocation19 [shape = 's32[1]{0}', space=sflag, size = 0x4, scoped, tag = 'scoped memory for _lambda_.1']
    #allocation20 [shape = 'u8[1024]{0}', space=vmem, size = 0x400, scoped, tag = 'output window, operand 0, single buffered']
    %15 = vsyncpa [#allocation5], 0
    %16 = vsyncpa [#allocation8], 0
    %17 = vsyncpa [#allocation11], 0
    %18 = vsyncpa [#allocation16], 0
    %19 = vsyncpa [#allocation19], 0
    %20 = vsyncpa [#allocation6], 0
    loop: start=0, step=1, limit=6
    $region2: #{_lambda_.1} parent=1 // loop_pre_header
      _
    $region3: #{_lambda_.1} parent=1 // loop_header
      %s22 = sphi 0, %s26
      %p23 = scmp.ge.s32.totalorder %s22, 6
      %s30 = sphi 0, %s30
      %s32 = sphi 0, %s30
      %s33 = sphi 0, %s32
      %s47 = sphi 0, %s33
      %s51 = sphi 0, %s51
      %s53 = sphi 0, %s51
      %s54 = sphi 0, %s53
      %s68 = sphi 0, %s54
      %s72 = sphi 0, %s72
      %s74 = sphi 0, %s72
      %s75 = sphi 0, %s74
      %s89 = sphi 0, %s75
      %s93 = sphi 0, %s93
      %s95 = sphi 0, %s93
      %s96 = sphi 0, %s95
      %s110 = sphi 0, %s96
      %s116 = sphi 0, %s118
      %s119 = sphi 0, %s116
      %s120 = sphi 0, %s119
      %s136 = sphi 0, %s120
      %s140 = sphi 0, %s140
      %s142 = sphi 0, %s140
      %s143 = sphi 0, %s142
      %s157 = sphi 0, %s143
      %s161 = sphi 0, %s161
      %s163 = sphi 0, %s161
      %s164 = sphi 0, %s163
      %s178 = sphi 0, %s164
      %s182 = sphi 0, %s182
      %s184 = sphi 0, %s182
      %s185 = sphi 0, %s184
      %s199 = sphi 0, %s185
      %s203 = sphi 0, %s203
      %s205 = sphi 0, %s203
      %s206 = sphi 0, %s205
      %s220 = sphi 0, %s206
      %s224 = sphi 0, %s224
      %s226 = sphi 0, %s224
      %s227 = sphi 0, %s226
      %s241 = sphi 0, %s227
      %s245 = sphi 0, %s245
      %s247 = sphi 0, %s245
      %s248 = sphi 0, %s247
      %s262 = sphi 0, %s248
    $region4: #{_lambda_.1} parent=1 // loop_header_branch
      %25 = sbr.rel (%p23) target = $region8
    $region5: #{_lambda_.1} parent=1 // loop_body
      %s27 = ssub.s32 %s22, 1
      %s28 = ssub.s32 %s22, 2
      %s29 = sadd.s32 %s22, 1
      %s31 = sadd.s32 %s30, 1
      %p34 = scmp.eq.s32.totalorder %s22, 3
      %p35 = scmp.ne.s32.totalorder %s30, %s32
      %p36 = scmp.eq.s32.totalorder %s22, 0
      %p37 = por %p35, %p36
      %p38 = scmp.ne.s32.totalorder %s30, %s32
      %p39 = scmp.eq.s32.totalorder %s27, 3
      %p40 = por %p38, %p39
      %p41 = scmp.ne.s32.totalorder %s32, %s33
      %p42 = scmp.eq.s32.totalorder %s27, 0
      %p43 = por %p41, %p42
      %p44 = scmp.ne.s32.totalorder %s32, %s33
      %p45 = scmp.eq.s32.totalorder %s28, 3
      %p46 = por %p44, %p45
      %p48 = scmp.ne.s32.totalorder %s33, %s47
      %p49 = scmp.eq.s32.totalorder %s28, 0
      %p50 = por %p48, %p49
      %s52 = sadd.s32 %s51, 1
      %p55 = scmp.eq.s32.totalorder %s22, 3
      %p56 = scmp.ne.s32.totalorder %s51, %s53
      %p57 = scmp.eq.s32.totalorder %s22, 0
      %p58 = por %p56, %p57
      %p59 = scmp.ne.s32.totalorder %s51, %s53
      %p60 = scmp.eq.s32.totalorder %s27, 3
      %p61 = por %p59, %p60
      %p62 = scmp.ne.s32.totalorder %s53, %s54
      %p63 = scmp.eq.s32.totalorder %s27, 0
      %p64 = por %p62, %p63
      %p65 = scmp.ne.s32.totalorder %s53, %s54
      %p66 = scmp.eq.s32.totalorder %s28, 3
      %p67 = por %p65, %p66
      %p69 = scmp.ne.s32.totalorder %s54, %s68
      %p70 = scmp.eq.s32.totalorder %s28, 0
      %p71 = por %p69, %p70
      %s73 = sadd.s32 %s72, 1
      %p76 = scmp.eq.s32.totalorder %s22, 3
      %p77 = scmp.ne.s32.totalorder %s72, %s74
      %p78 = scmp.eq.s32.totalorder %s22, 0
      %p79 = por %p77, %p78
      %p80 = scmp.ne.s32.totalorder %s72, %s74
      %p81 = scmp.eq.s32.totalorder %s27, 3
      %p82 = por %p80, %p81
      %p83 = scmp.ne.s32.totalorder %s74, %s75
      %p84 = scmp.eq.s32.totalorder %s27, 0
      %p85 = por %p83, %p84
      %p86 = scmp.ne.s32.totalorder %s74, %s75
      %p87 = scmp.eq.s32.totalorder %s28, 3
      %p88 = por %p86, %p87
      %p90 = scmp.ne.s32.totalorder %s75, %s89
      %p91 = scmp.eq.s32.totalorder %s28, 0
      %p92 = por %p90, %p91
      %s94 = sadd.s32 %s93, 1
      %p97 = scmp.eq.s32.totalorder %s22, 3
      %p98 = scmp.ne.s32.totalorder %s93, %s95
      %p99 = scmp.eq.s32.totalorder %s22, 0
      %p100 = por %p98, %p99
      %p101 = scmp.ne.s32.totalorder %s93, %s95
      %p102 = scmp.eq.s32.totalorder %s27, 3
      %p103 = por %p101, %p102
      %p104 = scmp.ne.s32.totalorder %s95, %s96
      %p105 = scmp.eq.s32.totalorder %s27, 0
      %p106 = por %p104, %p105
      %p107 = scmp.ne.s32.totalorder %s95, %s96
      %p108 = scmp.eq.s32.totalorder %s28, 3
      %p109 = por %p107, %p108
      %p111 = scmp.ne.s32.totalorder %s96, %s110
      %p112 = scmp.eq.s32.totalorder %s28, 0
      %p113 = por %p111, %p112
      %s114 = ssub.s32 %s22, %s29
      %p115 = scmp.eq.s32.totalorder %s114, 0
      %s117 = sadd.s32 %s116, 1
      %s118 = scalar_select %p115, %s116, %s117
      %p121 = pneg %p115
      %p122 = scmp.eq.s32.totalorder %s22, 3
      %p123 = por %p121, %p122
      %p124 = scmp.ne.s32.totalorder %s116, %s119
      %p125 = scmp.eq.s32.totalorder %s22, 0
      %p126 = por %p124, %p125
      %p127 = scmp.ne.s32.totalorder %s116, %s119
      %p128 = scmp.eq.s32.totalorder %s27, 3
      %p129 = por %p127, %p128
      %p130 = scmp.ne.s32.totalorder %s119, %s120
      %p131 = scmp.eq.s32.totalorder %s27, 0
      %p132 = por %p130, %p131
      %p133 = scmp.ne.s32.totalorder %s119, %s120
      %p134 = scmp.eq.s32.totalorder %s28, 3
      %p135 = por %p133, %p134
      %p137 = scmp.ne.s32.totalorder %s120, %s136
      %p138 = scmp.eq.s32.totalorder %s28, 0
      %p139 = por %p137, %p138
      %s141 = sadd.s32 %s140, 1
      %p144 = scmp.eq.s32.totalorder %s22, 3
      %p145 = scmp.ne.s32.totalorder %s140, %s142
      %p146 = scmp.eq.s32.totalorder %s22, 0
      %p147 = por %p145, %p146
      %p148 = scmp.ne.s32.totalorder %s140, %s142
      %p149 = scmp.eq.s32.totalorder %s27, 3
      %p150 = por %p148, %p149
      %p151 = scmp.ne.s32.totalorder %s142, %s143
      %p152 = scmp.eq.s32.totalorder %s27, 0
      %p153 = por %p151, %p152
      %p154 = scmp.ne.s32.totalorder %s142, %s143
      %p155 = scmp.eq.s32.totalorder %s28, 3
      %p156 = por %p154, %p155
      %p158 = scmp.ne.s32.totalorder %s143, %s157
      %p159 = scmp.eq.s32.totalorder %s28, 0
      %p160 = por %p158, %p159
      %s162 = sadd.s32 %s161, 1
      %p165 = scmp.eq.s32.totalorder %s22, 3
      %p166 = scmp.ne.s32.totalorder %s161, %s163
      %p167 = scmp.eq.s32.totalorder %s22, 0
      %p168 = por %p166, %p167
      %p169 = scmp.ne.s32.totalorder %s161, %s163
      %p170 = scmp.eq.s32.totalorder %s27, 3
      %p171 = por %p169, %p170
      %p172 = scmp.ne.s32.totalorder %s163, %s164
      %p173 = scmp.eq.s32.totalorder %s27, 0
      %p174 = por %p172, %p173
      %p175 = scmp.ne.s32.totalorder %s163, %s164
      %p176 = scmp.eq.s32.totalorder %s28, 3
      %p177 = por %p175, %p176
      %p179 = scmp.ne.s32.totalorder %s164, %s178
      %p180 = scmp.eq.s32.totalorder %s28, 0
      %p181 = por %p179, %p180
      %s183 = sadd.s32 %s182, 1
      %p186 = scmp.eq.s32.totalorder %s22, 3
      %p187 = scmp.ne.s32.totalorder %s182, %s184
      %p188 = scmp.eq.s32.totalorder %s22, 0
      %p189 = por %p187, %p188
      %p190 = scmp.ne.s32.totalorder %s182, %s184
      %p191 = scmp.eq.s32.totalorder %s27, 3
      %p192 = por %p190, %p191
      %p193 = scmp.ne.s32.totalorder %s184, %s185
      %p194 = scmp.eq.s32.totalorder %s27, 0
      %p195 = por %p193, %p194
      %p196 = scmp.ne.s32.totalorder %s184, %s185
      %p197 = scmp.eq.s32.totalorder %s28, 3
      %p198 = por %p196, %p197
      %p200 = scmp.ne.s32.totalorder %s185, %s199
      %p201 = scmp.eq.s32.totalorder %s28, 0
      %p202 = por %p200, %p201
      %s204 = sadd.s32 %s203, 1
      %p207 = scmp.eq.s32.totalorder %s22, 3
      %p208 = scmp.ne.s32.totalorder %s203, %s205
      %p209 = scmp.eq.s32.totalorder %s22, 0
      %p210 = por %p208, %p209
      %p211 = scmp.ne.s32.totalorder %s203, %s205
      %p212 = scmp.eq.s32.totalorder %s27, 3
      %p213 = por %p211, %p212
      %p214 = scmp.ne.s32.totalorder %s205, %s206
      %p215 = scmp.eq.s32.totalorder %s27, 0
      %p216 = por %p214, %p215
      %p217 = scmp.ne.s32.totalorder %s205, %s206
      %p218 = scmp.eq.s32.totalorder %s28, 3
      %p219 = por %p217, %p218
      %p221 = scmp.ne.s32.totalorder %s206, %s220
      %p222 = scmp.eq.s32.totalorder %s28, 0
      %p223 = por %p221, %p222
      %s225 = sadd.s32 %s224, 1
      %p228 = scmp.eq.s32.totalorder %s22, 3
      %p229 = scmp.ne.s32.totalorder %s224, %s226
      %p230 = scmp.eq.s32.totalorder %s22, 0
      %p231 = por %p229, %p230
      %p232 = scmp.ne.s32.totalorder %s224, %s226
      %p233 = scmp.eq.s32.totalorder %s27, 3
      %p234 = por %p232, %p233
      %p235 = scmp.ne.s32.totalorder %s226, %s227
      %p236 = scmp.eq.s32.totalorder %s27, 0
      %p237 = por %p235, %p236
      %p238 = scmp.ne.s32.totalorder %s226, %s227
      %p239 = scmp.eq.s32.totalorder %s28, 3
      %p240 = por %p238, %p239
      %p242 = scmp.ne.s32.totalorder %s227, %s241
      %p243 = scmp.eq.s32.totalorder %s28, 0
      %p244 = por %p242, %p243
      %s246 = sadd.s32 %s245, 1
      %p249 = scmp.eq.s32.totalorder %s22, 3
      %p250 = scmp.ne.s32.totalorder %s245, %s247
      %p251 = scmp.eq.s32.totalorder %s22, 0
      %p252 = por %p250, %p251
      %p253 = scmp.ne.s32.totalorder %s245, %s247
      %p254 = scmp.eq.s32.totalorder %s27, 3
      %p255 = por %p253, %p254
      %p256 = scmp.ne.s32.totalorder %s247, %s248
      %p257 = scmp.eq.s32.totalorder %s27, 0
      %p258 = por %p256, %p257
      %p259 = scmp.ne.s32.totalorder %s247, %s248
      %p260 = scmp.eq.s32.totalorder %s28, 3
      %p261 = por %p259, %p260
      %p263 = scmp.ne.s32.totalorder %s248, %s262
      %p264 = scmp.eq.s32.totalorder %s28, 0
      %p265 = por %p263, %p264
      %p266 = scmp.le.s32.totalorder 1, %s22
      %p267 = scmp.lt.s32.totalorder %s22, 5
      %p268 = pnand %p266, %p267
      %p269 = pneg %p268
      // Predicated region
      $region9: #{_lambda_.1} parent=5 // pred_check
        _
      $region10: #{_lambda_.1} parent=5 // pred_check_branch
        %271 = sbr.rel (%p268) target = $region12
      $region11: #{_lambda_.1} parent=5 // pred_region
        %s272 = ssub.s32 %s22, 1
        // Predicated region
        $region13: #{_lambda_.1} parent=11 // pred_check
          %p273 = pneg %p43
        $region14: #{_lambda_.1} parent=11 // pred_check_branch
          %275 = sbr.rel (%p273) target = $region16
        $region15: #{_lambda_.1} parent=11 // pred_region
          %s277 = ssub.s32 32, 32
          %278 = vsyncadd [#allocation5], %s277
          %s280 = sshll.u32 [#allocation4], 4
          %s281 = int_to_ptr.vmem [resolvable:$true] %s280
          %283 = dma.hbm_to_vmem [thread:$0]  %s0, 32, %s281, [#allocation5]
        $region16: #{_lambda_.1} parent=11 // pred_fallthru
          _
        // Predicated region
        $region17: #{_lambda_.1} parent=11 // pred_check
          %p284 = pneg %p64
        $region18: #{_lambda_.1} parent=11 // pred_check_branch
          %286 = sbr.rel (%p284) target = $region20
        $region19: #{_lambda_.1} parent=11 // pred_region
          %s288 = ssub.s32 32, 32
          %289 = vsyncadd [#allocation8], %s288
          %s291 = sshll.u32 [#allocation7], 4
          %s292 = int_to_ptr.vmem [resolvable:$true] %s291
          %294 = dma.hbm_to_vmem [thread:$0]  %s1, 32, %s292, [#allocation8]
        $region20: #{_lambda_.1} parent=11 // pred_fallthru
          _
        // Predicated region
        $region21: #{_lambda_.1} parent=11 // pred_check
          %p295 = pneg %p85
        $region22: #{_lambda_.1} parent=11 // pred_check_branch
          %297 = sbr.rel (%p295) target = $region24
        $region23: #{_lambda_.1} parent=11 // pred_region
          %s299 = ssub.s32 12288, 12288
          %300 = vsyncadd [#allocation8], %s299
          %s301 = sshll.u32 [#allocation9], 4
          %s302 = int_to_ptr.vmem [resolvable:$true] %s301
          %307 = dma.hbm_to_vmem [thread:$0]  %s2, 12288, %s302, [#allocation8], 128, 128, 8
        $region24: #{_lambda_.1} parent=11 // pred_fallthru
          _
        // Predicated region
        $region25: #{_lambda_.1} parent=11 // pred_check
          %p308 = pneg %p106
        $region26: #{_lambda_.1} parent=11 // pred_check_branch
          %310 = sbr.rel (%p308) target = $region28
        $region27: #{_lambda_.1} parent=11 // pred_region
          %s312 = ssub.s32 96, 96
          %313 = vsyncadd [#allocation11], %s312
          %s314 = sshll.u32 [#allocation10], 4
          %s315 = int_to_ptr.vmem [resolvable:$true] %s314
          %320 = dma.hbm_to_vmem [thread:$0]  %s3, 96, %s315, [#allocation11], 16, 16, 1
        $region28: #{_lambda_.1} parent=11 // pred_fallthru
          _
        // Predicated region
        $region29: #{_lambda_.1} parent=11 // pred_check
          %p321 = pneg %p153
        $region30: #{_lambda_.1} parent=11 // pred_check_branch
          %323 = sbr.rel (%p321) target = $region32
        $region31: #{_lambda_.1} parent=11 // pred_region
          %s325 = ssub.s32 16, 16
          %326 = vsyncadd [#allocation8], %s325
          %s328 = sshll.u32 [#allocation13], 4
          %s329 = int_to_ptr.vmem [resolvable:$true] %s328
          %331 = dma.hbm_to_vmem [thread:$0]  %s5, 16, %s329, [#allocation8]
        $region32: #{_lambda_.1} parent=11 // pred_fallthru
          _
        // Predicated region
        $region33: #{_lambda_.1} parent=11 // pred_check
          %p332 = pneg %p174
        $region34: #{_lambda_.1} parent=11 // pred_check_branch
          %334 = sbr.rel (%p332) target = $region36
        $region35: #{_lambda_.1} parent=11 // pred_region
          %s336 = ssub.s32 2048, 2048
          %337 = vsyncadd [#allocation11], %s336
          %s338 = sshll.u32 [#allocation14], 4
          %s339 = int_to_ptr.vmem [resolvable:$true] %s338
          %344 = dma.hbm_to_vmem [thread:$0]  %s6, 2048, %s339, [#allocation11], 128, 128, 8
        $region36: #{_lambda_.1} parent=11 // pred_fallthru
          _
        // Predicated region
        $region37: #{_lambda_.1} parent=11 // pred_check
          %p345 = pneg %p195
        $region38: #{_lambda_.1} parent=11 // pred_check_branch
          %347 = sbr.rel (%p345) target = $region40
        $region39: #{_lambda_.1} parent=11 // pred_region
          %s349 = ssub.s32 16, 16
          %350 = vsyncadd [#allocation16], %s349
          %s352 = sshll.u32 [#allocation15], 4
          %s353 = int_to_ptr.vmem [resolvable:$true] %s352
          %355 = dma.hbm_to_vmem [thread:$0]  %s7, 16, %s353, [#allocation16]
        $region40: #{_lambda_.1} parent=11 // pred_fallthru
          _
        // Predicated region
        $region41: #{_lambda_.1} parent=11 // pred_check
          %p356 = pneg %p216
        $region42: #{_lambda_.1} parent=11 // pred_check_branch
          %358 = sbr.rel (%p356) target = $region44
        $region43: #{_lambda_.1} parent=11 // pred_region
          %s360 = ssub.s32 2048, 2048
          %361 = vsyncadd [#allocation16], %s360
          %s362 = sshll.u32 [#allocation17], 4
          %s363 = int_to_ptr.vmem [resolvable:$true] %s362
          %368 = dma.hbm_to_vmem [thread:$0]  %s8, 2048, %s363, [#allocation16], 128, 128, 8
        $region44: #{_lambda_.1} parent=11 // pred_fallthru
          _
        // Predicated region
        $region45: #{_lambda_.1} parent=11 // pred_check
          %p369 = pneg %p237
        $region46: #{_lambda_.1} parent=11 // pred_check_branch
          %371 = sbr.rel (%p369) target = $region48
        $region47: #{_lambda_.1} parent=11 // pred_region
          %s373 = ssub.s32 16, 16
          %374 = vsyncadd [#allocation19], %s373
          %s376 = sshll.u32 [#allocation18], 4
          %s377 = int_to_ptr.vmem [resolvable:$true] %s376
          %379 = dma.hbm_to_vmem [thread:$0]  %s9, 16, %s377, [#allocation19]
        $region48: #{_lambda_.1} parent=11 // pred_fallthru
          _
      $region12: #{_lambda_.1} parent=5 // pred_fallthru
        _
      %p380 = scmp.lt.s32.totalorder %s22, 4
      // Predicated region
      $region49: #{_lambda_.1} parent=5 // pred_check
        %p381 = pneg %p380
      $region50: #{_lambda_.1} parent=5 // pred_check_branch
        %383 = sbr.rel (%p381) target = $region52
      $region51: #{_lambda_.1} parent=5 // pred_region
        // Predicated region
        $region53: #{_lambda_.1} parent=51 // pred_check
          %p384 = pneg %p126
        $region54: #{_lambda_.1} parent=51 // pred_check_branch
          %386 = sbr.rel (%p384) target = $region56
        $region55: #{_lambda_.1} parent=51 // pred_region
          %s387 = sand.u32 %s22, 1
          %s388 = scalar_lea.sflag [#allocation5], %s387
          %s389 = sand.u32 %s116, 1
          %s390 = smul.addr %s389, 4096
          %s391 = scalar_lea.vmem [#allocation12], %s390
          %s392 = smul.u32 512, %s22
          %s394 = ssub.s32 65536, 65536
          %395 = vsyncadd %s388, %s394
          %s396 = smul.addr %s392, 128
          %s397 = scalar_lea.hbm %s4, %s396
          %s398 = sshll.u32 %s391, 4
          %s399 = int_to_ptr.vmem [resolvable:$true] %s398
          %404 = dma.hbm_to_vmem [thread:$0]  %s397, 65536, %s399, %s388, 128, 128, 8
        $region56: #{_lambda_.1} parent=51 // pred_fallthru
          _
      $region52: #{_lambda_.1} parent=5 // pred_fallthru
        _
      %p405 = scmp.le.s32.totalorder 1, %s22
      %p406 = scmp.lt.s32.totalorder %s22, 5
      %p407 = pnand %p405, %p406
      %p408 = pneg %p407
      // Predicated region
      $region57: #{_lambda_.1} parent=5 // pred_check
        _
      $region58: #{_lambda_.1} parent=5 // pred_check_branch
        %410 = sbr.rel (%p407) target = $region60
      $region59: #{_lambda_.1} parent=5 // pred_region
        %s411 = ssub.s32 %s22, 1
        // Predicated region
        $region61: #{_lambda_.1} parent=59 // pred_check
          %p412 = pneg %p43
        $region62: #{_lambda_.1} parent=59 // pred_check_branch
          %414 = sbr.rel (%p412) target = $region64
        $region63: #{_lambda_.1} parent=59 // pred_region
          %415 = dma.done [#allocation5], 32
        $region64: #{_lambda_.1} parent=59 // pred_fallthru
          _
        // Predicated region
        $region65: #{_lambda_.1} parent=59 // pred_check
          %p416 = pneg %p64
        $region66: #{_lambda_.1} parent=59 // pred_check_branch
          %418 = sbr.rel (%p416) target = $region68
        $region67: #{_lambda_.1} parent=59 // pred_region
          %419 = dma.done [#allocation8], 32
        $region68: #{_lambda_.1} parent=59 // pred_fallthru
          _
        // Predicated region
        $region69: #{_lambda_.1} parent=59 // pred_check
          %p420 = pneg %p85
        $region70: #{_lambda_.1} parent=59 // pred_check_branch
          %422 = sbr.rel (%p420) target = $region72
        $region71: #{_lambda_.1} parent=59 // pred_region
          %423 = dma.done [#allocation8], 12288
        $region72: #{_lambda_.1} parent=59 // pred_fallthru
          _
        // Predicated region
        $region73: #{_lambda_.1} parent=59 // pred_check
          %p424 = pneg %p106
        $region74: #{_lambda_.1} parent=59 // pred_check_branch
          %426 = sbr.rel (%p424) target = $region76
        $region75: #{_lambda_.1} parent=59 // pred_region
          %427 = dma.done [#allocation11], 96
        $region76: #{_lambda_.1} parent=59 // pred_fallthru
          _
        %s428 = sand.u32 %s27, 1
        %s429 = scalar_lea.sflag [#allocation5], %s428
        %s430 = sand.u32 %s119, 1
        %s431 = smul.addr %s430, 4096
        %s432 = scalar_lea.vmem [#allocation12], %s431
        // Predicated region
        $region77: #{_lambda_.1} parent=59 // pred_check
          %p433 = pneg %p132
        $region78: #{_lambda_.1} parent=59 // pred_check_branch
          %435 = sbr.rel (%p433) target = $region80
        $region79: #{_lambda_.1} parent=59 // pred_region
          %436 = dma.done %s429, 65536
        $region80: #{_lambda_.1} parent=59 // pred_fallthru
          _
        // Predicated region
        $region81: #{_lambda_.1} parent=59 // pred_check
          %p437 = pneg %p153
        $region82: #{_lambda_.1} parent=59 // pred_check_branch
          %439 = sbr.rel (%p437) target = $region84
        $region83: #{_lambda_.1} parent=59 // pred_region
          %440 = dma.done [#allocation8], 16
        $region84: #{_lambda_.1} parent=59 // pred_fallthru
          _
        // Predicated region
        $region85: #{_lambda_.1} parent=59 // pred_check
          %p441 = pneg %p174
        $region86: #{_lambda_.1} parent=59 // pred_check_branch
          %443 = sbr.rel (%p441) target = $region88
        $region87: #{_lambda_.1} parent=59 // pred_region
          %444 = dma.done [#allocation11], 2048
        $region88: #{_lambda_.1} parent=59 // pred_fallthru
          _
        // Predicated region
        $region89: #{_lambda_.1} parent=59 // pred_check
          %p445 = pneg %p195
        $region90: #{_lambda_.1} parent=59 // pred_check_branch
          %447 = sbr.rel (%p445) target = $region92
        $region91: #{_lambda_.1} parent=59 // pred_region
          %448 = dma.done [#allocation16], 16
        $region92: #{_lambda_.1} parent=59 // pred_fallthru
          _
        // Predicated region
        $region93: #{_lambda_.1} parent=59 // pred_check
          %p449 = pneg %p216
        $region94: #{_lambda_.1} parent=59 // pred_check_branch
          %451 = sbr.rel (%p449) target = $region96
        $region95: #{_lambda_.1} parent=59 // pred_region
          %452 = dma.done [#allocation16], 2048
        $region96: #{_lambda_.1} parent=59 // pred_fallthru
          _
        // Predicated region
        $region97: #{_lambda_.1} parent=59 // pred_check
          %p453 = pneg %p237
        $region98: #{_lambda_.1} parent=59 // pred_check_branch
          %455 = sbr.rel (%p453) target = $region100
        $region99: #{_lambda_.1} parent=59 // pred_region
          %456 = dma.done [#allocation19], 16
        $region100: #{_lambda_.1} parent=59 // pred_fallthru
          _
        %p457 = pneg %p43
        %p458 = pneg %p40
        %p459 = pneg %p64
        %p460 = pneg %p61
        %p461 = pneg %p85
        %p462 = pneg %p82
        %p463 = pneg %p106
        %p464 = pneg %p103
        %s465 = sand.u32 %s27, 1
        %s466 = scalar_lea.sflag [#allocation5], %s465
        %s467 = sand.u32 %s119, 1
        %s468 = smul.addr %s467, 4096
        %s469 = scalar_lea.vmem [#allocation12], %s468
        %p470 = pneg %p132
        %p471 = pneg %p129
        %p472 = pneg %p153
        %p473 = pneg %p150
        %p474 = pneg %p174
        %p475 = pneg %p171
        %p476 = pneg %p195
        %p477 = pneg %p192
        %p478 = pneg %p216
        %p479 = pneg %p213
        %p480 = pneg %p237
        %p481 = pneg %p234
        %p482 = pneg %p258
        %p483 = pneg %p255
        %s484 = smul.u32 512, %s27
        %p485 = scmp.eq.s32.totalorder %s27, 0
        // Predicated region
        $region101: #{_lambda_.1} parent=59 // pred_check
          %p486 = pneg %p485
        $region102: #{_lambda_.1} parent=59 // pred_check_branch
          %488 = sbr.rel (%p486) target = $region104
        $region103: #{_lambda_.1} parent=59 // pred_region
          %v489 = vld [vmem:[#allocation4] sm:$0x3]
          %v490 = vld [vmem:[#allocation9] sm:$0xff]
          %v491 = vld [vmem:[#allocation9 + $0x8] sm:$0xff]
          %v492 = vld [vmem:[#allocation9 + $0x10] sm:$0xff]
          %v493 = vld [vmem:[#allocation9 + $0x18] sm:$0xff]
          %v494 = vld [vmem:[#allocation9 + $0x20] sm:$0xff]
          %v495 = vld [vmem:[#allocation9 + $0x28] sm:$0xff]
          %v496 = vld [vmem:[#allocation9 + $0x30] sm:$0xff]
          %v497 = vld [vmem:[#allocation9 + $0x38] sm:$0xff]
          %v498 = vld [vmem:[#allocation9 + $0x40] sm:$0xff]
          %v499 = vld [vmem:[#allocation9 + $0x48] sm:$0xff]
          %v500 = vld [vmem:[#allocation9 + $0x50] sm:$0xff]
          %v501 = vld [vmem:[#allocation9 + $0x58] sm:$0xff]
          %v502 = vld [vmem:[#allocation9 + $0x60] sm:$0xff]
          %v503 = vld [vmem:[#allocation9 + $0x68] sm:$0xff]
          %v504 = vld [vmem:[#allocation9 + $0x70] sm:$0xff]
          %v505 = vld [vmem:[#allocation9 + $0x78] sm:$0xff]
          %v506 = vld [vmem:[#allocation10] sm:$0x1]
          %v508 = vlaneseq
          %v509 = vshrl.u32 %v508, 7
          %v510 = vsub.s32 0, %v509
          %v511 = vrot.slane %v506, %v510
          %513 = vmatprep.subr.mxu0 0.0
          %514 = vmatpush1.msra.mxu0 %v490
          %515 = vmatprep.subr.mxu0 0.0
          %516 = vmatpush1.msra.mxu0 %v491
          %517 = vmatprep.subr.mxu0 0.0
          %518 = vmatpush1.msra.mxu0 %v492
          %519 = vmatprep.subr.mxu0 0.0
          %520 = vmatpush1.msra.mxu0 %v493
          %521 = vmatprep.subr.mxu0 0.0
          %522 = vmatpush1.msra.mxu0 %v494
          %523 = vmatprep.subr.mxu0 0.0
          %524 = vmatpush1.msra.mxu0 %v495
          %525 = vmatprep.subr.mxu0 0.0
          %526 = vmatpush1.msra.mxu0 %v496
          %527 = vmatprep.subr.mxu0 0.0
          %528 = vmatpush1.msra.mxu0 %v497
          %529 = vmatprep.subr.mxu0 0.0
          %530 = vmatpush1.msra.mxu0 %v498
          %531 = vmatprep.subr.mxu0 0.0
          %532 = vmatpush1.msra.mxu0 %v499
          %533 = vmatprep.subr.mxu0 0.0
          %534 = vmatpush1.msra.mxu0 %v500
          %535 = vmatprep.subr.mxu0 0.0
          %536 = vmatpush1.msra.mxu0 %v501
          %537 = vmatprep.subr.mxu0 0.0
          %538 = vmatpush1.msra.mxu0 %v502
          %539 = vmatprep.subr.mxu0 0.0
          %540 = vmatpush1.msra.mxu0 %v503
          %541 = vmatprep.subr.mxu0 0.0
          %542 = vmatpush1.msra.mxu0 %v504
          %543 = vmatprep.subr.mxu0 0.0
          %544 = vmatpush1.msra.mxu0 %v505
          %545 = vmatprep.subr.mxu0 0.0
          %546 = vmatpush1.msra.mxu0 0.0
          %547 = vmatprep.subr.mxu0 0.0
          %548 = vmatpush1.msra.mxu0 0.0
          %549 = vmatprep.subr.mxu0 0.0
          %550 = vmatpush1.msra.mxu0 0.0
          %551 = vmatprep.subr.mxu0 0.0
          %552 = vmatpush1.msra.mxu0 0.0
          %553 = vmatprep.subr.mxu0 0.0
          %554 = vmatpush1.msra.mxu0 0.0
          %555 = vmatprep.subr.mxu0 0.0
          %556 = vmatpush1.msra.mxu0 0.0
          %557 = vmatprep.subr.mxu0 0.0
          %558 = vmatpush1.msra.mxu0 0.0
          %559 = vmatprep.subr.mxu0 0.0
          %560 = vmatpush1.msra.mxu0 0.0
          %561 = vmatprep.subr.mxu0 0.0
          %562 = vmatpush1.msra.mxu0 0.0
          %563 = vmatprep.subr.mxu0 0.0
          %564 = vmatpush1.msra.mxu0 0.0
          %565 = vmatprep.subr.mxu0 0.0
          %566 = vmatpush1.msra.mxu0 0.0
          %567 = vmatprep.subr.mxu0 0.0
          %568 = vmatpush1.msra.mxu0 0.0
          %569 = vmatprep.subr.mxu0 0.0
          %570 = vmatpush1.msra.mxu0 0.0
          %571 = vmatprep.subr.mxu0 0.0
          %572 = vmatpush1.msra.mxu0 0.0
          %573 = vmatprep.subr.mxu0 0.0
          %574 = vmatpush1.msra.mxu0 0.0
          %575 = vmatprep.subr.mxu0 0.0
          %576 = vmatpush1.msra.mxu0 0.0
          %577 = vmatprep.mubr.f32.mxu0 0.0
          %578 = vmatmul.mubr.f32.gmra.mrb[0].mxu0 %v489
          %v579 = vpop.f32.mrb[0].mxu0
          %v580 = vadd.f32 %v511, %v579
          %v581 = vpop.f32.mrb[0].mxu0
          %582 = vdwg.mxu0
          %v583 = vmax.f32 %v580, 0.0
          %s584 = scalar_lea.vmem [#allocation9], 128
          %v585 = vld [vmem:[%s584] sm:$0xff]
          %v586 = vld [vmem:[%s584 + $0x8] sm:$0xff]
          %v587 = vld [vmem:[%s584 + $0x10] sm:$0xff]
          %v588 = vld [vmem:[%s584 + $0x18] sm:$0xff]
          %v589 = vld [vmem:[%s584 + $0x20] sm:$0xff]
          %v590 = vld [vmem:[%s584 + $0x28] sm:$0xff]
          %v591 = vld [vmem:[%s584 + $0x30] sm:$0xff]
          %v592 = vld [vmem:[%s584 + $0x38] sm:$0xff]
          %v593 = vld [vmem:[%s584 + $0x40] sm:$0xff]
          %v594 = vld [vmem:[%s584 + $0x48] sm:$0xff]
          %v595 = vld [vmem:[%s584 + $0x50] sm:$0xff]
          %v596 = vld [vmem:[%s584 + $0x58] sm:$0xff]
          %v597 = vld [vmem:[%s584 + $0x60] sm:$0xff]
          %v598 = vld [vmem:[%s584 + $0x68] sm:$0xff]
          %v599 = vld [vmem:[%s584 + $0x70] sm:$0xff]
          %v600 = vld [vmem:[%s584 + $0x78] sm:$0xff]
          %s601 = scalar_lea.vmem [#allocation10], 1
          %v602 = vld [vmem:[%s601] sm:$0x1]
          %v604 = vlaneseq
          %v605 = vshrl.u32 %v604, 7
          %v606 = vsub.s32 0, %v605
          %v607 = vrot.slane %v602, %v606
          %609 = vmatprep.subr.mxu0 0.0
          %610 = vmatpush1.msra.mxu0 %v585
          %611 = vmatprep.subr.mxu0 0.0
          %612 = vmatpush1.msra.mxu0 %v586
          %613 = vmatprep.subr.mxu0 0.0
          %614 = vmatpush1.msra.mxu0 %v587
          %615 = vmatprep.subr.mxu0 0.0
          %616 = vmatpush1.msra.mxu0 %v588
          %617 = vmatprep.subr.mxu0 0.0
          %618 = vmatpush1.msra.mxu0 %v589
          %619 = vmatprep.subr.mxu0 0.0
          %620 = vmatpush1.msra.mxu0 %v590
          %621 = vmatprep.subr.mxu0 0.0
          %622 = vmatpush1.msra.mxu0 %v591
          %623 = vmatprep.subr.mxu0 0.0
          %624 = vmatpush1.msra.mxu0 %v592
          %625 = vmatprep.subr.mxu0 0.0
          %626 = vmatpush1.msra.mxu0 %v593
          %627 = vmatprep.subr.mxu0 0.0
          %628 = vmatpush1.msra.mxu0 %v594
          %629 = vmatprep.subr.mxu0 0.0
          %630 = vmatpush1.msra.mxu0 %v595
          %631 = vmatprep.subr.mxu0 0.0
          %632 = vmatpush1.msra.mxu0 %v596
          %633 = vmatprep.subr.mxu0 0.0
          %634 = vmatpush1.msra.mxu0 %v597
          %635 = vmatprep.subr.mxu0 0.0
          %636 = vmatpush1.msra.mxu0 %v598
          %637 = vmatprep.subr.mxu0 0.0
          %638 = vmatpush1.msra.mxu0 %v599
          %639 = vmatprep.subr.mxu0 0.0
          %640 = vmatpush1.msra.mxu0 %v600
          %641 = vmatprep.subr.mxu0 0.0
          %642 = vmatpush1.msra.mxu0 0.0
          %643 = vmatprep.subr.mxu0 0.0
          %644 = vmatpush1.msra.mxu0 0.0
          %645 = vmatprep.subr.mxu0 0.0
          %646 = vmatpush1.msra.mxu0 0.0
          %647 = vmatprep.subr.mxu0 0.0
          %648 = vmatpush1.msra.mxu0 0.0
          %649 = vmatprep.subr.mxu0 0.0
          %650 = vmatpush1.msra.mxu0 0.0
          %651 = vmatprep.subr.mxu0 0.0
          %652 = vmatpush1.msra.mxu0 0.0
          %653 = vmatprep.subr.mxu0 0.0
          %654 = vmatpush1.msra.mxu0 0.0
          %655 = vmatprep.subr.mxu0 0.0
          %656 = vmatpush1.msra.mxu0 0.0
          %657 = vmatprep.subr.mxu0 0.0
          %658 = vmatpush1.msra.mxu0 0.0
          %659 = vmatprep.subr.mxu0 0.0
          %660 = vmatpush1.msra.mxu0 0.0
          %661 = vmatprep.subr.mxu0 0.0
          %662 = vmatpush1.msra.mxu0 0.0
          %663 = vmatprep.subr.mxu0 0.0
          %664 = vmatpush1.msra.mxu0 0.0
          %665 = vmatprep.subr.mxu0 0.0
          %666 = vmatpush1.msra.mxu0 0.0
          %667 = vmatprep.subr.mxu0 0.0
          %668 = vmatpush1.msra.mxu0 0.0
          %669 = vmatprep.subr.mxu0 0.0
          %670 = vmatpush1.msra.mxu0 0.0
          %671 = vmatprep.subr.mxu0 0.0
          %672 = vmatpush1.msra.mxu0 0.0
          %673 = vmatprep.mubr.f32.mxu0 0.0
          %674 = vmatmul.mubr.f32.gmra.mrb[0].mxu0 %v583
          %v675 = vpop.f32.mrb[0].mxu0
          %v676 = vadd.f32 %v607, %v675
          %v677 = vpop.f32.mrb[0].mxu0
          %678 = vdwg.mxu0
          %v679 = vmax.f32 %v676, 0.0
          %s680 = scalar_lea.vmem [#allocation9], 256
          %v681 = vld [vmem:[%s680] sm:$0xff]
          %v682 = vld [vmem:[%s680 + $0x8] sm:$0xff]
          %v683 = vld [vmem:[%s680 + $0x10] sm:$0xff]
          %v684 = vld [vmem:[%s680 + $0x18] sm:$0xff]
          %v685 = vld [vmem:[%s680 + $0x20] sm:$0xff]
          %v686 = vld [vmem:[%s680 + $0x28] sm:$0xff]
          %v687 = vld [vmem:[%s680 + $0x30] sm:$0xff]
          %v688 = vld [vmem:[%s680 + $0x38] sm:$0xff]
          %v689 = vld [vmem:[%s680 + $0x40] sm:$0xff]
          %v690 = vld [vmem:[%s680 + $0x48] sm:$0xff]
          %v691 = vld [vmem:[%s680 + $0x50] sm:$0xff]
          %v692 = vld [vmem:[%s680 + $0x58] sm:$0xff]
          %v693 = vld [vmem:[%s680 + $0x60] sm:$0xff]
          %v694 = vld [vmem:[%s680 + $0x68] sm:$0xff]
          %v695 = vld [vmem:[%s680 + $0x70] sm:$0xff]
          %v696 = vld [vmem:[%s680 + $0x78] sm:$0xff]
          %s697 = scalar_lea.vmem [#allocation10], 2
          %v698 = vld [vmem:[%s697] sm:$0x1]
          %v700 = vlaneseq
          %v701 = vshrl.u32 %v700, 7
          %v702 = vsub.s32 0, %v701
          %v703 = vrot.slane %v698, %v702
          %705 = vmatprep.subr.mxu0 0.0
          %706 = vmatpush1.msra.mxu0 %v681
          %707 = vmatprep.subr.mxu0 0.0
          %708 = vmatpush1.msra.mxu0 %v682
          %709 = vmatprep.subr.mxu0 0.0
          %710 = vmatpush1.msra.mxu0 %v683
          %711 = vmatprep.subr.mxu0 0.0
          %712 = vmatpush1.msra.mxu0 %v684
          %713 = vmatprep.subr.mxu0 0.0
          %714 = vmatpush1.msra.mxu0 %v685
          %715 = vmatprep.subr.mxu0 0.0
          %716 = vmatpush1.msra.mxu0 %v686
          %717 = vmatprep.subr.mxu0 0.0
          %718 = vmatpush1.msra.mxu0 %v687
          %719 = vmatprep.subr.mxu0 0.0
          %720 = vmatpush1.msra.mxu0 %v688
          %721 = vmatprep.subr.mxu0 0.0
          %722 = vmatpush1.msra.mxu0 %v689
          %723 = vmatprep.subr.mxu0 0.0
          %724 = vmatpush1.msra.mxu0 %v690
          %725 = vmatprep.subr.mxu0 0.0
          %726 = vmatpush1.msra.mxu0 %v691
          %727 = vmatprep.subr.mxu0 0.0
          %728 = vmatpush1.msra.mxu0 %v692
          %729 = vmatprep.subr.mxu0 0.0
          %730 = vmatpush1.msra.mxu0 %v693
          %731 = vmatprep.subr.mxu0 0.0
          %732 = vmatpush1.msra.mxu0 %v694
          %733 = vmatprep.subr.mxu0 0.0
          %734 = vmatpush1.msra.mxu0 %v695
          %735 = vmatprep.subr.mxu0 0.0
          %736 = vmatpush1.msra.mxu0 %v696
          %737 = vmatprep.subr.mxu0 0.0
          %738 = vmatpush1.msra.mxu0 0.0
          %739 = vmatprep.subr.mxu0 0.0
          %740 = vmatpush1.msra.mxu0 0.0
          %741 = vmatprep.subr.mxu0 0.0
          %742 = vmatpush1.msra.mxu0 0.0
          %743 = vmatprep.subr.mxu0 0.0
          %744 = vmatpush1.msra.mxu0 0.0
          %745 = vmatprep.subr.mxu0 0.0
          %746 = vmatpush1.msra.mxu0 0.0
          %747 = vmatprep.subr.mxu0 0.0
          %748 = vmatpush1.msra.mxu0 0.0
          %749 = vmatprep.subr.mxu0 0.0
          %750 = vmatpush1.msra.mxu0 0.0
          %751 = vmatprep.subr.mxu0 0.0
          %752 = vmatpush1.msra.mxu0 0.0
          %753 = vmatprep.subr.mxu0 0.0
          %754 = vmatpush1.msra.mxu0 0.0
          %755 = vmatprep.subr.mxu0 0.0
          %756 = vmatpush1.msra.mxu0 0.0
          %757 = vmatprep.subr.mxu0 0.0
          %758 = vmatpush1.msra.mxu0 0.0
          %759 = vmatprep.subr.mxu0 0.0
          %760 = vmatpush1.msra.mxu0 0.0
          %761 = vmatprep.subr.mxu0 0.0
          %762 = vmatpush1.msra.mxu0 0.0
          %763 = vmatprep.subr.mxu0 0.0
          %764 = vmatpush1.msra.mxu0 0.0
          %765 = vmatprep.subr.mxu0 0.0
          %766 = vmatpush1.msra.mxu0 0.0
          %767 = vmatprep.subr.mxu0 0.0
          %768 = vmatpush1.msra.mxu0 0.0
          %769 = vmatprep.mubr.f32.mxu0 0.0
          %770 = vmatmul.mubr.f32.gmra.mrb[0].mxu0 %v679
          %v771 = vpop.f32.mrb[0].mxu0
          %v772 = vadd.f32 %v703, %v771
          %v773 = vpop.f32.mrb[0].mxu0
          %774 = vdwg.mxu0
          %v775 = vld [vmem:[#allocation7] sm:$0x3]
          %s776 = scalar_lea.vmem [#allocation9], 384
          %v777 = vld [vmem:[%s776] sm:$0xff]
          %v778 = vld [vmem:[%s776 + $0x8] sm:$0xff]
          %v779 = vld [vmem:[%s776 + $0x10] sm:$0xff]
          %v780 = vld [vmem:[%s776 + $0x18] sm:$0xff]
          %v781 = vld [vmem:[%s776 + $0x20] sm:$0xff]
          %v782 = vld [vmem:[%s776 + $0x28] sm:$0xff]
          %v783 = vld [vmem:[%s776 + $0x30] sm:$0xff]
          %v784 = vld [vmem:[%s776 + $0x38] sm:$0xff]
          %v785 = vld [vmem:[%s776 + $0x40] sm:$0xff]
          %v786 = vld [vmem:[%s776 + $0x48] sm:$0xff]
          %v787 = vld [vmem:[%s776 + $0x50] sm:$0xff]
          %v788 = vld [vmem:[%s776 + $0x58] sm:$0xff]
          %v789 = vld [vmem:[%s776 + $0x60] sm:$0xff]
          %v790 = vld [vmem:[%s776 + $0x68] sm:$0xff]
          %v791 = vld [vmem:[%s776 + $0x70] sm:$0xff]
          %v792 = vld [vmem:[%s776 + $0x78] sm:$0xff]
          %s793 = scalar_lea.vmem [#allocation10], 3
          %v794 = vld [vmem:[%s793] sm:$0x1]
          %v796 = vlaneseq
          %v797 = vshrl.u32 %v796, 7
          %v798 = vsub.s32 0, %v797
          %v799 = vrot.slane %v794, %v798
          %801 = vmatprep.subr.mxu0 0.0
          %802 = vmatpush1.msra.mxu0 %v777
          %803 = vmatprep.subr.mxu0 0.0
          %804 = vmatpush1.msra.mxu0 %v778
          %805 = vmatprep.subr.mxu0 0.0
          %806 = vmatpush1.msra.mxu0 %v779
          %807 = vmatprep.subr.mxu0 0.0
          %808 = vmatpush1.msra.mxu0 %v780
          %809 = vmatprep.subr.mxu0 0.0
          %810 = vmatpush1.msra.mxu0 %v781
          %811 = vmatprep.subr.mxu0 0.0
          %812 = vmatpush1.msra.mxu0 %v782
          %813 = vmatprep.subr.mxu0 0.0
          %814 = vmatpush1.msra.mxu0 %v783
          %815 = vmatprep.subr.mxu0 0.0
          %816 = vmatpush1.msra.mxu0 %v784
          %817 = vmatprep.subr.mxu0 0.0
          %818 = vmatpush1.msra.mxu0 %v785
          %819 = vmatprep.subr.mxu0 0.0
          %820 = vmatpush1.msra.mxu0 %v786
          %821 = vmatprep.subr.mxu0 0.0
          %822 = vmatpush1.msra.mxu0 %v787
          %823 = vmatprep.subr.mxu0 0.0
          %824 = vmatpush1.msra.mxu0 %v788
          %825 = vmatprep.subr.mxu0 0.0
          %826 = vmatpush1.msra.mxu0 %v789
          %827 = vmatprep.subr.mxu0 0.0
          %828 = vmatpush1.msra.mxu0 %v790
          %829 = vmatprep.subr.mxu0 0.0
          %830 = vmatpush1.msra.mxu0 %v791
          %831 = vmatprep.subr.mxu0 0.0
          %832 = vmatpush1.msra.mxu0 %v792
          %833 = vmatprep.subr.mxu0 0.0
          %834 = vmatpush1.msra.mxu0 0.0
          %835 = vmatprep.subr.mxu0 0.0
          %836 = vmatpush1.msra.mxu0 0.0
          %837 = vmatprep.subr.mxu0 0.0
          %838 = vmatpush1.msra.mxu0 0.0
          %839 = vmatprep.subr.mxu0 0.0
          %840 = vmatpush1.msra.mxu0 0.0
          %841 = vmatprep.subr.mxu0 0.0
          %842 = vmatpush1.msra.mxu0 0.0
          %843 = vmatprep.subr.mxu0 0.0
          %844 = vmatpush1.msra.mxu0 0.0
          %845 = vmatprep.subr.mxu0 0.0
          %846 = vmatpush1.msra.mxu0 0.0
          %847 = vmatprep.subr.mxu0 0.0
          %848 = vmatpush1.msra.mxu0 0.0
          %849 = vmatprep.subr.mxu0 0.0
          %850 = vmatpush1.msra.mxu0 0.0
          %851 = vmatprep.subr.mxu0 0.0
          %852 = vmatpush1.msra.mxu0 0.0
          %853 = vmatprep.subr.mxu0 0.0
          %854 = vmatpush1.msra.mxu0 0.0
          %855 = vmatprep.subr.mxu0 0.0
          %856 = vmatpush1.msra.mxu0 0.0
          %857 = vmatprep.subr.mxu0 0.0
          %858 = vmatpush1.msra.mxu0 0.0
          %859 = vmatprep.subr.mxu0 0.0
          %860 = vmatpush1.msra.mxu0 0.0
          %861 = vmatprep.subr.mxu0 0.0
          %862 = vmatpush1.msra.mxu0 0.0
          %863 = vmatprep.subr.mxu0 0.0
          %864 = vmatpush1.msra.mxu0 0.0
          %865 = vmatprep.mubr.f32.mxu0 0.0
          %866 = vmatmul.mubr.f32.gmra.mrb[0].mxu0 %v775
          %v867 = vpop.f32.mrb[0].mxu0
          %v868 = vadd.f32 %v799, %v867
          %v869 = vpop.f32.mrb[0].mxu0
          %870 = vdwg.mxu0
          %v871 = vmax.f32 %v868, 0.0
          %s872 = scalar_lea.vmem [#allocation9], 512
          %v873 = vld [vmem:[%s872] sm:$0xff]
          %v874 = vld [vmem:[%s872 + $0x8] sm:$0xff]
          %v875 = vld [vmem:[%s872 + $0x10] sm:$0xff]
          %v876 = vld [vmem:[%s872 + $0x18] sm:$0xff]
          %v877 = vld [vmem:[%s872 + $0x20] sm:$0xff]
          %v878 = vld [vmem:[%s872 + $0x28] sm:$0xff]
          %v879 = vld [vmem:[%s872 + $0x30] sm:$0xff]
          %v880 = vld [vmem:[%s872 + $0x38] sm:$0xff]
          %v881 = vld [vmem:[%s872 + $0x40] sm:$0xff]
          %v882 = vld [vmem:[%s872 + $0x48] sm:$0xff]
          %v883 = vld [vmem:[%s872 + $0x50] sm:$0xff]
          %v884 = vld [vmem:[%s872 + $0x58] sm:$0xff]
          %v885 = vld [vmem:[%s872 + $0x60] sm:$0xff]
          %v886 = vld [vmem:[%s872 + $0x68] sm:$0xff]
          %v887 = vld [vmem:[%s872 + $0x70] sm:$0xff]
          %v888 = vld [vmem:[%s872 + $0x78] sm:$0xff]
          %s889 = scalar_lea.vmem [#allocation10], 4
          %v890 = vld [vmem:[%s889] sm:$0x1]
          %v892 = vlaneseq
          %v893 = vshrl.u32 %v892, 7
          %v894 = vsub.s32 0, %v893
          %v895 = vrot.slane %v890, %v894
          %897 = vmatprep.subr.mxu0 0.0
          %898 = vmatpush1.msra.mxu0 %v873
          %899 = vmatprep.subr.mxu0 0.0
          %900 = vmatpush1.msra.mxu0 %v874
          %901 = vmatprep.subr.mxu0 0.0
          %902 = vmatpush1.msra.mxu0 %v875
          %903 = vmatprep.subr.mxu0 0.0
          %904 = vmatpush1.msra.mxu0 %v876
          %905 = vmatprep.subr.mxu0 0.0
          %906 = vmatpush1.msra.mxu0 %v877
          %907 = vmatprep.subr.mxu0 0.0
          %908 = vmatpush1.msra.mxu0 %v878
          %909 = vmatprep.subr.mxu0 0.0
          %910 = vmatpush1.msra.mxu0 %v879
          %911 = vmatprep.subr.mxu0 0.0
          %912 = vmatpush1.msra.mxu0 %v880
          %913 = vmatprep.subr.mxu0 0.0
          %914 = vmatpush1.msra.mxu0 %v881
          %915 = vmatprep.subr.mxu0 0.0
          %916 = vmatpush1.msra.mxu0 %v882
          %917 = vmatprep.subr.mxu0 0.0
          %918 = vmatpush1.msra.mxu0 %v883
          %919 = vmatprep.subr.mxu0 0.0
          %920 = vmatpush1.msra.mxu0 %v884
          %921 = vmatprep.subr.mxu0 0.0
          %922 = vmatpush1.msra.mxu0 %v885
          %923 = vmatprep.subr.mxu0 0.0
          %924 = vmatpush1.msra.mxu0 %v886
          %925 = vmatprep.subr.mxu0 0.0
          %926 = vmatpush1.msra.mxu0 %v887
          %927 = vmatprep.subr.mxu0 0.0
          %928 = vmatpush1.msra.mxu0 %v888
          %929 = vmatprep.subr.mxu0 0.0
          %930 = vmatpush1.msra.mxu0 0.0
          %931 = vmatprep.subr.mxu0 0.0
          %932 = vmatpush1.msra.mxu0 0.0
          %933 = vmatprep.subr.mxu0 0.0
          %934 = vmatpush1.msra.mxu0 0.0
          %935 = vmatprep.subr.mxu0 0.0
          %936 = vmatpush1.msra.mxu0 0.0
          %937 = vmatprep.subr.mxu0 0.0
          %938 = vmatpush1.msra.mxu0 0.0
          %939 = vmatprep.subr.mxu0 0.0
          %940 = vmatpush1.msra.mxu0 0.0
          %941 = vmatprep.subr.mxu0 0.0
          %942 = vmatpush1.msra.mxu0 0.0
          %943 = vmatprep.subr.mxu0 0.0
          %944 = vmatpush1.msra.mxu0 0.0
          %945 = vmatprep.subr.mxu0 0.0
          %946 = vmatpush1.msra.mxu0 0.0
          %947 = vmatprep.subr.mxu0 0.0
          %948 = vmatpush1.msra.mxu0 0.0
          %949 = vmatprep.subr.mxu0 0.0
          %950 = vmatpush1.msra.mxu0 0.0
          %951 = vmatprep.subr.mxu0 0.0
          %952 = vmatpush1.msra.mxu0 0.0
          %953 = vmatprep.subr.mxu0 0.0
          %954 = vmatpush1.msra.mxu0 0.0
          %955 = vmatprep.subr.mxu0 0.0
          %956 = vmatpush1.msra.mxu0 0.0
          %957 = vmatprep.subr.mxu0 0.0
          %958 = vmatpush1.msra.mxu0 0.0
          %959 = vmatprep.subr.mxu0 0.0
          %960 = vmatpush1.msra.mxu0 0.0
          %961 = vmatprep.mubr.f32.mxu0 0.0
          %962 = vmatmul.mubr.f32.gmra.mrb[0].mxu0 %v871
          %v963 = vpop.f32.mrb[0].mxu0
          %v964 = vadd.f32 %v895, %v963
          %v965 = vpop.f32.mrb[0].mxu0
          %966 = vdwg.mxu0
          %v967 = vmax.f32 %v964, 0.0
          %s968 = scalar_lea.vmem [#allocation9], 640
          %v969 = vld [vmem:[%s968] sm:$0xff]
          %v970 = vld [vmem:[%s968 + $0x8] sm:$0xff]
          %v971 = vld [vmem:[%s968 + $0x10] sm:$0xff]
          %v972 = vld [vmem:[%s968 + $0x18] sm:$0xff]
          %v973 = vld [vmem:[%s968 + $0x20] sm:$0xff]
          %v974 = vld [vmem:[%s968 + $0x28] sm:$0xff]
          %v975 = vld [vmem:[%s968 + $0x30] sm:$0xff]
          %v976 = vld [vmem:[%s968 + $0x38] sm:$0xff]
          %v977 = vld [vmem:[%s968 + $0x40] sm:$0xff]
          %v978 = vld [vmem:[%s968 + $0x48] sm:$0xff]
          %v979 = vld [vmem:[%s968 + $0x50] sm:$0xff]
          %v980 = vld [vmem:[%s968 + $0x58] sm:$0xff]
          %v981 = vld [vmem:[%s968 + $0x60] sm:$0xff]
          %v982 = vld [vmem:[%s968 + $0x68] sm:$0xff]
          %v983 = vld [vmem:[%s968 + $0x70] sm:$0xff]
          %v984 = vld [vmem:[%s968 + $0x78] sm:$0xff]
          %s985 = scalar_lea.vmem [#allocation10], 5
          %v986 = vld [vmem:[%s985] sm:$0x1]
          %v988 = vlaneseq
          %v989 = vshrl.u32 %v988, 7
          %v990 = vsub.s32 0, %v989
          %v991 = vrot.slane %v986, %v990
          %993 = vmatprep.subr.mxu0 0.0
          %994 = vmatpush1.msra.mxu0 %v969
          %995 = vmatprep.subr.mxu0 0.0
          %996 = vmatpush1.msra.mxu0 %v970
          %997 = vmatprep.subr.mxu0 0.0
          %998 = vmatpush1.msra.mxu0 %v971
          %999 = vmatprep.subr.mxu0 0.0
          %1000 = vmatpush1.msra.mxu0 %v972
          %1001 = vmatprep.subr.mxu0 0.0
          %1002 = vmatpush1.msra.mxu0 %v973
          %1003 = vmatprep.subr.mxu0 0.0
          %1004 = vmatpush1.msra.mxu0 %v974
          %1005 = vmatprep.subr.mxu0 0.0
          %1006 = vmatpush1.msra.mxu0 %v975
          %1007 = vmatprep.subr.mxu0 0.0
          %1008 = vmatpush1.msra.mxu0 %v976
          %1009 = vmatprep.subr.mxu0 0.0
          %1010 = vmatpush1.msra.mxu0 %v977
          %1011 = vmatprep.subr.mxu0 0.0
          %1012 = vmatpush1.msra.mxu0 %v978
          %1013 = vmatprep.subr.mxu0 0.0
          %1014 = vmatpush1.msra.mxu0 %v979
          %1015 = vmatprep.subr.mxu0 0.0
          %1016 = vmatpush1.msra.mxu0 %v980
          %1017 = vmatprep.subr.mxu0 0.0
          %1018 = vmatpush1.msra.mxu0 %v981
          %1019 = vmatprep.subr.mxu0 0.0
          %1020 = vmatpush1.msra.mxu0 %v982
          %1021 = vmatprep.subr.mxu0 0.0
          %1022 = vmatpush1.msra.mxu0 %v983
          %1023 = vmatprep.subr.mxu0 0.0
          %1024 = vmatpush1.msra.mxu0 %v984
          %1025 = vmatprep.subr.mxu0 0.0
          %1026 = vmatpush1.msra.mxu0 0.0
          %1027 = vmatprep.subr.mxu0 0.0
          %1028 = vmatpush1.msra.mxu0 0.0
          %1029 = vmatprep.subr.mxu0 0.0
          %1030 = vmatpush1.msra.mxu0 0.0
          %1031 = vmatprep.subr.mxu0 0.0
          %1032 = vmatpush1.msra.mxu0 0.0
          %1033 = vmatprep.subr.mxu0 0.0
          %1034 = vmatpush1.msra.mxu0 0.0
          %1035 = vmatprep.subr.mxu0 0.0
          %1036 = vmatpush1.msra.mxu0 0.0
          %1037 = vmatprep.subr.mxu0 0.0
          %1038 = vmatpush1.msra.mxu0 0.0
          %1039 = vmatprep.subr.mxu0 0.0
          %1040 = vmatpush1.msra.mxu0 0.0
          %1041 = vmatprep.subr.mxu0 0.0
          %1042 = vmatpush1.msra.mxu0 0.0
          %1043 = vmatprep.subr.mxu0 0.0
          %1044 = vmatpush1.msra.mxu0 0.0
          %1045 = vmatprep.subr.mxu0 0.0
          %1046 = vmatpush1.msra.mxu0 0.0
          %1047 = vmatprep.subr.mxu0 0.0
          %1048 = vmatpush1.msra.mxu0 0.0
          %1049 = vmatprep.subr.mxu0 0.0
          %1050 = vmatpush1.msra.mxu0 0.0
          %1051 = vmatprep.subr.mxu0 0.0
          %1052 = vmatpush1.msra.mxu0 0.0
          %1053 = vmatprep.subr.mxu0 0.0
          %1054 = vmatpush1.msra.mxu0 0.0
          %1055 = vmatprep.subr.mxu0 0.0
          %1056 = vmatpush1.msra.mxu0 0.0
          %1057 = vmatprep.mubr.f32.mxu0 0.0
          %1058 = vmatmul.mubr.f32.gmra.mrb[0].mxu0 %v967
          %v1059 = vpop.f32.mrb[0].mxu0
          %v1060 = vadd.f32 %v991, %v1059
          %v1061 = vpop.f32.mrb[0].mxu0
          %1062 = vdwg.mxu0
          %v1063 = vlaneseq
          %v1064 = vshrl.u32 %v1063, 7
          %v1065 = vadd.s32 %v1064, 8
          %v1066 = vadd.s32 %v1064, 16
          %v1067 = vadd.s32 %v1064, 24
          %v1068 = vcvt.s32.f32 %v1064
          %v1069 = vcvt.s32.f32 %v1065
          %v1070 = vcvt.s32.f32 %v1066
          %v1071 = vcvt.s32.f32 %v1067
          %v1072 = vlaneseq
          %v1073 = vand.u32 %v1072, 127
          %v1074 = vadd.s32 %v1073, 128
          %v1075 = vadd.s32 %v1073, 256
          %v1076 = vadd.s32 %v1073, 384
          %v1077 = vadd.s32 %v1073, 512
          %v1078 = vadd.s32 %v1073, 640
          %v1079 = vadd.s32 %v1073, 768
          %v1080 = vadd.s32 %v1073, 896
          %v1081 = vadd.s32 %v1073, 1024
          %v1082 = vadd.s32 %v1073, 1152
          %v1083 = vadd.s32 %v1073, 1280
          %v1084 = vadd.s32 %v1073, 1408
          %v1085 = vadd.s32 %v1073, 1536
          %v1086 = vadd.s32 %v1073, 1664
          %v1087 = vadd.s32 %v1073, 1792
          %v1088 = vadd.s32 %v1073, 1920
          %v1089 = vadd.s32 %v1073, 2048
          %v1090 = vadd.s32 %v1073, 2176
          %v1091 = vadd.s32 %v1073, 2304
          %v1092 = vadd.s32 %v1073, 2432
          %v1093 = vadd.s32 %v1073, 2560
          %v1094 = vadd.s32 %v1073, 2688
          %v1095 = vadd.s32 %v1073, 2816
          %v1096 = vadd.s32 %v1073, 2944
          %v1097 = vadd.s32 %v1073, 3072
          %v1098 = vadd.s32 %v1073, 3200
          %v1099 = vadd.s32 %v1073, 3328
          %v1100 = vadd.s32 %v1073, 3456
          %v1101 = vadd.s32 %v1073, 3584
          %v1102 = vadd.s32 %v1073, 3712
          %v1103 = vadd.s32 %v1073, 3840
          %v1104 = vadd.s32 %v1073, 3968
          %v1105 = vcvt.s32.f32 %v1073
          %v1106 = vcvt.s32.f32 %v1074
          %v1107 = vcvt.s32.f32 %v1075
          %v1108 = vcvt.s32.f32 %v1076
          %v1109 = vcvt.s32.f32 %v1077
          %v1110 = vcvt.s32.f32 %v1078
          %v1111 = vcvt.s32.f32 %v1079
          %v1112 = vcvt.s32.f32 %v1080
          %v1113 = vcvt.s32.f32 %v1081
          %v1114 = vcvt.s32.f32 %v1082
          %v1115 = vcvt.s32.f32 %v1083
          %v1116 = vcvt.s32.f32 %v1084
          %v1117 = vcvt.s32.f32 %v1085
          %v1118 = vcvt.s32.f32 %v1086
          %v1119 = vcvt.s32.f32 %v1087
          %v1120 = vcvt.s32.f32 %v1088
          %v1121 = vcvt.s32.f32 %v1089
          %v1122 = vcvt.s32.f32 %v1090
          %v1123 = vcvt.s32.f32 %v1091
          %v1124 = vcvt.s32.f32 %v1092
          %v1125 = vcvt.s32.f32 %v1093
          %v1126 = vcvt.s32.f32 %v1094
          %v1127 = vcvt.s32.f32 %v1095
          %v1128 = vcvt.s32.f32 %v1096
          %v1129 = vcvt.s32.f32 %v1097
          %v1130 = vcvt.s32.f32 %v1098
          %v1131 = vcvt.s32.f32 %v1099
          %v1132 = vcvt.s32.f32 %v1100
          %v1133 = vcvt.s32.f32 %v1101
          %v1134 = vcvt.s32.f32 %v1102
          %v1135 = vcvt.s32.f32 %v1103
          %v1136 = vcvt.s32.f32 %v1104
          %v1137 = vmul.f32 %v1068, 128.0
          %v1138 = vmul.f32 %v1069, 128.0
          %v1139 = vmul.f32 %v1070, 128.0
          %v1140 = vmul.f32 %v1071, 128.0
          %vm1141 = vcmp.ge.f32.partialorder %v1105, %v1137
          %vm1142 = vcmp.ge.f32.partialorder %v1106, %v1137
          %vm1143 = vcmp.ge.f32.partialorder %v1107, %v1137
          %vm1144 = vcmp.ge.f32.partialorder %v1108, %v1137
          %vm1145 = vcmp.ge.f32.partialorder %v1109, %v1137
          %vm1146 = vcmp.ge.f32.partialorder %v1110, %v1137
          %vm1147 = vcmp.ge.f32.partialorder %v1111, %v1137
          %vm1148 = vcmp.ge.f32.partialorder %v1112, %v1137
          %vm1149 = vcmp.ge.f32.partialorder %v1113, %v1137
          %vm1150 = vcmp.ge.f32.partialorder %v1114, %v1137
          %vm1151 = vcmp.ge.f32.partialorder %v1115, %v1137
          %vm1152 = vcmp.ge.f32.partialorder %v1116, %v1137
          %vm1153 = vcmp.ge.f32.partialorder %v1117, %v1137
          %vm1154 = vcmp.ge.f32.partialorder %v1118, %v1137
          %vm1155 = vcmp.ge.f32.partialorder %v1119, %v1137
          %vm1156 = vcmp.ge.f32.partialorder %v1120, %v1137
          %vm1157 = vcmp.ge.f32.partialorder %v1121, %v1137
          %vm1158 = vcmp.ge.f32.partialorder %v1122, %v1137
          %vm1159 = vcmp.ge.f32.partialorder %v1123, %v1137
          %vm1160 = vcmp.ge.f32.partialorder %v1124, %v1137
          %vm1161 = vcmp.ge.f32.partialorder %v1125, %v1137
          %vm1162 = vcmp.ge.f32.partialorder %v1126, %v1137
          %vm1163 = vcmp.ge.f32.partialorder %v1127, %v1137
          %vm1164 = vcmp.ge.f32.partialorder %v1128, %v1137
          %vm1165 = vcmp.ge.f32.partialorder %v1129, %v1137
          %vm1166 = vcmp.ge.f32.partialorder %v1130, %v1137
          %vm1167 = vcmp.ge.f32.partialorder %v1131, %v1137
          %vm1168 = vcmp.ge.f32.partialorder %v1132, %v1137
          %vm1169 = vcmp.ge.f32.partialorder %v1133, %v1137
          %vm1170 = vcmp.ge.f32.partialorder %v1134, %v1137
          %vm1171 = vcmp.ge.f32.partialorder %v1135, %v1137
          %vm1172 = vcmp.ge.f32.partialorder %v1136, %v1137
          %vm1173 = vcmp.ge.f32.partialorder %v1105, %v1138
          %vm1174 = vcmp.ge.f32.partialorder %v1106, %v1138
          %vm1175 = vcmp.ge.f32.partialorder %v1107, %v1138
          %vm1176 = vcmp.ge.f32.partialorder %v1108, %v1138
          %vm1177 = vcmp.ge.f32.partialorder %v1109, %v1138
          %vm1178 = vcmp.ge.f32.partialorder %v1110, %v1138
          %vm1179 = vcmp.ge.f32.partialorder %v1111, %v1138
          %vm1180 = vcmp.ge.f32.partialorder %v1112, %v1138
          %vm1181 = vcmp.ge.f32.partialorder %v1113, %v1138
          %vm1182 = vcmp.ge.f32.partialorder %v1114, %v1138
          %vm1183 = vcmp.ge.f32.partialorder %v1115, %v1138
          %vm1184 = vcmp.ge.f32.partialorder %v1116, %v1138
          %vm1185 = vcmp.ge.f32.partialorder %v1117, %v1138
          %vm1186 = vcmp.ge.f32.partialorder %v1118, %v1138
          %vm1187 = vcmp.ge.f32.partialorder %v1119, %v1138
          %vm1188 = vcmp.ge.f32.partialorder %v1120, %v1138
          %vm1189 = vcmp.ge.f32.partialorder %v1121, %v1138
          %vm1190 = vcmp.ge.f32.partialorder %v1122, %v1138
          %vm1191 = vcmp.ge.f32.partialorder %v1123, %v1138
          %vm1192 = vcmp.ge.f32.partialorder %v1124, %v1138
          %vm1193 = vcmp.ge.f32.partialorder %v1125, %v1138
          %vm1194 = vcmp.ge.f32.partialorder %v1126, %v1138
          %vm1195 = vcmp.ge.f32.partialorder %v1127, %v1138
          %vm1196 = vcmp.ge.f32.partialorder %v1128, %v1138
          %vm1197 = vcmp.ge.f32.partialorder %v1129, %v1138
          %vm1198 = vcmp.ge.f32.partialorder %v1130, %v1138
          %vm1199 = vcmp.ge.f32.partialorder %v1131, %v1138
          %vm1200 = vcmp.ge.f32.partialorder %v1132, %v1138
          %vm1201 = vcmp.ge.f32.partialorder %v1133, %v1138
          %vm1202 = vcmp.ge.f32.partialorder %v1134, %v1138
          %vm1203 = vcmp.ge.f32.partialorder %v1135, %v1138
          %vm1204 = vcmp.ge.f32.partialorder %v1136, %v1138
          %vm1205 = vcmp.ge.f32.partialorder %v1105, %v1139
          %vm1206 = vcmp.ge.f32.partialorder %v1106, %v1139
          %vm1207 = vcmp.ge.f32.partialorder %v1107, %v1139
          %vm1208 = vcmp.ge.f32.partialorder %v1108, %v1139
          %vm1209 = vcmp.ge.f32.partialorder %v1109, %v1139
          %vm1210 = vcmp.ge.f32.partialorder %v1110, %v1139
          %vm1211 = vcmp.ge.f32.partialorder %v1111, %v1139
          %vm1212 = vcmp.ge.f32.partialorder %v1112, %v1139
          %vm1213 = vcmp.ge.f32.partialorder %v1113, %v1139
          %vm1214 = vcmp.ge.f32.partialorder %v1114, %v1139
          %vm1215 = vcmp.ge.f32.partialorder %v1115, %v1139
          %vm1216 = vcmp.ge.f32.partialorder %v1116, %v1139
          %vm1217 = vcmp.ge.f32.partialorder %v1117, %v1139
          %vm1218 = vcmp.ge.f32.partialorder %v1118, %v1139
          %vm1219 = vcmp.ge.f32.partialorder %v1119, %v1139
          %vm1220 = vcmp.ge.f32.partialorder %v1120, %v1139
          %vm1221 = vcmp.ge.f32.partialorder %v1121, %v1139
          %vm1222 = vcmp.ge.f32.partialorder %v1122, %v1139
          %vm1223 = vcmp.ge.f32.partialorder %v1123, %v1139
          %vm1224 = vcmp.ge.f32.partialorder %v1124, %v1139
          %vm1225 = vcmp.ge.f32.partialorder %v1125, %v1139
          %vm1226 = vcmp.ge.f32.partialorder %v1126, %v1139
          %vm1227 = vcmp.ge.f32.partialorder %v1127, %v1139
          %vm1228 = vcmp.ge.f32.partialorder %v1128, %v1139
          %vm1229 = vcmp.ge.f32.partialorder %v1129, %v1139
          %vm1230 = vcmp.ge.f32.partialorder %v1130, %v1139
          %vm1231 = vcmp.ge.f32.partialorder %v1131, %v1139
          %vm1232 = vcmp.ge.f32.partialorder %v1132, %v1139
          %vm1233 = vcmp.ge.f32.partialorder %v1133, %v1139
          %vm1234 = vcmp.ge.f32.partialorder %v1134, %v1139
          %vm1235 = vcmp.ge.f32.partialorder %v1135, %v1139
          %vm1236 = vcmp.ge.f32.partialorder %v1136, %v1139
          %vm1237 = vcmp.ge.f32.partialorder %v1105, %v1140
          %vm1238 = vcmp.ge.f32.partialorder %v1106, %v1140
          %vm1239 = vcmp.ge.f32.partialorder %v1107, %v1140
          %vm1240 = vcmp.ge.f32.partialorder %v1108, %v1140
          %vm1241 = vcmp.ge.f32.partialorder %v1109, %v1140
          %vm1242 = vcmp.ge.f32.partialorder %v1110, %v1140
          %vm1243 = vcmp.ge.f32.partialorder %v1111, %v1140
          %vm1244 = vcmp.ge.f32.partialorder %v1112, %v1140
          %vm1245 = vcmp.ge.f32.partialorder %v1113, %v1140
          %vm1246 = vcmp.ge.f32.partialorder %v1114, %v1140
          %vm1247 = vcmp.ge.f32.partialorder %v1115, %v1140
          %vm1248 = vcmp.ge.f32.partialorder %v1116, %v1140
          %vm1249 = vcmp.ge.f32.partialorder %v1117, %v1140
          %vm1250 = vcmp.ge.f32.partialorder %v1118, %v1140
          %vm1251 = vcmp.ge.f32.partialorder %v1119, %v1140
          %vm1252 = vcmp.ge.f32.partialorder %v1120, %v1140
          %vm1253 = vcmp.ge.f32.partialorder %v1121, %v1140
          %vm1254 = vcmp.ge.f32.partialorder %v1122, %v1140
          %vm1255 = vcmp.ge.f32.partialorder %v1123, %v1140
          %vm1256 = vcmp.ge.f32.partialorder %v1124, %v1140
          %vm1257 = vcmp.ge.f32.partialorder %v1125, %v1140
          %vm1258 = vcmp.ge.f32.partialorder %v1126, %v1140
          %vm1259 = vcmp.ge.f32.partialorder %v1127, %v1140
          %vm1260 = vcmp.ge.f32.partialorder %v1128, %v1140
          %vm1261 = vcmp.ge.f32.partialorder %v1129, %v1140
          %vm1262 = vcmp.ge.f32.partialorder %v1130, %v1140
          %vm1263 = vcmp.ge.f32.partialorder %v1131, %v1140
          %vm1264 = vcmp.ge.f32.partialorder %v1132, %v1140
          %vm1265 = vcmp.ge.f32.partialorder %v1133, %v1140
          %vm1266 = vcmp.ge.f32.partialorder %v1134, %v1140
          %vm1267 = vcmp.ge.f32.partialorder %v1135, %v1140
          %vm1268 = vcmp.ge.f32.partialorder %v1136, %v1140
          %v1269 = vadd.f32 %v1137, 128.0
          %v1270 = vadd.f32 %v1138, 128.0
          %v1271 = vadd.f32 %v1139, 128.0
          %v1272 = vadd.f32 %v1140, 128.0
          %vm1273 = vcmp.lt.f32.partialorder %v1105, %v1269
          %vm1274 = vcmp.lt.f32.partialorder %v1106, %v1269
          %vm1275 = vcmp.lt.f32.partialorder %v1107, %v1269
          %vm1276 = vcmp.lt.f32.partialorder %v1108, %v1269
          %vm1277 = vcmp.lt.f32.partialorder %v1109, %v1269
          %vm1278 = vcmp.lt.f32.partialorder %v1110, %v1269
          %vm1279 = vcmp.lt.f32.partialorder %v1111, %v1269
          %vm1280 = vcmp.lt.f32.partialorder %v1112, %v1269
          %vm1281 = vcmp.lt.f32.partialorder %v1113, %v1269
          %vm1282 = vcmp.lt.f32.partialorder %v1114, %v1269
          %vm1283 = vcmp.lt.f32.partialorder %v1115, %v1269
          %vm1284 = vcmp.lt.f32.partialorder %v1116, %v1269
          %vm1285 = vcmp.lt.f32.partialorder %v1117, %v1269
          %vm1286 = vcmp.lt.f32.partialorder %v1118, %v1269
          %vm1287 = vcmp.lt.f32.partialorder %v1119, %v1269
          %vm1288 = vcmp.lt.f32.partialorder %v1120, %v1269
          %vm1289 = vcmp.lt.f32.partialorder %v1121, %v1269
          %vm1290 = vcmp.lt.f32.partialorder %v1122, %v1269
          %vm1291 = vcmp.lt.f32.partialorder %v1123, %v1269
          %vm1292 = vcmp.lt.f32.partialorder %v1124, %v1269
          %vm1293 = vcmp.lt.f32.partialorder %v1125, %v1269
          %vm1294 = vcmp.lt.f32.partialorder %v1126, %v1269
          %vm1295 = vcmp.lt.f32.partialorder %v1127, %v1269
          %vm1296 = vcmp.lt.f32.partialorder %v1128, %v1269
          %vm1297 = vcmp.lt.f32.partialorder %v1129, %v1269
          %vm1298 = vcmp.lt.f32.partialorder %v1130, %v1269
          %vm1299 = vcmp.lt.f32.partialorder %v1131, %v1269
          %vm1300 = vcmp.lt.f32.partialorder %v1132, %v1269
          %vm1301 = vcmp.lt.f32.partialorder %v1133, %v1269
          %vm1302 = vcmp.lt.f32.partialorder %v1134, %v1269
          %vm1303 = vcmp.lt.f32.partialorder %v1135, %v1269
          %vm1304 = vcmp.lt.f32.partialorder %v1136, %v1269
          %vm1305 = vcmp.lt.f32.partialorder %v1105, %v1270
          %vm1306 = vcmp.lt.f32.partialorder %v1106, %v1270
          %vm1307 = vcmp.lt.f32.partialorder %v1107, %v1270
          %vm1308 = vcmp.lt.f32.partialorder %v1108, %v1270
          %vm1309 = vcmp.lt.f32.partialorder %v1109, %v1270
          %vm1310 = vcmp.lt.f32.partialorder %v1110, %v1270
          %vm1311 = vcmp.lt.f32.partialorder %v1111, %v1270
          %vm1312 = vcmp.lt.f32.partialorder %v1112, %v1270
          %vm1313 = vcmp.lt.f32.partialorder %v1113, %v1270
          %vm1314 = vcmp.lt.f32.partialorder %v1114, %v1270
          %vm1315 = vcmp.lt.f32.partialorder %v1115, %v1270
          %vm1316 = vcmp.lt.f32.partialorder %v1116, %v1270
          %vm1317 = vcmp.lt.f32.partialorder %v1117, %v1270
          %vm1318 = vcmp.lt.f32.partialorder %v1118, %v1270
          %vm1319 = vcmp.lt.f32.partialorder %v1119, %v1270
          %vm1320 = vcmp.lt.f32.partialorder %v1120, %v1270
          %vm1321 = vcmp.lt.f32.partialorder %v1121, %v1270
          %vm1322 = vcmp.lt.f32.partialorder %v1122, %v1270
          %vm1323 = vcmp.lt.f32.partialorder %v1123, %v1270
          %vm1324 = vcmp.lt.f32.partialorder %v1124, %v1270
          %vm1325 = vcmp.lt.f32.partialorder %v1125, %v1270
          %vm1326 = vcmp.lt.f32.partialorder %v1126, %v1270
          %vm1327 = vcmp.lt.f32.partialorder %v1127, %v1270
          %vm1328 = vcmp.lt.f32.partialorder %v1128, %v1270
          %vm1329 = vcmp.lt.f32.partialorder %v1129, %v1270
          %vm1330 = vcmp.lt.f32.partialorder %v1130, %v1270
          %vm1331 = vcmp.lt.f32.partialorder %v1131, %v1270
          %vm1332 = vcmp.lt.f32.partialorder %v1132, %v1270
          %vm1333 = vcmp.lt.f32.partialorder %v1133, %v1270
          %vm1334 = vcmp.lt.f32.partialorder %v1134, %v1270
          %vm1335 = vcmp.lt.f32.partialorder %v1135, %v1270
          %vm1336 = vcmp.lt.f32.partialorder %v1136, %v1270
          %vm1337 = vcmp.lt.f32.partialorder %v1105, %v1271
          %vm1338 = vcmp.lt.f32.partialorder %v1106, %v1271
          %vm1339 = vcmp.lt.f32.partialorder %v1107, %v1271
          %vm1340 = vcmp.lt.f32.partialorder %v1108, %v1271
          %vm1341 = vcmp.lt.f32.partialorder %v1109, %v1271
          %vm1342 = vcmp.lt.f32.partialorder %v1110, %v1271
          %vm1343 = vcmp.lt.f32.partialorder %v1111, %v1271
          %vm1344 = vcmp.lt.f32.partialorder %v1112, %v1271
          %vm1345 = vcmp.lt.f32.partialorder %v1113, %v1271
          %vm1346 = vcmp.lt.f32.partialorder %v1114, %v1271
          %vm1347 = vcmp.lt.f32.partialorder %v1115, %v1271
          %vm1348 = vcmp.lt.f32.partialorder %v1116, %v1271
          %vm1349 = vcmp.lt.f32.partialorder %v1117, %v1271
          %vm1350 = vcmp.lt.f32.partialorder %v1118, %v1271
          %vm1351 = vcmp.lt.f32.partialorder %v1119, %v1271
          %vm1352 = vcmp.lt.f32.partialorder %v1120, %v1271
          %vm1353 = vcmp.lt.f32.partialorder %v1121, %v1271
          %vm1354 = vcmp.lt.f32.partialorder %v1122, %v1271
          %vm1355 = vcmp.lt.f32.partialorder %v1123, %v1271
          %vm1356 = vcmp.lt.f32.partialorder %v1124, %v1271
          %vm1357 = vcmp.lt.f32.partialorder %v1125, %v1271
          %vm1358 = vcmp.lt.f32.partialorder %v1126, %v1271
          %vm1359 = vcmp.lt.f32.partialorder %v1127, %v1271
          %vm1360 = vcmp.lt.f32.partialorder %v1128, %v1271
          %vm1361 = vcmp.lt.f32.partialorder %v1129, %v1271
          %vm1362 = vcmp.lt.f32.partialorder %v1130, %v1271
          %vm1363 = vcmp.lt.f32.partialorder %v1131, %v1271
          %vm1364 = vcmp.lt.f32.partialorder %v1132, %v1271
          %vm1365 = vcmp.lt.f32.partialorder %v1133, %v1271
          %vm1366 = vcmp.lt.f32.partialorder %v1134, %v1271
          %vm1367 = vcmp.lt.f32.partialorder %v1135, %v1271
          %vm1368 = vcmp.lt.f32.partialorder %v1136, %v1271
          %vm1369 = vcmp.lt.f32.partialorder %v1105, %v1272
          %vm1370 = vcmp.lt.f32.partialorder %v1106, %v1272
          %vm1371 = vcmp.lt.f32.partialorder %v1107, %v1272
          %vm1372 = vcmp.lt.f32.partialorder %v1108, %v1272
          %vm1373 = vcmp.lt.f32.partialorder %v1109, %v1272
          %vm1374 = vcmp.lt.f32.partialorder %v1110, %v1272
          %vm1375 = vcmp.lt.f32.partialorder %v1111, %v1272
          %vm1376 = vcmp.lt.f32.partialorder %v1112, %v1272
          %vm1377 = vcmp.lt.f32.partialorder %v1113, %v1272
          %vm1378 = vcmp.lt.f32.partialorder %v1114, %v1272
          %vm1379 = vcmp.lt.f32.partialorder %v1115, %v1272
          %vm1380 = vcmp.lt.f32.partialorder %v1116, %v1272
          %vm1381 = vcmp.lt.f32.partialorder %v1117, %v1272
          %vm1382 = vcmp.lt.f32.partialorder %v1118, %v1272
          %vm1383 = vcmp.lt.f32.partialorder %v1119, %v1272
          %vm1384 = vcmp.lt.f32.partialorder %v1120, %v1272
          %vm1385 = vcmp.lt.f32.partialorder %v1121, %v1272
          %vm1386 = vcmp.lt.f32.partialorder %v1122, %v1272
          %vm1387 = vcmp.lt.f32.partialorder %v1123, %v1272
          %vm1388 = vcmp.lt.f32.partialorder %v1124, %v1272
          %vm1389 = vcmp.lt.f32.partialorder %v1125, %v1272
          %vm1390 = vcmp.lt.f32.partialorder %v1126, %v1272
          %vm1391 = vcmp.lt.f32.partialorder %v1127, %v1272
          %vm1392 = vcmp.lt.f32.partialorder %v1128, %v1272
          %vm1393 = vcmp.lt.f32.partialorder %v1129, %v1272
          %vm1394 = vcmp.lt.f32.partialorder %v1130, %v1272
          %vm1395 = vcmp.lt.f32.partialorder %v1131, %v1272
          %vm1396 = vcmp.lt.f32.partialorder %v1132, %v1272
          %vm1397 = vcmp.lt.f32.partialorder %v1133, %v1272
          %vm1398 = vcmp.lt.f32.partialorder %v1134, %v1272
          %vm1399 = vcmp.lt.f32.partialorder %v1135, %v1272
          %vm1400 = vcmp.lt.f32.partialorder %v1136, %v1272
          %vm1401 = vmand %vm1141, %vm1273
          %vm1402 = vmand %vm1142, %vm1274
          %vm1403 = vmand %vm1143, %vm1275
          %vm1404 = vmand %vm1144, %vm1276
          %vm1405 = vmand %vm1145, %vm1277
          %vm1406 = vmand %vm1146, %vm1278
          %vm1407 = vmand %vm1147, %vm1279
          %vm1408 = vmand %vm1148, %vm1280
          %vm1409 = vmand %vm1149, %vm1281
          %vm1410 = vmand %vm1150, %vm1282
          %vm1411 = vmand %vm1151, %vm1283
          %vm1412 = vmand %vm1152, %vm1284
          %vm1413 = vmand %vm1153, %vm1285
          %vm1414 = vmand %vm1154, %vm1286
          %vm1415 = vmand %vm1155, %vm1287
          %vm1416 = vmand %vm1156, %vm1288
          %vm1417 = vmand %vm1157, %vm1289
          %vm1418 = vmand %vm1158, %vm1290
          %vm1419 = vmand %vm1159, %vm1291
          %vm1420 = vmand %vm1160, %vm1292
          %vm1421 = vmand %vm1161, %vm1293
          %vm1422 = vmand %vm1162, %vm1294
          %vm1423 = vmand %vm1163, %vm1295
          %vm1424 = vmand %vm1164, %vm1296
          %vm1425 = vmand %vm1165, %vm1297
          %vm1426 = vmand %vm1166, %vm1298
          %vm1427 = vmand %vm1167, %vm1299
          %vm1428 = vmand %vm1168, %vm1300
          %vm1429 = vmand %vm1169, %vm1301
          %vm1430 = vmand %vm1170, %vm1302
          %vm1431 = vmand %vm1171, %vm1303
          %vm1432 = vmand %vm1172, %vm1304
          %vm1433 = vmand %vm1173, %vm1305
          %vm1434 = vmand %vm1174, %vm1306
          %vm1435 = vmand %vm1175, %vm1307
          %vm1436 = vmand %vm1176, %vm1308
          %vm1437 = vmand %vm1177, %vm1309
          %vm1438 = vmand %vm1178, %vm1310
          %vm1439 = vmand %vm1179, %vm1311
          %vm1440 = vmand %vm1180, %vm1312
          %vm1441 = vmand %vm1181, %vm1313
          %vm1442 = vmand %vm1182, %vm1314
          %vm1443 = vmand %vm1183, %vm1315
          %vm1444 = vmand %vm1184, %vm1316
          %vm1445 = vmand %vm1185, %vm1317
          %vm1446 = vmand %vm1186, %vm1318
          %vm1447 = vmand %vm1187, %vm1319
          %vm1448 = vmand %vm1188, %vm1320
          %vm1449 = vmand %vm1189, %vm1321
          %vm1450 = vmand %vm1190, %vm1322
          %vm1451 = vmand %vm1191, %vm1323
          %vm1452 = vmand %vm1192, %vm1324
          %vm1453 = vmand %vm1193, %vm1325
          %vm1454 = vmand %vm1194, %vm1326
          %vm1455 = vmand %vm1195, %vm1327
          %vm1456 = vmand %vm1196, %vm1328
          %vm1457 = vmand %vm1197, %vm1329
          %vm1458 = vmand %vm1198, %vm1330
          %vm1459 = vmand %vm1199, %vm1331
          %vm1460 = vmand %vm1200, %vm1332
          %vm1461 = vmand %vm1201, %vm1333
          %vm1462 = vmand %vm1202, %vm1334
          %vm1463 = vmand %vm1203, %vm1335
          %vm1464 = vmand %vm1204, %vm1336
          %vm1465 = vmand %vm1205, %vm1337
          %vm1466 = vmand %vm1206, %vm1338
          %vm1467 = vmand %vm1207, %vm1339
          %vm1468 = vmand %vm1208, %vm1340
          %vm1469 = vmand %vm1209, %vm1341
          %vm1470 = vmand %vm1210, %vm1342
          %vm1471 = vmand %vm1211, %vm1343
          %vm1472 = vmand %vm1212, %vm1344
          %vm1473 = vmand %vm1213, %vm1345
          %vm1474 = vmand %vm1214, %vm1346
          %vm1475 = vmand %vm1215, %vm1347
          %vm1476 = vmand %vm1216, %vm1348
          %vm1477 = vmand %vm1217, %vm1349
          %vm1478 = vmand %vm1218, %vm1350
          %vm1479 = vmand %vm1219, %vm1351
          %vm1480 = vmand %vm1220, %vm1352
          %vm1481 = vmand %vm1221, %vm1353
          %vm1482 = vmand %vm1222, %vm1354
          %vm1483 = vmand %vm1223, %vm1355
          %vm1484 = vmand %vm1224, %vm1356
          %vm1485 = vmand %vm1225, %vm1357
          %vm1486 = vmand %vm1226, %vm1358
          %vm1487 = vmand %vm1227, %vm1359
          %vm1488 = vmand %vm1228, %vm1360
          %vm1489 = vmand %vm1229, %vm1361
          %vm1490 = vmand %vm1230, %vm1362
          %vm1491 = vmand %vm1231, %vm1363
          %vm1492 = vmand %vm1232, %vm1364
          %vm1493 = vmand %vm1233, %vm1365
          %vm1494 = vmand %vm1234, %vm1366
          %vm1495 = vmand %vm1235, %vm1367
          %vm1496 = vmand %vm1236, %vm1368
          %vm1497 = vmand %vm1237, %vm1369
          %vm1498 = vmand %vm1238, %vm1370
          %vm1499 = vmand %vm1239, %vm1371
          %vm1500 = vmand %vm1240, %vm1372
          %vm1501 = vmand %vm1241, %vm1373
          %vm1502 = vmand %vm1242, %vm1374
          %vm1503 = vmand %vm1243, %vm1375
          %vm1504 = vmand %vm1244, %vm1376
          %vm1505 = vmand %vm1245, %vm1377
          %vm1506 = vmand %vm1246, %vm1378
          %vm1507 = vmand %vm1247, %vm1379
          %vm1508 = vmand %vm1248, %vm1380
          %vm1509 = vmand %vm1249, %vm1381
          %vm1510 = vmand %vm1250, %vm1382
          %vm1511 = vmand %vm1251, %vm1383
          %vm1512 = vmand %vm1252, %vm1384
          %vm1513 = vmand %vm1253, %vm1385
          %vm1514 = vmand %vm1254, %vm1386
          %vm1515 = vmand %vm1255, %vm1387
          %vm1516 = vmand %vm1256, %vm1388
          %vm1517 = vmand %vm1257, %vm1389
          %vm1518 = vmand %vm1258, %vm1390
          %vm1519 = vmand %vm1259, %vm1391
          %vm1520 = vmand %vm1260, %vm1392
          %vm1521 = vmand %vm1261, %vm1393
          %vm1522 = vmand %vm1262, %vm1394
          %vm1523 = vmand %vm1263, %vm1395
          %vm1524 = vmand %vm1264, %vm1396
          %vm1525 = vmand %vm1265, %vm1397
          %vm1526 = vmand %vm1266, %vm1398
          %vm1527 = vmand %vm1267, %vm1399
          %vm1528 = vmand %vm1268, %vm1400
          %v1529 = vsel %vm1401, 1, 0
          %v1530 = vsel %vm1402, 1, 0
          %v1531 = vsel %vm1403, 1, 0
          %v1532 = vsel %vm1404, 1, 0
          %v1533 = vsel %vm1405, 1, 0
          %v1534 = vsel %vm1406, 1, 0
          %v1535 = vsel %vm1407, 1, 0
          %v1536 = vsel %vm1408, 1, 0
          %v1537 = vsel %vm1409, 1, 0
          %v1538 = vsel %vm1410, 1, 0
          %v1539 = vsel %vm1411, 1, 0
          %v1540 = vsel %vm1412, 1, 0
          %v1541 = vsel %vm1413, 1, 0
          %v1542 = vsel %vm1414, 1, 0
          %v1543 = vsel %vm1415, 1, 0
          %v1544 = vsel %vm1416, 1, 0
          %v1545 = vsel %vm1417, 1, 0
          %v1546 = vsel %vm1418, 1, 0
          %v1547 = vsel %vm1419, 1, 0
          %v1548 = vsel %vm1420, 1, 0
          %v1549 = vsel %vm1421, 1, 0
          %v1550 = vsel %vm1422, 1, 0
          %v1551 = vsel %vm1423, 1, 0
          %v1552 = vsel %vm1424, 1, 0
          %v1553 = vsel %vm1425, 1, 0
          %v1554 = vsel %vm1426, 1, 0
          %v1555 = vsel %vm1427, 1, 0
          %v1556 = vsel %vm1428, 1, 0
          %v1557 = vsel %vm1429, 1, 0
          %v1558 = vsel %vm1430, 1, 0
          %v1559 = vsel %vm1431, 1, 0
          %v1560 = vsel %vm1432, 1, 0
          %v1561 = vsel %vm1433, 1, 0
          %v1562 = vsel %vm1434, 1, 0
          %v1563 = vsel %vm1435, 1, 0
          %v1564 = vsel %vm1436, 1, 0
          %v1565 = vsel %vm1437, 1, 0
          %v1566 = vsel %vm1438, 1, 0
          %v1567 = vsel %vm1439, 1, 0
          %v1568 = vsel %vm1440, 1, 0
          %v1569 = vsel %vm1441, 1, 0
          %v1570 = vsel %vm1442, 1, 0
          %v1571 = vsel %vm1443, 1, 0
          %v1572 = vsel %vm1444, 1, 0
          %v1573 = vsel %vm1445, 1, 0
          %v1574 = vsel %vm1446, 1, 0
          %v1575 = vsel %vm1447, 1, 0
          %v1576 = vsel %vm1448, 1, 0
          %v1577 = vsel %vm1449, 1, 0
          %v1578 = vsel %vm1450, 1, 0
          %v1579 = vsel %vm1451, 1, 0
          %v1580 = vsel %vm1452, 1, 0
          %v1581 = vsel %vm1453, 1, 0
          %v1582 = vsel %vm1454, 1, 0
          %v1583 = vsel %vm1455, 1, 0
          %v1584 = vsel %vm1456, 1, 0
          %v1585 = vsel %vm1457, 1, 0
          %v1586 = vsel %vm1458, 1, 0
          %v1587 = vsel %vm1459, 1, 0
          %v1588 = vsel %vm1460, 1, 0
          %v1589 = vsel %vm1461, 1, 0
          %v1590 = vsel %vm1462, 1, 0
          %v1591 = vsel %vm1463, 1, 0
          %v1592 = vsel %vm1464, 1, 0
          %v1593 = vsel %vm1465, 1, 0
          %v1594 = vsel %vm1466, 1, 0
          %v1595 = vsel %vm1467, 1, 0
          %v1596 = vsel %vm1468, 1, 0
          %v1597 = vsel %vm1469, 1, 0
          %v1598 = vsel %vm1470, 1, 0
          %v1599 = vsel %vm1471, 1, 0
          %v1600 = vsel %vm1472, 1, 0
          %v1601 = vsel %vm1473, 1, 0
          %v1602 = vsel %vm1474, 1, 0
          %v1603 = vsel %vm1475, 1, 0
          %v1604 = vsel %vm1476, 1, 0
          %v1605 = vsel %vm1477, 1, 0
          %v1606 = vsel %vm1478, 1, 0
          %v1607 = vsel %vm1479, 1, 0
          %v1608 = vsel %vm1480, 1, 0
          %v1609 = vsel %vm1481, 1, 0
          %v1610 = vsel %vm1482, 1, 0
          %v1611 = vsel %vm1483, 1, 0
          %v1612 = vsel %vm1484, 1, 0
          %v1613 = vsel %vm1485, 1, 0
          %v1614 = vsel %vm1486, 1, 0
          %v1615 = vsel %vm1487, 1, 0
          %v1616 = vsel %vm1488, 1, 0
          %v1617 = vsel %vm1489, 1, 0
          %v1618 = vsel %vm1490, 1, 0
          %v1619 = vsel %vm1491, 1, 0
          %v1620 = vsel %vm1492, 1, 0
          %v1621 = vsel %vm1493, 1, 0
          %v1622 = vsel %vm1494, 1, 0
          %v1623 = vsel %vm1495, 1, 0
          %v1624 = vsel %vm1496, 1, 0
          %v1625 = vsel %vm1497, 1, 0
          %v1626 = vsel %vm1498, 1, 0
          %v1627 = vsel %vm1499, 1, 0
          %v1628 = vsel %vm1500, 1, 0
          %v1629 = vsel %vm1501, 1, 0
          %v1630 = vsel %vm1502, 1, 0
          %v1631 = vsel %vm1503, 1, 0
          %v1632 = vsel %vm1504, 1, 0
          %v1633 = vsel %vm1505, 1, 0
          %v1634 = vsel %vm1506, 1, 0
          %v1635 = vsel %vm1507, 1, 0
          %v1636 = vsel %vm1508, 1, 0
          %v1637 = vsel %vm1509, 1, 0
          %v1638 = vsel %vm1510, 1, 0
          %v1639 = vsel %vm1511, 1, 0
          %v1640 = vsel %vm1512, 1, 0
          %v1641 = vsel %vm1513, 1, 0
          %v1642 = vsel %vm1514, 1, 0
          %v1643 = vsel %vm1515, 1, 0
          %v1644 = vsel %vm1516, 1, 0
          %v1645 = vsel %vm1517, 1, 0
          %v1646 = vsel %vm1518, 1, 0
          %v1647 = vsel %vm1519, 1, 0
          %v1648 = vsel %vm1520, 1, 0
          %v1649 = vsel %vm1521, 1, 0
          %v1650 = vsel %vm1522, 1, 0
          %v1651 = vsel %vm1523, 1, 0
          %v1652 = vsel %vm1524, 1, 0
          %v1653 = vsel %vm1525, 1, 0
          %v1654 = vsel %vm1526, 1, 0
          %v1655 = vsel %vm1527, 1, 0
          %v1656 = vsel %vm1528, 1, 0
          %v1657 = vcvt.s32.f32 %v1529
          %v1658 = vcvt.s32.f32 %v1530
          %v1659 = vcvt.s32.f32 %v1531
          %v1660 = vcvt.s32.f32 %v1532
          %v1661 = vcvt.s32.f32 %v1533
          %v1662 = vcvt.s32.f32 %v1534
          %v1663 = vcvt.s32.f32 %v1535
          %v1664 = vcvt.s32.f32 %v1536
          %v1665 = vcvt.s32.f32 %v1537
          %v1666 = vcvt.s32.f32 %v1538
          %v1667 = vcvt.s32.f32 %v1539
          %v1668 = vcvt.s32.f32 %v1540
          %v1669 = vcvt.s32.f32 %v1541
          %v1670 = vcvt.s32.f32 %v1542
          %v1671 = vcvt.s32.f32 %v1543
          %v1672 = vcvt.s32.f32 %v1544
          %v1673 = vcvt.s32.f32 %v1545
          %v1674 = vcvt.s32.f32 %v1546
          %v1675 = vcvt.s32.f32 %v1547
          %v1676 = vcvt.s32.f32 %v1548
          %v1677 = vcvt.s32.f32 %v1549
          %v1678 = vcvt.s32.f32 %v1550
          %v1679 = vcvt.s32.f32 %v1551
          %v1680 = vcvt.s32.f32 %v1552
          %v1681 = vcvt.s32.f32 %v1553
          %v1682 = vcvt.s32.f32 %v1554
          %v1683 = vcvt.s32.f32 %v1555
          %v1684 = vcvt.s32.f32 %v1556
          %v1685 = vcvt.s32.f32 %v1557
          %v1686 = vcvt.s32.f32 %v1558
          %v1687 = vcvt.s32.f32 %v1559
          %v1688 = vcvt.s32.f32 %v1560
          %v1689 = vcvt.s32.f32 %v1561
          %v1690 = vcvt.s32.f32 %v1562
          %v1691 = vcvt.s32.f32 %v1563
          %v1692 = vcvt.s32.f32 %v1564
          %v1693 = vcvt.s32.f32 %v1565
          %v1694 = vcvt.s32.f32 %v1566
          %v1695 = vcvt.s32.f32 %v1567
          %v1696 = vcvt.s32.f32 %v1568
          %v1697 = vcvt.s32.f32 %v1569
          %v1698 = vcvt.s32.f32 %v1570
          %v1699 = vcvt.s32.f32 %v1571
          %v1700 = vcvt.s32.f32 %v1572
          %v1701 = vcvt.s32.f32 %v1573
          %v1702 = vcvt.s32.f32 %v1574
          %v1703 = vcvt.s32.f32 %v1575
          %v1704 = vcvt.s32.f32 %v1576
          %v1705 = vcvt.s32.f32 %v1577
          %v1706 = vcvt.s32.f32 %v1578
          %v1707 = vcvt.s32.f32 %v1579
          %v1708 = vcvt.s32.f32 %v1580
          %v1709 = vcvt.s32.f32 %v1581
          %v1710 = vcvt.s32.f32 %v1582
          %v1711 = vcvt.s32.f32 %v1583
          %v1712 = vcvt.s32.f32 %v1584
          %v1713 = vcvt.s32.f32 %v1585
          %v1714 = vcvt.s32.f32 %v1586
          %v1715 = vcvt.s32.f32 %v1587
          %v1716 = vcvt.s32.f32 %v1588
          %v1717 = vcvt.s32.f32 %v1589
          %v1718 = vcvt.s32.f32 %v1590
          %v1719 = vcvt.s32.f32 %v1591
          %v1720 = vcvt.s32.f32 %v1592
          %v1721 = vcvt.s32.f32 %v1593
          %v1722 = vcvt.s32.f32 %v1594
          %v1723 = vcvt.s32.f32 %v1595
          %v1724 = vcvt.s32.f32 %v1596
          %v1725 = vcvt.s32.f32 %v1597
          %v1726 = vcvt.s32.f32 %v1598
          %v1727 = vcvt.s32.f32 %v1599
          %v1728 = vcvt.s32.f32 %v1600
          %v1729 = vcvt.s32.f32 %v1601
          %v1730 = vcvt.s32.f32 %v1602
          %v1731 = vcvt.s32.f32 %v1603
          %v1732 = vcvt.s32.f32 %v1604
          %v1733 = vcvt.s32.f32 %v1605
          %v1734 = vcvt.s32.f32 %v1606
          %v1735 = vcvt.s32.f32 %v1607
          %v1736 = vcvt.s32.f32 %v1608
          %v1737 = vcvt.s32.f32 %v1609
          %v1738 = vcvt.s32.f32 %v1610
          %v1739 = vcvt.s32.f32 %v1611
          %v1740 = vcvt.s32.f32 %v1612
          %v1741 = vcvt.s32.f32 %v1613
          %v1742 = vcvt.s32.f32 %v1614
          %v1743 = vcvt.s32.f32 %v1615
          %v1744 = vcvt.s32.f32 %v1616
          %v1745 = vcvt.s32.f32 %v1617
          %v1746 = vcvt.s32.f32 %v1618
          %v1747 = vcvt.s32.f32 %v1619
          %v1748 = vcvt.s32.f32 %v1620
          %v1749 = vcvt.s32.f32 %v1621
          %v1750 = vcvt.s32.f32 %v1622
          %v1751 = vcvt.s32.f32 %v1623
          %v1752 = vcvt.s32.f32 %v1624
          %v1753 = vcvt.s32.f32 %v1625
          %v1754 = vcvt.s32.f32 %v1626
          %v1755 = vcvt.s32.f32 %v1627
          %v1756 = vcvt.s32.f32 %v1628
          %v1757 = vcvt.s32.f32 %v1629
          %v1758 = vcvt.s32.f32 %v1630
          %v1759 = vcvt.s32.f32 %v1631
          %v1760 = vcvt.s32.f32 %v1632
          %v1761 = vcvt.s32.f32 %v1633
          %v1762 = vcvt.s32.f32 %v1634
          %v1763 = vcvt.s32.f32 %v1635
          %v1764 = vcvt.s32.f32 %v1636
          %v1765 = vcvt.s32.f32 %v1637
          %v1766 = vcvt.s32.f32 %v1638
          %v1767 = vcvt.s32.f32 %v1639
          %v1768 = vcvt.s32.f32 %v1640
          %v1769 = vcvt.s32.f32 %v1641
          %v1770 = vcvt.s32.f32 %v1642
          %v1771 = vcvt.s32.f32 %v1643
          %v1772 = vcvt.s32.f32 %v1644
          %v1773 = vcvt.s32.f32 %v1645
          %v1774 = vcvt.s32.f32 %v1646
          %v1775 = vcvt.s32.f32 %v1647
          %v1776 = vcvt.s32.f32 %v1648
          %v1777 = vcvt.s32.f32 %v1649
          %v1778 = vcvt.s32.f32 %v1650
          %v1779 = vcvt.s32.f32 %v1651
          %v1780 = vcvt.s32.f32 %v1652
          %v1781 = vcvt.s32.f32 %v1653
          %v1782 = vcvt.s32.f32 %v1654
          %v1783 = vcvt.s32.f32 %v1655
          %v1784 = vcvt.s32.f32 %v1656
          %v1785 = vadd.s32 %v1064, 32
          %v1786 = vadd.s32 %v1064, 40
          %v1787 = vadd.s32 %v1064, 48
          %v1788 = vadd.s32 %v1064, 56
          %v1789 = vadd.s32 %v1064, 64
          %v1790 = vadd.s32 %v1064, 72
          %v1791 = vadd.s32 %v1064, 80
          %v1792 = vadd.s32 %v1064, 88
          %v1793 = vadd.s32 %v1064, 96
          %v1794 = vadd.s32 %v1064, 104
          %v1795 = vadd.s32 %v1064, 112
          %v1796 = vadd.s32 %v1064, 120
          %vm1797 = vcmp.eq.s32.totalorder %v1064, %v1073
          %vm1798 = vcmp.eq.s32.totalorder %v1065, %v1073
          %vm1799 = vcmp.eq.s32.totalorder %v1066, %v1073
          %vm1800 = vcmp.eq.s32.totalorder %v1067, %v1073
          %vm1801 = vcmp.eq.s32.totalorder %v1785, %v1073
          %vm1802 = vcmp.eq.s32.totalorder %v1786, %v1073
          %vm1803 = vcmp.eq.s32.totalorder %v1787, %v1073
          %vm1804 = vcmp.eq.s32.totalorder %v1788, %v1073
          %vm1805 = vcmp.eq.s32.totalorder %v1789, %v1073
          %vm1806 = vcmp.eq.s32.totalorder %v1790, %v1073
          %vm1807 = vcmp.eq.s32.totalorder %v1791, %v1073
          %vm1808 = vcmp.eq.s32.totalorder %v1792, %v1073
          %vm1809 = vcmp.eq.s32.totalorder %v1793, %v1073
          %vm1810 = vcmp.eq.s32.totalorder %v1794, %v1073
          %vm1811 = vcmp.eq.s32.totalorder %v1795, %v1073
          %vm1812 = vcmp.eq.s32.totalorder %v1796, %v1073
          %v1813 = vsel %vm1797, 1, 0
          %v1814 = vsel %vm1798, 1, 0
          %v1815 = vsel %vm1799, 1, 0
          %v1816 = vsel %vm1800, 1, 0
          %v1817 = vsel %vm1801, 1, 0
          %v1818 = vsel %vm1802, 1, 0
          %v1819 = vsel %vm1803, 1, 0
          %v1820 = vsel %vm1804, 1, 0
          %v1821 = vsel %vm1805, 1, 0
          %v1822 = vsel %vm1806, 1, 0
          %v1823 = vsel %vm1807, 1, 0
          %v1824 = vsel %vm1808, 1, 0
          %v1825 = vsel %vm1809, 1, 0
          %v1826 = vsel %vm1810, 1, 0
          %v1827 = vsel %vm1811, 1, 0
          %v1828 = vsel %vm1812, 1, 0
          %v1829 = vcvt.s32.f32 %v1813
          %v1830 = vcvt.s32.f32 %v1814
          %v1831 = vcvt.s32.f32 %v1815
          %v1832 = vcvt.s32.f32 %v1816
          %v1833 = vcvt.s32.f32 %v1817
          %v1834 = vcvt.s32.f32 %v1818
          %v1835 = vcvt.s32.f32 %v1819
          %v1836 = vcvt.s32.f32 %v1820
          %v1837 = vcvt.s32.f32 %v1821
          %v1838 = vcvt.s32.f32 %v1822
          %v1839 = vcvt.s32.f32 %v1823
          %v1840 = vcvt.s32.f32 %v1824
          %v1841 = vcvt.s32.f32 %v1825
          %v1842 = vcvt.s32.f32 %v1826
          %v1843 = vcvt.s32.f32 %v1827
          %v1844 = vcvt.s32.f32 %v1828
          %1845 = vmatprep.subr.mxu0 0.0
          %1846 = vmatpush1.msra.mxu0 %v1829
          %1847 = vmatprep.subr.mxu0 0.0
          %1848 = vmatpush1.msra.mxu0 %v1830
          %1849 = vmatprep.subr.mxu0 0.0
          %1850 = vmatpush1.msra.mxu0 %v1831
          %1851 = vmatprep.subr.mxu0 0.0
          %1852 = vmatpush1.msra.mxu0 %v1832
          %1853 = vmatprep.subr.mxu0 0.0
          %1854 = vmatpush1.msra.mxu0 %v1833
          %1855 = vmatprep.subr.mxu0 0.0
          %1856 = vmatpush1.msra.mxu0 %v1834
          %1857 = vmatprep.subr.mxu0 0.0
          %1858 = vmatpush1.msra.mxu0 %v1835
          %1859 = vmatprep.subr.mxu0 0.0
          %1860 = vmatpush1.msra.mxu0 %v1836
          %1861 = vmatprep.subr.mxu0 0.0
          %1862 = vmatpush1.msra.mxu0 %v1837
          %1863 = vmatprep.subr.mxu0 0.0
          %1864 = vmatpush1.msra.mxu0 %v1838
          %1865 = vmatprep.subr.mxu0 0.0
          %1866 = vmatpush1.msra.mxu0 %v1839
          %1867 = vmatprep.subr.mxu0 0.0
          %1868 = vmatpush1.msra.mxu0 %v1840
          %1869 = vmatprep.subr.mxu0 0.0
          %1870 = vmatpush1.msra.mxu0 %v1841
          %1871 = vmatprep.subr.mxu0 0.0
          %1872 = vmatpush1.msra.mxu0 %v1842
          %1873 = vmatprep.subr.mxu0 0.0
          %1874 = vmatpush1.msra.mxu0 %v1843
          %1875 = vmatprep.subr.mxu0 0.0
          %1876 = vmatpush1.msra.mxu0 %v1844
          %1877 = vmatprep.subr.mxu0 0.0
          %1878 = vmatpush1.msra.mxu0 0.0
          %1879 = vmatprep.subr.mxu0 0.0
          %1880 = vmatpush1.msra.mxu0 0.0
          %1881 = vmatprep.subr.mxu0 0.0
          %1882 = vmatpush1.msra.mxu0 0.0
          %1883 = vmatprep.subr.mxu0 0.0
          %1884 = vmatpush1.msra.mxu0 0.0
          %1885 = vmatprep.subr.mxu0 0.0
          %1886 = vmatpush1.msra.mxu0 0.0
          %1887 = vmatprep.subr.mxu0 0.0
          %1888 = vmatpush1.msra.mxu0 0.0
          %1889 = vmatprep.subr.mxu0 0.0
          %1890 = vmatpush1.msra.mxu0 0.0
          %1891 = vmatprep.subr.mxu0 0.0
          %1892 = vmatpush1.msra.mxu0 0.0
          %1893 = vmatprep.subr.mxu0 0.0
          %1894 = vmatpush1.msra.mxu0 0.0
          %1895 = vmatprep.subr.mxu0 0.0
          %1896 = vmatpush1.msra.mxu0 0.0
          %1897 = vmatprep.subr.mxu0 0.0
          %1898 = vmatpush1.msra.mxu0 0.0
          %1899 = vmatprep.subr.mxu0 0.0
          %1900 = vmatpush1.msra.mxu0 0.0
          %1901 = vmatprep.subr.mxu0 0.0
          %1902 = vmatpush1.msra.mxu0 0.0
          %1903 = vmatprep.subr.mxu0 0.0
          %1904 = vmatpush1.msra.mxu0 0.0
          %1905 = vmatprep.subr.mxu0 0.0
          %1906 = vmatpush1.msra.mxu0 0.0
          %1907 = vmatprep.subr.mxu0 0.0
          %1908 = vmatpush1.msra.mxu0 0.0
          %1909 = vmatprep.mubr.f32.mxu0 0.0
          %1910 = vmatmul.mubr.f32.gmra.mrb[0].mxu0 %v772
          %v1911 = vpop.f32.mrb[0].mxu0
          %v1912 = vadd.f32 0.0, %v1911
          %v1913 = vpop.f32.mrb[0].mxu0
          %1914 = vdwg.mxu0
          %vm1915 = vcmask 261120
          %v1917 = vsel %vm1915, %v1912, 0
          %1919 = vmatprep.subr.mxu0 %v1658
          %1920 = vmatpush1.msra.mxu0 %v1657
          %1921 = vmatprep.subr.mxu0 %v1690
          %1922 = vmatpush1.msra.mxu0 %v1689
          %1923 = vmatprep.subr.mxu0 %v1722
          %1924 = vmatpush1.msra.mxu0 %v1721
          %1925 = vmatprep.subr.mxu0 %v1754
          %1926 = vmatpush1.msra.mxu0 %v1753
          %1927 = vmatprep.subr.mxu0 0.0
          %1928 = vmatpush1.msra.mxu0 0.0
          %1929 = vmatprep.subr.mxu0 0.0
          %1930 = vmatpush1.msra.mxu0 0.0
          %1931 = vmatprep.subr.mxu0 0.0
          %1932 = vmatpush1.msra.mxu0 0.0
          %1933 = vmatprep.subr.mxu0 0.0
          %1934 = vmatpush1.msra.mxu0 0.0
          %1935 = vmatprep.subr.mxu0 0.0
          %1936 = vmatpush1.msra.mxu0 0.0
          %1937 = vmatprep.subr.mxu0 0.0
          %1938 = vmatpush1.msra.mxu0 0.0
          %1939 = vmatprep.subr.mxu0 0.0
          %1940 = vmatpush1.msra.mxu0 0.0
          %1941 = vmatprep.subr.mxu0 0.0
          %1942 = vmatpush1.msra.mxu0 0.0
          %1943 = vmatprep.subr.mxu0 0.0
          %1944 = vmatpush1.msra.mxu0 0.0
          %1945 = vmatprep.subr.mxu0 0.0
          %1946 = vmatpush1.msra.mxu0 0.0
          %1947 = vmatprep.subr.mxu0 0.0
          %1948 = vmatpush1.msra.mxu0 0.0
          %1949 = vmatprep.subr.mxu0 0.0
          %1950 = vmatpush1.msra.mxu0 0.0
          %1951 = vmatprep.subr.mxu0 0.0
          %1952 = vmatpush1.msra.mxu0 0.0
          %1953 = vmatprep.subr.mxu0 0.0
          %1954 = vmatpush1.msra.mxu0 0.0
          %1955 = vmatprep.subr.mxu0 0.0
          %1956 = vmatpush1.msra.mxu0 0.0
          %1957 = vmatprep.subr.mxu0 0.0
          %1958 = vmatpush1.msra.mxu0 0.0
          %1959 = vmatprep.subr.mxu0 0.0
          %1960 = vmatpush1.msra.mxu0 0.0
          %1961 = vmatprep.subr.mxu0 0.0
          %1962 = vmatpush1.msra.mxu0 0.0
          %1963 = vmatprep.subr.mxu0 0.0
          %1964 = vmatpush1.msra.mxu0 0.0
          %1965 = vmatprep.subr.mxu0 0.0
          %1966 = vmatpush1.msra.mxu0 0.0
          %1967 = vmatprep.subr.mxu0 0.0
          %1968 = vmatpush1.msra.mxu0 0.0
          %1969 = vmatprep.subr.mxu0 0.0
          %1970 = vmatpush1.msra.mxu0 0.0
          %1971 = vmatprep.subr.mxu0 0.0
          %1972 = vmatpush1.msra.mxu0 0.0
          %1973 = vmatprep.subr.mxu0 0.0
          %1974 = vmatpush1.msra.mxu0 0.0
          %1975 = vmatprep.subr.mxu0 0.0
          %1976 = vmatpush1.msra.mxu0 0.0
          %1977 = vmatprep.subr.mxu0 0.0
          %1978 = vmatpush1.msra.mxu0 0.0
          %1979 = vmatprep.subr.mxu0 0.0
          %1980 = vmatpush1.msra.mxu0 0.0
          %1981 = vmatprep.subr.mxu0 0.0
          %1982 = vmatpush1.msra.mxu0 0.0
          %1983 = vmatprep.mubr.f32.mxu0 0.0
          %1984 = vmatmul.mubr.f32.gmra.mrb[0].mxu0 %v1917
          %v1985 = vpop.f32.mrb[0].mxu0
          %v1986 = vadd.f32 0.0, %v1985
          %v1987 = vpop.f32.mrb[0].mxu0
          %v1988 = vadd.f32 0.0, %v1987
          %1989 = vdwg.mxu0
          %1990 = vmatprep.subr.mxu0 %v1660
          %1991 = vmatpush1.msra.mxu0 %v1659
          %1992 = vmatprep.subr.mxu0 %v1692
          %1993 = vmatpush1.msra.mxu0 %v1691
          %1994 = vmatprep.subr.mxu0 %v1724
          %1995 = vmatpush1.msra.mxu0 %v1723
          %1996 = vmatprep.subr.mxu0 %v1756
          %1997 = vmatpush1.msra.mxu0 %v1755
          %1998 = vmatprep.subr.mxu0 0.0
          %1999 = vmatpush1.msra.mxu0 0.0
          %2000 = vmatprep.subr.mxu0 0.0
          %2001 = vmatpush1.msra.mxu0 0.0
          %2002 = vmatprep.subr.mxu0 0.0
          %2003 = vmatpush1.msra.mxu0 0.0
          %2004 = vmatprep.subr.mxu0 0.0
          %2005 = vmatpush1.msra.mxu0 0.0
          %2006 = vmatprep.subr.mxu0 0.0
          %2007 = vmatpush1.msra.mxu0 0.0
          %2008 = vmatprep.subr.mxu0 0.0
          %2009 = vmatpush1.msra.mxu0 0.0
          %2010 = vmatprep.subr.mxu0 0.0
          %2011 = vmatpush1.msra.mxu0 0.0
          %2012 = vmatprep.subr.mxu0 0.0
          %2013 = vmatpush1.msra.mxu0 0.0
          %2014 = vmatprep.subr.mxu0 0.0
          %2015 = vmatpush1.msra.mxu0 0.0
          %2016 = vmatprep.subr.mxu0 0.0
          %2017 = vmatpush1.msra.mxu0 0.0
          %2018 = vmatprep.subr.mxu0 0.0
          %2019 = vmatpush1.msra.mxu0 0.0
          %2020 = vmatprep.subr.mxu0 0.0
          %2021 = vmatpush1.msra.mxu0 0.0
          %2022 = vmatprep.subr.mxu0 0.0
          %2023 = vmatpush1.msra.mxu0 0.0
          %2024 = vmatprep.subr.mxu0 0.0
          %2025 = vmatpush1.msra.mxu0 0.0
          %2026 = vmatprep.subr.mxu0 0.0
          %2027 = vmatpush1.msra.mxu0 0.0
          %2028 = vmatprep.subr.mxu0 0.0
          %2029 = vmatpush1.msra.mxu0 0.0
          %2030 = vmatprep.subr.mxu0 0.0
          %2031 = vmatpush1.msra.mxu0 0.0
          %2032 = vmatprep.subr.mxu0 0.0
          %2033 = vmatpush1.msra.mxu0 0.0
          %2034 = vmatprep.subr.mxu0 0.0
          %2035 = vmatpush1.msra.mxu0 0.0
          %2036 = vmatprep.subr.mxu0 0.0
          %2037 = vmatpush1.msra.mxu0 0.0
          %2038 = vmatprep.subr.mxu0 0.0
          %2039 = vmatpush1.msra.mxu0 0.0
          %2040 = vmatprep.subr.mxu0 0.0
          %2041 = vmatpush1.msra.mxu0 0.0
          %2042 = vmatprep.subr.mxu0 0.0
          %2043 = vmatpush1.msra.mxu0 0.0
          %2044 = vmatprep.subr.mxu0 0.0
          %2045 = vmatpush1.msra.mxu0 0.0
          %2046 = vmatprep.subr.mxu0 0.0
          %2047 = vmatpush1.msra.mxu0 0.0
          %2048 = vmatprep.subr.mxu0 0.0
          %2049 = vmatpush1.msra.mxu0 0.0
          %2050 = vmatprep.subr.mxu0 0.0
          %2051 = vmatpush1.msra.mxu0 0.0
          %2052 = vmatprep.subr.mxu0 0.0
          %2053 = vmatpush1.msra.mxu0 0.0
          %2054 = vmatprep.mubr.f32.mxu0 0.0
          %2055 = vmatmul.mubr.f32.gmra.mrb[0].mxu0 %v1917
          %v2056 = vpop.f32.mrb[0].mxu0
          %v2057 = vadd.f32 0.0, %v2056
          %v2058 = vpop.f32.mrb[0].mxu0
          %v2059 = vadd.f32 0.0, %v2058
          %2060 = vdwg.mxu0
          %2061 = vmatprep.subr.mxu0 %v1662
          %2062 = vmatpush1.msra.mxu0 %v1661
          %2063 = vmatprep.subr.mxu0 %v1694
          %2064 = vmatpush1.msra.mxu0 %v1693
          %2065 = vmatprep.subr.mxu0 %v1726
          %2066 = vmatpush1.msra.mxu0 %v1725
          %2067 = vmatprep.subr.mxu0 %v1758
          %2068 = vmatpush1.msra.mxu0 %v1757
          %2069 = vmatprep.subr.mxu0 0.0
          %2070 = vmatpush1.msra.mxu0 0.0
          %2071 = vmatprep.subr.mxu0 0.0
          %2072 = vmatpush1.msra.mxu0 0.0
          %2073 = vmatprep.subr.mxu0 0.0
          %2074 = vmatpush1.msra.mxu0 0.0
          %2075 = vmatprep.subr.mxu0 0.0
          %2076 = vmatpush1.msra.mxu0 0.0
          %2077 = vmatprep.subr.mxu0 0.0
          %2078 = vmatpush1.msra.mxu0 0.0
          %2079 = vmatprep.subr.mxu0 0.0
          %2080 = vmatpush1.msra.mxu0 0.0
          %2081 = vmatprep.subr.mxu0 0.0
          %2082 = vmatpush1.msra.mxu0 0.0
          %2083 = vmatprep.subr.mxu0 0.0
          %2084 = vmatpush1.msra.mxu0 0.0
          %2085 = vmatprep.subr.mxu0 0.0
          %2086 = vmatpush1.msra.mxu0 0.0
          %2087 = vmatprep.subr.mxu0 0.0
          %2088 = vmatpush1.msra.mxu0 0.0
          %2089 = vmatprep.subr.mxu0 0.0
          %2090 = vmatpush1.msra.mxu0 0.0
          %2091 = vmatprep.subr.mxu0 0.0
          %2092 = vmatpush1.msra.mxu0 0.0
          %2093 = vmatprep.subr.mxu0 0.0
          %2094 = vmatpush1.msra.mxu0 0.0
          %2095 = vmatprep.subr.mxu0 0.0
          %2096 = vmatpush1.msra.mxu0 0.0
          %2097 = vmatprep.subr.mxu0 0.0
          %2098 = vmatpush1.msra.mxu0 0.0
          %2099 = vmatprep.subr.mxu0 0.0
          %2100 = vmatpush1.msra.mxu0 0.0
          %2101 = vmatprep.subr.mxu0 0.0
          %2102 = vmatpush1.msra.mxu0 0.0
          %2103 = vmatprep.subr.mxu0 0.0
          %2104 = vmatpush1.msra.mxu0 0.0
          %2105 = vmatprep.subr.mxu0 0.0
          %2106 = vmatpush1.msra.mxu0 0.0
          %2107 = vmatprep.subr.mxu0 0.0
          %2108 = vmatpush1.msra.mxu0 0.0
          %2109 = vmatprep.subr.mxu0 0.0
          %2110 = vmatpush1.msra.mxu0 0.0
          %2111 = vmatprep.subr.mxu0 0.0
          %2112 = vmatpush1.msra.mxu0 0.0
          %2113 = vmatprep.subr.mxu0 0.0
          %2114 = vmatpush1.msra.mxu0 0.0
          %2115 = vmatprep.subr.mxu0 0.0
          %2116 = vmatpush1.msra.mxu0 0.0
          %2117 = vmatprep.subr.mxu0 0.0
          %2118 = vmatpush1.msra.mxu0 0.0
          %2119 = vmatprep.subr.mxu0 0.0
          %2120 = vmatpush1.msra.mxu0 0.0
          %2121 = vmatprep.subr.mxu0 0.0
          %2122 = vmatpush1.msra.mxu0 0.0
          %2123 = vmatprep.subr.mxu0 0.0
          %2124 = vmatpush1.msra.mxu0 0.0
          %2125 = vmatprep.mubr.f32.mxu0 0.0
          %2126 = vmatmul.mubr.f32.gmra.mrb[0].mxu0 %v1917
          %v2127 = vpop.f32.mrb[0].mxu0
          %v2128 = vadd.f32 0.0, %v2127
          %v2129 = vpop.f32.mrb[0].mxu0
          %v2130 = vadd.f32 0.0, %v2129
          %2131 = vdwg.mxu0
          %2132 = vmatprep.subr.mxu0 %v1664
          %2133 = vmatpush1.msra.mxu0 %v1663
          %2134 = vmatprep.subr.mxu0 %v1696
          %2135 = vmatpush1.msra.mxu0 %v1695
          %2136 = vmatprep.subr.mxu0 %v1728
          %2137 = vmatpush1.msra.mxu0 %v1727
          %2138 = vmatprep.subr.mxu0 %v1760
          %2139 = vmatpush1.msra.mxu0 %v1759
          %2140 = vmatprep.subr.mxu0 0.0
          %2141 = vmatpush1.msra.mxu0 0.0
          %2142 = vmatprep.subr.mxu0 0.0
          %2143 = vmatpush1.msra.mxu0 0.0
          %2144 = vmatprep.subr.mxu0 0.0
          %2145 = vmatpush1.msra.mxu0 0.0
          %2146 = vmatprep.subr.mxu0 0.0
          %2147 = vmatpush1.msra.mxu0 0.0
          %2148 = vmatprep.subr.mxu0 0.0
          %2149 = vmatpush1.msra.mxu0 0.0
          %2150 = vmatprep.subr.mxu0 0.0
          %2151 = vmatpush1.msra.mxu0 0.0
          %2152 = vmatprep.subr.mxu0 0.0
          %2153 = vmatpush1.msra.mxu0 0.0
          %2154 = vmatprep.subr.mxu0 0.0
          %2155 = vmatpush1.msra.mxu0 0.0
          %2156 = vmatprep.subr.mxu0 0.0
          %2157 = vmatpush1.msra.mxu0 0.0
          %2158 = vmatprep.subr.mxu0 0.0
          %2159 = vmatpush1.msra.mxu0 0.0
          %2160 = vmatprep.subr.mxu0 0.0
          %2161 = vmatpush1.msra.mxu0 0.0
          %2162 = vmatprep.subr.mxu0 0.0
          %2163 = vmatpush1.msra.mxu0 0.0
          %2164 = vmatprep.subr.mxu0 0.0
          %2165 = vmatpush1.msra.mxu0 0.0
          %2166 = vmatprep.subr.mxu0 0.0
          %2167 = vmatpush1.msra.mxu0 0.0
          %2168 = vmatprep.subr.mxu0 0.0
          %2169 = vmatpush1.msra.mxu0 0.0
          %2170 = vmatprep.subr.mxu0 0.0
          %2171 = vmatpush1.msra.mxu0 0.0
          %2172 = vmatprep.subr.mxu0 0.0
          %2173 = vmatpush1.msra.mxu0 0.0
          %2174 = vmatprep.subr.mxu0 0.0
          %2175 = vmatpush1.msra.mxu0 0.0
          %2176 = vmatprep.subr.mxu0 0.0
          %2177 = vmatpush1.msra.mxu0 0.0
          %2178 = vmatprep.subr.mxu0 0.0
          %2179 = vmatpush1.msra.mxu0 0.0
          %2180 = vmatprep.subr.mxu0 0.0
          %2181 = vmatpush1.msra.mxu0 0.0
          %2182 = vmatprep.subr.mxu0 0.0
          %2183 = vmatpush1.msra.mxu0 0.0
          %2184 = vmatprep.subr.mxu0 0.0
          %2185 = vmatpush1.msra.mxu0 0.0
          %2186 = vmatprep.subr.mxu0 0.0
          %2187 = vmatpush1.msra.mxu0 0.0
          %2188 = vmatprep.subr.mxu0 0.0
          %2189 = vmatpush1.msra.mxu0 0.0
          %2190 = vmatprep.subr.mxu0 0.0
          %2191 = vmatpush1.msra.mxu0 0.0
          %2192 = vmatprep.subr.mxu0 0.0
          %2193 = vmatpush1.msra.mxu0 0.0
          %2194 = vmatprep.subr.mxu0 0.0
          %2195 = vmatpush1.msra.mxu0 0.0
          %2196 = vmatprep.mubr.f32.mxu0 0.0
          %2197 = vmatmul.mubr.f32.gmra.mrb[0].mxu0 %v1917
          %v2198 = vpop.f32.mrb[0].mxu0
          %v2199 = vadd.f32 0.0, %v2198
          %v2200 = vpop.f32.mrb[0].mxu0
          %v2201 = vadd.f32 0.0, %v2200
          %2202 = vdwg.mxu0
          %2203 = vmatprep.subr.mxu0 %v1666
          %2204 = vmatpush1.msra.mxu0 %v1665
          %2205 = vmatprep.subr.mxu0 %v1698
          %2206 = vmatpush1.msra.mxu0 %v1697
          %2207 = vmatprep.subr.mxu0 %v1730
          %2208 = vmatpush1.msra.mxu0 %v1729
          %2209 = vmatprep.subr.mxu0 %v1762
          %2210 = vmatpush1.msra.mxu0 %v1761
          %2211 = vmatprep.subr.mxu0 0.0
          %2212 = vmatpush1.msra.mxu0 0.0
          %2213 = vmatprep.subr.mxu0 0.0
          %2214 = vmatpush1.msra.mxu0 0.0
          %2215 = vmatprep.subr.mxu0 0.0
          %2216 = vmatpush1.msra.mxu0 0.0
          %2217 = vmatprep.subr.mxu0 0.0
          %2218 = vmatpush1.msra.mxu0 0.0
          %2219 = vmatprep.subr.mxu0 0.0
          %2220 = vmatpush1.msra.mxu0 0.0
          %2221 = vmatprep.subr.mxu0 0.0
          %2222 = vmatpush1.msra.mxu0 0.0
          %2223 = vmatprep.subr.mxu0 0.0
          %2224 = vmatpush1.msra.mxu0 0.0
          %2225 = vmatprep.subr.mxu0 0.0
          %2226 = vmatpush1.msra.mxu0 0.0
          %2227 = vmatprep.subr.mxu0 0.0
          %2228 = vmatpush1.msra.mxu0 0.0
          %2229 = vmatprep.subr.mxu0 0.0
          %2230 = vmatpush1.msra.mxu0 0.0
          %2231 = vmatprep.subr.mxu0 0.0
          %2232 = vmatpush1.msra.mxu0 0.0
          %2233 = vmatprep.subr.mxu0 0.0
          %2234 = vmatpush1.msra.mxu0 0.0
          %2235 = vmatprep.subr.mxu0 0.0
          %2236 = vmatpush1.msra.mxu0 0.0
          %2237 = vmatprep.subr.mxu0 0.0
          %2238 = vmatpush1.msra.mxu0 0.0
          %2239 = vmatprep.subr.mxu0 0.0
          %2240 = vmatpush1.msra.mxu0 0.0
          %2241 = vmatprep.subr.mxu0 0.0
          %2242 = vmatpush1.msra.mxu0 0.0
          %2243 = vmatprep.subr.mxu0 0.0
          %2244 = vmatpush1.msra.mxu0 0.0
          %2245 = vmatprep.subr.mxu0 0.0
          %2246 = vmatpush1.msra.mxu0 0.0
          %2247 = vmatprep.subr.mxu0 0.0
          %2248 = vmatpush1.msra.mxu0 0.0
          %2249 = vmatprep.subr.mxu0 0.0
          %2250 = vmatpush1.msra.mxu0 0.0
          %2251 = vmatprep.subr.mxu0 0.0
          %2252 = vmatpush1.msra.mxu0 0.0
          %2253 = vmatprep.subr.mxu0 0.0
          %2254 = vmatpush1.msra.mxu0 0.0
          %2255 = vmatprep.subr.mxu0 0.0
          %2256 = vmatpush1.msra.mxu0 0.0
          %2257 = vmatprep.subr.mxu0 0.0
          %2258 = vmatpush1.msra.mxu0 0.0
          %2259 = vmatprep.subr.mxu0 0.0
          %2260 = vmatpush1.msra.mxu0 0.0
          %2261 = vmatprep.subr.mxu0 0.0
          %2262 = vmatpush1.msra.mxu0 0.0
          %2263 = vmatprep.subr.mxu0 0.0
          %2264 = vmatpush1.msra.mxu0 0.0
          %2265 = vmatprep.subr.mxu0 0.0
          %2266 = vmatpush1.msra.mxu0 0.0
          %2267 = vmatprep.mubr.f32.mxu0 0.0
          %2268 = vmatmul.mubr.f32.gmra.mrb[0].mxu0 %v1917
          %v2269 = vpop.f32.mrb[0].mxu0
          %v2270 = vadd.f32 0.0, %v2269
          %v2271 = vpop.f32.mrb[0].mxu0
          %v2272 = vadd.f32 0.0, %v2271
          %2273 = vdwg.mxu0
          %2274 = vmatprep.subr.mxu0 %v1668
          %2275 = vmatpush1.msra.mxu0 %v1667
          %2276 = vmatprep.subr.mxu0 %v1700
          %2277 = vmatpush1.msra.mxu0 %v1699
          %2278 = vmatprep.subr.mxu0 %v1732
          %2279 = vmatpush1.msra.mxu0 %v1731
          %2280 = vmatprep.subr.mxu0 %v1764
          %2281 = vmatpush1.msra.mxu0 %v1763
          %2282 = vmatprep.subr.mxu0 0.0
          %2283 = vmatpush1.msra.mxu0 0.0
          %2284 = vmatprep.subr.mxu0 0.0
          %2285 = vmatpush1.msra.mxu0 0.0
          %2286 = vmatprep.subr.mxu0 0.0
          %2287 = vmatpush1.msra.mxu0 0.0
          %2288 = vmatprep.subr.mxu0 0.0
          %2289 = vmatpush1.msra.mxu0 0.0
          %2290 = vmatprep.subr.mxu0 0.0
          %2291 = vmatpush1.msra.mxu0 0.0
          %2292 = vmatprep.subr.mxu0 0.0
          %2293 = vmatpush1.msra.mxu0 0.0
          %2294 = vmatprep.subr.mxu0 0.0
          %2295 = vmatpush1.msra.mxu0 0.0
          %2296 = vmatprep.subr.mxu0 0.0
          %2297 = vmatpush1.msra.mxu0 0.0
          %2298 = vmatprep.subr.mxu0 0.0
          %2299 = vmatpush1.msra.mxu0 0.0
          %2300 = vmatprep.subr.mxu0 0.0
          %2301 = vmatpush1.msra.mxu0 0.0
          %2302 = vmatprep.subr.mxu0 0.0
          %2303 = vmatpush1.msra.mxu0 0.0
          %2304 = vmatprep.subr.mxu0 0.0
          %2305 = vmatpush1.msra.mxu0 0.0
          %2306 = vmatprep.subr.mxu0 0.0
          %2307 = vmatpush1.msra.mxu0 0.0
          %2308 = vmatprep.subr.mxu0 0.0
          %2309 = vmatpush1.msra.mxu0 0.0
          %2310 = vmatprep.subr.mxu0 0.0
          %2311 = vmatpush1.msra.mxu0 0.0
          %2312 = vmatprep.subr.mxu0 0.0
          %2313 = vmatpush1.msra.mxu0 0.0
          %2314 = vmatprep.subr.mxu0 0.0
          %2315 = vmatpush1.msra.mxu0 0.0
          %2316 = vmatprep.subr.mxu0 0.0
          %2317 = vmatpush1.msra.mxu0 0.0
          %2318 = vmatprep.subr.mxu0 0.0
          %2319 = vmatpush1.msra.mxu0 0.0
          %2320 = vmatprep.subr.mxu0 0.0
          %2321 = vmatpush1.msra.mxu0 0.0
          %2322 = vmatprep.subr.mxu0 0.0
          %2323 = vmatpush1.msra.mxu0 0.0
          %2324 = vmatprep.subr.mxu0 0.0
          %2325 = vmatpush1.msra.mxu0 0.0
          %2326 = vmatprep.subr.mxu0 0.0
          %2327 = vmatpush1.msra.mxu0 0.0
          %2328 = vmatprep.subr.mxu0 0.0
          %2329 = vmatpush1.msra.mxu0 0.0
          %2330 = vmatprep.subr.mxu0 0.0
          %2331 = vmatpush1.msra.mxu0 0.0
          %2332 = vmatprep.subr.mxu0 0.0
          %2333 = vmatpush1.msra.mxu0 0.0
          %2334 = vmatprep.subr.mxu0 0.0
          %2335 = vmatpush1.msra.mxu0 0.0
          %2336 = vmatprep.subr.mxu0 0.0
          %2337 = vmatpush1.msra.mxu0 0.0
          %2338 = vmatprep.mubr.f32.mxu0 0.0
          %2339 = vmatmul.mubr.f32.gmra.mrb[0].mxu0 %v1917
          %v2340 = vpop.f32.mrb[0].mxu0
          %v2341 = vadd.f32 0.0, %v2340
          %v2342 = vpop.f32.mrb[0].mxu0
          %v2343 = vadd.f32 0.0, %v2342
          %2344 = vdwg.mxu0
          %2345 = vmatprep.subr.mxu0 %v1670
          %2346 = vmatpush1.msra.mxu0 %v1669
          %2347 = vmatprep.subr.mxu0 %v1702
          %2348 = vmatpush1.msra.mxu0 %v1701
          %2349 = vmatprep.subr.mxu0 %v1734
          %2350 = vmatpush1.msra.mxu0 %v1733
          %2351 = vmatprep.subr.mxu0 %v1766
          %2352 = vmatpush1.msra.mxu0 %v1765
          %2353 = vmatprep.subr.mxu0 0.0
          %2354 = vmatpush1.msra.mxu0 0.0
          %2355 = vmatprep.subr.mxu0 0.0
          %2356 = vmatpush1.msra.mxu0 0.0
          %2357 = vmatprep.subr.mxu0 0.0
          %2358 = vmatpush1.msra.mxu0 0.0
          %2359 = vmatprep.subr.mxu0 0.0
          %2360 = vmatpush1.msra.mxu0 0.0
          %2361 = vmatprep.subr.mxu0 0.0
          %2362 = vmatpush1.msra.mxu0 0.0
          %2363 = vmatprep.subr.mxu0 0.0
          %2364 = vmatpush1.msra.mxu0 0.0
          %2365 = vmatprep.subr.mxu0 0.0
          %2366 = vmatpush1.msra.mxu0 0.0
          %2367 = vmatprep.subr.mxu0 0.0
          %2368 = vmatpush1.msra.mxu0 0.0
          %2369 = vmatprep.subr.mxu0 0.0
          %2370 = vmatpush1.msra.mxu0 0.0
          %2371 = vmatprep.subr.mxu0 0.0
          %2372 = vmatpush1.msra.mxu0 0.0
          %2373 = vmatprep.subr.mxu0 0.0
          %2374 = vmatpush1.msra.mxu0 0.0
          %2375 = vmatprep.subr.mxu0 0.0
          %2376 = vmatpush1.msra.mxu0 0.0
          %2377 = vmatprep.subr.mxu0 0.0
          %2378 = vmatpush1.msra.mxu0 0.0
          %2379 = vmatprep.subr.mxu0 0.0
          %2380 = vmatpush1.msra.mxu0 0.0
          %2381 = vmatprep.subr.mxu0 0.0
          %2382 = vmatpush1.msra.mxu0 0.0
          %2383 = vmatprep.subr.mxu0 0.0
          %2384 = vmatpush1.msra.mxu0 0.0
          %2385 = vmatprep.subr.mxu0 0.0
          %2386 = vmatpush1.msra.mxu0 0.0
          %2387 = vmatprep.subr.mxu0 0.0
          %2388 = vmatpush1.msra.mxu0 0.0
          %2389 = vmatprep.subr.mxu0 0.0
          %2390 = vmatpush1.msra.mxu0 0.0
          %2391 = vmatprep.subr.mxu0 0.0
          %2392 = vmatpush1.msra.mxu0 0.0
          %2393 = vmatprep.subr.mxu0 0.0
          %2394 = vmatpush1.msra.mxu0 0.0
          %2395 = vmatprep.subr.mxu0 0.0
          %2396 = vmatpush1.msra.mxu0 0.0
          %2397 = vmatprep.subr.mxu0 0.0
          %2398 = vmatpush1.msra.mxu0 0.0
          %2399 = vmatprep.subr.mxu0 0.0
          %2400 = vmatpush1.msra.mxu0 0.0
          %2401 = vmatprep.subr.mxu0 0.0
          %2402 = vmatpush1.msra.mxu0 0.0
          %2403 = vmatprep.subr.mxu0 0.0
          %2404 = vmatpush1.msra.mxu0 0.0
          %2405 = vmatprep.subr.mxu0 0.0
          %2406 = vmatpush1.msra.mxu0 0.0
          %2407 = vmatprep.subr.mxu0 0.0
          %2408 = vmatpush1.msra.mxu0 0.0
          %2409 = vmatprep.mubr.f32.mxu0 0.0
          %2410 = vmatmul.mubr.f32.gmra.mrb[0].mxu0 %v1917
          %v2411 = vpop.f32.mrb[0].mxu0
          %v2412 = vadd.f32 0.0, %v2411
          %v2413 = vpop.f32.mrb[0].mxu0
          %v2414 = vadd.f32 0.0, %v2413
          %2415 = vdwg.mxu0
          %2416 = vmatprep.subr.mxu0 %v1672
          %2417 = vmatpush1.msra.mxu0 %v1671
          %2418 = vmatprep.subr.mxu0 %v1704
          %2419 = vmatpush1.msra.mxu0 %v1703
          %2420 = vmatprep.subr.mxu0 %v1736
          %2421 = vmatpush1.msra.mxu0 %v1735
          %2422 = vmatprep.subr.mxu0 %v1768
          %2423 = vmatpush1.msra.mxu0 %v1767
          %2424 = vmatprep.subr.mxu0 0.0
          %2425 = vmatpush1.msra.mxu0 0.0
          %2426 = vmatprep.subr.mxu0 0.0
          %2427 = vmatpush1.msra.mxu0 0.0
          %2428 = vmatprep.subr.mxu0 0.0
          %2429 = vmatpush1.msra.mxu0 0.0
          %2430 = vmatprep.subr.mxu0 0.0
          %2431 = vmatpush1.msra.mxu0 0.0
          %2432 = vmatprep.subr.mxu0 0.0
          %2433 = vmatpush1.msra.mxu0 0.0
          %2434 = vmatprep.subr.mxu0 0.0
          %2435 = vmatpush1.msra.mxu0 0.0
          %2436 = vmatprep.subr.mxu0 0.0
          %2437 = vmatpush1.msra.mxu0 0.0
          %2438 = vmatprep.subr.mxu0 0.0
          %2439 = vmatpush1.msra.mxu0 0.0
          %2440 = vmatprep.subr.mxu0 0.0
          %2441 = vmatpush1.msra.mxu0 0.0
          %2442 = vmatprep.subr.mxu0 0.0
          %2443 = vmatpush1.msra.mxu0 0.0
          %2444 = vmatprep.subr.mxu0 0.0
          %2445 = vmatpush1.msra.mxu0 0.0
          %2446 = vmatprep.subr.mxu0 0.0
          %2447 = vmatpush1.msra.mxu0 0.0
          %2448 = vmatprep.subr.mxu0 0.0
          %2449 = vmatpush1.msra.mxu0 0.0
          %2450 = vmatprep.subr.mxu0 0.0
          %2451 = vmatpush1.msra.mxu0 0.0
          %2452 = vmatprep.subr.mxu0 0.0
          %2453 = vmatpush1.msra.mxu0 0.0
          %2454 = vmatprep.subr.mxu0 0.0
          %2455 = vmatpush1.msra.mxu0 0.0
          %2456 = vmatprep.subr.mxu0 0.0
          %2457 = vmatpush1.msra.mxu0 0.0
          %2458 = vmatprep.subr.mxu0 0.0
          %2459 = vmatpush1.msra.mxu0 0.0
          %2460 = vmatprep.subr.mxu0 0.0
          %2461 = vmatpush1.msra.mxu0 0.0
          %2462 = vmatprep.subr.mxu0 0.0
          %2463 = vmatpush1.msra.mxu0 0.0
          %2464 = vmatprep.subr.mxu0 0.0
          %2465 = vmatpush1.msra.mxu0 0.0
          %2466 = vmatprep.subr.mxu0 0.0
          %2467 = vmatpush1.msra.mxu0 0.0
          %2468 = vmatprep.subr.mxu0 0.0
          %2469 = vmatpush1.msra.mxu0 0.0
          %2470 = vmatprep.subr.mxu0 0.0
          %2471 = vmatpush1.msra.mxu0 0.0
          %2472 = vmatprep.subr.mxu0 0.0
          %2473 = vmatpush1.msra.mxu0 0.0
          %2474 = vmatprep.subr.mxu0 0.0
          %2475 = vmatpush1.msra.mxu0 0.0
          %2476 = vmatprep.subr.mxu0 0.0
          %2477 = vmatpush1.msra.mxu0 0.0
          %2478 = vmatprep.subr.mxu0 0.0
          %2479 = vmatpush1.msra.mxu0 0.0
          %2480 = vmatprep.mubr.f32.mxu0 0.0
          %2481 = vmatmul.mubr.f32.gmra.mrb[0].mxu0 %v1917
          %v2482 = vpop.f32.mrb[0].mxu0
          %v2483 = vadd.f32 0.0, %v2482
          %v2484 = vpop.f32.mrb[0].mxu0
          %v2485 = vadd.f32 0.0, %v2484
          %2486 = vdwg.mxu0
          %2487 = vmatprep.subr.mxu0 %v1674
          %2488 = vmatpush1.msra.mxu0 %v1673
          %2489 = vmatprep.subr.mxu0 %v1706
          %2490 = vmatpush1.msra.mxu0 %v1705
          %2491 = vmatprep.subr.mxu0 %v1738
          %2492 = vmatpush1.msra.mxu0 %v1737
          %2493 = vmatprep.subr.mxu0 %v1770
          %2494 = vmatpush1.msra.mxu0 %v1769
          %2495 = vmatprep.subr.mxu0 0.0
          %2496 = vmatpush1.msra.mxu0 0.0
          %2497 = vmatprep.subr.mxu0 0.0
          %2498 = vmatpush1.msra.mxu0 0.0
          %2499 = vmatprep.subr.mxu0 0.0
          %2500 = vmatpush1.msra.mxu0 0.0
          %2501 = vmatprep.subr.mxu0 0.0
          %2502 = vmatpush1.msra.mxu0 0.0
          %2503 = vmatprep.subr.mxu0 0.0
          %2504 = vmatpush1.msra.mxu0 0.0
          %2505 = vmatprep.subr.mxu0 0.0
          %2506 = vmatpush1.msra.mxu0 0.0
          %2507 = vmatprep.subr.mxu0 0.0
          %2508 = vmatpush1.msra.mxu0 0.0
          %2509 = vmatprep.subr.mxu0 0.0
          %2510 = vmatpush1.msra.mxu0 0.0
          %2511 = vmatprep.subr.mxu0 0.0
          %2512 = vmatpush1.msra.mxu0 0.0
          %2513 = vmatprep.subr.mxu0 0.0
          %2514 = vmatpush1.msra.mxu0 0.0
          %2515 = vmatprep.subr.mxu0 0.0
          %2516 = vmatpush1.msra.mxu0 0.0
          %2517 = vmatprep.subr.mxu0 0.0
          %2518 = vmatpush1.msra.mxu0 0.0
          %2519 = vmatprep.subr.mxu0 0.0
          %2520 = vmatpush1.msra.mxu0 0.0
          %2521 = vmatprep.subr.mxu0 0.0
          %2522 = vmatpush1.msra.mxu0 0.0
          %2523 = vmatprep.subr.mxu0 0.0
          %2524 = vmatpush1.msra.mxu0 0.0
          %2525 = vmatprep.subr.mxu0 0.0
          %2526 = vmatpush1.msra.mxu0 0.0
          %2527 = vmatprep.subr.mxu0 0.0
          %2528 = vmatpush1.msra.mxu0 0.0
          %2529 = vmatprep.subr.mxu0 0.0
          %2530 = vmatpush1.msra.mxu0 0.0
          %2531 = vmatprep.subr.mxu0 0.0
          %2532 = vmatpush1.msra.mxu0 0.0
          %2533 = vmatprep.subr.mxu0 0.0
          %2534 = vmatpush1.msra.mxu0 0.0
          %2535 = vmatprep.subr.mxu0 0.0
          %2536 = vmatpush1.msra.mxu0 0.0
          %2537 = vmatprep.subr.mxu0 0.0
          %2538 = vmatpush1.msra.mxu0 0.0
          %2539 = vmatprep.subr.mxu0 0.0
          %2540 = vmatpush1.msra.mxu0 0.0
          %2541 = vmatprep.subr.mxu0 0.0
          %2542 = vmatpush1.msra.mxu0 0.0
          %2543 = vmatprep.subr.mxu0 0.0
          %2544 = vmatpush1.msra.mxu0 0.0
          %2545 = vmatprep.subr.mxu0 0.0
          %2546 = vmatpush1.msra.mxu0 0.0
          %2547 = vmatprep.subr.mxu0 0.0
          %2548 = vmatpush1.msra.mxu0 0.0
          %2549 = vmatprep.subr.mxu0 0.0
          %2550 = vmatpush1.msra.mxu0 0.0
          %2551 = vmatprep.mubr.f32.mxu0 0.0
          %2552 = vmatmul.mubr.f32.gmra.mrb[0].mxu0 %v1917
          %v2553 = vpop.f32.mrb[0].mxu0
          %v2554 = vadd.f32 0.0, %v2553
          %v2555 = vpop.f32.mrb[0].mxu0
          %v2556 = vadd.f32 0.0, %v2555
          %2557 = vdwg.mxu0
          %2558 = vmatprep.subr.mxu0 %v1676
          %2559 = vmatpush1.msra.mxu0 %v1675
          %2560 = vmatprep.subr.mxu0 %v1708
          %2561 = vmatpush1.msra.mxu0 %v1707
          %2562 = vmatprep.subr.mxu0 %v1740
          %2563 = vmatpush1.msra.mxu0 %v1739
          %2564 = vmatprep.subr.mxu0 %v1772
          %2565 = vmatpush1.msra.mxu0 %v1771
          %2566 = vmatprep.subr.mxu0 0.0
          %2567 = vmatpush1.msra.mxu0 0.0
          %2568 = vmatprep.subr.mxu0 0.0
          %2569 = vmatpush1.msra.mxu0 0.0
          %2570 = vmatprep.subr.mxu0 0.0
          %2571 = vmatpush1.msra.mxu0 0.0
          %2572 = vmatprep.subr.mxu0 0.0
          %2573 = vmatpush1.msra.mxu0 0.0
          %2574 = vmatprep.subr.mxu0 0.0
          %2575 = vmatpush1.msra.mxu0 0.0
          %2576 = vmatprep.subr.mxu0 0.0
          %2577 = vmatpush1.msra.mxu0 0.0
          %2578 = vmatprep.subr.mxu0 0.0
          %2579 = vmatpush1.msra.mxu0 0.0
          %2580 = vmatprep.subr.mxu0 0.0
          %2581 = vmatpush1.msra.mxu0 0.0
          %2582 = vmatprep.subr.mxu0 0.0
          %2583 = vmatpush1.msra.mxu0 0.0
          %2584 = vmatprep.subr.mxu0 0.0
          %2585 = vmatpush1.msra.mxu0 0.0
          %2586 = vmatprep.subr.mxu0 0.0
          %2587 = vmatpush1.msra.mxu0 0.0
          %2588 = vmatprep.subr.mxu0 0.0
          %2589 = vmatpush1.msra.mxu0 0.0
          %2590 = vmatprep.subr.mxu0 0.0
          %2591 = vmatpush1.msra.mxu0 0.0
          %2592 = vmatprep.subr.mxu0 0.0
          %2593 = vmatpush1.msra.mxu0 0.0
          %2594 = vmatprep.subr.mxu0 0.0
          %2595 = vmatpush1.msra.mxu0 0.0
          %2596 = vmatprep.subr.mxu0 0.0
          %2597 = vmatpush1.msra.mxu0 0.0
          %2598 = vmatprep.subr.mxu0 0.0
          %2599 = vmatpush1.msra.mxu0 0.0
          %2600 = vmatprep.subr.mxu0 0.0
          %2601 = vmatpush1.msra.mxu0 0.0
          %2602 = vmatprep.subr.mxu0 0.0
          %2603 = vmatpush1.msra.mxu0 0.0
          %2604 = vmatprep.subr.mxu0 0.0
          %2605 = vmatpush1.msra.mxu0 0.0
          %2606 = vmatprep.subr.mxu0 0.0
          %2607 = vmatpush1.msra.mxu0 0.0
          %2608 = vmatprep.subr.mxu0 0.0
          %2609 = vmatpush1.msra.mxu0 0.0
          %2610 = vmatprep.subr.mxu0 0.0
          %2611 = vmatpush1.msra.mxu0 0.0
          %2612 = vmatprep.subr.mxu0 0.0
          %2613 = vmatpush1.msra.mxu0 0.0
          %2614 = vmatprep.subr.mxu0 0.0
          %2615 = vmatpush1.msra.mxu0 0.0
          %2616 = vmatprep.subr.mxu0 0.0
          %2617 = vmatpush1.msra.mxu0 0.0
          %2618 = vmatprep.subr.mxu0 0.0
          %2619 = vmatpush1.msra.mxu0 0.0
          %2620 = vmatprep.subr.mxu0 0.0
          %2621 = vmatpush1.msra.mxu0 0.0
          %2622 = vmatprep.mubr.f32.mxu0 0.0
          %2623 = vmatmul.mubr.f32.gmra.mrb[0].mxu0 %v1917
          %v2624 = vpop.f32.mrb[0].mxu0
          %v2625 = vadd.f32 0.0, %v2624
          %v2626 = vpop.f32.mrb[0].mxu0
          %v2627 = vadd.f32 0.0, %v2626
          %2628 = vdwg.mxu0
          %2629 = vmatprep.subr.mxu0 %v1678
          %2630 = vmatpush1.msra.mxu0 %v1677
          %2631 = vmatprep.subr.mxu0 %v1710
          %2632 = vmatpush1.msra.mxu0 %v1709
          %2633 = vmatprep.subr.mxu0 %v1742
          %2634 = vmatpush1.msra.mxu0 %v1741
          %2635 = vmatprep.subr.mxu0 %v1774
          %2636 = vmatpush1.msra.mxu0 %v1773
          %2637 = vmatprep.subr.mxu0 0.0
          %2638 = vmatpush1.msra.mxu0 0.0
          %2639 = vmatprep.subr.mxu0 0.0
          %2640 = vmatpush1.msra.mxu0 0.0
          %2641 = vmatprep.subr.mxu0 0.0
          %2642 = vmatpush1.msra.mxu0 0.0
          %2643 = vmatprep.subr.mxu0 0.0
          %2644 = vmatpush1.msra.mxu0 0.0
          %2645 = vmatprep.subr.mxu0 0.0
          %2646 = vmatpush1.msra.mxu0 0.0
          %2647 = vmatprep.subr.mxu0 0.0
          %2648 = vmatpush1.msra.mxu0 0.0
          %2649 = vmatprep.subr.mxu0 0.0
          %2650 = vmatpush1.msra.mxu0 0.0
          %2651 = vmatprep.subr.mxu0 0.0
          %2652 = vmatpush1.msra.mxu0 0.0
          %2653 = vmatprep.subr.mxu0 0.0
          %2654 = vmatpush1.msra.mxu0 0.0
          %2655 = vmatprep.subr.mxu0 0.0
          %2656 = vmatpush1.msra.mxu0 0.0
          %2657 = vmatprep.subr.mxu0 0.0
          %2658 = vmatpush1.msra.mxu0 0.0
          %2659 = vmatprep.subr.mxu0 0.0
          %2660 = vmatpush1.msra.mxu0 0.0
          %2661 = vmatprep.subr.mxu0 0.0
          %2662 = vmatpush1.msra.mxu0 0.0
          %2663 = vmatprep.subr.mxu0 0.0
          %2664 = vmatpush1.msra.mxu0 0.0
          %2665 = vmatprep.subr.mxu0 0.0
          %2666 = vmatpush1.msra.mxu0 0.0
          %2667 = vmatprep.subr.mxu0 0.0
          %2668 = vmatpush1.msra.mxu0 0.0
          %2669 = vmatprep.subr.mxu0 0.0
          %2670 = vmatpush1.msra.mxu0 0.0
          %2671 = vmatprep.subr.mxu0 0.0
          %2672 = vmatpush1.msra.mxu0 0.0
          %2673 = vmatprep.subr.mxu0 0.0
          %2674 = vmatpush1.msra.mxu0 0.0
          %2675 = vmatprep.subr.mxu0 0.0
          %2676 = vmatpush1.msra.mxu0 0.0
          %2677 = vmatprep.subr.mxu0 0.0
          %2678 = vmatpush1.msra.mxu0 0.0
          %2679 = vmatprep.subr.mxu0 0.0
          %2680 = vmatpush1.msra.mxu0 0.0
          %2681 = vmatprep.subr.mxu0 0.0
          %2682 = vmatpush1.msra.mxu0 0.0
          %2683 = vmatprep.subr.mxu0 0.0
          %2684 = vmatpush1.msra.mxu0 0.0
          %2685 = vmatprep.subr.mxu0 0.0
          %2686 = vmatpush1.msra.mxu0 0.0
          %2687 = vmatprep.subr.mxu0 0.0
          %2688 = vmatpush1.msra.mxu0 0.0
          %2689 = vmatprep.subr.mxu0 0.0
          %2690 = vmatpush1.msra.mxu0 0.0
          %2691 = vmatprep.subr.mxu0 0.0
          %2692 = vmatpush1.msra.mxu0 0.0
          %2693 = vmatprep.mubr.f32.mxu0 0.0
          %2694 = vmatmul.mubr.f32.gmra.mrb[0].mxu0 %v1917
          %v2695 = vpop.f32.mrb[0].mxu0
          %v2696 = vadd.f32 0.0, %v2695
          %v2697 = vpop.f32.mrb[0].mxu0
          %v2698 = vadd.f32 0.0, %v2697
          %2699 = vdwg.mxu0
          %2700 = vmatprep.subr.mxu0 %v1680
          %2701 = vmatpush1.msra.mxu0 %v1679
          %2702 = vmatprep.subr.mxu0 %v1712
          %2703 = vmatpush1.msra.mxu0 %v1711
          %2704 = vmatprep.subr.mxu0 %v1744
          %2705 = vmatpush1.msra.mxu0 %v1743
          %2706 = vmatprep.subr.mxu0 %v1776
          %2707 = vmatpush1.msra.mxu0 %v1775
          %2708 = vmatprep.subr.mxu0 0.0
          %2709 = vmatpush1.msra.mxu0 0.0
          %2710 = vmatprep.subr.mxu0 0.0
          %2711 = vmatpush1.msra.mxu0 0.0
          %2712 = vmatprep.subr.mxu0 0.0
          %2713 = vmatpush1.msra.mxu0 0.0
          %2714 = vmatprep.subr.mxu0 0.0
          %2715 = vmatpush1.msra.mxu0 0.0
          %2716 = vmatprep.subr.mxu0 0.0
          %2717 = vmatpush1.msra.mxu0 0.0
          %2718 = vmatprep.subr.mxu0 0.0
          %2719 = vmatpush1.msra.mxu0 0.0
          %2720 = vmatprep.subr.mxu0 0.0
          %2721 = vmatpush1.msra.mxu0 0.0
          %2722 = vmatprep.subr.mxu0 0.0
          %2723 = vmatpush1.msra.mxu0 0.0
          %2724 = vmatprep.subr.mxu0 0.0
          %2725 = vmatpush1.msra.mxu0 0.0
          %2726 = vmatprep.subr.mxu0 0.0
          %2727 = vmatpush1.msra.mxu0 0.0
          %2728 = vmatprep.subr.mxu0 0.0
          %2729 = vmatpush1.msra.mxu0 0.0
          %2730 = vmatprep.subr.mxu0 0.0
          %2731 = vmatpush1.msra.mxu0 0.0
          %2732 = vmatprep.subr.mxu0 0.0
          %2733 = vmatpush1.msra.mxu0 0.0
          %2734 = vmatprep.subr.mxu0 0.0
          %2735 = vmatpush1.msra.mxu0 0.0
          %2736 = vmatprep.subr.mxu0 0.0
          %2737 = vmatpush1.msra.mxu0 0.0
          %2738 = vmatprep.subr.mxu0 0.0
          %2739 = vmatpush1.msra.mxu0 0.0
          %2740 = vmatprep.subr.mxu0 0.0
          %2741 = vmatpush1.msra.mxu0 0.0
          %2742 = vmatprep.subr.mxu0 0.0
          %2743 = vmatpush1.msra.mxu0 0.0
          %2744 = vmatprep.subr.mxu0 0.0
          %2745 = vmatpush1.msra.mxu0 0.0
          %2746 = vmatprep.subr.mxu0 0.0
          %2747 = vmatpush1.msra.mxu0 0.0
          %2748 = vmatprep.subr.mxu0 0.0
          %2749 = vmatpush1.msra.mxu0 0.0
          %2750 = vmatprep.subr.mxu0 0.0
          %2751 = vmatpush1.msra.mxu0 0.0
          %2752 = vmatprep.subr.mxu0 0.0
          %2753 = vmatpush1.msra.mxu0 0.0
          %2754 = vmatprep.subr.mxu0 0.0
          %2755 = vmatpush1.msra.mxu0 0.0
          %2756 = vmatprep.subr.mxu0 0.0
          %2757 = vmatpush1.msra.mxu0 0.0
          %2758 = vmatprep.subr.mxu0 0.0
          %2759 = vmatpush1.msra.mxu0 0.0
          %2760 = vmatprep.subr.mxu0 0.0
          %2761 = vmatpush1.msra.mxu0 0.0
          %2762 = vmatprep.subr.mxu0 0.0
          %2763 = vmatpush1.msra.mxu0 0.0
          %2764 = vmatprep.mubr.f32.mxu0 0.0
          %2765 = vmatmul.mubr.f32.gmra.mrb[0].mxu0 %v1917
          %v2766 = vpop.f32.mrb[0].mxu0
          %v2767 = vadd.f32 0.0, %v2766
          %v2768 = vpop.f32.mrb[0].mxu0
          %v2769 = vadd.f32 0.0, %v2768
          %2770 = vdwg.mxu0
          %2771 = vmatprep.subr.mxu0 %v1682
          %2772 = vmatpush1.msra.mxu0 %v1681
          %2773 = vmatprep.subr.mxu0 %v1714
          %2774 = vmatpush1.msra.mxu0 %v1713
          %2775 = vmatprep.subr.mxu0 %v1746
          %2776 = vmatpush1.msra.mxu0 %v1745
          %2777 = vmatprep.subr.mxu0 %v1778
          %2778 = vmatpush1.msra.mxu0 %v1777
          %2779 = vmatprep.subr.mxu0 0.0
          %2780 = vmatpush1.msra.mxu0 0.0
          %2781 = vmatprep.subr.mxu0 0.0
          %2782 = vmatpush1.msra.mxu0 0.0
          %2783 = vmatprep.subr.mxu0 0.0
          %2784 = vmatpush1.msra.mxu0 0.0
          %2785 = vmatprep.subr.mxu0 0.0
          %2786 = vmatpush1.msra.mxu0 0.0
          %2787 = vmatprep.subr.mxu0 0.0
          %2788 = vmatpush1.msra.mxu0 0.0
          %2789 = vmatprep.subr.mxu0 0.0
          %2790 = vmatpush1.msra.mxu0 0.0
          %2791 = vmatprep.subr.mxu0 0.0
          %2792 = vmatpush1.msra.mxu0 0.0
          %2793 = vmatprep.subr.mxu0 0.0
          %2794 = vmatpush1.msra.mxu0 0.0
          %2795 = vmatprep.subr.mxu0 0.0
          %2796 = vmatpush1.msra.mxu0 0.0
          %2797 = vmatprep.subr.mxu0 0.0
          %2798 = vmatpush1.msra.mxu0 0.0
          %2799 = vmatprep.subr.mxu0 0.0
          %2800 = vmatpush1.msra.mxu0 0.0
          %2801 = vmatprep.subr.mxu0 0.0
          %2802 = vmatpush1.msra.mxu0 0.0
          %2803 = vmatprep.subr.mxu0 0.0
          %2804 = vmatpush1.msra.mxu0 0.0
          %2805 = vmatprep.subr.mxu0 0.0
          %2806 = vmatpush1.msra.mxu0 0.0
          %2807 = vmatprep.subr.mxu0 0.0
          %2808 = vmatpush1.msra.mxu0 0.0
          %2809 = vmatprep.subr.mxu0 0.0
          %2810 = vmatpush1.msra.mxu0 0.0
          %2811 = vmatprep.subr.mxu0 0.0
          %2812 = vmatpush1.msra.mxu0 0.0
          %2813 = vmatprep.subr.mxu0 0.0
          %2814 = vmatpush1.msra.mxu0 0.0
          %2815 = vmatprep.subr.mxu0 0.0
          %2816 = vmatpush1.msra.mxu0 0.0
          %2817 = vmatprep.subr.mxu0 0.0
          %2818 = vmatpush1.msra.mxu0 0.0
          %2819 = vmatprep.subr.mxu0 0.0
          %2820 = vmatpush1.msra.mxu0 0.0
          %2821 = vmatprep.subr.mxu0 0.0
          %2822 = vmatpush1.msra.mxu0 0.0
          %2823 = vmatprep.subr.mxu0 0.0
          %2824 = vmatpush1.msra.mxu0 0.0
          %2825 = vmatprep.subr.mxu0 0.0
          %2826 = vmatpush1.msra.mxu0 0.0
          %2827 = vmatprep.subr.mxu0 0.0
          %2828 = vmatpush1.msra.mxu0 0.0
          %2829 = vmatprep.subr.mxu0 0.0
          %2830 = vmatpush1.msra.mxu0 0.0
          %2831 = vmatprep.subr.mxu0 0.0
          %2832 = vmatpush1.msra.mxu0 0.0
          %2833 = vmatprep.subr.mxu0 0.0
          %2834 = vmatpush1.msra.mxu0 0.0
          %2835 = vmatprep.mubr.f32.mxu0 0.0
          %2836 = vmatmul.mubr.f32.gmra.mrb[0].mxu0 %v1917
          %v2837 = vpop.f32.mrb[0].mxu0
          %v2838 = vadd.f32 0.0, %v2837
          %v2839 = vpop.f32.mrb[0].mxu0
          %v2840 = vadd.f32 0.0, %v2839
          %2841 = vdwg.mxu0
          %2842 = vmatprep.subr.mxu0 %v1684
          %2843 = vmatpush1.msra.mxu0 %v1683
          %2844 = vmatprep.subr.mxu0 %v1716
          %2845 = vmatpush1.msra.mxu0 %v1715
          %2846 = vmatprep.subr.mxu0 %v1748
          %2847 = vmatpush1.msra.mxu0 %v1747
          %2848 = vmatprep.subr.mxu0 %v1780
          %2849 = vmatpush1.msra.mxu0 %v1779
          %2850 = vmatprep.subr.mxu0 0.0
          %2851 = vmatpush1.msra.mxu0 0.0
          %2852 = vmatprep.subr.mxu0 0.0
          %2853 = vmatpush1.msra.mxu0 0.0
          %2854 = vmatprep.subr.mxu0 0.0
          %2855 = vmatpush1.msra.mxu0 0.0
          %2856 = vmatprep.subr.mxu0 0.0
          %2857 = vmatpush1.msra.mxu0 0.0
          %2858 = vmatprep.subr.mxu0 0.0
          %2859 = vmatpush1.msra.mxu0 0.0
          %2860 = vmatprep.subr.mxu0 0.0
          %2861 = vmatpush1.msra.mxu0 0.0
          %2862 = vmatprep.subr.mxu0 0.0
          %2863 = vmatpush1.msra.mxu0 0.0
          %2864 = vmatprep.subr.mxu0 0.0
          %2865 = vmatpush1.msra.mxu0 0.0
          %2866 = vmatprep.subr.mxu0 0.0
          %2867 = vmatpush1.msra.mxu0 0.0
          %2868 = vmatprep.subr.mxu0 0.0
          %2869 = vmatpush1.msra.mxu0 0.0
          %2870 = vmatprep.subr.mxu0 0.0
          %2871 = vmatpush1.msra.mxu0 0.0
          %2872 = vmatprep.subr.mxu0 0.0
          %2873 = vmatpush1.msra.mxu0 0.0
          %2874 = vmatprep.subr.mxu0 0.0
          %2875 = vmatpush1.msra.mxu0 0.0
          %2876 = vmatprep.subr.mxu0 0.0
          %2877 = vmatpush1.msra.mxu0 0.0
          %2878 = vmatprep.subr.mxu0 0.0
          %2879 = vmatpush1.msra.mxu0 0.0
          %2880 = vmatprep.subr.mxu0 0.0
          %2881 = vmatpush1.msra.mxu0 0.0
          %2882 = vmatprep.subr.mxu0 0.0
          %2883 = vmatpush1.msra.mxu0 0.0
          %2884 = vmatprep.subr.mxu0 0.0
          %2885 = vmatpush1.msra.mxu0 0.0
          %2886 = vmatprep.subr.mxu0 0.0
          %2887 = vmatpush1.msra.mxu0 0.0
          %2888 = vmatprep.subr.mxu0 0.0
          %2889 = vmatpush1.msra.mxu0 0.0
          %2890 = vmatprep.subr.mxu0 0.0
          %2891 = vmatpush1.msra.mxu0 0.0
          %2892 = vmatprep.subr.mxu0 0.0
          %2893 = vmatpush1.msra.mxu0 0.0
          %2894 = vmatprep.subr.mxu0 0.0
          %2895 = vmatpush1.msra.mxu0 0.0
          %2896 = vmatprep.subr.mxu0 0.0
          %2897 = vmatpush1.msra.mxu0 0.0
          %2898 = vmatprep.subr.mxu0 0.0
          %2899 = vmatpush1.msra.mxu0 0.0
          %2900 = vmatprep.subr.mxu0 0.0
          %2901 = vmatpush1.msra.mxu0 0.0
          %2902 = vmatprep.subr.mxu0 0.0
          %2903 = vmatpush1.msra.mxu0 0.0
          %2904 = vmatprep.subr.mxu0 0.0
          %2905 = vmatpush1.msra.mxu0 0.0
          %2906 = vmatprep.mubr.f32.mxu0 0.0
          %2907 = vmatmul.mubr.f32.gmra.mrb[0].mxu0 %v1917
          %v2908 = vpop.f32.mrb[0].mxu0
          %v2909 = vadd.f32 0.0, %v2908
          %v2910 = vpop.f32.mrb[0].mxu0
          %v2911 = vadd.f32 0.0, %v2910
          %2912 = vdwg.mxu0
          %2913 = vmatprep.subr.mxu0 %v1686
          %2914 = vmatpush1.msra.mxu0 %v1685
          %2915 = vmatprep.subr.mxu0 %v1718
          %2916 = vmatpush1.msra.mxu0 %v1717
          %2917 = vmatprep.subr.mxu0 %v1750
          %2918 = vmatpush1.msra.mxu0 %v1749
          %2919 = vmatprep.subr.mxu0 %v1782
          %2920 = vmatpush1.msra.mxu0 %v1781
          %2921 = vmatprep.subr.mxu0 0.0
          %2922 = vmatpush1.msra.mxu0 0.0
          %2923 = vmatprep.subr.mxu0 0.0
          %2924 = vmatpush1.msra.mxu0 0.0
          %2925 = vmatprep.subr.mxu0 0.0
          %2926 = vmatpush1.msra.mxu0 0.0
          %2927 = vmatprep.subr.mxu0 0.0
          %2928 = vmatpush1.msra.mxu0 0.0
          %2929 = vmatprep.subr.mxu0 0.0
          %2930 = vmatpush1.msra.mxu0 0.0
          %2931 = vmatprep.subr.mxu0 0.0
          %2932 = vmatpush1.msra.mxu0 0.0
          %2933 = vmatprep.subr.mxu0 0.0
          %2934 = vmatpush1.msra.mxu0 0.0
          %2935 = vmatprep.subr.mxu0 0.0
          %2936 = vmatpush1.msra.mxu0 0.0
          %2937 = vmatprep.subr.mxu0 0.0
          %2938 = vmatpush1.msra.mxu0 0.0
          %2939 = vmatprep.subr.mxu0 0.0
          %2940 = vmatpush1.msra.mxu0 0.0
          %2941 = vmatprep.subr.mxu0 0.0
          %2942 = vmatpush1.msra.mxu0 0.0
          %2943 = vmatprep.subr.mxu0 0.0
          %2944 = vmatpush1.msra.mxu0 0.0
          %2945 = vmatprep.subr.mxu0 0.0
          %2946 = vmatpush1.msra.mxu0 0.0
          %2947 = vmatprep.subr.mxu0 0.0
          %2948 = vmatpush1.msra.mxu0 0.0
          %2949 = vmatprep.subr.mxu0 0.0
          %2950 = vmatpush1.msra.mxu0 0.0
          %2951 = vmatprep.subr.mxu0 0.0
          %2952 = vmatpush1.msra.mxu0 0.0
          %2953 = vmatprep.subr.mxu0 0.0
          %2954 = vmatpush1.msra.mxu0 0.0
          %2955 = vmatprep.subr.mxu0 0.0
          %2956 = vmatpush1.msra.mxu0 0.0
          %2957 = vmatprep.subr.mxu0 0.0
          %2958 = vmatpush1.msra.mxu0 0.0
          %2959 = vmatprep.subr.mxu0 0.0
          %2960 = vmatpush1.msra.mxu0 0.0
          %2961 = vmatprep.subr.mxu0 0.0
          %2962 = vmatpush1.msra.mxu0 0.0
          %2963 = vmatprep.subr.mxu0 0.0
          %2964 = vmatpush1.msra.mxu0 0.0
          %2965 = vmatprep.subr.mxu0 0.0
          %2966 = vmatpush1.msra.mxu0 0.0
          %2967 = vmatprep.subr.mxu0 0.0
          %2968 = vmatpush1.msra.mxu0 0.0
          %2969 = vmatprep.subr.mxu0 0.0
          %2970 = vmatpush1.msra.mxu0 0.0
          %2971 = vmatprep.subr.mxu0 0.0
          %2972 = vmatpush1.msra.mxu0 0.0
          %2973 = vmatprep.subr.mxu0 0.0
          %2974 = vmatpush1.msra.mxu0 0.0
          %2975 = vmatprep.subr.mxu0 0.0
          %2976 = vmatpush1.msra.mxu0 0.0
          %2977 = vmatprep.mubr.f32.mxu0 0.0
          %2978 = vmatmul.mubr.f32.gmra.mrb[0].mxu0 %v1917
          %v2979 = vpop.f32.mrb[0].mxu0
          %v2980 = vadd.f32 0.0, %v2979
          %v2981 = vpop.f32.mrb[0].mxu0
          %v2982 = vadd.f32 0.0, %v2981
          %2983 = vdwg.mxu0
          %2984 = vmatprep.subr.mxu0 %v1688
          %2985 = vmatpush1.msra.mxu0 %v1687
          %2986 = vmatprep.subr.mxu0 %v1720
          %2987 = vmatpush1.msra.mxu0 %v1719
          %2988 = vmatprep.subr.mxu0 %v1752
          %2989 = vmatpush1.msra.mxu0 %v1751
          %2990 = vmatprep.subr.mxu0 %v1784
          %2991 = vmatpush1.msra.mxu0 %v1783
          %2992 = vmatprep.subr.mxu0 0.0
          %2993 = vmatpush1.msra.mxu0 0.0
          %2994 = vmatprep.subr.mxu0 0.0
          %2995 = vmatpush1.msra.mxu0 0.0
          %2996 = vmatprep.subr.mxu0 0.0
          %2997 = vmatpush1.msra.mxu0 0.0
          %2998 = vmatprep.subr.mxu0 0.0
          %2999 = vmatpush1.msra.mxu0 0.0
          %3000 = vmatprep.subr.mxu0 0.0
          %3001 = vmatpush1.msra.mxu0 0.0
          %3002 = vmatprep.subr.mxu0 0.0
          %3003 = vmatpush1.msra.mxu0 0.0
          %3004 = vmatprep.subr.mxu0 0.0
          %3005 = vmatpush1.msra.mxu0 0.0
          %3006 = vmatprep.subr.mxu0 0.0
          %3007 = vmatpush1.msra.mxu0 0.0
          %3008 = vmatprep.subr.mxu0 0.0
          %3009 = vmatpush1.msra.mxu0 0.0
          %3010 = vmatprep.subr.mxu0 0.0
          %3011 = vmatpush1.msra.mxu0 0.0
          %3012 = vmatprep.subr.mxu0 0.0
          %3013 = vmatpush1.msra.mxu0 0.0
          %3014 = vmatprep.subr.mxu0 0.0
          %3015 = vmatpush1.msra.mxu0 0.0
          %3016 = vmatprep.subr.mxu0 0.0
          %3017 = vmatpush1.msra.mxu0 0.0
          %3018 = vmatprep.subr.mxu0 0.0
          %3019 = vmatpush1.msra.mxu0 0.0
          %3020 = vmatprep.subr.mxu0 0.0
          %3021 = vmatpush1.msra.mxu0 0.0
          %3022 = vmatprep.subr.mxu0 0.0
          %3023 = vmatpush1.msra.mxu0 0.0
          %3024 = vmatprep.subr.mxu0 0.0
          %3025 = vmatpush1.msra.mxu0 0.0
          %3026 = vmatprep.subr.mxu0 0.0
          %3027 = vmatpush1.msra.mxu0 0.0
          %3028 = vmatprep.subr.mxu0 0.0
          %3029 = vmatpush1.msra.mxu0 0.0
          %3030 = vmatprep.subr.mxu0 0.0
          %3031 = vmatpush1.msra.mxu0 0.0
          %3032 = vmatprep.subr.mxu0 0.0
          %3033 = vmatpush1.msra.mxu0 0.0
          %3034 = vmatprep.subr.mxu0 0.0
          %3035 = vmatpush1.msra.mxu0 0.0
          %3036 = vmatprep.subr.mxu0 0.0
          %3037 = vmatpush1.msra.mxu0 0.0
          %3038 = vmatprep.subr.mxu0 0.0
          %3039 = vmatpush1.msra.mxu0 0.0
          %3040 = vmatprep.subr.mxu0 0.0
          %3041 = vmatpush1.msra.mxu0 0.0
          %3042 = vmatprep.subr.mxu0 0.0
          %3043 = vmatpush1.msra.mxu0 0.0
          %3044 = vmatprep.subr.mxu0 0.0
          %3045 = vmatpush1.msra.mxu0 0.0
          %3046 = vmatprep.subr.mxu0 0.0
          %3047 = vmatpush1.msra.mxu0 0.0
          %3048 = vmatprep.mubr.f32.mxu0 0.0
          %3049 = vmatmul.mubr.f32.gmra.mrb[0].mxu0 %v1917
          %v3050 = vpop.f32.mrb[0].mxu0
          %v3051 = vadd.f32 0.0, %v3050
          %v3052 = vpop.f32.mrb[0].mxu0
          %v3053 = vadd.f32 0.0, %v3052
          %3054 = vdwg.mxu0
          %v3055 = vmul.f32 %v1986, %v1060
          %v3056 = vmul.f32 %v1988, %v1060
          %v3057 = vmul.f32 %v2057, %v1060
          %v3058 = vmul.f32 %v2059, %v1060
          %v3059 = vmul.f32 %v2128, %v1060
          %v3060 = vmul.f32 %v2130, %v1060
          %v3061 = vmul.f32 %v2199, %v1060
          %v3062 = vmul.f32 %v2201, %v1060
          %v3063 = vmul.f32 %v2270, %v1060
          %v3064 = vmul.f32 %v2272, %v1060
          %v3065 = vmul.f32 %v2341, %v1060
          %v3066 = vmul.f32 %v2343, %v1060
          %v3067 = vmul.f32 %v2412, %v1060
          %v3068 = vmul.f32 %v2414, %v1060
          %v3069 = vmul.f32 %v2483, %v1060
          %v3070 = vmul.f32 %v2485, %v1060
          %v3071 = vmul.f32 %v2554, %v1060
          %v3072 = vmul.f32 %v2556, %v1060
          %v3073 = vmul.f32 %v2625, %v1060
          %v3074 = vmul.f32 %v2627, %v1060
          %v3075 = vmul.f32 %v2696, %v1060
          %v3076 = vmul.f32 %v2698, %v1060
          %v3077 = vmul.f32 %v2767, %v1060
          %v3078 = vmul.f32 %v2769, %v1060
          %v3079 = vmul.f32 %v2838, %v1060
          %v3080 = vmul.f32 %v2840, %v1060
          %v3081 = vmul.f32 %v2909, %v1060
          %v3082 = vmul.f32 %v2911, %v1060
          %v3083 = vmul.f32 %v2980, %v1060
          %v3084 = vmul.f32 %v2982, %v1060
          %v3085 = vmul.f32 %v3051, %v1060
          %v3086 = vmul.f32 %v3053, %v1060
          %v3119 = vcombine.low %v3055, %v3056
          %v3120 = vcombine.low %v3057, %v3058
          %v3122 = vunpack.c.l.s4 1983009808
          %v3123 = vunpack.c.0.s8 %v3122
          %v3124 = vlaneseq
          %v3125 = vshrl.u32 %v3124, 7
          %v3126 = vsub.s32 %v3123, %v3125
          %v3127 = vrot.slane %v3119, %v3126
          %v3129 = vunpack.c.l.s4 1983009808
          %v3130 = vunpack.c.0.s8 %v3129
          %v3131 = vlaneseq
          %v3132 = vshrl.u32 %v3131, 7
          %v3133 = vsub.s32 %v3130, %v3132
          %v3134 = vrot.slane %v3120, %v3133
          %v3135 = vcombine.low %v3127, %v3134
          %v3136 = vcombine.low %v3059, %v3060
          %v3137 = vcombine.low %v3061, %v3062
          %v3139 = vunpack.c.l.s4 1983009808
          %v3140 = vunpack.c.0.s8 %v3139
          %v3141 = vlaneseq
          %v3142 = vshrl.u32 %v3141, 7
          %v3143 = vsub.s32 %v3140, %v3142
          %v3144 = vrot.slane %v3136, %v3143
          %v3146 = vunpack.c.l.s4 1983009808
          %v3147 = vunpack.c.0.s8 %v3146
          %v3148 = vlaneseq
          %v3149 = vshrl.u32 %v3148, 7
          %v3150 = vsub.s32 %v3147, %v3149
          %v3151 = vrot.slane %v3137, %v3150
          %v3152 = vcombine.low %v3144, %v3151
          %v3153 = vcombine.low %v3063, %v3064
          %v3154 = vcombine.low %v3065, %v3066
          %v3156 = vunpack.c.l.s4 1983009808
          %v3157 = vunpack.c.0.s8 %v3156
          %v3158 = vlaneseq
          %v3159 = vshrl.u32 %v3158, 7
          %v3160 = vsub.s32 %v3157, %v3159
          %v3161 = vrot.slane %v3153, %v3160
          %v3163 = vunpack.c.l.s4 1983009808
          %v3164 = vunpack.c.0.s8 %v3163
          %v3165 = vlaneseq
          %v3166 = vshrl.u32 %v3165, 7
          %v3167 = vsub.s32 %v3164, %v3166
          %v3168 = vrot.slane %v3154, %v3167
          %v3169 = vcombine.low %v3161, %v3168
          %v3170 = vcombine.low %v3067, %v3068
          %v3171 = vcombine.low %v3069, %v3070
          %v3173 = vunpack.c.l.s4 1983009808
          %v3174 = vunpack.c.0.s8 %v3173
          %v3175 = vlaneseq
          %v3176 = vshrl.u32 %v3175, 7
          %v3177 = vsub.s32 %v3174, %v3176
          %v3178 = vrot.slane %v3170, %v3177
          %v3180 = vunpack.c.l.s4 1983009808
          %v3181 = vunpack.c.0.s8 %v3180
          %v3182 = vlaneseq
          %v3183 = vshrl.u32 %v3182, 7
          %v3184 = vsub.s32 %v3181, %v3183
          %v3185 = vrot.slane %v3171, %v3184
          %v3186 = vcombine.low %v3178, %v3185
          %v3187 = vcombine.low %v3071, %v3072
          %v3188 = vcombine.low %v3073, %v3074
          %v3190 = vunpack.c.l.s4 1983009808
          %v3191 = vunpack.c.0.s8 %v3190
          %v3192 = vlaneseq
          %v3193 = vshrl.u32 %v3192, 7
          %v3194 = vsub.s32 %v3191, %v3193
          %v3195 = vrot.slane %v3187, %v3194
          %v3197 = vunpack.c.l.s4 1983009808
          %v3198 = vunpack.c.0.s8 %v3197
          %v3199 = vlaneseq
          %v3200 = vshrl.u32 %v3199, 7
          %v3201 = vsub.s32 %v3198, %v3200
          %v3202 = vrot.slane %v3188, %v3201
          %v3203 = vcombine.low %v3195, %v3202
          %v3204 = vcombine.low %v3075, %v3076
          %v3205 = vcombine.low %v3077, %v3078
          %v3207 = vunpack.c.l.s4 1983009808
          %v3208 = vunpack.c.0.s8 %v3207
          %v3209 = vlaneseq
          %v3210 = vshrl.u32 %v3209, 7
          %v3211 = vsub.s32 %v3208, %v3210
          %v3212 = vrot.slane %v3204, %v3211
          %v3214 = vunpack.c.l.s4 1983009808
          %v3215 = vunpack.c.0.s8 %v3214
          %v3216 = vlaneseq
          %v3217 = vshrl.u32 %v3216, 7
          %v3218 = vsub.s32 %v3215, %v3217
          %v3219 = vrot.slane %v3205, %v3218
          %v3220 = vcombine.low %v3212, %v3219
          %v3221 = vcombine.low %v3079, %v3080
          %v3222 = vcombine.low %v3081, %v3082
          %v3224 = vunpack.c.l.s4 1983009808
          %v3225 = vunpack.c.0.s8 %v3224
          %v3226 = vlaneseq
          %v3227 = vshrl.u32 %v3226, 7
          %v3228 = vsub.s32 %v3225, %v3227
          %v3229 = vrot.slane %v3221, %v3228
          %v3231 = vunpack.c.l.s4 1983009808
          %v3232 = vunpack.c.0.s8 %v3231
          %v3233 = vlaneseq
          %v3234 = vshrl.u32 %v3233, 7
          %v3235 = vsub.s32 %v3232, %v3234
          %v3236 = vrot.slane %v3222, %v3235
          %v3237 = vcombine.low %v3229, %v3236
          %v3238 = vcombine.low %v3083, %v3084
          %v3239 = vcombine.low %v3085, %v3086
          %v3241 = vunpack.c.l.s4 1983009808
          %v3242 = vunpack.c.0.s8 %v3241
          %v3243 = vlaneseq
          %v3244 = vshrl.u32 %v3243, 7
          %v3245 = vsub.s32 %v3242, %v3244
          %v3246 = vrot.slane %v3238, %v3245
          %v3248 = vunpack.c.l.s4 1983009808
          %v3249 = vunpack.c.0.s8 %v3248
          %v3250 = vlaneseq
          %v3251 = vshrl.u32 %v3250, 7
          %v3252 = vsub.s32 %v3249, %v3251
          %v3253 = vrot.slane %v3239, %v3252
          %v3254 = vcombine.low %v3246, %v3253
          %3263 = vst [vmem:[#allocation2] sm:$0xff] %v3135
          %3264 = vst [vmem:[#allocation2 + $0x8] sm:$0xff] %v3152
          %3265 = vst [vmem:[#allocation2 + $0x10] sm:$0xff] %v3169
          %3266 = vst [vmem:[#allocation2 + $0x18] sm:$0xff] %v3186
          %3267 = vst [vmem:[#allocation2 + $0x20] sm:$0xff] %v3203
          %3268 = vst [vmem:[#allocation2 + $0x28] sm:$0xff] %v3220
          %3269 = vst [vmem:[#allocation2 + $0x30] sm:$0xff] %v3237
          %3270 = vst [vmem:[#allocation2 + $0x38] sm:$0xff] %v3254
          %v3271 = vadd.s32 %v1073, 32
          %vm3272 = vcmp.eq.s32.totalorder %v1064, %v3271
          %vm3273 = vcmp.eq.s32.totalorder %v1065, %v3271
          %vm3274 = vcmp.eq.s32.totalorder %v1066, %v3271
          %vm3275 = vcmp.eq.s32.totalorder %v1067, %v3271
          %vm3276 = vcmp.eq.s32.totalorder %v1785, %v3271
          %vm3277 = vcmp.eq.s32.totalorder %v1786, %v3271
          %vm3278 = vcmp.eq.s32.totalorder %v1787, %v3271
          %vm3279 = vcmp.eq.s32.totalorder %v1788, %v3271
          %vm3280 = vcmp.eq.s32.totalorder %v1789, %v3271
          %vm3281 = vcmp.eq.s32.totalorder %v1790, %v3271
          %vm3282 = vcmp.eq.s32.totalorder %v1791, %v3271
          %vm3283 = vcmp.eq.s32.totalorder %v1792, %v3271
          %vm3284 = vcmp.eq.s32.totalorder %v1793, %v3271
          %vm3285 = vcmp.eq.s32.totalorder %v1794, %v3271
          %vm3286 = vcmp.eq.s32.totalorder %v1795, %v3271
          %vm3287 = vcmp.eq.s32.totalorder %v1796, %v3271
          %v3288 = vsel %vm3272, 1, 0
          %v3289 = vsel %vm3273, 1, 0
          %v3290 = vsel %vm3274, 1, 0
          %v3291 = vsel %vm3275, 1, 0
          %v3292 = vsel %vm3276, 1, 0
          %v3293 = vsel %vm3277, 1, 0
          %v3294 = vsel %vm3278, 1, 0
          %v3295 = vsel %vm3279, 1, 0
          %v3296 = vsel %vm3280, 1, 0
          %v3297 = vsel %vm3281, 1, 0
          %v3298 = vsel %vm3282, 1, 0
          %v3299 = vsel %vm3283, 1, 0
          %v3300 = vsel %vm3284, 1, 0
          %v3301 = vsel %vm3285, 1, 0
          %v3302 = vsel %vm3286, 1, 0
          %v3303 = vsel %vm3287, 1, 0
          %v3304 = vcvt.s32.f32 %v3288
          %v3305 = vcvt.s32.f32 %v3289
          %v3306 = vcvt.s32.f32 %v3290
          %v3307 = vcvt.s32.f32 %v3291
          %v3308 = vcvt.s32.f32 %v3292
          %v3309 = vcvt.s32.f32 %v3293
          %v3310 = vcvt.s32.f32 %v3294
          %v3311 = vcvt.s32.f32 %v3295
          %v3312 = vcvt.s32.f32 %v3296
          %v3313 = vcvt.s32.f32 %v3297
          %v3314 = vcvt.s32.f32 %v3298
          %v3315 = vcvt.s32.f32 %v3299
          %v3316 = vcvt.s32.f32 %v3300
          %v3317 = vcvt.s32.f32 %v3301
          %v3318 = vcvt.s32.f32 %v3302
          %v3319 = vcvt.s32.f32 %v3303
          %3320 = vmatprep.subr.mxu0 0.0
          %3321 = vmatpush1.msra.mxu0 %v3304
          %3322 = vmatprep.subr.mxu0 0.0
          %3323 = vmatpush1.msra.mxu0 %v3305
          %3324 = vmatprep.subr.mxu0 0.0
          %3325 = vmatpush1.msra.mxu0 %v3306
          %3326 = vmatprep.subr.mxu0 0.0
          %3327 = vmatpush1.msra.mxu0 %v3307
          %3328 = vmatprep.subr.mxu0 0.0
          %3329 = vmatpush1.msra.mxu0 %v3308
          %3330 = vmatprep.subr.mxu0 0.0
          %3331 = vmatpush1.msra.mxu0 %v3309
          %3332 = vmatprep.subr.mxu0 0.0
          %3333 = vmatpush1.msra.mxu0 %v3310
          %3334 = vmatprep.subr.mxu0 0.0
          %3335 = vmatpush1.msra.mxu0 %v3311
          %3336 = vmatprep.subr.mxu0 0.0
          %3337 = vmatpush1.msra.mxu0 %v3312
          %3338 = vmatprep.subr.mxu0 0.0
          %3339 = vmatpush1.msra.mxu0 %v3313
          %3340 = vmatprep.subr.mxu0 0.0
          %3341 = vmatpush1.msra.mxu0 %v3314
          %3342 = vmatprep.subr.mxu0 0.0
          %3343 = vmatpush1.msra.mxu0 %v3315
          %3344 = vmatprep.subr.mxu0 0.0
          %3345 = vmatpush1.msra.mxu0 %v3316
          %3346 = vmatprep.subr.mxu0 0.0
          %3347 = vmatpush1.msra.mxu0 %v3317
          %3348 = vmatprep.subr.mxu0 0.0
          %3349 = vmatpush1.msra.mxu0 %v3318
          %3350 = vmatprep.subr.mxu0 0.0
          %3351 = vmatpush1.msra.mxu0 %v3319
          %3352 = vmatprep.subr.mxu0 0.0
          %3353 = vmatpush1.msra.mxu0 0.0
          %3354 = vmatprep.subr.mxu0 0.0
          %3355 = vmatpush1.msra.mxu0 0.0
          %3356 = vmatprep.subr.mxu0 0.0
          %3357 = vmatpush1.msra.mxu0 0.0
          %3358 = vmatprep.subr.mxu0 0.0
          %3359 = vmatpush1.msra.mxu0 0.0
          %3360 = vmatprep.subr.mxu0 0.0
          %3361 = vmatpush1.msra.mxu0 0.0
          %3362 = vmatprep.subr.mxu0 0.0
          %3363 = vmatpush1.msra.mxu0 0.0
          %3364 = vmatprep.subr.mxu0 0.0
          %3365 = vmatpush1.msra.mxu0 0.0
          %3366 = vmatprep.subr.mxu0 0.0
          %3367 = vmatpush1.msra.mxu0 0.0
          %3368 = vmatprep.subr.mxu0 0.0
          %3369 = vmatpush1.msra.mxu0 0.0
          %3370 = vmatprep.subr.mxu0 0.0
          %3371 = vmatpush1.msra.mxu0 0.0
          %3372 = vmatprep.subr.mxu0 0.0
          %3373 = vmatpush1.msra.mxu0 0.0
          %3374 = vmatprep.subr.mxu0 0.0
          %3375 = vmatpush1.msra.mxu0 0.0
          %3376 = vmatprep.subr.mxu0 0.0
          %3377 = vmatpush1.msra.mxu0 0.0
          %3378 = vmatprep.subr.mxu0 0.0
          %3379 = vmatpush1.msra.mxu0 0.0
          %3380 = vmatprep.subr.mxu0 0.0
          %3381 = vmatpush1.msra.mxu0 0.0
          %3382 = vmatprep.subr.mxu0 0.0
          %3383 = vmatpush1.msra.mxu0 0.0
          %3384 = vmatprep.mubr.f32.mxu0 0.0
          %3385 = vmatmul.mubr.f32.gmra.mrb[0].mxu0 %v772
          %v3386 = vpop.f32.mrb[0].mxu0
          %v3387 = vadd.f32 0.0, %v3386
          %v3388 = vpop.f32.mrb[0].mxu0
          %3389 = vdwg.mxu0
          %v3391 = vsel %vm1915, %v3387, 0
          %3393 = vmatprep.subr.mxu0 %v1658
          %3394 = vmatpush1.msra.mxu0 %v1657
          %3395 = vmatprep.subr.mxu0 %v1690
          %3396 = vmatpush1.msra.mxu0 %v1689
          %3397 = vmatprep.subr.mxu0 %v1722
          %3398 = vmatpush1.msra.mxu0 %v1721
          %3399 = vmatprep.subr.mxu0 %v1754
          %3400 = vmatpush1.msra.mxu0 %v1753
          %3401 = vmatprep.subr.mxu0 0.0
          %3402 = vmatpush1.msra.mxu0 0.0
          %3403 = vmatprep.subr.mxu0 0.0
          %3404 = vmatpush1.msra.mxu0 0.0
          %3405 = vmatprep.subr.mxu0 0.0
          %3406 = vmatpush1.msra.mxu0 0.0
          %3407 = vmatprep.subr.mxu0 0.0
          %3408 = vmatpush1.msra.mxu0 0.0
          %3409 = vmatprep.subr.mxu0 0.0
          %3410 = vmatpush1.msra.mxu0 0.0
          %3411 = vmatprep.subr.mxu0 0.0
          %3412 = vmatpush1.msra.mxu0 0.0
          %3413 = vmatprep.subr.mxu0 0.0
          %3414 = vmatpush1.msra.mxu0 0.0
          %3415 = vmatprep.subr.mxu0 0.0
          %3416 = vmatpush1.msra.mxu0 0.0
          %3417 = vmatprep.subr.mxu0 0.0
          %3418 = vmatpush1.msra.mxu0 0.0
          %3419 = vmatprep.subr.mxu0 0.0
          %3420 = vmatpush1.msra.mxu0 0.0
          %3421 = vmatprep.subr.mxu0 0.0
          %3422 = vmatpush1.msra.mxu0 0.0
          %3423 = vmatprep.subr.mxu0 0.0
          %3424 = vmatpush1.msra.mxu0 0.0
          %3425 = vmatprep.subr.mxu0 0.0
          %3426 = vmatpush1.msra.mxu0 0.0
          %3427 = vmatprep.subr.mxu0 0.0
          %3428 = vmatpush1.msra.mxu0 0.0
          %3429 = vmatprep.subr.mxu0 0.0
          %3430 = vmatpush1.msra.mxu0 0.0
          %3431 = vmatprep.subr.mxu0 0.0
          %3432 = vmatpush1.msra.mxu0 0.0
          %3433 = vmatprep.subr.mxu0 0.0
          %3434 = vmatpush1.msra.mxu0 0.0
          %3435 = vmatprep.subr.mxu0 0.0
          %3436 = vmatpush1.msra.mxu0 0.0
          %3437 = vmatprep.subr.mxu0 0.0
          %3438 = vmatpush1.msra.mxu0 0.0
          %3439 = vmatprep.subr.mxu0 0.0
          %3440 = vmatpush1.msra.mxu0 0.0
          %3441 = vmatprep.subr.mxu0 0.0
          %3442 = vmatpush1.msra.mxu0 0.0
          %3443 = vmatprep.subr.mxu0 0.0
          %3444 = vmatpush1.msra.mxu0 0.0
          %3445 = vmatprep.subr.mxu0 0.0
          %3446 = vmatpush1.msra.mxu0 0.0
          %3447 = vmatprep.subr.mxu0 0.0
          %3448 = vmatpush1.msra.mxu0 0.0
          %3449 = vmatprep.subr.mxu0 0.0
          %3450 = vmatpush1.msra.mxu0 0.0
          %3451 = vmatprep.subr.mxu0 0.0
          %3452 = vmatpush1.msra.mxu0 0.0
          %3453 = vmatprep.subr.mxu0 0.0
          %3454 = vmatpush1.msra.mxu0 0.0
          %3455 = vmatprep.subr.mxu0 0.0
          %3456 = vmatpush1.msra.mxu0 0.0
          %3457 = vmatprep.mubr.f32.mxu0 0.0
          %3458 = vmatmul.mubr.f32.gmra.mrb[0].mxu0 %v3391
          %v3459 = vpop.f32.mrb[0].mxu0
          %v3460 = vadd.f32 0.0, %v3459
          %v3461 = vpop.f32.mrb[0].mxu0
          %v3462 = vadd.f32 0.0, %v3461
          %3463 = vdwg.mxu0
          %3464 = vmatprep.subr.mxu0 %v1660
          %3465 = vmatpush1.msra.mxu0 %v1659
          %3466 = vmatprep.subr.mxu0 %v1692
          %3467 = vmatpush1.msra.mxu0 %v1691
          %3468 = vmatprep.subr.mxu0 %v1724
          %3469 = vmatpush1.msra.mxu0 %v1723
          %3470 = vmatprep.subr.mxu0 %v1756
          %3471 = vmatpush1.msra.mxu0 %v1755
          %3472 = vmatprep.subr.mxu0 0.0
          %3473 = vmatpush1.msra.mxu0 0.0
          %3474 = vmatprep.subr.mxu0 0.0
          %3475 = vmatpush1.msra.mxu0 0.0
          %3476 = vmatprep.subr.mxu0 0.0
          %3477 = vmatpush1.msra.mxu0 0.0
          %3478 = vmatprep.subr.mxu0 0.0
          %3479 = vmatpush1.msra.mxu0 0.0
          %3480 = vmatprep.subr.mxu0 0.0
          %3481 = vmatpush1.msra.mxu0 0.0
          %3482 = vmatprep.subr.mxu0 0.0
          %3483 = vmatpush1.msra.mxu0 0.0
          %3484 = vmatprep.subr.mxu0 0.0
          %3485 = vmatpush1.msra.mxu0 0.0
          %3486 = vmatprep.subr.mxu0 0.0
          %3487 = vmatpush1.msra.mxu0 0.0
          %3488 = vmatprep.subr.mxu0 0.0
          %3489 = vmatpush1.msra.mxu0 0.0
          %3490 = vmatprep.subr.mxu0 0.0
          %3491 = vmatpush1.msra.mxu0 0.0
          %3492 = vmatprep.subr.mxu0 0.0
          %3493 = vmatpush1.msra.mxu0 0.0
          %3494 = vmatprep.subr.mxu0 0.0
          %3495 = vmatpush1.msra.mxu0 0.0
          %3496 = vmatprep.subr.mxu0 0.0
          %3497 = vmatpush1.msra.mxu0 0.0
          %3498 = vmatprep.subr.mxu0 0.0
          %3499 = vmatpush1.msra.mxu0 0.0
          %3500 = vmatprep.subr.mxu0 0.0
          %3501 = vmatpush1.msra.mxu0 0.0
          %3502 = vmatprep.subr.mxu0 0.0
          %3503 = vmatpush1.msra.mxu0 0.0
          %3504 = vmatprep.subr.mxu0 0.0
          %3505 = vmatpush1.msra.mxu0 0.0
          %3506 = vmatprep.subr.mxu0 0.0
          %3507 = vmatpush1.msra.mxu0 0.0
          %3508 = vmatprep.subr.mxu0 0.0
          %3509 = vmatpush1.msra.mxu0 0.0
          %3510 = vmatprep.subr.mxu0 0.0
          %3511 = vmatpush1.msra.mxu0 0.0
          %3512 = vmatprep.subr.mxu0 0.0
          %3513 = vmatpush1.msra.mxu0 0.0
          %3514 = vmatprep.subr.mxu0 0.0
          %3515 = vmatpush1.msra.mxu0 0.0
          %3516 = vmatprep.subr.mxu0 0.0
          %3517 = vmatpush1.msra.mxu0 0.0
          %3518 = vmatprep.subr.mxu0 0.0
          %3519 = vmatpush1.msra.mxu0 0.0
          %3520 = vmatprep.subr.mxu0 0.0
          %3521 = vmatpush1.msra.mxu0 0.0
          %3522 = vmatprep.subr.mxu0 0.0
          %3523 = vmatpush1.msra.mxu0 0.0
          %3524 = vmatprep.subr.mxu0 0.0
          %3525 = vmatpush1.msra.mxu0 0.0
          %3526 = vmatprep.subr.mxu0 0.0
          %3527 = vmatpush1.msra.mxu0 0.0
          %3528 = vmatprep.mubr.f32.mxu0 0.0
          %3529 = vmatmul.mubr.f32.gmra.mrb[0].mxu0 %v3391
          %v3530 = vpop.f32.mrb[0].mxu0
          %v3531 = vadd.f32 0.0, %v3530
          %v3532 = vpop.f32.mrb[0].mxu0
          %v3533 = vadd.f32 0.0, %v3532
          %3534 = vdwg.mxu0
          %3535 = vmatprep.subr.mxu0 %v1662
          %3536 = vmatpush1.msra.mxu0 %v1661
          %3537 = vmatprep.subr.mxu0 %v1694
          %3538 = vmatpush1.msra.mxu0 %v1693
          %3539 = vmatprep.subr.mxu0 %v1726
          %3540 = vmatpush1.msra.mxu0 %v1725
          %3541 = vmatprep.subr.mxu0 %v1758
          %3542 = vmatpush1.msra.mxu0 %v1757
          %3543 = vmatprep.subr.mxu0 0.0
          %3544 = vmatpush1.msra.mxu0 0.0
          %3545 = vmatprep.subr.mxu0 0.0
          %3546 = vmatpush1.msra.mxu0 0.0
          %3547 = vmatprep.subr.mxu0 0.0
          %3548 = vmatpush1.msra.mxu0 0.0
          %3549 = vmatprep.subr.mxu0 0.0
          %3550 = vmatpush1.msra.mxu0 0.0
          %3551 = vmatprep.subr.mxu0 0.0
          %3552 = vmatpush1.msra.mxu0 0.0
          %3553 = vmatprep.subr.mxu0 0.0
          %3554 = vmatpush1.msra.mxu0 0.0
          %3555 = vmatprep.subr.mxu0 0.0
          %3556 = vmatpush1.msra.mxu0 0.0
          %3557 = vmatprep.subr.mxu0 0.0
          %3558 = vmatpush1.msra.mxu0 0.0
          %3559 = vmatprep.subr.mxu0 0.0
          %3560 = vmatpush1.msra.mxu0 0.0
          %3561 = vmatprep.subr.mxu0 0.0
          %3562 = vmatpush1.msra.mxu0 0.0
          %3563 = vmatprep.subr.mxu0 0.0
          %3564 = vmatpush1.msra.mxu0 0.0
          %3565 = vmatprep.subr.mxu0 0.0
          %3566 = vmatpush1.msra.mxu0 0.0
          %3567 = vmatprep.subr.mxu0 0.0
          %3568 = vmatpush1.msra.mxu0 0.0
          %3569 = vmatprep.subr.mxu0 0.0
          %3570 = vmatpush1.msra.mxu0 0.0
          %3571 = vmatprep.subr.mxu0 0.0
          %3572 = vmatpush1.msra.mxu0 0.0
          %3573 = vmatprep.subr.mxu0 0.0
          %3574 = vmatpush1.msra.mxu0 0.0
          %3575 = vmatprep.subr.mxu0 0.0
          %3576 = vmatpush1.msra.mxu0 0.0
          %3577 = vmatprep.subr.mxu0 0.0
          %3578 = vmatpush1.msra.mxu0 0.0
          %3579 = vmatprep.subr.mxu0 0.0
          %3580 = vmatpush1.msra.mxu0 0.0
          %3581 = vmatprep.subr.mxu0 0.0
          %3582 = vmatpush1.msra.mxu0 0.0
          %3583 = vmatprep.subr.mxu0 0.0
          %3584 = vmatpush1.msra.mxu0 0.0
          %3585 = vmatprep.subr.mxu0 0.0
          %3586 = vmatpush1.msra.mxu0 0.0
          %3587 = vmatprep.subr.mxu0 0.0
          %3588 = vmatpush1.msra.mxu0 0.0
          %3589 = vmatprep.subr.mxu0 0.0
          %3590 = vmatpush1.msra.mxu0 0.0
          %3591 = vmatprep.subr.mxu0 0.0
          %3592 = vmatpush1.msra.mxu0 0.0
          %3593 = vmatprep.subr.mxu0 0.0
          %3594 = vmatpush1.msra.mxu0 0.0
          %3595 = vmatprep.subr.mxu0 0.0
          %3596 = vmatpush1.msra.mxu0 0.0
          %3597 = vmatprep.subr.mxu0 0.0
          %3598 = vmatpush1.msra.mxu0 0.0
          %3599 = vmatprep.mubr.f32.mxu0 0.0
          %3600 = vmatmul.mubr.f32.gmra.mrb[0].mxu0 %v3391
          %v3601 = vpop.f32.mrb[0].mxu0
          %v3602 = vadd.f32 0.0, %v3601
          %v3603 = vpop.f32.mrb[0].mxu0
          %v3604 = vadd.f32 0.0, %v3603
          %3605 = vdwg.mxu0
          %3606 = vmatprep.subr.mxu0 %v1664
          %3607 = vmatpush1.msra.mxu0 %v1663
          %3608 = vmatprep.subr.mxu0 %v1696
          %3609 = vmatpush1.msra.mxu0 %v1695
          %3610 = vmatprep.subr.mxu0 %v1728
          %3611 = vmatpush1.msra.mxu0 %v1727
          %3612 = vmatprep.subr.mxu0 %v1760
          %3613 = vmatpush1.msra.mxu0 %v1759
          %3614 = vmatprep.subr.mxu0 0.0
          %3615 = vmatpush1.msra.mxu0 0.0
          %3616 = vmatprep.subr.mxu0 0.0
          %3617 = vmatpush1.msra.mxu0 0.0
          %3618 = vmatprep.subr.mxu0 0.0
          %3619 = vmatpush1.msra.mxu0 0.0
          %3620 = vmatprep.subr.mxu0 0.0
          %3621 = vmatpush1.msra.mxu0 0.0
          %3622 = vmatprep.subr.mxu0 0.0
          %3623 = vmatpush1.msra.mxu0 0.0
          %3624 = vmatprep.subr.mxu0 0.0
          %3625 = vmatpush1.msra.mxu0 0.0
          %3626 = vmatprep.subr.mxu0 0.0
          %3627 = vmatpush1.msra.mxu0 0.0
          %3628 = vmatprep.subr.mxu0 0.0
          %3629 = vmatpush1.msra.mxu0 0.0
          %3630 = vmatprep.subr.mxu0 0.0
          %3631 = vmatpush1.msra.mxu0 0.0
          %3632 = vmatprep.subr.mxu0 0.0
          %3633 = vmatpush1.msra.mxu0 0.0
          %3634 = vmatprep.subr.mxu0 0.0
          %3635 = vmatpush1.msra.mxu0 0.0
          %3636 = vmatprep.subr.mxu0 0.0
          %3637 = vmatpush1.msra.mxu0 0.0
          %3638 = vmatprep.subr.mxu0 0.0
          %3639 = vmatpush1.msra.mxu0 0.0
          %3640 = vmatprep.subr.mxu0 0.0
          %3641 = vmatpush1.msra.mxu0 0.0
          %3642 = vmatprep.subr.mxu0 0.0
          %3643 = vmatpush1.msra.mxu0 0.0
          %3644 = vmatprep.subr.mxu0 0.0
          %3645 = vmatpush1.msra.mxu0 0.0
          %3646 = vmatprep.subr.mxu0 0.0
          %3647 = vmatpush1.msra.mxu0 0.0
          %3648 = vmatprep.subr.mxu0 0.0
          %3649 = vmatpush1.msra.mxu0 0.0
          %3650 = vmatprep.subr.mxu0 0.0
          %3651 = vmatpush1.msra.mxu0 0.0
          %3652 = vmatprep.subr.mxu0 0.0
          %3653 = vmatpush1.msra.mxu0 0.0
          %3654 = vmatprep.subr.mxu0 0.0
          %3655 = vmatpush1.msra.mxu0 0.0
          %3656 = vmatprep.subr.mxu0 0.0
          %3657 = vmatpush1.msra.mxu0 0.0
          %3658 = vmatprep.subr.mxu0 0.0
          %3659 = vmatpush1.msra.mxu0 0.0
          %3660 = vmatprep.subr.mxu0 0.0
          %3661 = vmatpush1.msra.mxu0 0.0
          %3662 = vmatprep.subr.mxu0 0.0
          %3663 = vmatpush1.msra.mxu0 0.0
          %3664 = vmatprep.subr.mxu0 0.0
          %3665 = vmatpush1.msra.mxu0 0.0
          %3666 = vmatprep.subr.mxu0 0.0
          %3667 = vmatpush1.msra.mxu0 0.0
          %3668 = vmatprep.subr.mxu0 0.0
          %3669 = vmatpush1.msra.mxu0 0.0
          %3670 = vmatprep.mubr.f32.mxu0 0.0
          %3671 = vmatmul.mubr.f32.gmra.mrb[0].mxu0 %v3391
          %v3672 = vpop.f32.mrb[0].mxu0
          %v3673 = vadd.f32 0.0, %v3672
          %v3674 = vpop.f32.mrb[0].mxu0
          %v3675 = vadd.f32 0.0, %v3674
          %3676 = vdwg.mxu0
          %3677 = vmatprep.subr.mxu0 %v1666
          %3678 = vmatpush1.msra.mxu0 %v1665
          %3679 = vmatprep.subr.mxu0 %v1698
          %3680 = vmatpush1.msra.mxu0 %v1697
          %3681 = vmatprep.subr.mxu0 %v1730
          %3682 = vmatpush1.msra.mxu0 %v1729
          %3683 = vmatprep.subr.mxu0 %v1762
          %3684 = vmatpush1.msra.mxu0 %v1761
          %3685 = vmatprep.subr.mxu0 0.0
          %3686 = vmatpush1.msra.mxu0 0.0
          %3687 = vmatprep.subr.mxu0 0.0
          %3688 = vmatpush1.msra.mxu0 0.0
          %3689 = vmatprep.subr.mxu0 0.0
          %3690 = vmatpush1.msra.mxu0 0.0
          %3691 = vmatprep.subr.mxu0 0.0
          %3692 = vmatpush1.msra.mxu0 0.0
          %3693 = vmatprep.subr.mxu0 0.0
          %3694 = vmatpush1.msra.mxu0 0.0
          %3695 = vmatprep.subr.mxu0 0.0
          %3696 = vmatpush1.msra.mxu0 0.0
          %3697 = vmatprep.subr.mxu0 0.0
          %3698 = vmatpush1.msra.mxu0 0.0
          %3699 = vmatprep.subr.mxu0 0.0
          %3700 = vmatpush1.msra.mxu0 0.0
          %3701 = vmatprep.subr.mxu0 0.0
          %3702 = vmatpush1.msra.mxu0 0.0
          %3703 = vmatprep.subr.mxu0 0.0
          %3704 = vmatpush1.msra.mxu0 0.0
          %3705 = vmatprep.subr.mxu0 0.0
          %3706 = vmatpush1.msra.mxu0 0.0
          %3707 = vmatprep.subr.mxu0 0.0
          %3708 = vmatpush1.msra.mxu0 0.0
          %3709 = vmatprep.subr.mxu0 0.0
          %3710 = vmatpush1.msra.mxu0 0.0
          %3711 = vmatprep.subr.mxu0 0.0
          %3712 = vmatpush1.msra.mxu0 0.0
          %3713 = vmatprep.subr.mxu0 0.0
          %3714 = vmatpush1.msra.mxu0 0.0
          %3715 = vmatprep.subr.mxu0 0.0
          %3716 = vmatpush1.msra.mxu0 0.0
          %3717 = vmatprep.subr.mxu0 0.0
          %3718 = vmatpush1.msra.mxu0 0.0
          %3719 = vmatprep.subr.mxu0 0.0
          %3720 = vmatpush1.msra.mxu0 0.0
          %3721 = vmatprep.subr.mxu0 0.0
          %3722 = vmatpush1.msra.mxu0 0.0
          %3723 = vmatprep.subr.mxu0 0.0
          %3724 = vmatpush1.msra.mxu0 0.0
          %3725 = vmatprep.subr.mxu0 0.0
          %3726 = vmatpush1.msra.mxu0 0.0
          %3727 = vmatprep.subr.mxu0 0.0
          %3728 = vmatpush1.msra.mxu0 0.0
          %3729 = vmatprep.subr.mxu0 0.0
          %3730 = vmatpush1.msra.mxu0 0.0
          %3731 = vmatprep.subr.mxu0 0.0
          %3732 = vmatpush1.msra.mxu0 0.0
          %3733 = vmatprep.subr.mxu0 0.0
          %3734 = vmatpush1.msra.mxu0 0.0
          %3735 = vmatprep.subr.mxu0 0.0
          %3736 = vmatpush1.msra.mxu0 0.0
          %3737 = vmatprep.subr.mxu0 0.0
          %3738 = vmatpush1.msra.mxu0 0.0
          %3739 = vmatprep.subr.mxu0 0.0
          %3740 = vmatpush1.msra.mxu0 0.0
          %3741 = vmatprep.mubr.f32.mxu0 0.0
          %3742 = vmatmul.mubr.f32.gmra.mrb[0].mxu0 %v3391
          %v3743 = vpop.f32.mrb[0].mxu0
          %v3744 = vadd.f32 0.0, %v3743
          %v3745 = vpop.f32.mrb[0].mxu0
          %v3746 = vadd.f32 0.0, %v3745
          %3747 = vdwg.mxu0
          %3748 = vmatprep.subr.mxu0 %v1668
          %3749 = vmatpush1.msra.mxu0 %v1667
          %3750 = vmatprep.subr.mxu0 %v1700
          %3751 = vmatpush1.msra.mxu0 %v1699
          %3752 = vmatprep.subr.mxu0 %v1732
          %3753 = vmatpush1.msra.mxu0 %v1731
          %3754 = vmatprep.subr.mxu0 %v1764
          %3755 = vmatpush1.msra.mxu0 %v1763
          %3756 = vmatprep.subr.mxu0 0.0
          %3757 = vmatpush1.msra.mxu0 0.0
          %3758 = vmatprep.subr.mxu0 0.0
          %3759 = vmatpush1.msra.mxu0 0.0
          %3760 = vmatprep.subr.mxu0 0.0
          %3761 = vmatpush1.msra.mxu0 0.0
          %3762 = vmatprep.subr.mxu0 0.0
          %3763 = vmatpush1.msra.mxu0 0.0
          %3764 = vmatprep.subr.mxu0 0.0
          %3765 = vmatpush1.msra.mxu0 0.0
          %3766 = vmatprep.subr.mxu0 0.0
          %3767 = vmatpush1.msra.mxu0 0.0
          %3768 = vmatprep.subr.mxu0 0.0
          %3769 = vmatpush1.msra.mxu0 0.0
          %3770 = vmatprep.subr.mxu0 0.0
          %3771 = vmatpush1.msra.mxu0 0.0
          %3772 = vmatprep.subr.mxu0 0.0
          %3773 = vmatpush1.msra.mxu0 0.0
          %3774 = vmatprep.subr.mxu0 0.0
          %3775 = vmatpush1.msra.mxu0 0.0
          %3776 = vmatprep.subr.mxu0 0.0
          %3777 = vmatpush1.msra.mxu0 0.0
          %3778 = vmatprep.subr.mxu0 0.0
          %3779 = vmatpush1.msra.mxu0 0.0
          %3780 = vmatprep.subr.mxu0 0.0
          %3781 = vmatpush1.msra.mxu0 0.0
          %3782 = vmatprep.subr.mxu0 0.0
          %3783 = vmatpush1.msra.mxu0 0.0
          %3784 = vmatprep.subr.mxu0 0.0
          %3785 = vmatpush1.msra.mxu0 0.0
          %3786 = vmatprep.subr.mxu0 0.0
          %3787 = vmatpush1.msra.mxu0 0.0
          %3788 = vmatprep.subr.mxu0 0.0
          %3789 = vmatpush1.msra.mxu0 0.0
          %3790 = vmatprep.subr.mxu0 0.0
          %3791 = vmatpush1.msra.mxu0 0.0
          %3792 = vmatprep.subr.mxu0 0.0
          %3793 = vmatpush1.msra.mxu0 0.0
          %3794 = vmatprep.subr.mxu0 0.0
          %3795 = vmatpush1.msra.mxu0 0.0
          %3796 = vmatprep.subr.mxu0 0.0
          %3797 = vmatpush1.msra.mxu0 0.0
          %3798 = vmatprep.subr.mxu0 0.0
          %3799 = vmatpush1.msra.mxu0 0.0
          %3800 = vmatprep.subr.mxu0 0.0
          %3801 = vmatpush1.msra.mxu0 0.0
          %3802 = vmatprep.subr.mxu0 0.0
          %3803 = vmatpush1.msra.mxu0 0.0
          %3804 = vmatprep.subr.mxu0 0.0
          %3805 = vmatpush1.msra.mxu0 0.0
          %3806 = vmatprep.subr.mxu0 0.0
          %3807 = vmatpush1.msra.mxu0 0.0
          %3808 = vmatprep.subr.mxu0 0.0
          %3809 = vmatpush1.msra.mxu0 0.0
          %3810 = vmatprep.subr.mxu0 0.0
          %3811 = vmatpush1.msra.mxu0 0.0
          %3812 = vmatprep.mubr.f32.mxu0 0.0
          %3813 = vmatmul.mubr.f32.gmra.mrb[0].mxu0 %v3391
          %v3814 = vpop.f32.mrb[0].mxu0
          %v3815 = vadd.f32 0.0, %v3814
          %v3816 = vpop.f32.mrb[0].mxu0
          %v3817 = vadd.f32 0.0, %v3816
          %3818 = vdwg.mxu0
          %3819 = vmatprep.subr.mxu0 %v1670
          %3820 = vmatpush1.msra.mxu0 %v1669
          %3821 = vmatprep.subr.mxu0 %v1702
          %3822 = vmatpush1.msra.mxu0 %v1701
          %3823 = vmatprep.subr.mxu0 %v1734
          %3824 = vmatpush1.msra.mxu0 %v1733
          %3825 = vmatprep.subr.mxu0 %v1766
          %3826 = vmatpush1.msra.mxu0 %v1765
          %3827 = vmatprep.subr.mxu0 0.0
          %3828 = vmatpush1.msra.mxu0 0.0
          %3829 = vmatprep.subr.mxu0 0.0
          %3830 = vmatpush1.msra.mxu0 0.0
          %3831 = vmatprep.subr.mxu0 0.0
          %3832 = vmatpush1.msra.mxu0 0.0
          %3833 = vmatprep.subr.mxu0 0.0
          %3834 = vmatpush1.msra.mxu0 0.0
          %3835 = vmatprep.subr.mxu0 0.0
          %3836 = vmatpush1.msra.mxu0 0.0
          %3837 = vmatprep.subr.mxu0 0.0
          %3838 = vmatpush1.msra.mxu0 0.0
          %3839 = vmatprep.subr.mxu0 0.0
          %3840 = vmatpush1.msra.mxu0 0.0
          %3841 = vmatprep.subr.mxu0 0.0
          %3842 = vmatpush1.msra.mxu0 0.0
          %3843 = vmatprep.subr.mxu0 0.0
          %3844 = vmatpush1.msra.mxu0 0.0
          %3845 = vmatprep.subr.mxu0 0.0
          %3846 = vmatpush1.msra.mxu0 0.0
          %3847 = vmatprep.subr.mxu0 0.0
          %3848 = vmatpush1.msra.mxu0 0.0
          %3849 = vmatprep.subr.mxu0 0.0
          %3850 = vmatpush1.msra.mxu0 0.0
          %3851 = vmatprep.subr.mxu0 0.0
          %3852 = vmatpush1.msra.mxu0 0.0
          %3853 = vmatprep.subr.mxu0 0.0
          %3854 = vmatpush1.msra.mxu0 0.0
          %3855 = vmatprep.subr.mxu0 0.0
          %3856 = vmatpush1.msra.mxu0 0.0
          %3857 = vmatprep.subr.mxu0 0.0
          %3858 = vmatpush1.msra.mxu0 0.0
          %3859 = vmatprep.subr.mxu0 0.0
          %3860 = vmatpush1.msra.mxu0 0.0
          %3861 = vmatprep.subr.mxu0 0.0
          %3862 = vmatpush1.msra.mxu0 0.0
          %3863 = vmatprep.subr.mxu0 0.0
          %3864 = vmatpush1.msra.mxu0 0.0
          %3865 = vmatprep.subr.mxu0 0.0
          %3866 = vmatpush1.msra.mxu0 0.0
          %3867 = vmatprep.subr.mxu0 0.0
          %3868 = vmatpush1.msra.mxu0 0.0
          %3869 = vmatprep.subr.mxu0 0.0
          %3870 = vmatpush1.msra.mxu0 0.0
          %3871 = vmatprep.subr.mxu0 0.0
          %3872 = vmatpush1.msra.mxu0 0.0
          %3873 = vmatprep.subr.mxu0 0.0
          %3874 = vmatpush1.msra.mxu0 0.0
          %3875 = vmatprep.subr.mxu0 0.0
          %3876 = vmatpush1.msra.mxu0 0.0
          %3877 = vmatprep.subr.mxu0 0.0
          %3878 = vmatpush1.msra.mxu0 0.0
          %3879 = vmatprep.subr.mxu0 0.0
          %3880 = vmatpush1.msra.mxu0 0.0
          %3881 = vmatprep.subr.mxu0 0.0
          %3882 = vmatpush1.msra.mxu0 0.0
          %3883 = vmatprep.mubr.f32.mxu0 0.0
          %3884 = vmatmul.mubr.f32.gmra.mrb[0].mxu0 %v3391
          %v3885 = vpop.f32.mrb[0].mxu0
          %v3886 = vadd.f32 0.0, %v3885
          %v3887 = vpop.f32.mrb[0].mxu0
          %v3888 = vadd.f32 0.0, %v3887
          %3889 = vdwg.mxu0
          %3890 = vmatprep.subr.mxu0 %v1672
          %3891 = vmatpush1.msra.mxu0 %v1671
          %3892 = vmatprep.subr.mxu0 %v1704
          %3893 = vmatpush1.msra.mxu0 %v1703
          %3894 = vmatprep.subr.mxu0 %v1736
          %3895 = vmatpush1.msra.mxu0 %v1735
          %3896 = vmatprep.subr.mxu0 %v1768
          %3897 = vmatpush1.msra.mxu0 %v1767
          %3898 = vmatprep.subr.mxu0 0.0
          %3899 = vmatpush1.msra.mxu0 0.0
          %3900 = vmatprep.subr.mxu0 0.0
          %3901 = vmatpush1.msra.mxu0 0.0
          %3902 = vmatprep.subr.mxu0 0.0
          %3903 = vmatpush1.msra.mxu0 0.0
          %3904 = vmatprep.subr.mxu0 0.0
          %3905 = vmatpush1.msra.mxu0 0.0
          %3906 = vmatprep.subr.mxu0 0.0
          %3907 = vmatpush1.msra.mxu0 0.0
          %3908 = vmatprep.subr.mxu0 0.0
          %3909 = vmatpush1.msra.mxu0 0.0
          %3910 = vmatprep.subr.mxu0 0.0
          %3911 = vmatpush1.msra.mxu0 0.0
          %3912 = vmatprep.subr.mxu0 0.0
          %3913 = vmatpush1.msra.mxu0 0.0
          %3914 = vmatprep.subr.mxu0 0.0
          %3915 = vmatpush1.msra.mxu0 0.0
          %3916 = vmatprep.subr.mxu0 0.0
          %3917 = vmatpush1.msra.mxu0 0.0
          %3918 = vmatprep.subr.mxu0 0.0
          %3919 = vmatpush1.msra.mxu0 0.0
          %3920 = vmatprep.subr.mxu0 0.0
          %3921 = vmatpush1.msra.mxu0 0.0
          %3922 = vmatprep.subr.mxu0 0.0
          %3923 = vmatpush1.msra.mxu0 0.0
          %3924 = vmatprep.subr.mxu0 0.0
          %3925 = vmatpush1.msra.mxu0 0.0
          %3926 = vmatprep.subr.mxu0 0.0
          %3927 = vmatpush1.msra.mxu0 0.0
          %3928 = vmatprep.subr.mxu0 0.0
          %3929 = vmatpush1.msra.mxu0 0.0
          %3930 = vmatprep.subr.mxu0 0.0
          %3931 = vmatpush1.msra.mxu0 0.0
          %3932 = vmatprep.subr.mxu0 0.0
          %3933 = vmatpush1.msra.mxu0 0.0
          %3934 = vmatprep.subr.mxu0 0.0
          %3935 = vmatpush1.msra.mxu0 0.0
          %3936 = vmatprep.subr.mxu0 0.0
          %3937 = vmatpush1.msra.mxu0 0.0
          %3938 = vmatprep.subr.mxu0 0.0
          %3939 = vmatpush1.msra.mxu0 0.0
          %3940 = vmatprep.subr.mxu0 0.0
          %3941 = vmatpush1.msra.mxu0 0.0
          %3942 = vmatprep.subr.mxu0 0.0
          %3943 = vmatpush1.msra.mxu0 0.0
          %3944 = vmatprep.subr.mxu0 0.0
          %3945 = vmatpush1.msra.mxu0 0.0
          %3946 = vmatprep.subr.mxu0 0.0
          %3947 = vmatpush1.msra.mxu0 0.0
          %3948 = vmatprep.subr.mxu0 0.0
          %3949 = vmatpush1.msra.mxu0 0.0
          %3950 = vmatprep.subr.mxu0 0.0
          %3951 = vmatpush1.msra.mxu0 0.0
          %3952 = vmatprep.subr.mxu0 0.0
          %3953 = vmatpush1.msra.mxu0 0.0
          %3954 = vmatprep.mubr.f32.mxu0 0.0
          %3955 = vmatmul.mubr.f32.gmra.mrb[0].mxu0 %v3391
          %v3956 = vpop.f32.mrb[0].mxu0
          %v3957 = vadd.f32 0.0, %v3956
          %v3958 = vpop.f32.mrb[0].mxu0
          %v3959 = vadd.f32 0.0, %v3958
          %3960 = vdwg.mxu0
          %3961 = vmatprep.subr.mxu0 %v1674
          %3962 = vmatpush1.msra.mxu0 %v1673
          %3963 = vmatprep.subr.mxu0 %v1706
          %3964 = vmatpush1.msra.mxu0 %v1705
          %3965 = vmatprep.subr.mxu0 %v1738
          %3966 = vmatpush1.msra.mxu0 %v1737
          %3967 = vmatprep.subr.mxu0 %v1770
          %3968 = vmatpush1.msra.mxu0 %v1769
          %3969 = vmatprep.subr.mxu0 0.0
          %3970 = vmatpush1.msra.mxu0 0.0
          %3971 = vmatprep.subr.mxu0 0.0
          %3972 = vmatpush1.msra.mxu0 0.0
          %3973 = vmatprep.subr.mxu0 0.0
          %3974 = vmatpush1.msra.mxu0 0.0
          %3975 = vmatprep.subr.mxu0 0.0
          %3976 = vmatpush1.msra.mxu0 0.0
          %3977 = vmatprep.subr.mxu0 0.0
          %3978 = vmatpush1.msra.mxu0 0.0
          %3979 = vmatprep.subr.mxu0 0.0
          %3980 = vmatpush1.msra.mxu0 0.0
          %3981 = vmatprep.subr.mxu0 0.0
          %3982 = vmatpush1.msra.mxu0 0.0
          %3983 = vmatprep.subr.mxu0 0.0
          %3984 = vmatpush1.msra.mxu0 0.0
          %3985 = vmatprep.subr.mxu0 0.0
          %3986 = vmatpush1.msra.mxu0 0.0
          %3987 = vmatprep.subr.mxu0 0.0
          %3988 = vmatpush1.msra.mxu0 0.0
          %3989 = vmatprep.subr.mxu0 0.0
          %3990 = vmatpush1.msra.mxu0 0.0
          %3991 = vmatprep.subr.mxu0 0.0
          %3992 = vmatpush1.msra.mxu0 0.0
          %3993 = vmatprep.subr.mxu0 0.0
          %3994 = vmatpush1.msra.mxu0 0.0
          %3995 = vmatprep.subr.mxu0 0.0
          %3996 = vmatpush1.msra.mxu0 0.0
          %3997 = vmatprep.subr.mxu0 0.0
          %3998 = vmatpush1.msra.mxu0 0.0
          %3999 = vmatprep.subr.mxu0 0.0
          %4000 = vmatpush1.msra.mxu0 0.0
          %4001 = vmatprep.subr.mxu0 0.0
          %4002 = vmatpush1.msra.mxu0 0.0
          %4003 = vmatprep.subr.mxu0 0.0
          %4004 = vmatpush1.msra.mxu0 0.0
          %4005 = vmatprep.subr.mxu0 0.0
          %4006 = vmatpush1.msra.mxu0 0.0
          %4007 = vmatprep.subr.mxu0 0.0
          %4008 = vmatpush1.msra.mxu0 0.0
          %4009 = vmatprep.subr.mxu0 0.0
          %4010 = vmatpush1.msra.mxu0 0.0
          %4011 = vmatprep.subr.mxu0 0.0
          %4012 = vmatpush1.msra.mxu0 0.0
          %4013 = vmatprep.subr.mxu0 0.0
          %4014 = vmatpush1.msra.mxu0 0.0
          %4015 = vmatprep.subr.mxu0 0.0
          %4016 = vmatpush1.msra.mxu0 0.0
          %4017 = vmatprep.subr.mxu0 0.0
          %4018 = vmatpush1.msra.mxu0 0.0
          %4019 = vmatprep.subr.mxu0 0.0
          %4020 = vmatpush1.msra.mxu0 0.0
          %4021 = vmatprep.subr.mxu0 0.0
          %4022 = vmatpush1.msra.mxu0 0.0
          %4023 = vmatprep.subr.mxu0 0.0
          %4024 = vmatpush1.msra.mxu0 0.0
          %4025 = vmatprep.mubr.f32.mxu0 0.0
          %4026 = vmatmul.mubr.f32.gmra.mrb[0].mxu0 %v3391
          %v4027 = vpop.f32.mrb[0].mxu0
          %v4028 = vadd.f32 0.0, %v4027
          %v4029 = vpop.f32.mrb[0].mxu0
          %v4030 = vadd.f32 0.0, %v4029
          %4031 = vdwg.mxu0
          %4032 = vmatprep.subr.mxu0 %v1676
          %4033 = vmatpush1.msra.mxu0 %v1675
          %4034 = vmatprep.subr.mxu0 %v1708
          %4035 = vmatpush1.msra.mxu0 %v1707
          %4036 = vmatprep.subr.mxu0 %v1740
          %4037 = vmatpush1.msra.mxu0 %v1739
          %4038 = vmatprep.subr.mxu0 %v1772
          %4039 = vmatpush1.msra.mxu0 %v1771
          %4040 = vmatprep.subr.mxu0 0.0
          %4041 = vmatpush1.msra.mxu0 0.0
          %4042 = vmatprep.subr.mxu0 0.0
          %4043 = vmatpush1.msra.mxu0 0.0
          %4044 = vmatprep.subr.mxu0 0.0
          %4045 = vmatpush1.msra.mxu0 0.0
          %4046 = vmatprep.subr.mxu0 0.0
          %4047 = vmatpush1.msra.mxu0 0.0
          %4048 = vmatprep.subr.mxu0 0.0
          %4049 = vmatpush1.msra.mxu0 0.0
          %4050 = vmatprep.subr.mxu0 0.0
          %4051 = vmatpush1.msra.mxu0 0.0
          %4052 = vmatprep.subr.mxu0 0.0
          %4053 = vmatpush1.msra.mxu0 0.0
          %4054 = vmatprep.subr.mxu0 0.0
          %4055 = vmatpush1.msra.mxu0 0.0
          %4056 = vmatprep.subr.mxu0 0.0
          %4057 = vmatpush1.msra.mxu0 0.0
          %4058 = vmatprep.subr.mxu0 0.0
          %4059 = vmatpush1.msra.mxu0 0.0
          %4060 = vmatprep.subr.mxu0 0.0
          %4061 = vmatpush1.msra.mxu0 0.0
          %4062 = vmatprep.subr.mxu0 0.0
          %4063 = vmatpush1.msra.mxu0 0.0
          %4064 = vmatprep.subr.mxu0 0.0
          %4065 = vmatpush1.msra.mxu0 0.0
          %4066 = vmatprep.subr.mxu0 0.0
          %4067 = vmatpush1.msra.mxu0 0.0
          %4068 = vmatprep.subr.mxu0 0.0
          %4069 = vmatpush1.msra.mxu0 0.0
          %4070 = vmatprep.subr.mxu0 0.0
          %4071 = vmatpush1.msra.mxu0 0.0
          %4072 = vmatprep.subr.mxu0 0.0
          %4073 = vmatpush1.msra.mxu0 0.0
          %4074 = vmatprep.subr.mxu0 0.0
          %4075 = vmatpush1.msra.mxu0 0.0
          %4076 = vmatprep.subr.mxu0 0.0
          %4077 = vmatpush1.msra.mxu0 0.0
          %4078 = vmatprep.subr.mxu0 0.0
          %4079 = vmatpush1.msra.mxu0 0.0
          %4080 = vmatprep.subr.mxu0 0.0
          %4081 = vmatpush1.msra.mxu0 0.0
          %4082 = vmatprep.subr.mxu0 0.0
          %4083 = vmatpush1.msra.mxu0 0.0
          %4084 = vmatprep.subr.mxu0 0.0
          %4085 = vmatpush1.msra.mxu0 0.0
          %4086 = vmatprep.subr.mxu0 0.0
          %4087 = vmatpush1.msra.mxu0 0.0
          %4088 = vmatprep.subr.mxu0 0.0
          %4089 = vmatpush1.msra.mxu0 0.0
          %4090 = vmatprep.subr.mxu0 0.0
          %4091 = vmatpush1.msra.mxu0 0.0
          %4092 = vmatprep.subr.mxu0 0.0
          %4093 = vmatpush1.msra.mxu0 0.0
          %4094 = vmatprep.subr.mxu0 0.0
          %4095 = vmatpush1.msra.mxu0 0.0
          %4096 = vmatprep.mubr.f32.mxu0 0.0
          %4097 = vmatmul.mubr.f32.gmra.mrb[0].mxu0 %v3391
          %v4098 = vpop.f32.mrb[0].mxu0
          %v4099 = vadd.f32 0.0, %v4098
          %v4100 = vpop.f32.mrb[0].mxu0
          %v4101 = vadd.f32 0.0, %v4100
          %4102 = vdwg.mxu0
          %4103 = vmatprep.subr.mxu0 %v1678
          %4104 = vmatpush1.msra.mxu0 %v1677
          %4105 = vmatprep.subr.mxu0 %v1710
          %4106 = vmatpush1.msra.mxu0 %v1709
          %4107 = vmatprep.subr.mxu0 %v1742
          %4108 = vmatpush1.msra.mxu0 %v1741
          %4109 = vmatprep.subr.mxu0 %v1774
          %4110 = vmatpush1.msra.mxu0 %v1773
          %4111 = vmatprep.subr.mxu0 0.0
          %4112 = vmatpush1.msra.mxu0 0.0
          %4113 = vmatprep.subr.mxu0 0.0
          %4114 = vmatpush1.msra.mxu0 0.0
          %4115 = vmatprep.subr.mxu0 0.0
          %4116 = vmatpush1.msra.mxu0 0.0
          %4117 = vmatprep.subr.mxu0 0.0
          %4118 = vmatpush1.msra.mxu0 0.0
          %4119 = vmatprep.subr.mxu0 0.0
          %4120 = vmatpush1.msra.mxu0 0.0
          %4121 = vmatprep.subr.mxu0 0.0
          %4122 = vmatpush1.msra.mxu0 0.0
          %4123 = vmatprep.subr.mxu0 0.0
          %4124 = vmatpush1.msra.mxu0 0.0
          %4125 = vmatprep.subr.mxu0 0.0
          %4126 = vmatpush1.msra.mxu0 0.0
          %4127 = vmatprep.subr.mxu0 0.0
          %4128 = vmatpush1.msra.mxu0 0.0
          %4129 = vmatprep.subr.mxu0 0.0
          %4130 = vmatpush1.msra.mxu0 0.0
          %4131 = vmatprep.subr.mxu0 0.0
          %4132 = vmatpush1.msra.mxu0 0.0
          %4133 = vmatprep.subr.mxu0 0.0
          %4134 = vmatpush1.msra.mxu0 0.0
          %4135 = vmatprep.subr.mxu0 0.0
          %4136 = vmatpush1.msra.mxu0 0.0
          %4137 = vmatprep.subr.mxu0 0.0
          %4138 = vmatpush1.msra.mxu0 0.0
          %4139 = vmatprep.subr.mxu0 0.0
          %4140 = vmatpush1.msra.mxu0 0.0
          %4141 = vmatprep.subr.mxu0 0.0
          %4142 = vmatpush1.msra.mxu0 0.0
          %4143 = vmatprep.subr.mxu0 0.0
          %4144 = vmatpush1.msra.mxu0 0.0
          %4145 = vmatprep.subr.mxu0 0.0
          %4146 = vmatpush1.msra.mxu0 0.0
          %4147 = vmatprep.subr.mxu0 0.0
          %4148 = vmatpush1.msra.mxu0 0.0
          %4149 = vmatprep.subr.mxu0 0.0
          %4150 = vmatpush1.msra.mxu0 0.0
          %4151 = vmatprep.subr.mxu0 0.0
          %4152 = vmatpush1.msra.mxu0 0.0
          %4153 = vmatprep.subr.mxu0 0.0
          %4154 = vmatpush1.msra.mxu0 0.0
          %4155 = vmatprep.subr.mxu0 0.0
          %4156 = vmatpush1.msra.mxu0 0.0
          %4157 = vmatprep.subr.mxu0 0.0
          %4158 = vmatpush1.msra.mxu0 0.0
          %4159 = vmatprep.subr.mxu0 0.0
          %4160 = vmatpush1.msra.mxu0 0.0
          %4161 = vmatprep.subr.mxu0 0.0
          %4162 = vmatpush1.msra.mxu0 0.0
          %4163 = vmatprep.subr.mxu0 0.0
          %4164 = vmatpush1.msra.mxu0 0.0
          %4165 = vmatprep.subr.mxu0 0.0
          %4166 = vmatpush1.msra.mxu0 0.0
          %4167 = vmatprep.mubr.f32.mxu0 0.0
          %4168 = vmatmul.mubr.f32.gmra.mrb[0].mxu0 %v3391
          %v4169 = vpop.f32.mrb[0].mxu0
          %v4170 = vadd.f32 0.0, %v4169
          %v4171 = vpop.f32.mrb[0].mxu0
          %v4172 = vadd.f32 0.0, %v4171
          %4173 = vdwg.mxu0
          %4174 = vmatprep.subr.mxu0 %v1680
          %4175 = vmatpush1.msra.mxu0 %v1679
          %4176 = vmatprep.subr.mxu0 %v1712
          %4177 = vmatpush1.msra.mxu0 %v1711
          %4178 = vmatprep.subr.mxu0 %v1744
          %4179 = vmatpush1.msra.mxu0 %v1743
          %4180 = vmatprep.subr.mxu0 %v1776
          %4181 = vmatpush1.msra.mxu0 %v1775
          %4182 = vmatprep.subr.mxu0 0.0
          %4183 = vmatpush1.msra.mxu0 0.0
          %4184 = vmatprep.subr.mxu0 0.0
          %4185 = vmatpush1.msra.mxu0 0.0
          %4186 = vmatprep.subr.mxu0 0.0
          %4187 = vmatpush1.msra.mxu0 0.0
          %4188 = vmatprep.subr.mxu0 0.0
          %4189 = vmatpush1.msra.mxu0 0.0
          %4190 = vmatprep.subr.mxu0 0.0
          %4191 = vmatpush1.msra.mxu0 0.0
          %4192 = vmatprep.subr.mxu0 0.0
          %4193 = vmatpush1.msra.mxu0 0.0
          %4194 = vmatprep.subr.mxu0 0.0
          %4195 = vmatpush1.msra.mxu0 0.0
          %4196 = vmatprep.subr.mxu0 0.0
          %4197 = vmatpush1.msra.mxu0 0.0
          %4198 = vmatprep.subr.mxu0 0.0
          %4199 = vmatpush1.msra.mxu0 0.0
          %4200 = vmatprep.subr.mxu0 0.0
          %4201 = vmatpush1.msra.mxu0 0.0
          %4202 = vmatprep.subr.mxu0 0.0
          %4203 = vmatpush1.msra.mxu0 0.0
          %4204 = vmatprep.subr.mxu0 0.0
          %4205 = vmatpush1.msra.mxu0 0.0
          %4206 = vmatprep.subr.mxu0 0.0
          %4207 = vmatpush1.msra.mxu0 0.0
          %4208 = vmatprep.subr.mxu0 0.0
          %4209 = vmatpush1.msra.mxu0 0.0
          %4210 = vmatprep.subr.mxu0 0.0
          %4211 = vmatpush1.msra.mxu0 0.0
          %4212 = vmatprep.subr.mxu0 0.0
          %4213 = vmatpush1.msra.mxu0 0.0
          %4214 = vmatprep.subr.mxu0 0.0
          %4215 = vmatpush1.msra.mxu0 0.0
          %4216 = vmatprep.subr.mxu0 0.0
          %4217 = vmatpush1.msra.mxu0 0.0
          %4218 = vmatprep.subr.mxu0 0.0
          %4219 = vmatpush1.msra.mxu0 0.0
          %4220 = vmatprep.subr.mxu0 0.0
          %4221 = vmatpush1.msra.mxu0 0.0
          %4222 = vmatprep.subr.mxu0 0.0
          %4223 = vmatpush1.msra.mxu0 0.0
          %4224 = vmatprep.subr.mxu0 0.0
          %4225 = vmatpush1.msra.mxu0 0.0
          %4226 = vmatprep.subr.mxu0 0.0
          %4227 = vmatpush1.msra.mxu0 0.0
          %4228 = vmatprep.subr.mxu0 0.0
          %4229 = vmatpush1.msra.mxu0 0.0
          %4230 = vmatprep.subr.mxu0 0.0
          %4231 = vmatpush1.msra.mxu0 0.0
          %4232 = vmatprep.subr.mxu0 0.0
          %4233 = vmatpush1.msra.mxu0 0.0
          %4234 = vmatprep.subr.mxu0 0.0
          %4235 = vmatpush1.msra.mxu0 0.0
          %4236 = vmatprep.subr.mxu0 0.0
          %4237 = vmatpush1.msra.mxu0 0.0
          %4238 = vmatprep.mubr.f32.mxu0 0.0
          %4239 = vmatmul.mubr.f32.gmra.mrb[0].mxu0 %v3391
          %v4240 = vpop.f32.mrb[0].mxu0
          %v4241 = vadd.f32 0.0, %v4240
          %v4242 = vpop.f32.mrb[0].mxu0
          %v4243 = vadd.f32 0.0, %v4242
          %4244 = vdwg.mxu0
          %4245 = vmatprep.subr.mxu0 %v1682
          %4246 = vmatpush1.msra.mxu0 %v1681
          %4247 = vmatprep.subr.mxu0 %v1714
          %4248 = vmatpush1.msra.mxu0 %v1713
          %4249 = vmatprep.subr.mxu0 %v1746
          %4250 = vmatpush1.msra.mxu0 %v1745
          %4251 = vmatprep.subr.mxu0 %v1778
          %4252 = vmatpush1.msra.mxu0 %v1777
          %4253 = vmatprep.subr.mxu0 0.0
          %4254 = vmatpush1.msra.mxu0 0.0
          %4255 = vmatprep.subr.mxu0 0.0
          %4256 = vmatpush1.msra.mxu0 0.0
          %4257 = vmatprep.subr.mxu0 0.0
          %4258 = vmatpush1.msra.mxu0 0.0
          %4259 = vmatprep.subr.mxu0 0.0
          %4260 = vmatpush1.msra.mxu0 0.0
          %4261 = vmatprep.subr.mxu0 0.0
          %4262 = vmatpush1.msra.mxu0 0.0
          %4263 = vmatprep.subr.mxu0 0.0
          %4264 = vmatpush1.msra.mxu0 0.0
          %4265 = vmatprep.subr.mxu0 0.0
          %4266 = vmatpush1.msra.mxu0 0.0
          %4267 = vmatprep.subr.mxu0 0.0
          %4268 = vmatpush1.msra.mxu0 0.0
          %4269 = vmatprep.subr.mxu0 0.0
          %4270 = vmatpush1.msra.mxu0 0.0
          %4271 = vmatprep.subr.mxu0 0.0
          %4272 = vmatpush1.msra.mxu0 0.0
          %4273 = vmatprep.subr.mxu0 0.0
          %4274 = vmatpush1.msra.mxu0 0.0
          %4275 = vmatprep.subr.mxu0 0.0
          %4276 = vmatpush1.msra.mxu0 0.0
          %4277 = vmatprep.subr.mxu0 0.0
          %4278 = vmatpush1.msra.mxu0 0.0
          %4279 = vmatprep.subr.mxu0 0.0
          %4280 = vmatpush1.msra.mxu0 0.0
          %4281 = vmatprep.subr.mxu0 0.0
          %4282 = vmatpush1.msra.mxu0 0.0
          %4283 = vmatprep.subr.mxu0 0.0
          %4284 = vmatpush1.msra.mxu0 0.0
          %4285 = vmatprep.subr.mxu0 0.0
          %4286 = vmatpush1.msra.mxu0 0.0
          %4287 = vmatprep.subr.mxu0 0.0
          %4288 = vmatpush1.msra.mxu0 0.0
          %4289 = vmatprep.subr.mxu0 0.0
          %4290 = vmatpush1.msra.mxu0 0.0
          %4291 = vmatprep.subr.mxu0 0.0
          %4292 = vmatpush1.msra.mxu0 0.0
          %4293 = vmatprep.subr.mxu0 0.0
          %4294 = vmatpush1.msra.mxu0 0.0
          %4295 = vmatprep.subr.mxu0 0.0
          %4296 = vmatpush1.msra.mxu0 0.0
          %4297 = vmatprep.subr.mxu0 0.0
          %4298 = vmatpush1.msra.mxu0 0.0
          %4299 = vmatprep.subr.mxu0 0.0
          %4300 = vmatpush1.msra.mxu0 0.0
          %4301 = vmatprep.subr.mxu0 0.0
          %4302 = vmatpush1.msra.mxu0 0.0
          %4303 = vmatprep.subr.mxu0 0.0
          %4304 = vmatpush1.msra.mxu0 0.0
          %4305 = vmatprep.subr.mxu0 0.0
          %4306 = vmatpush1.msra.mxu0 0.0
          %4307 = vmatprep.subr.mxu0 0.0
          %4308 = vmatpush1.msra.mxu0 0.0
          %4309 = vmatprep.mubr.f32.mxu0 0.0
          %4310 = vmatmul.mubr.f32.gmra.mrb[0].mxu0 %v3391
          %v4311 = vpop.f32.mrb[0].mxu0
          %v4312 = vadd.f32 0.0, %v4311
          %v4313 = vpop.f32.mrb[0].mxu0
          %v4314 = vadd.f32 0.0, %v4313
          %4315 = vdwg.mxu0
          %4316 = vmatprep.subr.mxu0 %v1684
          %4317 = vmatpush1.msra.mxu0 %v1683
          %4318 = vmatprep.subr.mxu0 %v1716
          %4319 = vmatpush1.msra.mxu0 %v1715
          %4320 = vmatprep.subr.mxu0 %v1748
          %4321 = vmatpush1.msra.mxu0 %v1747
          %4322 = vmatprep.subr.mxu0 %v1780
          %4323 = vmatpush1.msra.mxu0 %v1779
          %4324 = vmatprep.subr.mxu0 0.0
          %4325 = vmatpush1.msra.mxu0 0.0
          %4326 = vmatprep.subr.mxu0 0.0
          %4327 = vmatpush1.msra.mxu0 0.0
          %4328 = vmatprep.subr.mxu0 0.0
          %4329 = vmatpush1.msra.mxu0 0.0
          %4330 = vmatprep.subr.mxu0 0.0
          %4331 = vmatpush1.msra.mxu0 0.0
          %4332 = vmatprep.subr.mxu0 0.0
          %4333 = vmatpush1.msra.mxu0 0.0
          %4334 = vmatprep.subr.mxu0 0.0
          %4335 = vmatpush1.msra.mxu0 0.0
          %4336 = vmatprep.subr.mxu0 0.0
          %4337 = vmatpush1.msra.mxu0 0.0
          %4338 = vmatprep.subr.mxu0 0.0
          %4339 = vmatpush1.msra.mxu0 0.0
          %4340 = vmatprep.subr.mxu0 0.0
          %4341 = vmatpush1.msra.mxu0 0.0
          %4342 = vmatprep.subr.mxu0 0.0
          %4343 = vmatpush1.msra.mxu0 0.0
          %4344 = vmatprep.subr.mxu0 0.0
          %4345 = vmatpush1.msra.mxu0 0.0
          %4346 = vmatprep.subr.mxu0 0.0
          %4347 = vmatpush1.msra.mxu0 0.0
          %4348 = vmatprep.subr.mxu0 0.0
          %4349 = vmatpush1.msra.mxu0 0.0
          %4350 = vmatprep.subr.mxu0 0.0
          %4351 = vmatpush1.msra.mxu0 0.0
          %4352 = vmatprep.subr.mxu0 0.0
          %4353 = vmatpush1.msra.mxu0 0.0
          %4354 = vmatprep.subr.mxu0 0.0
          %4355 = vmatpush1.msra.mxu0 0.0
          %4356 = vmatprep.subr.mxu0 0.0
          %4357 = vmatpush1.msra.mxu0 0.0
          %4358 = vmatprep.subr.mxu0 0.0
          %4359 = vmatpush1.msra.mxu0 0.0
          %4360 = vmatprep.subr.mxu0 0.0
          %4361 = vmatpush1.msra.mxu0 0.0
          %4362 = vmatprep.subr.mxu0 0.0
          %4363 = vmatpush1.msra.mxu0 0.0
          %4364 = vmatprep.subr.mxu0 0.0
          %4365 = vmatpush1.msra.mxu0 0.0
          %4366 = vmatprep.subr.mxu0 0.0
          %4367 = vmatpush1.msra.mxu0 0.0
          %4368 = vmatprep.subr.mxu0 0.0
          %4369 = vmatpush1.msra.mxu0 0.0
          %4370 = vmatprep.subr.mxu0 0.0
          %4371 = vmatpush1.msra.mxu0 0.0
          %4372 = vmatprep.subr.mxu0 0.0
          %4373 = vmatpush1.msra.mxu0 0.0
          %4374 = vmatprep.subr.mxu0 0.0
          %4375 = vmatpush1.msra.mxu0 0.0
          %4376 = vmatprep.subr.mxu0 0.0
          %4377 = vmatpush1.msra.mxu0 0.0
          %4378 = vmatprep.subr.mxu0 0.0
          %4379 = vmatpush1.msra.mxu0 0.0
          %4380 = vmatprep.mubr.f32.mxu0 0.0
          %4381 = vmatmul.mubr.f32.gmra.mrb[0].mxu0 %v3391
          %v4382 = vpop.f32.mrb[0].mxu0
          %v4383 = vadd.f32 0.0, %v4382
          %v4384 = vpop.f32.mrb[0].mxu0
          %v4385 = vadd.f32 0.0, %v4384
          %4386 = vdwg.mxu0
          %4387 = vmatprep.subr.mxu0 %v1686
          %4388 = vmatpush1.msra.mxu0 %v1685
          %4389 = vmatprep.subr.mxu0 %v1718
          %4390 = vmatpush1.msra.mxu0 %v1717
          %4391 = vmatprep.subr.mxu0 %v1750
          %4392 = vmatpush1.msra.mxu0 %v1749
          %4393 = vmatprep.subr.mxu0 %v1782
          %4394 = vmatpush1.msra.mxu0 %v1781
          %4395 = vmatprep.subr.mxu0 0.0
          %4396 = vmatpush1.msra.mxu0 0.0
          %4397 = vmatprep.subr.mxu0 0.0
          %4398 = vmatpush1.msra.mxu0 0.0
          %4399 = vmatprep.subr.mxu0 0.0
          %4400 = vmatpush1.msra.mxu0 0.0
          %4401 = vmatprep.subr.mxu0 0.0
          %4402 = vmatpush1.msra.mxu0 0.0
          %4403 = vmatprep.subr.mxu0 0.0
          %4404 = vmatpush1.msra.mxu0 0.0
          %4405 = vmatprep.subr.mxu0 0.0
          %4406 = vmatpush1.msra.mxu0 0.0
          %4407 = vmatprep.subr.mxu0 0.0
          %4408 = vmatpush1.msra.mxu0 0.0
          %4409 = vmatprep.subr.mxu0 0.0
          %4410 = vmatpush1.msra.mxu0 0.0
          %4411 = vmatprep.subr.mxu0 0.0
          %4412 = vmatpush1.msra.mxu0 0.0
          %4413 = vmatprep.subr.mxu0 0.0
          %4414 = vmatpush1.msra.mxu0 0.0
          %4415 = vmatprep.subr.mxu0 0.0
          %4416 = vmatpush1.msra.mxu0 0.0
          %4417 = vmatprep.subr.mxu0 0.0
          %4418 = vmatpush1.msra.mxu0 0.0
          %4419 = vmatprep.subr.mxu0 0.0
          %4420 = vmatpush1.msra.mxu0 0.0
          %4421 = vmatprep.subr.mxu0 0.0
          %4422 = vmatpush1.msra.mxu0 0.0
          %4423 = vmatprep.subr.mxu0 0.0
          %4424 = vmatpush1.msra.mxu0 0.0
          %4425 = vmatprep.subr.mxu0 0.0
          %4426 = vmatpush1.msra.mxu0 0.0
          %4427 = vmatprep.subr.mxu0 0.0
          %4428 = vmatpush1.msra.mxu0 0.0
          %4429 = vmatprep.subr.mxu0 0.0
          %4430 = vmatpush1.msra.mxu0 0.0
          %4431 = vmatprep.subr.mxu0 0.0
          %4432 = vmatpush1.msra.mxu0 0.0
          %4433 = vmatprep.subr.mxu0 0.0
          %4434 = vmatpush1.msra.mxu0 0.0
          %4435 = vmatprep.subr.mxu0 0.0
          %4436 = vmatpush1.msra.mxu0 0.0
          %4437 = vmatprep.subr.mxu0 0.0
          %4438 = vmatpush1.msra.mxu0 0.0
          %4439 = vmatprep.subr.mxu0 0.0
          %4440 = vmatpush1.msra.mxu0 0.0
          %4441 = vmatprep.subr.mxu0 0.0
          %4442 = vmatpush1.msra.mxu0 0.0
          %4443 = vmatprep.subr.mxu0 0.0
          %4444 = vmatpush1.msra.mxu0 0.0
          %4445 = vmatprep.subr.mxu0 0.0
          %4446 = vmatpush1.msra.mxu0 0.0
          %4447 = vmatprep.subr.mxu0 0.0
          %4448 = vmatpush1.msra.mxu0 0.0
          %4449 = vmatprep.subr.mxu0 0.0
          %4450 = vmatpush1.msra.mxu0 0.0
          %4451 = vmatprep.mubr.f32.mxu0 0.0
          %4452 = vmatmul.mubr.f32.gmra.mrb[0].mxu0 %v3391
          %v4453 = vpop.f32.mrb[0].mxu0
          %v4454 = vadd.f32 0.0, %v4453
          %v4455 = vpop.f32.mrb[0].mxu0
          %v4456 = vadd.f32 0.0, %v4455
          %4457 = vdwg.mxu0
          %4458 = vmatprep.subr.mxu0 %v1688
          %4459 = vmatpush1.msra.mxu0 %v1687
          %4460 = vmatprep.subr.mxu0 %v1720
          %4461 = vmatpush1.msra.mxu0 %v1719
          %4462 = vmatprep.subr.mxu0 %v1752
          %4463 = vmatpush1.msra.mxu0 %v1751
          %4464 = vmatprep.subr.mxu0 %v1784
          %4465 = vmatpush1.msra.mxu0 %v1783
          %4466 = vmatprep.subr.mxu0 0.0
          %4467 = vmatpush1.msra.mxu0 0.0
          %4468 = vmatprep.subr.mxu0 0.0
          %4469 = vmatpush1.msra.mxu0 0.0
          %4470 = vmatprep.subr.mxu0 0.0
          %4471 = vmatpush1.msra.mxu0 0.0
          %4472 = vmatprep.subr.mxu0 0.0
          %4473 = vmatpush1.msra.mxu0 0.0
          %4474 = vmatprep.subr.mxu0 0.0
          %4475 = vmatpush1.msra.mxu0 0.0
          %4476 = vmatprep.subr.mxu0 0.0
          %4477 = vmatpush1.msra.mxu0 0.0
          %4478 = vmatprep.subr.mxu0 0.0
          %4479 = vmatpush1.msra.mxu0 0.0
          %4480 = vmatprep.subr.mxu0 0.0
          %4481 = vmatpush1.msra.mxu0 0.0
          %4482 = vmatprep.subr.mxu0 0.0
          %4483 = vmatpush1.msra.mxu0 0.0
          %4484 = vmatprep.subr.mxu0 0.0
          %4485 = vmatpush1.msra.mxu0 0.0
          %4486 = vmatprep.subr.mxu0 0.0
          %4487 = vmatpush1.msra.mxu0 0.0
          %4488 = vmatprep.subr.mxu0 0.0
          %4489 = vmatpush1.msra.mxu0 0.0
          %4490 = vmatprep.subr.mxu0 0.0
          %4491 = vmatpush1.msra.mxu0 0.0
          %4492 = vmatprep.subr.mxu0 0.0
          %4493 = vmatpush1.msra.mxu0 0.0
          %4494 = vmatprep.subr.mxu0 0.0
          %4495 = vmatpush1.msra.mxu0 0.0
          %4496 = vmatprep.subr.mxu0 0.0
          %4497 = vmatpush1.msra.mxu0 0.0
          %4498 = vmatprep.subr.mxu0 0.0
          %4499 = vmatpush1.msra.mxu0 0.0
          %4500 = vmatprep.subr.mxu0 0.0
          %4501 = vmatpush1.msra.mxu0 0.0
          %4502 = vmatprep.subr.mxu0 0.0
          %4503 = vmatpush1.msra.mxu0 0.0
          %4504 = vmatprep.subr.mxu0 0.0
          %4505 = vmatpush1.msra.mxu0 0.0
          %4506 = vmatprep.subr.mxu0 0.0
          %4507 = vmatpush1.msra.mxu0 0.0
          %4508 = vmatprep.subr.mxu0 0.0
          %4509 = vmatpush1.msra.mxu0 0.0
          %4510 = vmatprep.subr.mxu0 0.0
          %4511 = vmatpush1.msra.mxu0 0.0
          %4512 = vmatprep.subr.mxu0 0.0
          %4513 = vmatpush1.msra.mxu0 0.0
          %4514 = vmatprep.subr.mxu0 0.0
          %4515 = vmatpush1.msra.mxu0 0.0
          %4516 = vmatprep.subr.mxu0 0.0
          %4517 = vmatpush1.msra.mxu0 0.0
          %4518 = vmatprep.subr.mxu0 0.0
          %4519 = vmatpush1.msra.mxu0 0.0
          %4520 = vmatprep.subr.mxu0 0.0
          %4521 = vmatpush1.msra.mxu0 0.0
          %4522 = vmatprep.mubr.f32.mxu0 0.0
          %4523 = vmatmul.mubr.f32.gmra.mrb[0].mxu0 %v3391
          %v4524 = vpop.f32.mrb[0].mxu0
          %v4525 = vadd.f32 0.0, %v4524
          %v4526 = vpop.f32.mrb[0].mxu0
          %v4527 = vadd.f32 0.0, %v4526
          %4528 = vdwg.mxu0
          %v4529 = vmul.f32 %v3460, %v1060
          %v4530 = vmul.f32 %v3462, %v1060
          %v4531 = vmul.f32 %v3531, %v1060
          %v4532 = vmul.f32 %v3533, %v1060
          %v4533 = vmul.f32 %v3602, %v1060
          %v4534 = vmul.f32 %v3604, %v1060
          %v4535 = vmul.f32 %v3673, %v1060
          %v4536 = vmul.f32 %v3675, %v1060
          %v4537 = vmul.f32 %v3744, %v1060
          %v4538 = vmul.f32 %v3746, %v1060
          %v4539 = vmul.f32 %v3815, %v1060
          %v4540 = vmul.f32 %v3817, %v1060
          %v4541 = vmul.f32 %v3886, %v1060
          %v4542 = vmul.f32 %v3888, %v1060
          %v4543 = vmul.f32 %v3957, %v1060
          %v4544 = vmul.f32 %v3959, %v1060
          %v4545 = vmul.f32 %v4028, %v1060
          %v4546 = vmul.f32 %v4030, %v1060
          %v4547 = vmul.f32 %v4099, %v1060
          %v4548 = vmul.f32 %v4101, %v1060
          %v4549 = vmul.f32 %v4170, %v1060
          %v4550 = vmul.f32 %v4172, %v1060
          %v4551 = vmul.f32 %v4241, %v1060
          %v4552 = vmul.f32 %v4243, %v1060
          %v4553 = vmul.f32 %v4312, %v1060
          %v4554 = vmul.f32 %v4314, %v1060
          %v4555 = vmul.f32 %v4383, %v1060
          %v4556 = vmul.f32 %v4385, %v1060
          %v4557 = vmul.f32 %v4454, %v1060
          %v4558 = vmul.f32 %v4456, %v1060
          %v4559 = vmul.f32 %v4525, %v1060
          %v4560 = vmul.f32 %v4527, %v1060
          %v4593 = vcombine.low %v4529, %v4530
          %v4594 = vcombine.low %v4531, %v4532
          %v4596 = vunpack.c.l.s4 1983009808
          %v4597 = vunpack.c.0.s8 %v4596
          %v4598 = vlaneseq
          %v4599 = vshrl.u32 %v4598, 7
          %v4600 = vsub.s32 %v4597, %v4599
          %v4601 = vrot.slane %v4593, %v4600
          %v4603 = vunpack.c.l.s4 1983009808
          %v4604 = vunpack.c.0.s8 %v4603
          %v4605 = vlaneseq
          %v4606 = vshrl.u32 %v4605, 7
          %v4607 = vsub.s32 %v4604, %v4606
          %v4608 = vrot.slane %v4594, %v4607
          %v4609 = vcombine.low %v4601, %v4608
          %v4610 = vcombine.low %v4533, %v4534
          %v4611 = vcombine.low %v4535, %v4536
          %v4613 = vunpack.c.l.s4 1983009808
          %v4614 = vunpack.c.0.s8 %v4613
          %v4615 = vlaneseq
          %v4616 = vshrl.u32 %v4615, 7
          %v4617 = vsub.s32 %v4614, %v4616
          %v4618 = vrot.slane %v4610, %v4617
          %v4620 = vunpack.c.l.s4 1983009808
          %v4621 = vunpack.c.0.s8 %v4620
          %v4622 = vlaneseq
          %v4623 = vshrl.u32 %v4622, 7
          %v4624 = vsub.s32 %v4621, %v4623
          %v4625 = vrot.slane %v4611, %v4624
          %v4626 = vcombine.low %v4618, %v4625
          %v4627 = vcombine.low %v4537, %v4538
          %v4628 = vcombine.low %v4539, %v4540
          %v4630 = vunpack.c.l.s4 1983009808
          %v4631 = vunpack.c.0.s8 %v4630
          %v4632 = vlaneseq
          %v4633 = vshrl.u32 %v4632, 7
          %v4634 = vsub.s32 %v4631, %v4633
          %v4635 = vrot.slane %v4627, %v4634
          %v4637 = vunpack.c.l.s4 1983009808
          %v4638 = vunpack.c.0.s8 %v4637
          %v4639 = vlaneseq
          %v4640 = vshrl.u32 %v4639, 7
          %v4641 = vsub.s32 %v4638, %v4640
          %v4642 = vrot.slane %v4628, %v4641
          %v4643 = vcombine.low %v4635, %v4642
          %v4644 = vcombine.low %v4541, %v4542
          %v4645 = vcombine.low %v4543, %v4544
          %v4647 = vunpack.c.l.s4 1983009808
          %v4648 = vunpack.c.0.s8 %v4647
          %v4649 = vlaneseq
          %v4650 = vshrl.u32 %v4649, 7
          %v4651 = vsub.s32 %v4648, %v4650
          %v4652 = vrot.slane %v4644, %v4651
          %v4654 = vunpack.c.l.s4 1983009808
          %v4655 = vunpack.c.0.s8 %v4654
          %v4656 = vlaneseq
          %v4657 = vshrl.u32 %v4656, 7
          %v4658 = vsub.s32 %v4655, %v4657
          %v4659 = vrot.slane %v4645, %v4658
          %v4660 = vcombine.low %v4652, %v4659
          %v4661 = vcombine.low %v4545, %v4546
          %v4662 = vcombine.low %v4547, %v4548
          %v4664 = vunpack.c.l.s4 1983009808
          %v4665 = vunpack.c.0.s8 %v4664
          %v4666 = vlaneseq
          %v4667 = vshrl.u32 %v4666, 7
          %v4668 = vsub.s32 %v4665, %v4667
          %v4669 = vrot.slane %v4661, %v4668
          %v4671 = vunpack.c.l.s4 1983009808
          %v4672 = vunpack.c.0.s8 %v4671
          %v4673 = vlaneseq
          %v4674 = vshrl.u32 %v4673, 7
          %v4675 = vsub.s32 %v4672, %v4674
          %v4676 = vrot.slane %v4662, %v4675
          %v4677 = vcombine.low %v4669, %v4676
          %v4678 = vcombine.low %v4549, %v4550
          %v4679 = vcombine.low %v4551, %v4552
          %v4681 = vunpack.c.l.s4 1983009808
          %v4682 = vunpack.c.0.s8 %v4681
          %v4683 = vlaneseq
          %v4684 = vshrl.u32 %v4683, 7
          %v4685 = vsub.s32 %v4682, %v4684
          %v4686 = vrot.slane %v4678, %v4685
          %v4688 = vunpack.c.l.s4 1983009808
          %v4689 = vunpack.c.0.s8 %v4688
          %v4690 = vlaneseq
          %v4691 = vshrl.u32 %v4690, 7
          %v4692 = vsub.s32 %v4689, %v4691
          %v4693 = vrot.slane %v4679, %v4692
          %v4694 = vcombine.low %v4686, %v4693
          %v4695 = vcombine.low %v4553, %v4554
          %v4696 = vcombine.low %v4555, %v4556
          %v4698 = vunpack.c.l.s4 1983009808
          %v4699 = vunpack.c.0.s8 %v4698
          %v4700 = vlaneseq
          %v4701 = vshrl.u32 %v4700, 7
          %v4702 = vsub.s32 %v4699, %v4701
          %v4703 = vrot.slane %v4695, %v4702
          %v4705 = vunpack.c.l.s4 1983009808
          %v4706 = vunpack.c.0.s8 %v4705
          %v4707 = vlaneseq
          %v4708 = vshrl.u32 %v4707, 7
          %v4709 = vsub.s32 %v4706, %v4708
          %v4710 = vrot.slane %v4696, %v4709
          %v4711 = vcombine.low %v4703, %v4710
          %v4712 = vcombine.low %v4557, %v4558
          %v4713 = vcombine.low %v4559, %v4560
          %v4715 = vunpack.c.l.s4 1983009808
          %v4716 = vunpack.c.0.s8 %v4715
          %v4717 = vlaneseq
          %v4718 = vshrl.u32 %v4717, 7
          %v4719 = vsub.s32 %v4716, %v4718
          %v4720 = vrot.slane %v4712, %v4719
          %v4722 = vunpack.c.l.s4 1983009808
          %v4723 = vunpack.c.0.s8 %v4722
          %v4724 = vlaneseq
          %v4725 = vshrl.u32 %v4724, 7
          %v4726 = vsub.s32 %v4723, %v4725
          %v4727 = vrot.slane %v4713, %v4726
          %v4728 = vcombine.low %v4720, %v4727
          %s4737 = scalar_lea.vmem [#allocation2], 64
          %4738 = vst [vmem:[%s4737] sm:$0xff] %v4609
          %4739 = vst [vmem:[%s4737 + $0x8] sm:$0xff] %v4626
          %4740 = vst [vmem:[%s4737 + $0x10] sm:$0xff] %v4643
          %4741 = vst [vmem:[%s4737 + $0x18] sm:$0xff] %v4660
          %4742 = vst [vmem:[%s4737 + $0x20] sm:$0xff] %v4677
          %4743 = vst [vmem:[%s4737 + $0x28] sm:$0xff] %v4694
          %4744 = vst [vmem:[%s4737 + $0x30] sm:$0xff] %v4711
          %4745 = vst [vmem:[%s4737 + $0x38] sm:$0xff] %v4728
          %v4746 = vadd.s32 %v1073, 64
          %vm4747 = vcmp.eq.s32.totalorder %v1064, %v4746
          %vm4748 = vcmp.eq.s32.totalorder %v1065, %v4746
          %vm4749 = vcmp.eq.s32.totalorder %v1066, %v4746
          %vm4750 = vcmp.eq.s32.totalorder %v1067, %v4746
          %vm4751 = vcmp.eq.s32.totalorder %v1785, %v4746
          %vm4752 = vcmp.eq.s32.totalorder %v1786, %v4746
          %vm4753 = vcmp.eq.s32.totalorder %v1787, %v4746
          %vm4754 = vcmp.eq.s32.totalorder %v1788, %v4746
          %vm4755 = vcmp.eq.s32.totalorder %v1789, %v4746
          %vm4756 = vcmp.eq.s32.totalorder %v1790, %v4746
          %vm4757 = vcmp.eq.s32.totalorder %v1791, %v4746
          %vm4758 = vcmp.eq.s32.totalorder %v1792, %v4746
          %vm4759 = vcmp.eq.s32.totalorder %v1793, %v4746
          %vm4760 = vcmp.eq.s32.totalorder %v1794, %v4746
          %vm4761 = vcmp.eq.s32.totalorder %v1795, %v4746
          %vm4762 = vcmp.eq.s32.totalorder %v1796, %v4746
          %v4763 = vsel %vm4747, 1, 0
          %v4764 = vsel %vm4748, 1, 0
          %v4765 = vsel %vm4749, 1, 0
          %v4766 = vsel %vm4750, 1, 0
          %v4767 = vsel %vm4751, 1, 0
          %v4768 = vsel %vm4752, 1, 0
          %v4769 = vsel %vm4753, 1, 0
          %v4770 = vsel %vm4754, 1, 0
          %v4771 = vsel %vm4755, 1, 0
          %v4772 = vsel %vm4756, 1, 0
          %v4773 = vsel %vm4757, 1, 0
          %v4774 = vsel %vm4758, 1, 0
          %v4775 = vsel %vm4759, 1, 0
          %v4776 = vsel %vm4760, 1, 0
          %v4777 = vsel %vm4761, 1, 0
          %v4778 = vsel %vm4762, 1, 0
          %v4779 = vcvt.s32.f32 %v4763
          %v4780 = vcvt.s32.f32 %v4764
          %v4781 = vcvt.s32.f32 %v4765
          %v4782 = vcvt.s32.f32 %v4766
          %v4783 = vcvt.s32.f32 %v4767
          %v4784 = vcvt.s32.f32 %v4768
          %v4785 = vcvt.s32.f32 %v4769
          %v4786 = vcvt.s32.f32 %v4770
          %v4787 = vcvt.s32.f32 %v4771
          %v4788 = vcvt.s32.f32 %v4772
          %v4789 = vcvt.s32.f32 %v4773
          %v4790 = vcvt.s32.f32 %v4774
          %v4791 = vcvt.s32.f32 %v4775
          %v4792 = vcvt.s32.f32 %v4776
          %v4793 = vcvt.s32.f32 %v4777
          %v4794 = vcvt.s32.f32 %v4778
          %4795 = vmatprep.subr.mxu0 0.0
          %4796 = vmatpush1.msra.mxu0 %v4779
          %4797 = vmatprep.subr.mxu0 0.0
          %4798 = vmatpush1.msra.mxu0 %v4780
          %4799 = vmatprep.subr.mxu0 0.0
          %4800 = vmatpush1.msra.mxu0 %v4781
          %4801 = vmatprep.subr.mxu0 0.0
          %4802 = vmatpush1.msra.mxu0 %v4782
          %4803 = vmatprep.subr.mxu0 0.0
          %4804 = vmatpush1.msra.mxu0 %v4783
          %4805 = vmatprep.subr.mxu0 0.0
          %4806 = vmatpush1.msra.mxu0 %v4784
          %4807 = vmatprep.subr.mxu0 0.0
          %4808 = vmatpush1.msra.mxu0 %v4785
          %4809 = vmatprep.subr.mxu0 0.0
          %4810 = vmatpush1.msra.mxu0 %v4786
          %4811 = vmatprep.subr.mxu0 0.0
          %4812 = vmatpush1.msra.mxu0 %v4787
          %4813 = vmatprep.subr.mxu0 0.0
          %4814 = vmatpush1.msra.mxu0 %v4788
          %4815 = vmatprep.subr.mxu0 0.0
          %4816 = vmatpush1.msra.mxu0 %v4789
          %4817 = vmatprep.subr.mxu0 0.0
          %4818 = vmatpush1.msra.mxu0 %v4790
          %4819 = vmatprep.subr.mxu0 0.0
          %4820 = vmatpush1.msra.mxu0 %v4791
          %4821 = vmatprep.subr.mxu0 0.0
          %4822 = vmatpush1.msra.mxu0 %v4792
          %4823 = vmatprep.subr.mxu0 0.0
          %4824 = vmatpush1.msra.mxu0 %v4793
          %4825 = vmatprep.subr.mxu0 0.0
          %4826 = vmatpush1.msra.mxu0 %v4794
          %4827 = vmatprep.subr.mxu0 0.0
          %4828 = vmatpush1.msra.mxu0 0.0
          %4829 = vmatprep.subr.mxu0 0.0
          %4830 = vmatpush1.msra.mxu0 0.0
          %4831 = vmatprep.subr.mxu0 0.0
          %4832 = vmatpush1.msra.mxu0 0.0
          %4833 = vmatprep.subr.mxu0 0.0
          %4834 = vmatpush1.msra.mxu0 0.0
          %4835 = vmatprep.subr.mxu0 0.0
          %4836 = vmatpush1.msra.mxu0 0.0
          %4837 = vmatprep.subr.mxu0 0.0
          %4838 = vmatpush1.msra.mxu0 0.0
          %4839 = vmatprep.subr.mxu0 0.0
          %4840 = vmatpush1.msra.mxu0 0.0
          %4841 = vmatprep.subr.mxu0 0.0
          %4842 = vmatpush1.msra.mxu0 0.0
          %4843 = vmatprep.subr.mxu0 0.0
          %4844 = vmatpush1.msra.mxu0 0.0
          %4845 = vmatprep.subr.mxu0 0.0
          %4846 = vmatpush1.msra.mxu0 0.0
          %4847 = vmatprep.subr.mxu0 0.0
          %4848 = vmatpush1.msra.mxu0 0.0
          %4849 = vmatprep.subr.mxu0 0.0
          %4850 = vmatpush1.msra.mxu0 0.0
          %4851 = vmatprep.subr.mxu0 0.0
          %4852 = vmatpush1.msra.mxu0 0.0
          %4853 = vmatprep.subr.mxu0 0.0
          %4854 = vmatpush1.msra.mxu0 0.0
          %4855 = vmatprep.subr.mxu0 0.0
          %4856 = vmatpush1.msra.mxu0 0.0
          %4857 = vmatprep.subr.mxu0 0.0
          %4858 = vmatpush1.msra.mxu0 0.0
          %4859 = vmatprep.mubr.f32.mxu0 0.0
          %4860 = vmatmul.mubr.f32.gmra.mrb[0].mxu0 %v772
          %v4861 = vpop.f32.mrb[0].mxu0
          %v4862 = vadd.f32 0.0, %v4861
          %v4863 = vpop.f32.mrb[0].mxu0
          %4864 = vdwg.mxu0
          %v4866 = vsel %vm1915, %v4862, 0
          %4868 = vmatprep.subr.mxu0 %v1658
          %4869 = vmatpush1.msra.mxu0 %v1657
          %4870 = vmatprep.subr.mxu0 %v1690
          %4871 = vmatpush1.msra.mxu0 %v1689
          %4872 = vmatprep.subr.mxu0 %v1722
          %4873 = vmatpush1.msra.mxu0 %v1721
          %4874 = vmatprep.subr.mxu0 %v1754
          %4875 = vmatpush1.msra.mxu0 %v1753
          %4876 = vmatprep.subr.mxu0 0.0
          %4877 = vmatpush1.msra.mxu0 0.0
          %4878 = vmatprep.subr.mxu0 0.0
          %4879 = vmatpush1.msra.mxu0 0.0
          %4880 = vmatprep.subr.mxu0 0.0
          %4881 = vmatpush1.msra.mxu0 0.0
          %4882 = vmatprep.subr.mxu0 0.0
          %4883 = vmatpush1.msra.mxu0 0.0
          %4884 = vmatprep.subr.mxu0 0.0
          %4885 = vmatpush1.msra.mxu0 0.0
          %4886 = vmatprep.subr.mxu0 0.0
          %4887 = vmatpush1.msra.mxu0 0.0
          %4888 = vmatprep.subr.mxu0 0.0
          %4889 = vmatpush1.msra.mxu0 0.0
          %4890 = vmatprep.subr.mxu0 0.0
          %4891 = vmatpush1.msra.mxu0 0.0
          %4892 = vmatprep.subr.mxu0 0.0
          %4893 = vmatpush1.msra.mxu0 0.0
          %4894 = vmatprep.subr.mxu0 0.0
          %4895 = vmatpush1.msra.mxu0 0.0
          %4896 = vmatprep.subr.mxu0 0.0
          %4897 = vmatpush1.msra.mxu0 0.0
          %4898 = vmatprep.subr.mxu0 0.0
          %4899 = vmatpush1.msra.mxu0 0.0
          %4900 = vmatprep.subr.mxu0 0.0
          %4901 = vmatpush1.msra.mxu0 0.0
          %4902 = vmatprep.subr.mxu0 0.0
          %4903 = vmatpush1.msra.mxu0 0.0
          %4904 = vmatprep.subr.mxu0 0.0
          %4905 = vmatpush1.msra.mxu0 0.0
          %4906 = vmatprep.subr.mxu0 0.0
          %4907 = vmatpush1.msra.mxu0 0.0
          %4908 = vmatprep.subr.mxu0 0.0
          %4909 = vmatpush1.msra.mxu0 0.0
          %4910 = vmatprep.subr.mxu0 0.0
          %4911 = vmatpush1.msra.mxu0 0.0
          %4912 = vmatprep.subr.mxu0 0.0
          %4913 = vmatpush1.msra.mxu0 0.0
          %4914 = vmatprep.subr.mxu0 0.0
          %4915 = vmatpush1.msra.mxu0 0.0
          %4916 = vmatprep.subr.mxu0 0.0
          %4917 = vmatpush1.msra.mxu0 0.0
          %4918 = vmatprep.subr.mxu0 0.0
          %4919 = vmatpush1.msra.mxu0 0.0
          %4920 = vmatprep.subr.mxu0 0.0
          %4921 = vmatpush1.msra.mxu0 0.0
          %4922 = vmatprep.subr.mxu0 0.0
          %4923 = vmatpush1.msra.mxu0 0.0
          %4924 = vmatprep.subr.mxu0 0.0
          %4925 = vmatpush1.msra.mxu0 0.0
          %4926 = vmatprep.subr.mxu0 0.0
          %4927 = vmatpush1.msra.mxu0 0.0
          %4928 = vmatprep.subr.mxu0 0.0
          %4929 = vmatpush1.msra.mxu0 0.0
          %4930 = vmatprep.subr.mxu0 0.0
          %4931 = vmatpush1.msra.mxu0 0.0
          %4932 = vmatprep.mubr.f32.mxu0 0.0
          %4933 = vmatmul.mubr.f32.gmra.mrb[0].mxu0 %v4866
          %v4934 = vpop.f32.mrb[0].mxu0
          %v4935 = vadd.f32 0.0, %v4934
          %v4936 = vpop.f32.mrb[0].mxu0
          %v4937 = vadd.f32 0.0, %v4936
          %4938 = vdwg.mxu0
          %4939 = vmatprep.subr.mxu0 %v1660
          %4940 = vmatpush1.msra.mxu0 %v1659
          %4941 = vmatprep.subr.mxu0 %v1692
          %4942 = vmatpush1.msra.mxu0 %v1691
          %4943 = vmatprep.subr.mxu0 %v1724
          %4944 = vmatpush1.msra.mxu0 %v1723
          %4945 = vmatprep.subr.mxu0 %v1756
          %4946 = vmatpush1.msra.mxu0 %v1755
          %4947 = vmatprep.subr.mxu0 0.0
          %4948 = vmatpush1.msra.mxu0 0.0
          %4949 = vmatprep.subr.mxu0 0.0
          %4950 = vmatpush1.msra.mxu0 0.0
          %4951 = vmatprep.subr.mxu0 0.0
          %4952 = vmatpush1.msra.mxu0 0.0
          %4953 = vmatprep.subr.mxu0 0.0
          %4954 = vmatpush1.msra.mxu0 0.0
          %4955 = vmatprep.subr.mxu0 0.0
          %4956 = vmatpush1.msra.mxu0 0.0
          %4957 = vmatprep.subr.mxu0 0.0
          %4958 = vmatpush1.msra.mxu0 0.0
          %4959 = vmatprep.subr.mxu0 0.0
          %4960 = vmatpush1.msra.mxu0 0.0
          %4961 = vmatprep.subr.mxu0 0.0
          %4962 = vmatpush1.msra.mxu0 0.0
          %4963 = vmatprep.subr.mxu0 0.0
          %4964 = vmatpush1.msra.mxu0 0.0
          %4965 = vmatprep.subr.mxu0 0.0
          %4966 = vmatpush1.msra.mxu0 0.0
          %4967 = vmatprep.subr.mxu0 0.0
          %4968 = vmatpush1.msra.mxu0 0.0
          %4969 = vmatprep.subr.mxu0 0.0
          %4970 = vmatpush1.msra.mxu0 0.0
          %4971 = vmatprep.subr.mxu0 0.0
          %4972 = vmatpush1.msra.mxu0 0.0
          %4973 = vmatprep.subr.mxu0 0.0
          %4974 = vmatpush1.msra.mxu0 0.0
          %4975 = vmatprep.subr.mxu0 0.0
          %4976 = vmatpush1.msra.mxu0 0.0
          %4977 = vmatprep.subr.mxu0 0.0
          %4978 = vmatpush1.msra.mxu0 0.0
          %4979 = vmatprep.subr.mxu0 0.0
          %4980 = vmatpush1.msra.mxu0 0.0
          %4981 = vmatprep.subr.mxu0 0.0
          %4982 = vmatpush1.msra.mxu0 0.0
          %4983 = vmatprep.subr.mxu0 0.0
          %4984 = vmatpush1.msra.mxu0 0.0
          %4985 = vmatprep.subr.mxu0 0.0
          %4986 = vmatpush1.msra.mxu0 0.0
          %4987 = vmatprep.subr.mxu0 0.0
          %4988 = vmatpush1.msra.mxu0 0.0
          %4989 = vmatprep.subr.mxu0 0.0
          %4990 = vmatpush1.msra.mxu0 0.0
          %4991 = vmatprep.subr.mxu0 0.0
          %4992 = vmatpush1.msra.mxu0 0.0
          %4993 = vmatprep.subr.mxu0 0.0
          %4994 = vmatpush1.msra.mxu0 0.0
          %4995 = vmatprep.subr.mxu0 0.0
          %4996 = vmatpush1.msra.mxu0 0.0
          %4997 = vmatprep.subr.mxu0 0.0
          %4998 = vmatpush1.msra.mxu0 0.0
          %4999 = vmatprep.subr.mxu0 0.0
          %5000 = vmatpush1.msra.mxu0 0.0
          %5001 = vmatprep.subr.mxu0 0.0
          %5002 = vmatpush1.msra.mxu0 0.0
          %5003 = vmatprep.mubr.f32.mxu0 0.0
          %5004 = vmatmul.mubr.f32.gmra.mrb[0].mxu0 %v4866
          %v5005 = vpop.f32.mrb[0].mxu0
          %v5006 = vadd.f32 0.0, %v5005
          %v5007 = vpop.f32.mrb[0].mxu0
          %v5008 = vadd.f32 0.0, %v5007
          %5009 = vdwg.mxu0
          %5010 = vmatprep.subr.mxu0 %v1662
          %5011 = vmatpush1.msra.mxu0 %v1661
          %5012 = vmatprep.subr.mxu0 %v1694
          %5013 = vmatpush1.msra.mxu0 %v1693
          %5014 = vmatprep.subr.mxu0 %v1726
          %5015 = vmatpush1.msra.mxu0 %v1725
          %5016 = vmatprep.subr.mxu0 %v1758
          %5017 = vmatpush1.msra.mxu0 %v1757
          %5018 = vmatprep.subr.mxu0 0.0
          %5019 = vmatpush1.msra.mxu0 0.0
          %5020 = vmatprep.subr.mxu0 0.0
          %5021 = vmatpush1.msra.mxu0 0.0
          %5022 = vmatprep.subr.mxu0 0.0
          %5023 = vmatpush1.msra.mxu0 0.0
          %5024 = vmatprep.subr.mxu0 0.0
          %5025 = vmatpush1.msra.mxu0 0.0
          %5026 = vmatprep.subr.mxu0 0.0
          %5027 = vmatpush1.msra.mxu0 0.0
          %5028 = vmatprep.subr.mxu0 0.0
          %5029 = vmatpush1.msra.mxu0 0.0
          %5030 = vmatprep.subr.mxu0 0.0
          %5031 = vmatpush1.msra.mxu0 0.0
          %5032 = vmatprep.subr.mxu0 0.0
          %5033 = vmatpush1.msra.mxu0 0.0
          %5034 = vmatprep.subr.mxu0 0.0
          %5035 = vmatpush1.msra.mxu0 0.0
          %5036 = vmatprep.subr.mxu0 0.0
          %5037 = vmatpush1.msra.mxu0 0.0
          %5038 = vmatprep.subr.mxu0 0.0
          %5039 = vmatpush1.msra.mxu0 0.0
          %5040 = vmatprep.subr.mxu0 0.0
          %5041 = vmatpush1.msra.mxu0 0.0
          %5042 = vmatprep.subr.mxu0 0.0
          %5043 = vmatpush1.msra.mxu0 0.0
          %5044 = vmatprep.subr.mxu0 0.0
          %5045 = vmatpush1.msra.mxu0 0.0
          %5046 = vmatprep.subr.mxu0 0.0
          %5047 = vmatpush1.msra.mxu0 0.0
          %5048 = vmatprep.subr.mxu0 0.0
          %5049 = vmatpush1.msra.mxu0 0.0
          %5050 = vmatprep.subr.mxu0 0.0
          %5051 = vmatpush1.msra.mxu0 0.0
          %5052 = vmatprep.subr.mxu0 0.0
          %5053 = vmatpush1.msra.mxu0 0.0
          %5054 = vmatprep.subr.mxu0 0.0
          %5055 = vmatpush1.msra.mxu0 0.0
          %5056 = vmatprep.subr.mxu0 0.0
          %5057 = vmatpush1.msra.mxu0 0.0
          %5058 = vmatprep.subr.mxu0 0.0
          %5059 = vmatpush1.msra.mxu0 0.0
          %5060 = vmatprep.subr.mxu0 0.0
          %5061 = vmatpush1.msra.mxu0 0.0
          %5062 = vmatprep.subr.mxu0 0.0
          %5063 = vmatpush1.msra.mxu0 0.0
          %5064 = vmatprep.subr.mxu0 0.0
          %5065 = vmatpush1.msra.mxu0 0.0
          %5066 = vmatprep.subr.mxu0 0.0
          %5067 = vmatpush1.msra.mxu0 0.0
          %5068 = vmatprep.subr.mxu0 0.0
          %5069 = vmatpush1.msra.mxu0 0.0
          %5070 = vmatprep.subr.mxu0 0.0
          %5071 = vmatpush1.msra.mxu0 0.0
          %5072 = vmatprep.subr.mxu0 0.0
          %5073 = vmatpush1.msra.mxu0 0.0
          %5074 = vmatprep.mubr.f32.mxu0 0.0
          %5075 = vmatmul.mubr.f32.gmra.mrb[0].mxu0 %v4866
          %v5076 = vpop.f32.mrb[0].mxu0
          %v5077 = vadd.f32 0.0, %v5076
          %v5078 = vpop.f32.mrb[0].mxu0
          %v5079 = vadd.f32 0.0, %v5078
          %5080 = vdwg.mxu0
          %5081 = vmatprep.subr.mxu0 %v1664
          %5082 = vmatpush1.msra.mxu0 %v1663
          %5083 = vmatprep.subr.mxu0 %v1696
          %5084 = vmatpush1.msra.mxu0 %v1695
          %5085 = vmatprep.subr.mxu0 %v1728
          %5086 = vmatpush1.msra.mxu0 %v1727
          %5087 = vmatprep.subr.mxu0 %v1760
          %5088 = vmatpush1.msra.mxu0 %v1759
          %5089 = vmatprep.subr.mxu0 0.0
          %5090 = vmatpush1.msra.mxu0 0.0
          %5091 = vmatprep.subr.mxu0 0.0
          %5092 = vmatpush1.msra.mxu0 0.0
          %5093 = vmatprep.subr.mxu0 0.0
          %5094 = vmatpush1.msra.mxu0 0.0
          %5095 = vmatprep.subr.mxu0 0.0
          %5096 = vmatpush1.msra.mxu0 0.0
          %5097 = vmatprep.subr.mxu0 0.0
          %5098 = vmatpush1.msra.mxu0 0.0
          %5099 = vmatprep.subr.mxu0 0.0
          %5100 = vmatpush1.msra.mxu0 0.0
          %5101 = vmatprep.subr.mxu0 0.0
          %5102 = vmatpush1.msra.mxu0 0.0
          %5103 = vmatprep.subr.mxu0 0.0
          %5104 = vmatpush1.msra.mxu0 0.0
          %5105 = vmatprep.subr.mxu0 0.0
          %5106 = vmatpush1.msra.mxu0 0.0
          %5107 = vmatprep.subr.mxu0 0.0
          %5108 = vmatpush1.msra.mxu0 0.0
          %5109 = vmatprep.subr.mxu0 0.0
          %5110 = vmatpush1.msra.mxu0 0.0
          %5111 = vmatprep.subr.mxu0 0.0
          %5112 = vmatpush1.msra.mxu0 0.0
          %5113 = vmatprep.subr.mxu0 0.0
          %5114 = vmatpush1.msra.mxu0 0.0
          %5115 = vmatprep.subr.mxu0 0.0
          %5116 = vmatpush1.msra.mxu0 0.0
          %5117 = vmatprep.subr.mxu0 0.0
          %5118 = vmatpush1.msra.mxu0 0.0
          %5119 = vmatprep.subr.mxu0 0.0
          %5120 = vmatpush1.msra.mxu0 0.0
          %5121 = vmatprep.subr.mxu0 0.0
          %5122 = vmatpush1.msra.mxu0 0.0
          %5123 = vmatprep.subr.mxu0 0.0
          %5124 = vmatpush1.msra.mxu0 0.0
          %5125 = vmatprep.subr.mxu0 0.0
          %5126 = vmatpush1.msra.mxu0 0.0
          %5127 = vmatprep.subr.mxu0 0.0
          %5128 = vmatpush1.msra.mxu0 0.0
          %5129 = vmatprep.subr.mxu0 0.0
          %5130 = vmatpush1.msra.mxu0 0.0
          %5131 = vmatprep.subr.mxu0 0.0
          %5132 = vmatpush1.msra.mxu0 0.0
          %5133 = vmatprep.subr.mxu0 0.0
          %5134 = vmatpush1.msra.mxu0 0.0
          %5135 = vmatprep.subr.mxu0 0.0
          %5136 = vmatpush1.msra.mxu0 0.0
          %5137 = vmatprep.subr.mxu0 0.0
          %5138 = vmatpush1.msra.mxu0 0.0
          %5139 = vmatprep.subr.mxu0 0.0
          %5140 = vmatpush1.msra.mxu0 0.0
          %5141 = vmatprep.subr.mxu0 0.0
          %5142 = vmatpush1.msra.mxu0 0.0
          %5143 = vmatprep.subr.mxu0 0.0
          %5144 = vmatpush1.msra.mxu0 0.0
          %5145 = vmatprep.mubr.f32.mxu0 0.0
          %5146 = vmatmul.mubr.f32.gmra.mrb[0].mxu0 %v4866
          %v5147 = vpop.f32.mrb[0].mxu0
          %v5148 = vadd.f32 0.0, %v5147
          %v5149 = vpop.f32.mrb[0].mxu0
          %v5150 = vadd.f32 0.0, %v5149
          %5151 = vdwg.mxu0
          %5152 = vmatprep.subr.mxu0 %v1666
          %5153 = vmatpush1.msra.mxu0 %v1665
          %5154 = vmatprep.subr.mxu0 %v1698
          %5155 = vmatpush1.msra.mxu0 %v1697
          %5156 = vmatprep.subr.mxu0 %v1730
          %5157 = vmatpush1.msra.mxu0 %v1729
          %5158 = vmatprep.subr.mxu0 %v1762
          %5159 = vmatpush1.msra.mxu0 %v1761
          %5160 = vmatprep.subr.mxu0 0.0
          %5161 = vmatpush1.msra.mxu0 0.0
          %5162 = vmatprep.subr.mxu0 0.0
          %5163 = vmatpush1.msra.mxu0 0.0
          %5164 = vmatprep.subr.mxu0 0.0
          %5165 = vmatpush1.msra.mxu0 0.0
          %5166 = vmatprep.subr.mxu0 0.0
          %5167 = vmatpush1.msra.mxu0 0.0
          %5168 = vmatprep.subr.mxu0 0.0
          %5169 = vmatpush1.msra.mxu0 0.0
          %5170 = vmatprep.subr.mxu0 0.0
          %5171 = vmatpush1.msra.mxu0 0.0
          %5172 = vmatprep.subr.mxu0 0.0
          %5173 = vmatpush1.msra.mxu0 0.0
          %5174 = vmatprep.subr.mxu0 0.0
          %5175 = vmatpush1.msra.mxu0 0.0
          %5176 = vmatprep.subr.mxu0 0.0
          %5177 = vmatpush1.msra.mxu0 0.0
          %5178 = vmatprep.subr.mxu0 0.0
          %5179 = vmatpush1.msra.mxu0 0.0
          %5180 = vmatprep.subr.mxu0 0.0
          %5181 = vmatpush1.msra.mxu0 0.0
          %5182 = vmatprep.subr.mxu0 0.0
          %5183 = vmatpush1.msra.mxu0 0.0
          %5184 = vmatprep.subr.mxu0 0.0
          %5185 = vmatpush1.msra.mxu0 0.0
          %5186 = vmatprep.subr.mxu0 0.0
          %5187 = vmatpush1.msra.mxu0 0.0
          %5188 = vmatprep.subr.mxu0 0.0
          %5189 = vmatpush1.msra.mxu0 0.0
          %5190 = vmatprep.subr.mxu0 0.0
          %5191 = vmatpush1.msra.mxu0 0.0
          %5192 = vmatprep.subr.mxu0 0.0
          %5193 = vmatpush1.msra.mxu0 0.0
          %5194 = vmatprep.subr.mxu0 0.0
          %5195 = vmatpush1.msra.mxu0 0.0
          %5196 = vmatprep.subr.mxu0 0.0
          %5197 = vmatpush1.msra.mxu0 0.0
          %5198 = vmatprep.subr.mxu0 0.0
          %5199 = vmatpush1.msra.mxu0 0.0
          %5200 = vmatprep.subr.mxu0 0.0
          %5201 = vmatpush1.msra.mxu0 0.0
          %5202 = vmatprep.subr.mxu0 0.0
          %5203 = vmatpush1.msra.mxu0 0.0
          %5204 = vmatprep.subr.mxu0 0.0
          %5205 = vmatpush1.msra.mxu0 0.0
          %5206 = vmatprep.subr.mxu0 0.0
          %5207 = vmatpush1.msra.mxu0 0.0
          %5208 = vmatprep.subr.mxu0 0.0
          %5209 = vmatpush1.msra.mxu0 0.0
          %5210 = vmatprep.subr.mxu0 0.0
          %5211 = vmatpush1.msra.mxu0 0.0
          %5212 = vmatprep.subr.mxu0 0.0
          %5213 = vmatpush1.msra.mxu0 0.0
          %5214 = vmatprep.subr.mxu0 0.0
          %5215 = vmatpush1.msra.mxu0 0.0
          %5216 = vmatprep.mubr.f32.mxu0 0.0
          %5217 = vmatmul.mubr.f32.gmra.mrb[0].mxu0 %v4866
          %v5218 = vpop.f32.mrb[0].mxu0
          %v5219 = vadd.f32 0.0, %v5218
          %v5220 = vpop.f32.mrb[0].mxu0
          %v5221 = vadd.f32 0.0, %v5220
          %5222 = vdwg.mxu0
          %5223 = vmatprep.subr.mxu0 %v1668
          %5224 = vmatpush1.msra.mxu0 %v1667
          %5225 = vmatprep.subr.mxu0 %v1700
          %5226 = vmatpush1.msra.mxu0 %v1699
          %5227 = vmatprep.subr.mxu0 %v1732
          %5228 = vmatpush1.msra.mxu0 %v1731
          %5229 = vmatprep.subr.mxu0 %v1764
          %5230 = vmatpush1.msra.mxu0 %v1763
          %5231 = vmatprep.subr.mxu0 0.0
          %5232 = vmatpush1.msra.mxu0 0.0
          %5233 = vmatprep.subr.mxu0 0.0
          %5234 = vmatpush1.msra.mxu0 0.0
          %5235 = vmatprep.subr.mxu0 0.0
          %5236 = vmatpush1.msra.mxu0 0.0
          %5237 = vmatprep.subr.mxu0 0.0
          %5238 = vmatpush1.msra.mxu0 0.0
          %5239 = vmatprep.subr.mxu0 0.0
          %5240 = vmatpush1.msra.mxu0 0.0
          %5241 = vmatprep.subr.mxu0 0.0
          %5242 = vmatpush1.msra.mxu0 0.0
          %5243 = vmatprep.subr.mxu0 0.0
          %5244 = vmatpush1.msra.mxu0 0.0
          %5245 = vmatprep.subr.mxu0 0.0
          %5246 = vmatpush1.msra.mxu0 0.0
          %5247 = vmatprep.subr.mxu0 0.0
          %5248 = vmatpush1.msra.mxu0 0.0
          %5249 = vmatprep.subr.mxu0 0.0
          %5250 = vmatpush1.msra.mxu0 0.0
          %5251 = vmatprep.subr.mxu0 0.0
          %5252 = vmatpush1.msra.mxu0 0.0
          %5253 = vmatprep.subr.mxu0 0.0
          %5254 = vmatpush1.msra.mxu0 0.0
          %5255 = vmatprep.subr.mxu0 0.0
          %5256 = vmatpush1.msra.mxu0 0.0
          %5257 = vmatprep.subr.mxu0 0.0
          %5258 = vmatpush1.msra.mxu0 0.0
          %5259 = vmatprep.subr.mxu0 0.0
          %5260 = vmatpush1.msra.mxu0 0.0
          %5261 = vmatprep.subr.mxu0 0.0
          %5262 = vmatpush1.msra.mxu0 0.0
          %5263 = vmatprep.subr.mxu0 0.0
          %5264 = vmatpush1.msra.mxu0 0.0
          %5265 = vmatprep.subr.mxu0 0.0
          %5266 = vmatpush1.msra.mxu0 0.0
          %5267 = vmatprep.subr.mxu0 0.0
          %5268 = vmatpush1.msra.mxu0 0.0
          %5269 = vmatprep.subr.mxu0 0.0
          %5270 = vmatpush1.msra.mxu0 0.0
          %5271 = vmatprep.subr.mxu0 0.0
          %5272 = vmatpush1.msra.mxu0 0.0
          %5273 = vmatprep.subr.mxu0 0.0
          %5274 = vmatpush1.msra.mxu0 0.0
          %5275 = vmatprep.subr.mxu0 0.0
          %5276 = vmatpush1.msra.mxu0 0.0
          %5277 = vmatprep.subr.mxu0 0.0
          %5278 = vmatpush1.msra.mxu0 0.0
          %5279 = vmatprep.subr.mxu0 0.0
          %5280 = vmatpush1.msra.mxu0 0.0
          %5281 = vmatprep.subr.mxu0 0.0
          %5282 = vmatpush1.msra.mxu0 0.0
          %5283 = vmatprep.subr.mxu0 0.0
          %5284 = vmatpush1.msra.mxu0 0.0
          %5285 = vmatprep.subr.mxu0 0.0
          %5286 = vmatpush1.msra.mxu0 0.0
          %5287 = vmatprep.mubr.f32.mxu0 0.0
          %5288 = vmatmul.mubr.f32.gmra.mrb[0].mxu0 %v4866
          %v5289 = vpop.f32.mrb[0].mxu0
          %v5290 = vadd.f32 0.0, %v5289
          %v5291 = vpop.f32.mrb[0].mxu0
          %v5292 = vadd.f32 0.0, %v5291
          %5293 = vdwg.mxu0
          %5294 = vmatprep.subr.mxu0 %v1670
          %5295 = vmatpush1.msra.mxu0 %v1669
          %5296 = vmatprep.subr.mxu0 %v1702
          %5297 = vmatpush1.msra.mxu0 %v1701
          %5298 = vmatprep.subr.mxu0 %v1734
          %5299 = vmatpush1.msra.mxu0 %v1733
          %5300 = vmatprep.subr.mxu0 %v1766
          %5301 = vmatpush1.msra.mxu0 %v1765
          %5302 = vmatprep.subr.mxu0 0.0
          %5303 = vmatpush1.msra.mxu0 0.0
          %5304 = vmatprep.subr.mxu0 0.0
          %5305 = vmatpush1.msra.mxu0 0.0
          %5306 = vmatprep.subr.mxu0 0.0
          %5307 = vmatpush1.msra.mxu0 0.0
          %5308 = vmatprep.subr.mxu0 0.0
          %5309 = vmatpush1.msra.mxu0 0.0
          %5310 = vmatprep.subr.mxu0 0.0
          %5311 = vmatpush1.msra.mxu0 0.0
          %5312 = vmatprep.subr.mxu0 0.0
          %5313 = vmatpush1.msra.mxu0 0.0
          %5314 = vmatprep.subr.mxu0 0.0
          %5315 = vmatpush1.msra.mxu0 0.0
          %5316 = vmatprep.subr.mxu0 0.0
          %5317 = vmatpush1.msra.mxu0 0.0
          %5318 = vmatprep.subr.mxu0 0.0
          %5319 = vmatpush1.msra.mxu0 0.0
          %5320 = vmatprep.subr.mxu0 0.0
          %5321 = vmatpush1.msra.mxu0 0.0
          %5322 = vmatprep.subr.mxu0 0.0
          %5323 = vmatpush1.msra.mxu0 0.0
          %5324 = vmatprep.subr.mxu0 0.0
          %5325 = vmatpush1.msra.mxu0 0.0
          %5326 = vmatprep.subr.mxu0 0.0
          %5327 = vmatpush1.msra.mxu0 0.0
          %5328 = vmatprep.subr.mxu0 0.0
          %5329 = vmatpush1.msra.mxu0 0.0
          %5330 = vmatprep.subr.mxu0 0.0
          %5331 = vmatpush1.msra.mxu0 0.0
          %5332 = vmatprep.subr.mxu0 0.0
          %5333 = vmatpush1.msra.mxu0 0.0
          %5334 = vmatprep.subr.mxu0 0.0
          %5335 = vmatpush1.msra.mxu0 0.0
          %5336 = vmatprep.subr.mxu0 0.0
          %5337 = vmatpush1.msra.mxu0 0.0
          %5338 = vmatprep.subr.mxu0 0.0
          %5339 = vmatpush1.msra.mxu0 0.0
          %5340 = vmatprep.subr.mxu0 0.0
          %5341 = vmatpush1.msra.mxu0 0.0
          %5342 = vmatprep.subr.mxu0 0.0
          %5343 = vmatpush1.msra.mxu0 0.0
          %5344 = vmatprep.subr.mxu0 0.0
          %5345 = vmatpush1.msra.mxu0 0.0
          %5346 = vmatprep.subr.mxu0 0.0
          %5347 = vmatpush1.msra.mxu0 0.0
          %5348 = vmatprep.subr.mxu0 0.0
          %5349 = vmatpush1.msra.mxu0 0.0
          %5350 = vmatprep.subr.mxu0 0.0
          %5351 = vmatpush1.msra.mxu0 0.0
          %5352 = vmatprep.subr.mxu0 0.0
          %5353 = vmatpush1.msra.mxu0 0.0
          %5354 = vmatprep.subr.mxu0 0.0
          %5355 = vmatpush1.msra.mxu0 0.0
          %5356 = vmatprep.subr.mxu0 0.0
          %5357 = vmatpush1.msra.mxu0 0.0
          %5358 = vmatprep.mubr.f32.mxu0 0.0
          %5359 = vmatmul.mubr.f32.gmra.mrb[0].mxu0 %v4866
          %v5360 = vpop.f32.mrb[0].mxu0
          %v5361 = vadd.f32 0.0, %v5360
          %v5362 = vpop.f32.mrb[0].mxu0
          %v5363 = vadd.f32 0.0, %v5362
          %5364 = vdwg.mxu0
          %5365 = vmatprep.subr.mxu0 %v1672
          %5366 = vmatpush1.msra.mxu0 %v1671
          %5367 = vmatprep.subr.mxu0 %v1704
          %5368 = vmatpush1.msra.mxu0 %v1703
          %5369 = vmatprep.subr.mxu0 %v1736
          %5370 = vmatpush1.msra.mxu0 %v1735
          %5371 = vmatprep.subr.mxu0 %v1768
          %5372 = vmatpush1.msra.mxu0 %v1767
          %5373 = vmatprep.subr.mxu0 0.0
          %5374 = vmatpush1.msra.mxu0 0.0
          %5375 = vmatprep.subr.mxu0 0.0
          %5376 = vmatpush1.msra.mxu0 0.0
          %5377 = vmatprep.subr.mxu0 0.0
          %5378 = vmatpush1.msra.mxu0 0.0
          %5379 = vmatprep.subr.mxu0 0.0
          %5380 = vmatpush1.msra.mxu0 0.0
          %5381 = vmatprep.subr.mxu0 0.0
          %5382 = vmatpush1.msra.mxu0 0.0
          %5383 = vmatprep.subr.mxu0 0.0
          %5384 = vmatpush1.msra.mxu0 0.0
          %5385 = vmatprep.subr.mxu0 0.0
          %5386 = vmatpush1.msra.mxu0 0.0
          %5387 = vmatprep.subr.mxu0 0.0
          %5388 = vmatpush1.msra.mxu0 0.0
          %5389 = vmatprep.subr.mxu0 0.0
          %5390 = vmatpush1.msra.mxu0 0.0
          %5391 = vmatprep.subr.mxu0 0.0
          %5392 = vmatpush1.msra.mxu0 0.0
          %5393 = vmatprep.subr.mxu0 0.0
          %5394 = vmatpush1.msra.mxu0 0.0
          %5395 = vmatprep.subr.mxu0 0.0
          %5396 = vmatpush1.msra.mxu0 0.0
          %5397 = vmatprep.subr.mxu0 0.0
          %5398 = vmatpush1.msra.mxu0 0.0
          %5399 = vmatprep.subr.mxu0 0.0
          %5400 = vmatpush1.msra.mxu0 0.0
          %5401 = vmatprep.subr.mxu0 0.0
          %5402 = vmatpush1.msra.mxu0 0.0
          %5403 = vmatprep.subr.mxu0 0.0
          %5404 = vmatpush1.msra.mxu0 0.0
          %5405 = vmatprep.subr.mxu0 0.0
          %5406 = vmatpush1.msra.mxu0 0.0
          %5407 = vmatprep.subr.mxu0 0.0
          %5408 = vmatpush1.msra.mxu0 0.0
          %5409 = vmatprep.subr.mxu0 0.0
          %5410 = vmatpush1.msra.mxu0 0.0
          %5411 = vmatprep.subr.mxu0 0.0
          %5412 = vmatpush1.msra.mxu0 0.0
          %5413 = vmatprep.subr.mxu0 0.0
          %5414 = vmatpush1.msra.mxu0 0.0
          %5415 = vmatprep.subr.mxu0 0.0
          %5416 = vmatpush1.msra.mxu0 0.0
          %5417 = vmatprep.subr.mxu0 0.0
          %5418 = vmatpush1.msra.mxu0 0.0
          %5419 = vmatprep.subr.mxu0 0.0
          %5420 = vmatpush1.msra.mxu0 0.0
          %5421 = vmatprep.subr.mxu0 0.0
          %5422 = vmatpush1.msra.mxu0 0.0
          %5423 = vmatprep.subr.mxu0 0.0
          %5424 = vmatpush1.msra.mxu0 0.0
          %5425 = vmatprep.subr.mxu0 0.0
          %5426 = vmatpush1.msra.mxu0 0.0
          %5427 = vmatprep.subr.mxu0 0.0
          %5428 = vmatpush1.msra.mxu0 0.0
          %5429 = vmatprep.mubr.f32.mxu0 0.0
          %5430 = vmatmul.mubr.f32.gmra.mrb[0].mxu0 %v4866
          %v5431 = vpop.f32.mrb[0].mxu0
          %v5432 = vadd.f32 0.0, %v5431
          %v5433 = vpop.f32.mrb[0].mxu0
          %v5434 = vadd.f32 0.0, %v5433
          %5435 = vdwg.mxu0
          %5436 = vmatprep.subr.mxu0 %v1674
          %5437 = vmatpush1.msra.mxu0 %v1673
          %5438 = vmatprep.subr.mxu0 %v1706
          %5439 = vmatpush1.msra.mxu0 %v1705
          %5440 = vmatprep.subr.mxu0 %v1738
          %5441 = vmatpush1.msra.mxu0 %v1737
          %5442 = vmatprep.subr.mxu0 %v1770
          %5443 = vmatpush1.msra.mxu0 %v1769
          %5444 = vmatprep.subr.mxu0 0.0
          %5445 = vmatpush1.msra.mxu0 0.0
          %5446 = vmatprep.subr.mxu0 0.0
          %5447 = vmatpush1.msra.mxu0 0.0
          %5448 = vmatprep.subr.mxu0 0.0
          %5449 = vmatpush1.msra.mxu0 0.0
          %5450 = vmatprep.subr.mxu0 0.0
          %5451 = vmatpush1.msra.mxu0 0.0
          %5452 = vmatprep.subr.mxu0 0.0
          %5453 = vmatpush1.msra.mxu0 0.0
          %5454 = vmatprep.subr.mxu0 0.0
          %5455 = vmatpush1.msra.mxu0 0.0
          %5456 = vmatprep.subr.mxu0 0.0
          %5457 = vmatpush1.msra.mxu0 0.0
          %5458 = vmatprep.subr.mxu0 0.0
          %5459 = vmatpush1.msra.mxu0 0.0
          %5460 = vmatprep.subr.mxu0 0.0
          %5461 = vmatpush1.msra.mxu0 0.0
          %5462 = vmatprep.subr.mxu0 0.0
          %5463 = vmatpush1.msra.mxu0 0.0
          %5464 = vmatprep.subr.mxu0 0.0
          %5465 = vmatpush1.msra.mxu0 0.0
          %5466 = vmatprep.subr.mxu0 0.0
          %5467 = vmatpush1.msra.mxu0 0.0
          %5468 = vmatprep.subr.mxu0 0.0
          %5469 = vmatpush1.msra.mxu0 0.0
          %5470 = vmatprep.subr.mxu0 0.0
          %5471 = vmatpush1.msra.mxu0 0.0
          %5472 = vmatprep.subr.mxu0 0.0
          %5473 = vmatpush1.msra.mxu0 0.0
          %5474 = vmatprep.subr.mxu0 0.0
          %5475 = vmatpush1.msra.mxu0 0.0
          %5476 = vmatprep.subr.mxu0 0.0
          %5477 = vmatpush1.msra.mxu0 0.0
          %5478 = vmatprep.subr.mxu0 0.0
          %5479 = vmatpush1.msra.mxu0 0.0
          %5480 = vmatprep.subr.mxu0 0.0
          %5481 = vmatpush1.msra.mxu0 0.0
          %5482 = vmatprep.subr.mxu0 0.0
          %5483 = vmatpush1.msra.mxu0 0.0
          %5484 = vmatprep.subr.mxu0 0.0
          %5485 = vmatpush1.msra.mxu0 0.0
          %5486 = vmatprep.subr.mxu0 0.0
          %5487 = vmatpush1.msra.mxu0 0.0
          %5488 = vmatprep.subr.mxu0 0.0
          %5489 = vmatpush1.msra.mxu0 0.0
          %5490 = vmatprep.subr.mxu0 0.0
          %5491 = vmatpush1.msra.mxu0 0.0
          %5492 = vmatprep.subr.mxu0 0.0
          %5493 = vmatpush1.msra.mxu0 0.0
          %5494 = vmatprep.subr.mxu0 0.0
          %5495 = vmatpush1.msra.mxu0 0.0
          %5496 = vmatprep.subr.mxu0 0.0
          %5497 = vmatpush1.msra.mxu0 0.0
          %5498 = vmatprep.subr.mxu0 0.0
          %5499 = vmatpush1.msra.mxu0 0.0
          %5500 = vmatprep.mubr.f32.mxu0 0.0
          %5501 = vmatmul.mubr.f32.gmra.mrb[0].mxu0 %v4866
          %v5502 = vpop.f32.mrb[0].mxu0
          %v5503 = vadd.f32 0.0, %v5502
          %v5504 = vpop.f32.mrb[0].mxu0
          %v5505 = vadd.f32 0.0, %v5504
          %5506 = vdwg.mxu0
          %5507 = vmatprep.subr.mxu0 %v1676
          %5508 = vmatpush1.msra.mxu0 %v1675
          %5509 = vmatprep.subr.mxu0 %v1708
          %5510 = vmatpush1.msra.mxu0 %v1707
          %5511 = vmatprep.subr.mxu0 %v1740
          %5512 = vmatpush1.msra.mxu0 %v1739
          %5513 = vmatprep.subr.mxu0 %v1772
          %5514 = vmatpush1.msra.mxu0 %v1771
          %5515 = vmatprep.subr.mxu0 0.0
          %5516 = vmatpush1.msra.mxu0 0.0
          %5517 = vmatprep.subr.mxu0 0.0
          %5518 = vmatpush1.msra.mxu0 0.0
          %5519 = vmatprep.subr.mxu0 0.0
          %5520 = vmatpush1.msra.mxu0 0.0
          %5521 = vmatprep.subr.mxu0 0.0
          %5522 = vmatpush1.msra.mxu0 0.0
          %5523 = vmatprep.subr.mxu0 0.0
          %5524 = vmatpush1.msra.mxu0 0.0
          %5525 = vmatprep.subr.mxu0 0.0
          %5526 = vmatpush1.msra.mxu0 0.0
          %5527 = vmatprep.subr.mxu0 0.0
          %5528 = vmatpush1.msra.mxu0 0.0
          %5529 = vmatprep.subr.mxu0 0.0
          %5530 = vmatpush1.msra.mxu0 0.0
          %5531 = vmatprep.subr.mxu0 0.0
          %5532 = vmatpush1.msra.mxu0 0.0
          %5533 = vmatprep.subr.mxu0 0.0
          %5534 = vmatpush1.msra.mxu0 0.0
          %5535 = vmatprep.subr.mxu0 0.0
          %5536 = vmatpush1.msra.mxu0 0.0
          %5537 = vmatprep.subr.mxu0 0.0
          %5538 = vmatpush1.msra.mxu0 0.0
          %5539 = vmatprep.subr.mxu0 0.0
          %5540 = vmatpush1.msra.mxu0 0.0
          %5541 = vmatprep.subr.mxu0 0.0
          %5542 = vmatpush1.msra.mxu0 0.0
          %5543 = vmatprep.subr.mxu0 0.0
          %5544 = vmatpush1.msra.mxu0 0.0
          %5545 = vmatprep.subr.mxu0 0.0
          %5546 = vmatpush1.msra.mxu0 0.0
          %5547 = vmatprep.subr.mxu0 0.0
          %5548 = vmatpush1.msra.mxu0 0.0
          %5549 = vmatprep.subr.mxu0 0.0
          %5550 = vmatpush1.msra.mxu0 0.0
          %5551 = vmatprep.subr.mxu0 0.0
          %5552 = vmatpush1.msra.mxu0 0.0
          %5553 = vmatprep.subr.mxu0 0.0
          %5554 = vmatpush1.msra.mxu0 0.0
          %5555 = vmatprep.subr.mxu0 0.0
          %5556 = vmatpush1.msra.mxu0 0.0
          %5557 = vmatprep.subr.mxu0 0.0
          %5558 = vmatpush1.msra.mxu0 0.0
          %5559 = vmatprep.subr.mxu0 0.0
          %5560 = vmatpush1.msra.mxu0 0.0
          %5561 = vmatprep.subr.mxu0 0.0
          %5562 = vmatpush1.msra.mxu0 0.0
          %5563 = vmatprep.subr.mxu0 0.0
          %5564 = vmatpush1.msra.mxu0 0.0
          %5565 = vmatprep.subr.mxu0 0.0
          %5566 = vmatpush1.msra.mxu0 0.0
          %5567 = vmatprep.subr.mxu0 0.0
          %5568 = vmatpush1.msra.mxu0 0.0
          %5569 = vmatprep.subr.mxu0 0.0
          %5570 = vmatpush1.msra.mxu0 0.0
          %5571 = vmatprep.mubr.f32.mxu0 0.0
          %5572 = vmatmul.mubr.f32.gmra.mrb[0].mxu0 %v4866
          %v5573 = vpop.f32.mrb[0].mxu0
          %v5574 = vadd.f32 0.0, %v5573
          %v5575 = vpop.f32.mrb[0].mxu0
          %v5576 = vadd.f32 0.0, %v5575
          %5577 = vdwg.mxu0
          %5578 = vmatprep.subr.mxu0 %v1678
          %5579 = vmatpush1.msra.mxu0 %v1677
          %5580 = vmatprep.subr.mxu0 %v1710
          %5581 = vmatpush1.msra.mxu0 %v1709
          %5582 = vmatprep.subr.mxu0 %v1742
          %5583 = vmatpush1.msra.mxu0 %v1741
          %5584 = vmatprep.subr.mxu0 %v1774
          %5585 = vmatpush1.msra.mxu0 %v1773
          %5586 = vmatprep.subr.mxu0 0.0
          %5587 = vmatpush1.msra.mxu0 0.0
          %5588 = vmatprep.subr.mxu0 0.0
          %5589 = vmatpush1.msra.mxu0 0.0
          %5590 = vmatprep.subr.mxu0 0.0
          %5591 = vmatpush1.msra.mxu0 0.0
          %5592 = vmatprep.subr.mxu0 0.0
          %5593 = vmatpush1.msra.mxu0 0.0
          %5594 = vmatprep.subr.mxu0 0.0
          %5595 = vmatpush1.msra.mxu0 0.0
          %5596 = vmatprep.subr.mxu0 0.0
          %5597 = vmatpush1.msra.mxu0 0.0
          %5598 = vmatprep.subr.mxu0 0.0
          %5599 = vmatpush1.msra.mxu0 0.0
          %5600 = vmatprep.subr.mxu0 0.0
          %5601 = vmatpush1.msra.mxu0 0.0
          %5602 = vmatprep.subr.mxu0 0.0
          %5603 = vmatpush1.msra.mxu0 0.0
          %5604 = vmatprep.subr.mxu0 0.0
          %5605 = vmatpush1.msra.mxu0 0.0
          %5606 = vmatprep.subr.mxu0 0.0
          %5607 = vmatpush1.msra.mxu0 0.0
          %5608 = vmatprep.subr.mxu0 0.0
          %5609 = vmatpush1.msra.mxu0 0.0
          %5610 = vmatprep.subr.mxu0 0.0
          %5611 = vmatpush1.msra.mxu0 0.0
          %5612 = vmatprep.subr.mxu0 0.0
          %5613 = vmatpush1.msra.mxu0 0.0
          %5614 = vmatprep.subr.mxu0 0.0
          %5615 = vmatpush1.msra.mxu0 0.0
          %5616 = vmatprep.subr.mxu0 0.0
          %5617 = vmatpush1.msra.mxu0 0.0
          %5618 = vmatprep.subr.mxu0 0.0
          %5619 = vmatpush1.msra.mxu0 0.0
          %5620 = vmatprep.subr.mxu0 0.0
          %5621 = vmatpush1.msra.mxu0 0.0
          %5622 = vmatprep.subr.mxu0 0.0
          %5623 = vmatpush1.msra.mxu0 0.0
          %5624 = vmatprep.subr.mxu0 0.0
          %5625 = vmatpush1.msra.mxu0 0.0
          %5626 = vmatprep.subr.mxu0 0.0
          %5627 = vmatpush1.msra.mxu0 0.0
          %5628 = vmatprep.subr.mxu0 0.0
          %5629 = vmatpush1.msra.mxu0 0.0
          %5630 = vmatprep.subr.mxu0 0.0
          %5631 = vmatpush1.msra.mxu0 0.0
          %5632 = vmatprep.subr.mxu0 0.0
          %5633 = vmatpush1.msra.mxu0 0.0
          %5634 = vmatprep.subr.mxu0 0.0
          %5635 = vmatpush1.msra.mxu0 0.0
          %5636 = vmatprep.subr.mxu0 0.0
          %5637 = vmatpush1.msra.mxu0 0.0
          %5638 = vmatprep.subr.mxu0 0.0
          %5639 = vmatpush1.msra.mxu0 0.0
          %5640 = vmatprep.subr.mxu0 0.0
          %5641 = vmatpush1.msra.mxu0 0.0
          %5642 = vmatprep.mubr.f32.mxu0 0.0
          %5643 = vmatmul.mubr.f32.gmra.mrb[0].mxu0 %v4866
          %v5644 = vpop.f32.mrb[0].mxu0
          %v5645 = vadd.f32 0.0, %v5644
          %v5646 = vpop.f32.mrb[0].mxu0
          %v5647 = vadd.f32 0.0, %v5646
          %5648 = vdwg.mxu0
          %5649 = vmatprep.subr.mxu0 %v1680
          %5650 = vmatpush1.msra.mxu0 %v1679
          %5651 = vmatprep.subr.mxu0 %v1712
          %5652 = vmatpush1.msra.mxu0 %v1711
          %5653 = vmatprep.subr.mxu0 %v1744
          %5654 = vmatpush1.msra.mxu0 %v1743
          %5655 = vmatprep.subr.mxu0 %v1776
          %5656 = vmatpush1.msra.mxu0 %v1775
          %5657 = vmatprep.subr.mxu0 0.0
          %5658 = vmatpush1.msra.mxu0 0.0
          %5659 = vmatprep.subr.mxu0 0.0
          %5660 = vmatpush1.msra.mxu0 0.0
          %5661 = vmatprep.subr.mxu0 0.0
          %5662 = vmatpush1.msra.mxu0 0.0
          %5663 = vmatprep.subr.mxu0 0.0
          %5664 = vmatpush1.msra.mxu0 0.0
          %5665 = vmatprep.subr.mxu0 0.0
          %5666 = vmatpush1.msra.mxu0 0.0
          %5667 = vmatprep.subr.mxu0 0.0
          %5668 = vmatpush1.msra.mxu0 0.0
          %5669 = vmatprep.subr.mxu0 0.0
          %5670 = vmatpush1.msra.mxu0 0.0
          %5671 = vmatprep.subr.mxu0 0.0
          %5672 = vmatpush1.msra.mxu0 0.0
          %5673 = vmatprep.subr.mxu0 0.0
          %5674 = vmatpush1.msra.mxu0 0.0
          %5675 = vmatprep.subr.mxu0 0.0
          %5676 = vmatpush1.msra.mxu0 0.0
          %5677 = vmatprep.subr.mxu0 0.0
          %5678 = vmatpush1.msra.mxu0 0.0
          %5679 = vmatprep.subr.mxu0 0.0
          %5680 = vmatpush1.msra.mxu0 0.0
          %5681 = vmatprep.subr.mxu0 0.0
          %5682 = vmatpush1.msra.mxu0 0.0
          %5683 = vmatprep.subr.mxu0 0.0
          %5684 = vmatpush1.msra.mxu0 0.0
          %5685 = vmatprep.subr.mxu0 0.0
          %5686 = vmatpush1.msra.mxu0 0.0
          %5687 = vmatprep.subr.mxu0 0.0
          %5688 = vmatpush1.msra.mxu0 0.0
          %5689 = vmatprep.subr.mxu0 0.0
          %5690 = vmatpush1.msra.mxu0 0.0
          %5691 = vmatprep.subr.mxu0 0.0
          %5692 = vmatpush1.msra.mxu0 0.0
          %5693 = vmatprep.subr.mxu0 0.0
          %5694 = vmatpush1.msra.mxu0 0.0
          %5695 = vmatprep.subr.mxu0 0.0
          %5696 = vmatpush1.msra.mxu0 0.0
          %5697 = vmatprep.subr.mxu0 0.0
          %5698 = vmatpush1.msra.mxu0 0.0
          %5699 = vmatprep.subr.mxu0 0.0
          %5700 = vmatpush1.msra.mxu0 0.0
          %5701 = vmatprep.subr.mxu0 0.0
          %5702 = vmatpush1.msra.mxu0 0.0
          %5703 = vmatprep.subr.mxu0 0.0
          %5704 = vmatpush1.msra.mxu0 0.0
          %5705 = vmatprep.subr.mxu0 0.0
          %5706 = vmatpush1.msra.mxu0 0.0
          %5707 = vmatprep.subr.mxu0 0.0
          %5708 = vmatpush1.msra.mxu0 0.0
          %5709 = vmatprep.subr.mxu0 0.0
          %5710 = vmatpush1.msra.mxu0 0.0
          %5711 = vmatprep.subr.mxu0 0.0
          %5712 = vmatpush1.msra.mxu0 0.0
          %5713 = vmatprep.mubr.f32.mxu0 0.0
          %5714 = vmatmul.mubr.f32.gmra.mrb[0].mxu0 %v4866
          %v5715 = vpop.f32.mrb[0].mxu0
          %v5716 = vadd.f32 0.0, %v5715
          %v5717 = vpop.f32.mrb[0].mxu0
          %v5718 = vadd.f32 0.0, %v5717
          %5719 = vdwg.mxu0
          %5720 = vmatprep.subr.mxu0 %v1682
          %5721 = vmatpush1.msra.mxu0 %v1681
          %5722 = vmatprep.subr.mxu0 %v1714
          %5723 = vmatpush1.msra.mxu0 %v1713
          %5724 = vmatprep.subr.mxu0 %v1746
          %5725 = vmatpush1.msra.mxu0 %v1745
          %5726 = vmatprep.subr.mxu0 %v1778
          %5727 = vmatpush1.msra.mxu0 %v1777
          %5728 = vmatprep.subr.mxu0 0.0
          %5729 = vmatpush1.msra.mxu0 0.0
          %5730 = vmatprep.subr.mxu0 0.0
          %5731 = vmatpush1.msra.mxu0 0.0
          %5732 = vmatprep.subr.mxu0 0.0
          %5733 = vmatpush1.msra.mxu0 0.0
          %5734 = vmatprep.subr.mxu0 0.0
          %5735 = vmatpush1.msra.mxu0 0.0
          %5736 = vmatprep.subr.mxu0 0.0
          %5737 = vmatpush1.msra.mxu0 0.0
          %5738 = vmatprep.subr.mxu0 0.0
          %5739 = vmatpush1.msra.mxu0 0.0
          %5740 = vmatprep.subr.mxu0 0.0
          %5741 = vmatpush1.msra.mxu0 0.0
          %5742 = vmatprep.subr.mxu0 0.0
          %5743 = vmatpush1.msra.mxu0 0.0
          %5744 = vmatprep.subr.mxu0 0.0
          %5745 = vmatpush1.msra.mxu0 0.0
          %5746 = vmatprep.subr.mxu0 0.0
          %5747 = vmatpush1.msra.mxu0 0.0
          %5748 = vmatprep.subr.mxu0 0.0
          %5749 = vmatpush1.msra.mxu0 0.0
          %5750 = vmatprep.subr.mxu0 0.0
          %5751 = vmatpush1.msra.mxu0 0.0
          %5752 = vmatprep.subr.mxu0 0.0
          %5753 = vmatpush1.msra.mxu0 0.0
          %5754 = vmatprep.subr.mxu0 0.0
          %5755 = vmatpush1.msra.mxu0 0.0
          %5756 = vmatprep.subr.mxu0 0.0
          %5757 = vmatpush1.msra.mxu0 0.0
          %5758 = vmatprep.subr.mxu0 0.0
          %5759 = vmatpush1.msra.mxu0 0.0
          %5760 = vmatprep.subr.mxu0 0.0
          %5761 = vmatpush1.msra.mxu0 0.0
          %5762 = vmatprep.subr.mxu0 0.0
          %5763 = vmatpush1.msra.mxu0 0.0
          %5764 = vmatprep.subr.mxu0 0.0
          %5765 = vmatpush1.msra.mxu0 0.0
          %5766 = vmatprep.subr.mxu0 0.0
          %5767 = vmatpush1.msra.mxu0 0.0
          %5768 = vmatprep.subr.mxu0 0.0
          %5769 = vmatpush1.msra.mxu0 0.0
          %5770 = vmatprep.subr.mxu0 0.0
          %5771 = vmatpush1.msra.mxu0 0.0
          %5772 = vmatprep.subr.mxu0 0.0
          %5773 = vmatpush1.msra.mxu0 0.0
          %5774 = vmatprep.subr.mxu0 0.0
          %5775 = vmatpush1.msra.mxu0 0.0
          %5776 = vmatprep.subr.mxu0 0.0
          %5777 = vmatpush1.msra.mxu0 0.0
          %5778 = vmatprep.subr.mxu0 0.0
          %5779 = vmatpush1.msra.mxu0 0.0
          %5780 = vmatprep.subr.mxu0 0.0
          %5781 = vmatpush1.msra.mxu0 0.0
          %5782 = vmatprep.subr.mxu0 0.0
          %5783 = vmatpush1.msra.mxu0 0.0
          %5784 = vmatprep.mubr.f32.mxu0 0.0
          %5785 = vmatmul.mubr.f32.gmra.mrb[0].mxu0 %v4866
          %v5786 = vpop.f32.mrb[0].mxu0
          %v5787 = vadd.f32 0.0, %v5786
          %v5788 = vpop.f32.mrb[0].mxu0
          %v5789 = vadd.f32 0.0, %v5788
          %5790 = vdwg.mxu0
          %5791 = vmatprep.subr.mxu0 %v1684
          %5792 = vmatpush1.msra.mxu0 %v1683
          %5793 = vmatprep.subr.mxu0 %v1716
          %5794 = vmatpush1.msra.mxu0 %v1715
          %5795 = vmatprep.subr.mxu0 %v1748
          %5796 = vmatpush1.msra.mxu0 %v1747
          %5797 = vmatprep.subr.mxu0 %v1780
          %5798 = vmatpush1.msra.mxu0 %v1779
          %5799 = vmatprep.subr.mxu0 0.0
          %5800 = vmatpush1.msra.mxu0 0.0
          %5801 = vmatprep.subr.mxu0 0.0
          %5802 = vmatpush1.msra.mxu0 0.0
          %5803 = vmatprep.subr.mxu0 0.0
          %5804 = vmatpush1.msra.mxu0 0.0
          %5805 = vmatprep.subr.mxu0 0.0
          %5806 = vmatpush1.msra.mxu0 0.0
          %5807 = vmatprep.subr.mxu0 0.0
          %5808 = vmatpush1.msra.mxu0 0.0
          %5809 = vmatprep.subr.mxu0 0.0
          %5810 = vmatpush1.msra.mxu0 0.0
          %5811 = vmatprep.subr.mxu0 0.0
          %5812 = vmatpush1.msra.mxu0 0.0
          %5813 = vmatprep.subr.mxu0 0.0
          %5814 = vmatpush1.msra.mxu0 0.0
          %5815 = vmatprep.subr.mxu0 0.0
          %5816 = vmatpush1.msra.mxu0 0.0
          %5817 = vmatprep.subr.mxu0 0.0
          %5818 = vmatpush1.msra.mxu0 0.0
          %5819 = vmatprep.subr.mxu0 0.0
          %5820 = vmatpush1.msra.mxu0 0.0
          %5821 = vmatprep.subr.mxu0 0.0
          %5822 = vmatpush1.msra.mxu0 0.0
          %5823 = vmatprep.subr.mxu0 0.0
          %5824 = vmatpush1.msra.mxu0 0.0
          %5825 = vmatprep.subr.mxu0 0.0
          %5826 = vmatpush1.msra.mxu0 0.0
          %5827 = vmatprep.subr.mxu0 0.0
          %5828 = vmatpush1.msra.mxu0 0.0
          %5829 = vmatprep.subr.mxu0 0.0
          %5830 = vmatpush1.msra.mxu0 0.0
          %5831 = vmatprep.subr.mxu0 0.0
          %5832 = vmatpush1.msra.mxu0 0.0
          %5833 = vmatprep.subr.mxu0 0.0
          %5834 = vmatpush1.msra.mxu0 0.0
          %5835 = vmatprep.subr.mxu0 0.0
          %5836 = vmatpush1.msra.mxu0 0.0
          %5837 = vmatprep.subr.mxu0 0.0
          %5838 = vmatpush1.msra.mxu0 0.0
          %5839 = vmatprep.subr.mxu0 0.0
          %5840 = vmatpush1.msra.mxu0 0.0
          %5841 = vmatprep.subr.mxu0 0.0
          %5842 = vmatpush1.msra.mxu0 0.0
          %5843 = vmatprep.subr.mxu0 0.0
          %5844 = vmatpush1.msra.mxu0 0.0
          %5845 = vmatprep.subr.mxu0 0.0
          %5846 = vmatpush1.msra.mxu0 0.0
          %5847 = vmatprep.subr.mxu0 0.0
          %5848 = vmatpush1.msra.mxu0 0.0
          %5849 = vmatprep.subr.mxu0 0.0
          %5850 = vmatpush1.msra.mxu0 0.0
          %5851 = vmatprep.subr.mxu0 0.0
          %5852 = vmatpush1.msra.mxu0 0.0
          %5853 = vmatprep.subr.mxu0 0.0
          %5854 = vmatpush1.msra.mxu0 0.0
          %5855 = vmatprep.mubr.f32.mxu0 0.0
          %5856 = vmatmul.mubr.f32.gmra.mrb[0].mxu0 %v4866
          %v5857 = vpop.f32.mrb[0].mxu0
          %v5858 = vadd.f32 0.0, %v5857
          %v5859 = vpop.f32.mrb[0].mxu0
          %v5860 = vadd.f32 0.0, %v5859
          %5861 = vdwg.mxu0
          %5862 = vmatprep.subr.mxu0 %v1686
          %5863 = vmatpush1.msra.mxu0 %v1685
          %5864 = vmatprep.subr.mxu0 %v1718
          %5865 = vmatpush1.msra.mxu0 %v1717
          %5866 = vmatprep.subr.mxu0 %v1750
          %5867 = vmatpush1.msra.mxu0 %v1749
          %5868 = vmatprep.subr.mxu0 %v1782
          %5869 = vmatpush1.msra.mxu0 %v1781
          %5870 = vmatprep.subr.mxu0 0.0
          %5871 = vmatpush1.msra.mxu0 0.0
          %5872 = vmatprep.subr.mxu0 0.0
          %5873 = vmatpush1.msra.mxu0 0.0
          %5874 = vmatprep.subr.mxu0 0.0
          %5875 = vmatpush1.msra.mxu0 0.0
          %5876 = vmatprep.subr.mxu0 0.0
          %5877 = vmatpush1.msra.mxu0 0.0
          %5878 = vmatprep.subr.mxu0 0.0
          %5879 = vmatpush1.msra.mxu0 0.0
          %5880 = vmatprep.subr.mxu0 0.0
          %5881 = vmatpush1.msra.mxu0 0.0
          %5882 = vmatprep.subr.mxu0 0.0
          %5883 = vmatpush1.msra.mxu0 0.0
          %5884 = vmatprep.subr.mxu0 0.0
          %5885 = vmatpush1.msra.mxu0 0.0
          %5886 = vmatprep.subr.mxu0 0.0
          %5887 = vmatpush1.msra.mxu0 0.0
          %5888 = vmatprep.subr.mxu0 0.0
          %5889 = vmatpush1.msra.mxu0 0.0
          %5890 = vmatprep.subr.mxu0 0.0
          %5891 = vmatpush1.msra.mxu0 0.0
          %5892 = vmatprep.subr.mxu0 0.0
          %5893 = vmatpush1.msra.mxu0 0.0
          %5894 = vmatprep.subr.mxu0 0.0
          %5895 = vmatpush1.msra.mxu0 0.0
          %5896 = vmatprep.subr.mxu0 0.0
          %5897 = vmatpush1.msra.mxu0 0.0
          %5898 = vmatprep.subr.mxu0 0.0
          %5899 = vmatpush1.msra.mxu0 0.0
          %5900 = vmatprep.subr.mxu0 0.0
          %5901 = vmatpush1.msra.mxu0 0.0
          %5902 = vmatprep.subr.mxu0 0.0
          %5903 = vmatpush1.msra.mxu0 0.0
          %5904 = vmatprep.subr.mxu0 0.0
          %5905 = vmatpush1.msra.mxu0 0.0
          %5906 = vmatprep.subr.mxu0 0.0
          %5907 = vmatpush1.msra.mxu0 0.0
          %5908 = vmatprep.subr.mxu0 0.0
          %5909 = vmatpush1.msra.mxu0 0.0
          %5910 = vmatprep.subr.mxu0 0.0
          %5911 = vmatpush1.msra.mxu0 0.0
          %5912 = vmatprep.subr.mxu0 0.0
          %5913 = vmatpush1.msra.mxu0 0.0
          %5914 = vmatprep.subr.mxu0 0.0
          %5915 = vmatpush1.msra.mxu0 0.0
          %5916 = vmatprep.subr.mxu0 0.0
          %5917 = vmatpush1.msra.mxu0 0.0
          %5918 = vmatprep.subr.mxu0 0.0
          %5919 = vmatpush1.msra.mxu0 0.0
          %5920 = vmatprep.subr.mxu0 0.0
          %5921 = vmatpush1.msra.mxu0 0.0
          %5922 = vmatprep.subr.mxu0 0.0
          %5923 = vmatpush1.msra.mxu0 0.0
          %5924 = vmatprep.subr.mxu0 0.0
          %5925 = vmatpush1.msra.mxu0 0.0
          %5926 = vmatprep.mubr.f32.mxu0 0.0
          %5927 = vmatmul.mubr.f32.gmra.mrb[0].mxu0 %v4866
          %v5928 = vpop.f32.mrb[0].mxu0
          %v5929 = vadd.f32 0.0, %v5928
          %v5930 = vpop.f32.mrb[0].mxu0
          %v5931 = vadd.f32 0.0, %v5930
          %5932 = vdwg.mxu0
          %5933 = vmatprep.subr.mxu0 %v1688
          %5934 = vmatpush1.msra.mxu0 %v1687
          %5935 = vmatprep.subr.mxu0 %v1720
          %5936 = vmatpush1.msra.mxu0 %v1719
          %5937 = vmatprep.subr.mxu0 %v1752
          %5938 = vmatpush1.msra.mxu0 %v1751
          %5939 = vmatprep.subr.mxu0 %v1784
          %5940 = vmatpush1.msra.mxu0 %v1783
          %5941 = vmatprep.subr.mxu0 0.0
          %5942 = vmatpush1.msra.mxu0 0.0
          %5943 = vmatprep.subr.mxu0 0.0
          %5944 = vmatpush1.msra.mxu0 0.0
          %5945 = vmatprep.subr.mxu0 0.0
          %5946 = vmatpush1.msra.mxu0 0.0
          %5947 = vmatprep.subr.mxu0 0.0
          %5948 = vmatpush1.msra.mxu0 0.0
          %5949 = vmatprep.subr.mxu0 0.0
          %5950 = vmatpush1.msra.mxu0 0.0
          %5951 = vmatprep.subr.mxu0 0.0
          %5952 = vmatpush1.msra.mxu0 0.0
          %5953 = vmatprep.subr.mxu0 0.0
          %5954 = vmatpush1.msra.mxu0 0.0
          %5955 = vmatprep.subr.mxu0 0.0
          %5956 = vmatpush1.msra.mxu0 0.0
          %5957 = vmatprep.subr.mxu0 0.0
          %5958 = vmatpush1.msra.mxu0 0.0
          %5959 = vmatprep.subr.mxu0 0.0
          %5960 = vmatpush1.msra.mxu0 0.0
          %5961 = vmatprep.subr.mxu0 0.0
          %5962 = vmatpush1.msra.mxu0 0.0
          %5963 = vmatprep.subr.mxu0 0.0
          %5964 = vmatpush1.msra.mxu0 0.0
          %5965 = vmatprep.subr.mxu0 0.0
          %5966 = vmatpush1.msra.mxu0 0.0
          %5967 = vmatprep.subr.mxu0 0.0
          %5968 = vmatpush1.msra.mxu0 0.0
          %5969 = vmatprep.subr.mxu0 0.0
          %5970 = vmatpush1.msra.mxu0 0.0
          %5971 = vmatprep.subr.mxu0 0.0
          %5972 = vmatpush1.msra.mxu0 0.0
          %5973 = vmatprep.subr.mxu0 0.0
          %5974 = vmatpush1.msra.mxu0 0.0
          %5975 = vmatprep.subr.mxu0 0.0
          %5976 = vmatpush1.msra.mxu0 0.0
          %5977 = vmatprep.subr.mxu0 0.0
          %5978 = vmatpush1.msra.mxu0 0.0
          %5979 = vmatprep.subr.mxu0 0.0
          %5980 = vmatpush1.msra.mxu0 0.0
          %5981 = vmatprep.subr.mxu0 0.0
          %5982 = vmatpush1.msra.mxu0 0.0
          %5983 = vmatprep.subr.mxu0 0.0
          %5984 = vmatpush1.msra.mxu0 0.0
          %5985 = vmatprep.subr.mxu0 0.0
          %5986 = vmatpush1.msra.mxu0 0.0
          %5987 = vmatprep.subr.mxu0 0.0
          %5988 = vmatpush1.msra.mxu0 0.0
          %5989 = vmatprep.subr.mxu0 0.0
          %5990 = vmatpush1.msra.mxu0 0.0
          %5991 = vmatprep.subr.mxu0 0.0
          %5992 = vmatpush1.msra.mxu0 0.0
          %5993 = vmatprep.subr.mxu0 0.0
          %5994 = vmatpush1.msra.mxu0 0.0
          %5995 = vmatprep.subr.mxu0 0.0
          %5996 = vmatpush1.msra.mxu0 0.0
          %5997 = vmatprep.mubr.f32.mxu0 0.0
          %5998 = vmatmul.mubr.f32.gmra.mrb[0].mxu0 %v4866
          %v5999 = vpop.f32.mrb[0].mxu0
          %v6000 = vadd.f32 0.0, %v5999
          %v6001 = vpop.f32.mrb[0].mxu0
          %v6002 = vadd.f32 0.0, %v6001
          %6003 = vdwg.mxu0
          %v6004 = vmul.f32 %v4935, %v1060
          %v6005 = vmul.f32 %v4937, %v1060
          %v6006 = vmul.f32 %v5006, %v1060
          %v6007 = vmul.f32 %v5008, %v1060
          %v6008 = vmul.f32 %v5077, %v1060
          %v6009 = vmul.f32 %v5079, %v1060
          %v6010 = vmul.f32 %v5148, %v1060
          %v6011 = vmul.f32 %v5150, %v1060
          %v6012 = vmul.f32 %v5219, %v1060
          %v6013 = vmul.f32 %v5221, %v1060
          %v6014 = vmul.f32 %v5290, %v1060
          %v6015 = vmul.f32 %v5292, %v1060
          %v6016 = vmul.f32 %v5361, %v1060
          %v6017 = vmul.f32 %v5363, %v1060
          %v6018 = vmul.f32 %v5432, %v1060
          %v6019 = vmul.f32 %v5434, %v1060
          %v6020 = vmul.f32 %v5503, %v1060
          %v6021 = vmul.f32 %v5505, %v1060
          %v6022 = vmul.f32 %v5574, %v1060
          %v6023 = vmul.f32 %v5576, %v1060
          %v6024 = vmul.f32 %v5645, %v1060
          %v6025 = vmul.f32 %v5647, %v1060
          %v6026 = vmul.f32 %v5716, %v1060
          %v6027 = vmul.f32 %v5718, %v1060
          %v6028 = vmul.f32 %v5787, %v1060
          %v6029 = vmul.f32 %v5789, %v1060
          %v6030 = vmul.f32 %v5858, %v1060
          %v6031 = vmul.f32 %v5860, %v1060
          %v6032 = vmul.f32 %v5929, %v1060
          %v6033 = vmul.f32 %v5931, %v1060
          %v6034 = vmul.f32 %v6000, %v1060
          %v6035 = vmul.f32 %v6002, %v1060
          %v6068 = vcombine.low %v6004, %v6005
          %v6069 = vcombine.low %v6006, %v6007
          %v6071 = vunpack.c.l.s4 1983009808
          %v6072 = vunpack.c.0.s8 %v6071
          %v6073 = vlaneseq
          %v6074 = vshrl.u32 %v6073, 7
          %v6075 = vsub.s32 %v6072, %v6074
          %v6076 = vrot.slane %v6068, %v6075
          %v6078 = vunpack.c.l.s4 1983009808
          %v6079 = vunpack.c.0.s8 %v6078
          %v6080 = vlaneseq
          %v6081 = vshrl.u32 %v6080, 7
          %v6082 = vsub.s32 %v6079, %v6081
          %v6083 = vrot.slane %v6069, %v6082
          %v6084 = vcombine.low %v6076, %v6083
          %v6085 = vcombine.low %v6008, %v6009
          %v6086 = vcombine.low %v6010, %v6011
          %v6088 = vunpack.c.l.s4 1983009808
          %v6089 = vunpack.c.0.s8 %v6088
          %v6090 = vlaneseq
          %v6091 = vshrl.u32 %v6090, 7
          %v6092 = vsub.s32 %v6089, %v6091
          %v6093 = vrot.slane %v6085, %v6092
          %v6095 = vunpack.c.l.s4 1983009808
          %v6096 = vunpack.c.0.s8 %v6095
          %v6097 = vlaneseq
          %v6098 = vshrl.u32 %v6097, 7
          %v6099 = vsub.s32 %v6096, %v6098
          %v6100 = vrot.slane %v6086, %v6099
          %v6101 = vcombine.low %v6093, %v6100
          %v6102 = vcombine.low %v6012, %v6013
          %v6103 = vcombine.low %v6014, %v6015
          %v6105 = vunpack.c.l.s4 1983009808
          %v6106 = vunpack.c.0.s8 %v6105
          %v6107 = vlaneseq
          %v6108 = vshrl.u32 %v6107, 7
          %v6109 = vsub.s32 %v6106, %v6108
          %v6110 = vrot.slane %v6102, %v6109
          %v6112 = vunpack.c.l.s4 1983009808
          %v6113 = vunpack.c.0.s8 %v6112
          %v6114 = vlaneseq
          %v6115 = vshrl.u32 %v6114, 7
          %v6116 = vsub.s32 %v6113, %v6115
          %v6117 = vrot.slane %v6103, %v6116
          %v6118 = vcombine.low %v6110, %v6117
          %v6119 = vcombine.low %v6016, %v6017
          %v6120 = vcombine.low %v6018, %v6019
          %v6122 = vunpack.c.l.s4 1983009808
          %v6123 = vunpack.c.0.s8 %v6122
          %v6124 = vlaneseq
          %v6125 = vshrl.u32 %v6124, 7
          %v6126 = vsub.s32 %v6123, %v6125
          %v6127 = vrot.slane %v6119, %v6126
          %v6129 = vunpack.c.l.s4 1983009808
          %v6130 = vunpack.c.0.s8 %v6129
          %v6131 = vlaneseq
          %v6132 = vshrl.u32 %v6131, 7
          %v6133 = vsub.s32 %v6130, %v6132
          %v6134 = vrot.slane %v6120, %v6133
          %v6135 = vcombine.low %v6127, %v6134
          %v6136 = vcombine.low %v6020, %v6021
          %v6137 = vcombine.low %v6022, %v6023
          %v6139 = vunpack.c.l.s4 1983009808
          %v6140 = vunpack.c.0.s8 %v6139
          %v6141 = vlaneseq
          %v6142 = vshrl.u32 %v6141, 7
          %v6143 = vsub.s32 %v6140, %v6142
          %v6144 = vrot.slane %v6136, %v6143
          %v6146 = vunpack.c.l.s4 1983009808
          %v6147 = vunpack.c.0.s8 %v6146
          %v6148 = vlaneseq
          %v6149 = vshrl.u32 %v6148, 7
          %v6150 = vsub.s32 %v6147, %v6149
          %v6151 = vrot.slane %v6137, %v6150
          %v6152 = vcombine.low %v6144, %v6151
          %v6153 = vcombine.low %v6024, %v6025
          %v6154 = vcombine.low %v6026, %v6027
          %v6156 = vunpack.c.l.s4 1983009808
          %v6157 = vunpack.c.0.s8 %v6156
          %v6158 = vlaneseq
          %v6159 = vshrl.u32 %v6158, 7
          %v6160 = vsub.s32 %v6157, %v6159
          %v6161 = vrot.slane %v6153, %v6160
          %v6163 = vunpack.c.l.s4 1983009808
          %v6164 = vunpack.c.0.s8 %v6163
          %v6165 = vlaneseq
          %v6166 = vshrl.u32 %v6165, 7
          %v6167 = vsub.s32 %v6164, %v6166
          %v6168 = vrot.slane %v6154, %v6167
          %v6169 = vcombine.low %v6161, %v6168
          %v6170 = vcombine.low %v6028, %v6029
          %v6171 = vcombine.low %v6030, %v6031
          %v6173 = vunpack.c.l.s4 1983009808
          %v6174 = vunpack.c.0.s8 %v6173
          %v6175 = vlaneseq
          %v6176 = vshrl.u32 %v6175, 7
          %v6177 = vsub.s32 %v6174, %v6176
          %v6178 = vrot.slane %v6170, %v6177
          %v6180 = vunpack.c.l.s4 1983009808
          %v6181 = vunpack.c.0.s8 %v6180
          %v6182 = vlaneseq
          %v6183 = vshrl.u32 %v6182, 7
          %v6184 = vsub.s32 %v6181, %v6183
          %v6185 = vrot.slane %v6171, %v6184
          %v6186 = vcombine.low %v6178, %v6185
          %v6187 = vcombine.low %v6032, %v6033
          %v6188 = vcombine.low %v6034, %v6035
          %v6190 = vunpack.c.l.s4 1983009808
          %v6191 = vunpack.c.0.s8 %v6190
          %v6192 = vlaneseq
          %v6193 = vshrl.u32 %v6192, 7
          %v6194 = vsub.s32 %v6191, %v6193
          %v6195 = vrot.slane %v6187, %v6194
          %v6197 = vunpack.c.l.s4 1983009808
          %v6198 = vunpack.c.0.s8 %v6197
          %v6199 = vlaneseq
          %v6200 = vshrl.u32 %v6199, 7
          %v6201 = vsub.s32 %v6198, %v6200
          %v6202 = vrot.slane %v6188, %v6201
          %v6203 = vcombine.low %v6195, %v6202
          %s6212 = scalar_lea.vmem [#allocation2], 128
          %6213 = vst [vmem:[%s6212] sm:$0xff] %v6084
          %6214 = vst [vmem:[%s6212 + $0x8] sm:$0xff] %v6101
          %6215 = vst [vmem:[%s6212 + $0x10] sm:$0xff] %v6118
          %6216 = vst [vmem:[%s6212 + $0x18] sm:$0xff] %v6135
          %6217 = vst [vmem:[%s6212 + $0x20] sm:$0xff] %v6152
          %6218 = vst [vmem:[%s6212 + $0x28] sm:$0xff] %v6169
          %6219 = vst [vmem:[%s6212 + $0x30] sm:$0xff] %v6186
          %6220 = vst [vmem:[%s6212 + $0x38] sm:$0xff] %v6203
          %v6221 = vadd.s32 %v1073, 96
          %vm6222 = vcmp.eq.s32.totalorder %v1064, %v6221
          %vm6223 = vcmp.eq.s32.totalorder %v1065, %v6221
          %vm6224 = vcmp.eq.s32.totalorder %v1066, %v6221
          %vm6225 = vcmp.eq.s32.totalorder %v1067, %v6221
          %vm6226 = vcmp.eq.s32.totalorder %v1785, %v6221
          %vm6227 = vcmp.eq.s32.totalorder %v1786, %v6221
          %vm6228 = vcmp.eq.s32.totalorder %v1787, %v6221
          %vm6229 = vcmp.eq.s32.totalorder %v1788, %v6221
          %vm6230 = vcmp.eq.s32.totalorder %v1789, %v6221
          %vm6231 = vcmp.eq.s32.totalorder %v1790, %v6221
          %vm6232 = vcmp.eq.s32.totalorder %v1791, %v6221
          %vm6233 = vcmp.eq.s32.totalorder %v1792, %v6221
          %vm6234 = vcmp.eq.s32.totalorder %v1793, %v6221
          %vm6235 = vcmp.eq.s32.totalorder %v1794, %v6221
          %vm6236 = vcmp.eq.s32.totalorder %v1795, %v6221
          %vm6237 = vcmp.eq.s32.totalorder %v1796, %v6221
          %v6238 = vsel %vm6222, 1, 0
          %v6239 = vsel %vm6223, 1, 0
          %v6240 = vsel %vm6224, 1, 0
          %v6241 = vsel %vm6225, 1, 0
          %v6242 = vsel %vm6226, 1, 0
          %v6243 = vsel %vm6227, 1, 0
          %v6244 = vsel %vm6228, 1, 0
          %v6245 = vsel %vm6229, 1, 0
          %v6246 = vsel %vm6230, 1, 0
          %v6247 = vsel %vm6231, 1, 0
          %v6248 = vsel %vm6232, 1, 0
          %v6249 = vsel %vm6233, 1, 0
          %v6250 = vsel %vm6234, 1, 0
          %v6251 = vsel %vm6235, 1, 0
          %v6252 = vsel %vm6236, 1, 0
          %v6253 = vsel %vm6237, 1, 0
          %v6254 = vcvt.s32.f32 %v6238
          %v6255 = vcvt.s32.f32 %v6239
          %v6256 = vcvt.s32.f32 %v6240
          %v6257 = vcvt.s32.f32 %v6241
          %v6258 = vcvt.s32.f32 %v6242
          %v6259 = vcvt.s32.f32 %v6243
          %v6260 = vcvt.s32.f32 %v6244
          %v6261 = vcvt.s32.f32 %v6245
          %v6262 = vcvt.s32.f32 %v6246
          %v6263 = vcvt.s32.f32 %v6247
          %v6264 = vcvt.s32.f32 %v6248
          %v6265 = vcvt.s32.f32 %v6249
          %v6266 = vcvt.s32.f32 %v6250
          %v6267 = vcvt.s32.f32 %v6251
          %v6268 = vcvt.s32.f32 %v6252
          %v6269 = vcvt.s32.f32 %v6253
          %6270 = vmatprep.subr.mxu0 0.0
          %6271 = vmatpush1.msra.mxu0 %v6254
          %6272 = vmatprep.subr.mxu0 0.0
          %6273 = vmatpush1.msra.mxu0 %v6255
          %6274 = vmatprep.subr.mxu0 0.0
          %6275 = vmatpush1.msra.mxu0 %v6256
          %6276 = vmatprep.subr.mxu0 0.0
          %6277 = vmatpush1.msra.mxu0 %v6257
          %6278 = vmatprep.subr.mxu0 0.0
          %6279 = vmatpush1.msra.mxu0 %v6258
          %6280 = vmatprep.subr.mxu0 0.0
          %6281 = vmatpush1.msra.mxu0 %v6259
          %6282 = vmatprep.subr.mxu0 0.0
          %6283 = vmatpush1.msra.mxu0 %v6260
          %6284 = vmatprep.subr.mxu0 0.0
          %6285 = vmatpush1.msra.mxu0 %v6261
          %6286 = vmatprep.subr.mxu0 0.0
          %6287 = vmatpush1.msra.mxu0 %v6262
          %6288 = vmatprep.subr.mxu0 0.0
          %6289 = vmatpush1.msra.mxu0 %v6263
          %6290 = vmatprep.subr.mxu0 0.0
          %6291 = vmatpush1.msra.mxu0 %v6264
          %6292 = vmatprep.subr.mxu0 0.0
          %6293 = vmatpush1.msra.mxu0 %v6265
          %6294 = vmatprep.subr.mxu0 0.0
          %6295 = vmatpush1.msra.mxu0 %v6266
          %6296 = vmatprep.subr.mxu0 0.0
          %6297 = vmatpush1.msra.mxu0 %v6267
          %6298 = vmatprep.subr.mxu0 0.0
          %6299 = vmatpush1.msra.mxu0 %v6268
          %6300 = vmatprep.subr.mxu0 0.0
          %6301 = vmatpush1.msra.mxu0 %v6269
          %6302 = vmatprep.subr.mxu0 0.0
          %6303 = vmatpush1.msra.mxu0 0.0
          %6304 = vmatprep.subr.mxu0 0.0
          %6305 = vmatpush1.msra.mxu0 0.0
          %6306 = vmatprep.subr.mxu0 0.0
          %6307 = vmatpush1.msra.mxu0 0.0
          %6308 = vmatprep.subr.mxu0 0.0
          %6309 = vmatpush1.msra.mxu0 0.0
          %6310 = vmatprep.subr.mxu0 0.0
          %6311 = vmatpush1.msra.mxu0 0.0
          %6312 = vmatprep.subr.mxu0 0.0
          %6313 = vmatpush1.msra.mxu0 0.0
          %6314 = vmatprep.subr.mxu0 0.0
          %6315 = vmatpush1.msra.mxu0 0.0
          %6316 = vmatprep.subr.mxu0 0.0
          %6317 = vmatpush1.msra.mxu0 0.0
          %6318 = vmatprep.subr.mxu0 0.0
          %6319 = vmatpush1.msra.mxu0 0.0
          %6320 = vmatprep.subr.mxu0 0.0
          %6321 = vmatpush1.msra.mxu0 0.0
          %6322 = vmatprep.subr.mxu0 0.0
          %6323 = vmatpush1.msra.mxu0 0.0
          %6324 = vmatprep.subr.mxu0 0.0
          %6325 = vmatpush1.msra.mxu0 0.0
          %6326 = vmatprep.subr.mxu0 0.0
          %6327 = vmatpush1.msra.mxu0 0.0
          %6328 = vmatprep.subr.mxu0 0.0
          %6329 = vmatpush1.msra.mxu0 0.0
          %6330 = vmatprep.subr.mxu0 0.0
          %6331 = vmatpush1.msra.mxu0 0.0
          %6332 = vmatprep.subr.mxu0 0.0
          %6333 = vmatpush1.msra.mxu0 0.0
          %6334 = vmatprep.mubr.f32.mxu0 0.0
          %6335 = vmatmul.mubr.f32.gmra.mrb[0].mxu0 %v772
          %v6336 = vpop.f32.mrb[0].mxu0
          %v6337 = vadd.f32 0.0, %v6336
          %v6338 = vpop.f32.mrb[0].mxu0
          %6339 = vdwg.mxu0
          %v6341 = vsel %vm1915, %v6337, 0
          %6343 = vmatprep.subr.mxu0 %v1658
          %6344 = vmatpush1.msra.mxu0 %v1657
          %6345 = vmatprep.subr.mxu0 %v1690
          %6346 = vmatpush1.msra.mxu0 %v1689
          %6347 = vmatprep.subr.mxu0 %v1722
          %6348 = vmatpush1.msra.mxu0 %v1721
          %6349 = vmatprep.subr.mxu0 %v1754
          %6350 = vmatpush1.msra.mxu0 %v1753
          %6351 = vmatprep.subr.mxu0 0.0
          %6352 = vmatpush1.msra.mxu0 0.0
          %6353 = vmatprep.subr.mxu0 0.0
          %6354 = vmatpush1.msra.mxu0 0.0
          %6355 = vmatprep.subr.mxu0 0.0
          %6356 = vmatpush1.msra.mxu0 0.0
          %6357 = vmatprep.subr.mxu0 0.0
          %6358 = vmatpush1.msra.mxu0 0.0
          %6359 = vmatprep.subr.mxu0 0.0
          %6360 = vmatpush1.msra.mxu0 0.0
          %6361 = vmatprep.subr.mxu0 0.0
          %6362 = vmatpush1.msra.mxu0 0.0
          %6363 = vmatprep.subr.mxu0 0.0
          %6364 = vmatpush1.msra.mxu0 0.0
          %6365 = vmatprep.subr.mxu0 0.0
          %6366 = vmatpush1.msra.mxu0 0.0
          %6367 = vmatprep.subr.mxu0 0.0
          %6368 = vmatpush1.msra.mxu0 0.0
          %6369 = vmatprep.subr.mxu0 0.0
          %6370 = vmatpush1.msra.mxu0 0.0
          %6371 = vmatprep.subr.mxu0 0.0
          %6372 = vmatpush1.msra.mxu0 0.0
          %6373 = vmatprep.subr.mxu0 0.0
          %6374 = vmatpush1.msra.mxu0 0.0
          %6375 = vmatprep.subr.mxu0 0.0
          %6376 = vmatpush1.msra.mxu0 0.0
          %6377 = vmatprep.subr.mxu0 0.0
          %6378 = vmatpush1.msra.mxu0 0.0
          %6379 = vmatprep.subr.mxu0 0.0
          %6380 = vmatpush1.msra.mxu0 0.0
          %6381 = vmatprep.subr.mxu0 0.0
          %6382 = vmatpush1.msra.mxu0 0.0
          %6383 = vmatprep.subr.mxu0 0.0
          %6384 = vmatpush1.msra.mxu0 0.0
          %6385 = vmatprep.subr.mxu0 0.0
          %6386 = vmatpush1.msra.mxu0 0.0
          %6387 = vmatprep.subr.mxu0 0.0
          %6388 = vmatpush1.msra.mxu0 0.0
          %6389 = vmatprep.subr.mxu0 0.0
          %6390 = vmatpush1.msra.mxu0 0.0
          %6391 = vmatprep.subr.mxu0 0.0
          %6392 = vmatpush1.msra.mxu0 0.0
          %6393 = vmatprep.subr.mxu0 0.0
          %6394 = vmatpush1.msra.mxu0 0.0
          %6395 = vmatprep.subr.mxu0 0.0
          %6396 = vmatpush1.msra.mxu0 0.0
          %6397 = vmatprep.subr.mxu0 0.0
          %6398 = vmatpush1.msra.mxu0 0.0
          %6399 = vmatprep.subr.mxu0 0.0
          %6400 = vmatpush1.msra.mxu0 0.0
          %6401 = vmatprep.subr.mxu0 0.0
          %6402 = vmatpush1.msra.mxu0 0.0
          %6403 = vmatprep.subr.mxu0 0.0
          %6404 = vmatpush1.msra.mxu0 0.0
          %6405 = vmatprep.subr.mxu0 0.0
          %6406 = vmatpush1.msra.mxu0 0.0
          %6407 = vmatprep.mubr.f32.mxu0 0.0
          %6408 = vmatmul.mubr.f32.gmra.mrb[0].mxu0 %v6341
          %v6409 = vpop.f32.mrb[0].mxu0
          %v6410 = vadd.f32 0.0, %v6409
          %v6411 = vpop.f32.mrb[0].mxu0
          %v6412 = vadd.f32 0.0, %v6411
          %6413 = vdwg.mxu0
          %6414 = vmatprep.subr.mxu0 %v1660
          %6415 = vmatpush1.msra.mxu0 %v1659
          %6416 = vmatprep.subr.mxu0 %v1692
          %6417 = vmatpush1.msra.mxu0 %v1691
          %6418 = vmatprep.subr.mxu0 %v1724
          %6419 = vmatpush1.msra.mxu0 %v1723
          %6420 = vmatprep.subr.mxu0 %v1756
          %6421 = vmatpush1.msra.mxu0 %v1755
          %6422 = vmatprep.subr.mxu0 0.0
          %6423 = vmatpush1.msra.mxu0 0.0
          %6424 = vmatprep.subr.mxu0 0.0
          %6425 = vmatpush1.msra.mxu0 0.0
          %6426 = vmatprep.subr.mxu0 0.0
          %6427 = vmatpush1.msra.mxu0 0.0
          %6428 = vmatprep.subr.mxu0 0.0
          %6429 = vmatpush1.msra.mxu0 0.0
          %6430 = vmatprep.subr.mxu0 0.0
          %6431 = vmatpush1.msra.mxu0 0.0
          %6432 = vmatprep.subr.mxu0 0.0
          %6433 = vmatpush1.msra.mxu0 0.0
          %6434 = vmatprep.subr.mxu0 0.0
          %6435 = vmatpush1.msra.mxu0 0.0
          %6436 = vmatprep.subr.mxu0 0.0
          %6437 = vmatpush1.msra.mxu0 0.0
          %6438 = vmatprep.subr.mxu0 0.0
          %6439 = vmatpush1.msra.mxu0 0.0
          %6440 = vmatprep.subr.mxu0 0.0
          %6441 = vmatpush1.msra.mxu0 0.0
          %6442 = vmatprep.subr.mxu0 0.0
          %6443 = vmatpush1.msra.mxu0 0.0
          %6444 = vmatprep.subr.mxu0 0.0
          %6445 = vmatpush1.msra.mxu0 0.0
          %6446 = vmatprep.subr.mxu0 0.0
          %6447 = vmatpush1.msra.mxu0 0.0
          %6448 = vmatprep.subr.mxu0 0.0
          %6449 = vmatpush1.msra.mxu0 0.0
          %6450 = vmatprep.subr.mxu0 0.0
          %6451 = vmatpush1.msra.mxu0 0.0
          %6452 = vmatprep.subr.mxu0 0.0
          %6453 = vmatpush1.msra.mxu0 0.0
          %6454 = vmatprep.subr.mxu0 0.0
          %6455 = vmatpush1.msra.mxu0 0.0
          %6456 = vmatprep.subr.mxu0 0.0
          %6457 = vmatpush1.msra.mxu0 0.0
          %6458 = vmatprep.subr.mxu0 0.0
          %6459 = vmatpush1.msra.mxu0 0.0
          %6460 = vmatprep.subr.mxu0 0.0
          %6461 = vmatpush1.msra.mxu0 0.0
          %6462 = vmatprep.subr.mxu0 0.0
          %6463 = vmatpush1.msra.mxu0 0.0
          %6464 = vmatprep.subr.mxu0 0.0
          %6465 = vmatpush1.msra.mxu0 0.0
          %6466 = vmatprep.subr.mxu0 0.0
          %6467 = vmatpush1.msra.mxu0 0.0
          %6468 = vmatprep.subr.mxu0 0.0
          %6469 = vmatpush1.msra.mxu0 0.0
          %6470 = vmatprep.subr.mxu0 0.0
          %6471 = vmatpush1.msra.mxu0 0.0
          %6472 = vmatprep.subr.mxu0 0.0
          %6473 = vmatpush1.msra.mxu0 0.0
          %6474 = vmatprep.subr.mxu0 0.0
          %6475 = vmatpush1.msra.mxu0 0.0
          %6476 = vmatprep.subr.mxu0 0.0
          %6477 = vmatpush1.msra.mxu0 0.0
          %6478 = vmatprep.mubr.f32.mxu0 0.0
          %6479 = vmatmul.mubr.f32.gmra.mrb[0].mxu0 %v6341
          %v6480 = vpop.f32.mrb[0].mxu0
          %v6481 = vadd.f32 0.0, %v6480
          %v6482 = vpop.f32.mrb[0].mxu0
          %v6483 = vadd.f32 0.0, %v6482
          %6484 = vdwg.mxu0
          %6485 = vmatprep.subr.mxu0 %v1662
          %6486 = vmatpush1.msra.mxu0 %v1661
          %6487 = vmatprep.subr.mxu0 %v1694
          %6488 = vmatpush1.msra.mxu0 %v1693
          %6489 = vmatprep.subr.mxu0 %v1726
          %6490 = vmatpush1.msra.mxu0 %v1725
          %6491 = vmatprep.subr.mxu0 %v1758
          %6492 = vmatpush1.msra.mxu0 %v1757
          %6493 = vmatprep.subr.mxu0 0.0
          %6494 = vmatpush1.msra.mxu0 0.0
          %6495 = vmatprep.subr.mxu0 0.0
          %6496 = vmatpush1.msra.mxu0 0.0
          %6497 = vmatprep.subr.mxu0 0.0
          %6498 = vmatpush1.msra.mxu0 0.0
          %6499 = vmatprep.subr.mxu0 0.0
          %6500 = vmatpush1.msra.mxu0 0.0
          %6501 = vmatprep.subr.mxu0 0.0
          %6502 = vmatpush1.msra.mxu0 0.0
          %6503 = vmatprep.subr.mxu0 0.0
          %6504 = vmatpush1.msra.mxu0 0.0
          %6505 = vmatprep.subr.mxu0 0.0
          %6506 = vmatpush1.msra.mxu0 0.0
          %6507 = vmatprep.subr.mxu0 0.0
          %6508 = vmatpush1.msra.mxu0 0.0
          %6509 = vmatprep.subr.mxu0 0.0
          %6510 = vmatpush1.msra.mxu0 0.0
          %6511 = vmatprep.subr.mxu0 0.0
          %6512 = vmatpush1.msra.mxu0 0.0
          %6513 = vmatprep.subr.mxu0 0.0
          %6514 = vmatpush1.msra.mxu0 0.0
          %6515 = vmatprep.subr.mxu0 0.0
          %6516 = vmatpush1.msra.mxu0 0.0
          %6517 = vmatprep.subr.mxu0 0.0
          %6518 = vmatpush1.msra.mxu0 0.0
          %6519 = vmatprep.subr.mxu0 0.0
          %6520 = vmatpush1.msra.mxu0 0.0
          %6521 = vmatprep.subr.mxu0 0.0
          %6522 = vmatpush1.msra.mxu0 0.0
          %6523 = vmatprep.subr.mxu0 0.0
          %6524 = vmatpush1.msra.mxu0 0.0
          %6525 = vmatprep.subr.mxu0 0.0
          %6526 = vmatpush1.msra.mxu0 0.0
          %6527 = vmatprep.subr.mxu0 0.0
          %6528 = vmatpush1.msra.mxu0 0.0
          %6529 = vmatprep.subr.mxu0 0.0
          %6530 = vmatpush1.msra.mxu0 0.0
          %6531 = vmatprep.subr.mxu0 0.0
          %6532 = vmatpush1.msra.mxu0 0.0
          %6533 = vmatprep.subr.mxu0 0.0
          %6534 = vmatpush1.msra.mxu0 0.0
          %6535 = vmatprep.subr.mxu0 0.0
          %6536 = vmatpush1.msra.mxu0 0.0
          %6537 = vmatprep.subr.mxu0 0.0
          %6538 = vmatpush1.msra.mxu0 0.0
          %6539 = vmatprep.subr.mxu0 0.0
          %6540 = vmatpush1.msra.mxu0 0.0
          %6541 = vmatprep.subr.mxu0 0.0
          %6542 = vmatpush1.msra.mxu0 0.0
          %6543 = vmatprep.subr.mxu0 0.0
          %6544 = vmatpush1.msra.mxu0 0.0
          %6545 = vmatprep.subr.mxu0 0.0
          %6546 = vmatpush1.msra.mxu0 0.0
          %6547 = vmatprep.subr.mxu0 0.0
          %6548 = vmatpush1.msra.mxu0 0.0
          %6549 = vmatprep.mubr.f32.mxu0 0.0
          %6550 = vmatmul.mubr.f32.gmra.mrb[0].mxu0 %v6341
          %v6551 = vpop.f32.mrb[0].mxu0
          %v6552 = vadd.f32 0.0, %v6551
          %v6553 = vpop.f32.mrb[0].mxu0
          %v6554 = vadd.f32 0.0, %v6553
          %6555 = vdwg.mxu0
          %6556 = vmatprep.subr.mxu0 %v1664
          %6557 = vmatpush1.msra.mxu0 %v1663
          %6558 = vmatprep.subr.mxu0 %v1696
          %6559 = vmatpush1.msra.mxu0 %v1695
          %6560 = vmatprep.subr.mxu0 %v1728
          %6561 = vmatpush1.msra.mxu0 %v1727
          %6562 = vmatprep.subr.mxu0 %v1760
          %6563 = vmatpush1.msra.mxu0 %v1759
          %6564 = vmatprep.subr.mxu0 0.0
          %6565 = vmatpush1.msra.mxu0 0.0
          %6566 = vmatprep.subr.mxu0 0.0
          %6567 = vmatpush1.msra.mxu0 0.0
          %6568 = vmatprep.subr.mxu0 0.0
          %6569 = vmatpush1.msra.mxu0 0.0
          %6570 = vmatprep.subr.mxu0 0.0
          %6571 = vmatpush1.msra.mxu0 0.0
          %6572 = vmatprep.subr.mxu0 0.0
          %6573 = vmatpush1.msra.mxu0 0.0
          %6574 = vmatprep.subr.mxu0 0.0
          %6575 = vmatpush1.msra.mxu0 0.0
          %6576 = vmatprep.subr.mxu0 0.0
          %6577 = vmatpush1.msra.mxu0 0.0
          %6578 = vmatprep.subr.mxu0 0.0
          %6579 = vmatpush1.msra.mxu0 0.0
          %6580 = vmatprep.subr.mxu0 0.0
          %6581 = vmatpush1.msra.mxu0 0.0
          %6582 = vmatprep.subr.mxu0 0.0
          %6583 = vmatpush1.msra.mxu0 0.0
          %6584 = vmatprep.subr.mxu0 0.0
          %6585 = vmatpush1.msra.mxu0 0.0
          %6586 = vmatprep.subr.mxu0 0.0
          %6587 = vmatpush1.msra.mxu0 0.0
          %6588 = vmatprep.subr.mxu0 0.0
          %6589 = vmatpush1.msra.mxu0 0.0
          %6590 = vmatprep.subr.mxu0 0.0
          %6591 = vmatpush1.msra.mxu0 0.0
          %6592 = vmatprep.subr.mxu0 0.0
          %6593 = vmatpush1.msra.mxu0 0.0
          %6594 = vmatprep.subr.mxu0 0.0
          %6595 = vmatpush1.msra.mxu0 0.0
          %6596 = vmatprep.subr.mxu0 0.0
          %6597 = vmatpush1.msra.mxu0 0.0
          %6598 = vmatprep.subr.mxu0 0.0
          %6599 = vmatpush1.msra.mxu0 0.0
          %6600 = vmatprep.subr.mxu0 0.0
          %6601 = vmatpush1.msra.mxu0 0.0
          %6602 = vmatprep.subr.mxu0 0.0
          %6603 = vmatpush1.msra.mxu0 0.0
          %6604 = vmatprep.subr.mxu0 0.0
          %6605 = vmatpush1.msra.mxu0 0.0
          %6606 = vmatprep.subr.mxu0 0.0
          %6607 = vmatpush1.msra.mxu0 0.0
          %6608 = vmatprep.subr.mxu0 0.0
          %6609 = vmatpush1.msra.mxu0 0.0
          %6610 = vmatprep.subr.mxu0 0.0
          %6611 = vmatpush1.msra.mxu0 0.0
          %6612 = vmatprep.subr.mxu0 0.0
          %6613 = vmatpush1.msra.mxu0 0.0
          %6614 = vmatprep.subr.mxu0 0.0
          %6615 = vmatpush1.msra.mxu0 0.0
          %6616 = vmatprep.subr.mxu0 0.0
          %6617 = vmatpush1.msra.mxu0 0.0
          %6618 = vmatprep.subr.mxu0 0.0
          %6619 = vmatpush1.msra.mxu0 0.0
          %6620 = vmatprep.mubr.f32.mxu0 0.0
          %6621 = vmatmul.mubr.f32.gmra.mrb[0].mxu0 %v6341
          %v6622 = vpop.f32.mrb[0].mxu0
          %v6623 = vadd.f32 0.0, %v6622
          %v6624 = vpop.f32.mrb[0].mxu0
          %v6625 = vadd.f32 0.0, %v6624
          %6626 = vdwg.mxu0
          %6627 = vmatprep.subr.mxu0 %v1666
          %6628 = vmatpush1.msra.mxu0 %v1665
          %6629 = vmatprep.subr.mxu0 %v1698
          %6630 = vmatpush1.msra.mxu0 %v1697
          %6631 = vmatprep.subr.mxu0 %v1730
          %6632 = vmatpush1.msra.mxu0 %v1729
          %6633 = vmatprep.subr.mxu0 %v1762
          %6634 = vmatpush1.msra.mxu0 %v1761
          %6635 = vmatprep.subr.mxu0 0.0
          %6636 = vmatpush1.msra.mxu0 0.0
          %6637 = vmatprep.subr.mxu0 0.0
          %6638 = vmatpush1.msra.mxu0 0.0
          %6639 = vmatprep.subr.mxu0 0.0
          %6640 = vmatpush1.msra.mxu0 0.0
          %6641 = vmatprep.subr.mxu0 0.0
          %6642 = vmatpush1.msra.mxu0 0.0
          %6643 = vmatprep.subr.mxu0 0.0
          %6644 = vmatpush1.msra.mxu0 0.0
          %6645 = vmatprep.subr.mxu0 0.0
          %6646 = vmatpush1.msra.mxu0 0.0
          %6647 = vmatprep.subr.mxu0 0.0
          %6648 = vmatpush1.msra.mxu0 0.0
          %6649 = vmatprep.subr.mxu0 0.0
          %6650 = vmatpush1.msra.mxu0 0.0
          %6651 = vmatprep.subr.mxu0 0.0
          %6652 = vmatpush1.msra.mxu0 0.0
          %6653 = vmatprep.subr.mxu0 0.0
          %6654 = vmatpush1.msra.mxu0 0.0
          %6655 = vmatprep.subr.mxu0 0.0
          %6656 = vmatpush1.msra.mxu0 0.0
          %6657 = vmatprep.subr.mxu0 0.0
          %6658 = vmatpush1.msra.mxu0 0.0
          %6659 = vmatprep.subr.mxu0 0.0
          %6660 = vmatpush1.msra.mxu0 0.0
          %6661 = vmatprep.subr.mxu0 0.0
          %6662 = vmatpush1.msra.mxu0 0.0
          %6663 = vmatprep.subr.mxu0 0.0
          %6664 = vmatpush1.msra.mxu0 0.0
          %6665 = vmatprep.subr.mxu0 0.0
          %6666 = vmatpush1.msra.mxu0 0.0
          %6667 = vmatprep.subr.mxu0 0.0
          %6668 = vmatpush1.msra.mxu0 0.0
          %6669 = vmatprep.subr.mxu0 0.0
          %6670 = vmatpush1.msra.mxu0 0.0
          %6671 = vmatprep.subr.mxu0 0.0
          %6672 = vmatpush1.msra.mxu0 0.0
          %6673 = vmatprep.subr.mxu0 0.0
          %6674 = vmatpush1.msra.mxu0 0.0
          %6675 = vmatprep.subr.mxu0 0.0
          %6676 = vmatpush1.msra.mxu0 0.0
          %6677 = vmatprep.subr.mxu0 0.0
          %6678 = vmatpush1.msra.mxu0 0.0
          %6679 = vmatprep.subr.mxu0 0.0
          %6680 = vmatpush1.msra.mxu0 0.0
          %6681 = vmatprep.subr.mxu0 0.0
          %6682 = vmatpush1.msra.mxu0 0.0
          %6683 = vmatprep.subr.mxu0 0.0
          %6684 = vmatpush1.msra.mxu0 0.0
          %6685 = vmatprep.subr.mxu0 0.0
          %6686 = vmatpush1.msra.mxu0 0.0
          %6687 = vmatprep.subr.mxu0 0.0
          %6688 = vmatpush1.msra.mxu0 0.0
          %6689 = vmatprep.subr.mxu0 0.0
          %6690 = vmatpush1.msra.mxu0 0.0
          %6691 = vmatprep.mubr.f32.mxu0 0.0
          %6692 = vmatmul.mubr.f32.gmra.mrb[0].mxu0 %v6341
          %v6693 = vpop.f32.mrb[0].mxu0
          %v6694 = vadd.f32 0.0, %v6693
          %v6695 = vpop.f32.mrb[0].mxu0
          %v6696 = vadd.f32 0.0, %v6695
          %6697 = vdwg.mxu0
          %6698 = vmatprep.subr.mxu0 %v1668
          %6699 = vmatpush1.msra.mxu0 %v1667
          %6700 = vmatprep.subr.mxu0 %v1700
          %6701 = vmatpush1.msra.mxu0 %v1699
          %6702 = vmatprep.subr.mxu0 %v1732
          %6703 = vmatpush1.msra.mxu0 %v1731
          %6704 = vmatprep.subr.mxu0 %v1764
          %6705 = vmatpush1.msra.mxu0 %v1763
          %6706 = vmatprep.subr.mxu0 0.0
          %6707 = vmatpush1.msra.mxu0 0.0
          %6708 = vmatprep.subr.mxu0 0.0
          %6709 = vmatpush1.msra.mxu0 0.0
          %6710 = vmatprep.subr.mxu0 0.0
          %6711 = vmatpush1.msra.mxu0 0.0
          %6712 = vmatprep.subr.mxu0 0.0
          %6713 = vmatpush1.msra.mxu0 0.0
          %6714 = vmatprep.subr.mxu0 0.0
          %6715 = vmatpush1.msra.mxu0 0.0
          %6716 = vmatprep.subr.mxu0 0.0
          %6717 = vmatpush1.msra.mxu0 0.0
          %6718 = vmatprep.subr.mxu0 0.0
          %6719 = vmatpush1.msra.mxu0 0.0
          %6720 = vmatprep.subr.mxu0 0.0
          %6721 = vmatpush1.msra.mxu0 0.0
          %6722 = vmatprep.subr.mxu0 0.0
          %6723 = vmatpush1.msra.mxu0 0.0
          %6724 = vmatprep.subr.mxu0 0.0
          %6725 = vmatpush1.msra.mxu0 0.0
          %6726 = vmatprep.subr.mxu0 0.0
          %6727 = vmatpush1.msra.mxu0 0.0
          %6728 = vmatprep.subr.mxu0 0.0
          %6729 = vmatpush1.msra.mxu0 0.0
          %6730 = vmatprep.subr.mxu0 0.0
          %6731 = vmatpush1.msra.mxu0 0.0
          %6732 = vmatprep.subr.mxu0 0.0
          %6733 = vmatpush1.msra.mxu0 0.0
          %6734 = vmatprep.subr.mxu0 0.0
          %6735 = vmatpush1.msra.mxu0 0.0
          %6736 = vmatprep.subr.mxu0 0.0
          %6737 = vmatpush1.msra.mxu0 0.0
          %6738 = vmatprep.subr.mxu0 0.0
          %6739 = vmatpush1.msra.mxu0 0.0
          %6740 = vmatprep.subr.mxu0 0.0
          %6741 = vmatpush1.msra.mxu0 0.0
          %6742 = vmatprep.subr.mxu0 0.0
          %6743 = vmatpush1.msra.mxu0 0.0
          %6744 = vmatprep.subr.mxu0 0.0
          %6745 = vmatpush1.msra.mxu0 0.0
          %6746 = vmatprep.subr.mxu0 0.0
          %6747 = vmatpush1.msra.mxu0 0.0
          %6748 = vmatprep.subr.mxu0 0.0
          %6749 = vmatpush1.msra.mxu0 0.0
          %6750 = vmatprep.subr.mxu0 0.0
          %6751 = vmatpush1.msra.mxu0 0.0
          %6752 = vmatprep.subr.mxu0 0.0
          %6753 = vmatpush1.msra.mxu0 0.0
          %6754 = vmatprep.subr.mxu0 0.0
          %6755 = vmatpush1.msra.mxu0 0.0
          %6756 = vmatprep.subr.mxu0 0.0
          %6757 = vmatpush1.msra.mxu0 0.0
          %6758 = vmatprep.subr.mxu0 0.0
          %6759 = vmatpush1.msra.mxu0 0.0
          %6760 = vmatprep.subr.mxu0 0.0
          %6761 = vmatpush1.msra.mxu0 0.0
          %6762 = vmatprep.mubr.f32.mxu0 0.0
          %6763 = vmatmul.mubr.f32.gmra.mrb[0].mxu0 %v6341
          %v6764 = vpop.f32.mrb[0].mxu0
          %v6765 = vadd.f32 0.0, %v6764
          %v6766 = vpop.f32.mrb[0].mxu0
          %v6767 = vadd.f32 0.0, %v6766
          %6768 = vdwg.mxu0
          %6769 = vmatprep.subr.mxu0 %v1670
          %6770 = vmatpush1.msra.mxu0 %v1669
          %6771 = vmatprep.subr.mxu0 %v1702
          %6772 = vmatpush1.msra.mxu0 %v1701
          %6773 = vmatprep.subr.mxu0 %v1734
          %6774 = vmatpush1.msra.mxu0 %v1733
          %6775 = vmatprep.subr.mxu0 %v1766
          %6776 = vmatpush1.msra.mxu0 %v1765
          %6777 = vmatprep.subr.mxu0 0.0
          %6778 = vmatpush1.msra.mxu0 0.0
          %6779 = vmatprep.subr.mxu0 0.0
          %6780 = vmatpush1.msra.mxu0 0.0
          %6781 = vmatprep.subr.mxu0 0.0
          %6782 = vmatpush1.msra.mxu0 0.0
          %6783 = vmatprep.subr.mxu0 0.0
          %6784 = vmatpush1.msra.mxu0 0.0
          %6785 = vmatprep.subr.mxu0 0.0
          %6786 = vmatpush1.msra.mxu0 0.0
          %6787 = vmatprep.subr.mxu0 0.0
          %6788 = vmatpush1.msra.mxu0 0.0
          %6789 = vmatprep.subr.mxu0 0.0
          %6790 = vmatpush1.msra.mxu0 0.0
          %6791 = vmatprep.subr.mxu0 0.0
          %6792 = vmatpush1.msra.mxu0 0.0
          %6793 = vmatprep.subr.mxu0 0.0
          %6794 = vmatpush1.msra.mxu0 0.0
          %6795 = vmatprep.subr.mxu0 0.0
          %6796 = vmatpush1.msra.mxu0 0.0
          %6797 = vmatprep.subr.mxu0 0.0
          %6798 = vmatpush1.msra.mxu0 0.0
          %6799 = vmatprep.subr.mxu0 0.0
          %6800 = vmatpush1.msra.mxu0 0.0
          %6801 = vmatprep.subr.mxu0 0.0
          %6802 = vmatpush1.msra.mxu0 0.0
          %6803 = vmatprep.subr.mxu0 0.0
          %6804 = vmatpush1.msra.mxu0 0.0
          %6805 = vmatprep.subr.mxu0 0.0
          %6806 = vmatpush1.msra.mxu0 0.0
          %6807 = vmatprep.subr.mxu0 0.0
          %6808 = vmatpush1.msra.mxu0 0.0
          %6809 = vmatprep.subr.mxu0 0.0
          %6810 = vmatpush1.msra.mxu0 0.0
          %6811 = vmatprep.subr.mxu0 0.0
          %6812 = vmatpush1.msra.mxu0 0.0
          %6813 = vmatprep.subr.mxu0 0.0
          %6814 = vmatpush1.msra.mxu0 0.0
          %6815 = vmatprep.subr.mxu0 0.0
          %6816 = vmatpush1.msra.mxu0 0.0
          %6817 = vmatprep.subr.mxu0 0.0
          %6818 = vmatpush1.msra.mxu0 0.0
          %6819 = vmatprep.subr.mxu0 0.0
          %6820 = vmatpush1.msra.mxu0 0.0
          %6821 = vmatprep.subr.mxu0 0.0
          %6822 = vmatpush1.msra.mxu0 0.0
          %6823 = vmatprep.subr.mxu0 0.0
          %6824 = vmatpush1.msra.mxu0 0.0
          %6825 = vmatprep.subr.mxu0 0.0
          %6826 = vmatpush1.msra.mxu0 0.0
          %6827 = vmatprep.subr.mxu0 0.0
          %6828 = vmatpush1.msra.mxu0 0.0
          %6829 = vmatprep.subr.mxu0 0.0
          %6830 = vmatpush1.msra.mxu0 0.0
          %6831 = vmatprep.subr.mxu0 0.0
          %6832 = vmatpush1.msra.mxu0 0.0
          %6833 = vmatprep.mubr.f32.mxu0 0.0
          %6834 = vmatmul.mubr.f32.gmra.mrb[0].mxu0 %v6341
          %v6835 = vpop.f32.mrb[0].mxu0
          %v6836 = vadd.f32 0.0, %v6835
          %v6837 = vpop.f32.mrb[0].mxu0
          %v6838 = vadd.f32 0.0, %v6837
          %6839 = vdwg.mxu0
          %6840 = vmatprep.subr.mxu0 %v1672
          %6841 = vmatpush1.msra.mxu0 %v1671
          %6842 = vmatprep.subr.mxu0 %v1704
          %6843 = vmatpush1.msra.mxu0 %v1703
          %6844 = vmatprep.subr.mxu0 %v1736
          %6845 = vmatpush1.msra.mxu0 %v1735
          %6846 = vmatprep.subr.mxu0 %v1768
          %6847 = vmatpush1.msra.mxu0 %v1767
          %6848 = vmatprep.subr.mxu0 0.0
          %6849 = vmatpush1.msra.mxu0 0.0
          %6850 = vmatprep.subr.mxu0 0.0
          %6851 = vmatpush1.msra.mxu0 0.0
          %6852 = vmatprep.subr.mxu0 0.0
          %6853 = vmatpush1.msra.mxu0 0.0
          %6854 = vmatprep.subr.mxu0 0.0
          %6855 = vmatpush1.msra.mxu0 0.0
          %6856 = vmatprep.subr.mxu0 0.0
          %6857 = vmatpush1.msra.mxu0 0.0
          %6858 = vmatprep.subr.mxu0 0.0
          %6859 = vmatpush1.msra.mxu0 0.0
          %6860 = vmatprep.subr.mxu0 0.0
          %6861 = vmatpush1.msra.mxu0 0.0
          %6862 = vmatprep.subr.mxu0 0.0
          %6863 = vmatpush1.msra.mxu0 0.0
          %6864 = vmatprep.subr.mxu0 0.0
          %6865 = vmatpush1.msra.mxu0 0.0
          %6866 = vmatprep.subr.mxu0 0.0
          %6867 = vmatpush1.msra.mxu0 0.0
          %6868 = vmatprep.subr.mxu0 0.0
          %6869 = vmatpush1.msra.mxu0 0.0
          %6870 = vmatprep.subr.mxu0 0.0
          %6871 = vmatpush1.msra.mxu0 0.0
          %6872 = vmatprep.subr.mxu0 0.0
          %6873 = vmatpush1.msra.mxu0 0.0
          %6874 = vmatprep.subr.mxu0 0.0
          %6875 = vmatpush1.msra.mxu0 0.0
          %6876 = vmatprep.subr.mxu0 0.0
          %6877 = vmatpush1.msra.mxu0 0.0
          %6878 = vmatprep.subr.mxu0 0.0
          %6879 = vmatpush1.msra.mxu0 0.0
          %6880 = vmatprep.subr.mxu0 0.0
          %6881 = vmatpush1.msra.mxu0 0.0
          %6882 = vmatprep.subr.mxu0 0.0
          %6883 = vmatpush1.msra.mxu0 0.0
          %6884 = vmatprep.subr.mxu0 0.0
          %6885 = vmatpush1.msra.mxu0 0.0
          %6886 = vmatprep.subr.mxu0 0.0
          %6887 = vmatpush1.msra.mxu0 0.0
          %6888 = vmatprep.subr.mxu0 0.0
          %6889 = vmatpush1.msra.mxu0 0.0
          %6890 = vmatprep.subr.mxu0 0.0
          %6891 = vmatpush1.msra.mxu0 0.0
          %6892 = vmatprep.subr.mxu0 0.0
          %6893 = vmatpush1.msra.mxu0 0.0
          %6894 = vmatprep.subr.mxu0 0.0
          %6895 = vmatpush1.msra.mxu0 0.0
          %6896 = vmatprep.subr.mxu0 0.0
          %6897 = vmatpush1.msra.mxu0 0.0
          %6898 = vmatprep.subr.mxu0 0.0
          %6899 = vmatpush1.msra.mxu0 0.0
          %6900 = vmatprep.subr.mxu0 0.0
          %6901 = vmatpush1.msra.mxu0 0.0
          %6902 = vmatprep.subr.mxu0 0.0
          %6903 = vmatpush1.msra.mxu0 0.0
          %6904 = vmatprep.mubr.f32.mxu0 0.0
          %6905 = vmatmul.mubr.f32.gmra.mrb[0].mxu0 %v6341
          %v6906 = vpop.f32.mrb[0].mxu0
          %v6907 = vadd.f32 0.0, %v6906
          %v6908 = vpop.f32.mrb[0].mxu0
          %v6909 = vadd.f32 0.0, %v6908
          %6910 = vdwg.mxu0
          %6911 = vmatprep.subr.mxu0 %v1674
          %6912 = vmatpush1.msra.mxu0 %v1673
          %6913 = vmatprep.subr.mxu0 %v1706
          %6914 = vmatpush1.msra.mxu0 %v1705
          %6915 = vmatprep.subr.mxu0 %v1738
          %6916 = vmatpush1.msra.mxu0 %v1737
          %6917 = vmatprep.subr.mxu0 %v1770
          %6918 = vmatpush1.msra.mxu0 %v1769
          %6919 = vmatprep.subr.mxu0 0.0
          %6920 = vmatpush1.msra.mxu0 0.0
          %6921 = vmatprep.subr.mxu0 0.0
          %6922 = vmatpush1.msra.mxu0 0.0
          %6923 = vmatprep.subr.mxu0 0.0
          %6924 = vmatpush1.msra.mxu0 0.0
          %6925 = vmatprep.subr.mxu0 0.0
          %6926 = vmatpush1.msra.mxu0 0.0
          %6927 = vmatprep.subr.mxu0 0.0
          %6928 = vmatpush1.msra.mxu0 0.0
          %6929 = vmatprep.subr.mxu0 0.0
          %6930 = vmatpush1.msra.mxu0 0.0
          %6931 = vmatprep.subr.mxu0 0.0
          %6932 = vmatpush1.msra.mxu0 0.0
          %6933 = vmatprep.subr.mxu0 0.0
          %6934 = vmatpush1.msra.mxu0 0.0
          %6935 = vmatprep.subr.mxu0 0.0
          %6936 = vmatpush1.msra.mxu0 0.0
          %6937 = vmatprep.subr.mxu0 0.0
          %6938 = vmatpush1.msra.mxu0 0.0
          %6939 = vmatprep.subr.mxu0 0.0
          %6940 = vmatpush1.msra.mxu0 0.0
          %6941 = vmatprep.subr.mxu0 0.0
          %6942 = vmatpush1.msra.mxu0 0.0
          %6943 = vmatprep.subr.mxu0 0.0
          %6944 = vmatpush1.msra.mxu0 0.0
          %6945 = vmatprep.subr.mxu0 0.0
          %6946 = vmatpush1.msra.mxu0 0.0
          %6947 = vmatprep.subr.mxu0 0.0
          %6948 = vmatpush1.msra.mxu0 0.0
          %6949 = vmatprep.subr.mxu0 0.0
          %6950 = vmatpush1.msra.mxu0 0.0
          %6951 = vmatprep.subr.mxu0 0.0
          %6952 = vmatpush1.msra.mxu0 0.0
          %6953 = vmatprep.subr.mxu0 0.0
          %6954 = vmatpush1.msra.mxu0 0.0
          %6955 = vmatprep.subr.mxu0 0.0
          %6956 = vmatpush1.msra.mxu0 0.0
          %6957 = vmatprep.subr.mxu0 0.0
          %6958 = vmatpush1.msra.mxu0 0.0
          %6959 = vmatprep.subr.mxu0 0.0
          %6960 = vmatpush1.msra.mxu0 0.0
          %6961 = vmatprep.subr.mxu0 0.0
          %6962 = vmatpush1.msra.mxu0 0.0
          %6963 = vmatprep.subr.mxu0 0.0
          %6964 = vmatpush1.msra.mxu0 0.0
          %6965 = vmatprep.subr.mxu0 0.0
          %6966 = vmatpush1.msra.mxu0 0.0
          %6967 = vmatprep.subr.mxu0 0.0
          %6968 = vmatpush1.msra.mxu0 0.0
          %6969 = vmatprep.subr.mxu0 0.0
          %6970 = vmatpush1.msra.mxu0 0.0
          %6971 = vmatprep.subr.mxu0 0.0
          %6972 = vmatpush1.msra.mxu0 0.0
          %6973 = vmatprep.subr.mxu0 0.0
          %6974 = vmatpush1.msra.mxu0 0.0
          %6975 = vmatprep.mubr.f32.mxu0 0.0
          %6976 = vmatmul.mubr.f32.gmra.mrb[0].mxu0 %v6341
          %v6977 = vpop.f32.mrb[0].mxu0
          %v6978 = vadd.f32 0.0, %v6977
          %v6979 = vpop.f32.mrb[0].mxu0
          %v6980 = vadd.f32 0.0, %v6979
          %6981 = vdwg.mxu0
          %6982 = vmatprep.subr.mxu0 %v1676
          %6983 = vmatpush1.msra.mxu0 %v1675
          %6984 = vmatprep.subr.mxu0 %v1708
          %6985 = vmatpush1.msra.mxu0 %v1707
          %6986 = vmatprep.subr.mxu0 %v1740
          %6987 = vmatpush1.msra.mxu0 %v1739
          %6988 = vmatprep.subr.mxu0 %v1772
          %6989 = vmatpush1.msra.mxu0 %v1771
          %6990 = vmatprep.subr.mxu0 0.0
          %6991 = vmatpush1.msra.mxu0 0.0
          %6992 = vmatprep.subr.mxu0 0.0
          %6993 = vmatpush1.msra.mxu0 0.0
          %6994 = vmatprep.subr.mxu0 0.0
          %6995 = vmatpush1.msra.mxu0 0.0
          %6996 = vmatprep.subr.mxu0 0.0
          %6997 = vmatpush1.msra.mxu0 0.0
          %6998 = vmatprep.subr.mxu0 0.0
          %6999 = vmatpush1.msra.mxu0 0.0
          %7000 = vmatprep.subr.mxu0 0.0
          %7001 = vmatpush1.msra.mxu0 0.0
          %7002 = vmatprep.subr.mxu0 0.0
          %7003 = vmatpush1.msra.mxu0 0.0
          %7004 = vmatprep.subr.mxu0 0.0
          %7005 = vmatpush1.msra.mxu0 0.0
          %7006 = vmatprep.subr.mxu0 0.0
          %7007 = vmatpush1.msra.mxu0 0.0
          %7008 = vmatprep.subr.mxu0 0.0
          %7009 = vmatpush1.msra.mxu0 0.0
          %7010 = vmatprep.subr.mxu0 0.0
          %7011 = vmatpush1.msra.mxu0 0.0
          %7012 = vmatprep.subr.mxu0 0.0
          %7013 = vmatpush1.msra.mxu0 0.0
          %7014 = vmatprep.subr.mxu0 0.0
          %7015 = vmatpush1.msra.mxu0 0.0
          %7016 = vmatprep.subr.mxu0 0.0
          %7017 = vmatpush1.msra.mxu0 0.0
          %7018 = vmatprep.subr.mxu0 0.0
          %7019 = vmatpush1.msra.mxu0 0.0
          %7020 = vmatprep.subr.mxu0 0.0
          %7021 = vmatpush1.msra.mxu0 0.0
          %7022 = vmatprep.subr.mxu0 0.0
          %7023 = vmatpush1.msra.mxu0 0.0
          %7024 = vmatprep.subr.mxu0 0.0
          %7025 = vmatpush1.msra.mxu0 0.0
          %7026 = vmatprep.subr.mxu0 0.0
          %7027 = vmatpush1.msra.mxu0 0.0
          %7028 = vmatprep.subr.mxu0 0.0
          %7029 = vmatpush1.msra.mxu0 0.0
          %7030 = vmatprep.subr.mxu0 0.0
          %7031 = vmatpush1.msra.mxu0 0.0
          %7032 = vmatprep.subr.mxu0 0.0
          %7033 = vmatpush1.msra.mxu0 0.0
          %7034 = vmatprep.subr.mxu0 0.0
          %7035 = vmatpush1.msra.mxu0 0.0
          %7036 = vmatprep.subr.mxu0 0.0
          %7037 = vmatpush1.msra.mxu0 0.0
          %7038 = vmatprep.subr.mxu0 0.0
          %7039 = vmatpush1.msra.mxu0 0.0
          %7040 = vmatprep.subr.mxu0 0.0
          %7041 = vmatpush1.msra.mxu0 0.0
          %7042 = vmatprep.subr.mxu0 0.0
          %7043 = vmatpush1.msra.mxu0 0.0
          %7044 = vmatprep.subr.mxu0 0.0
          %7045 = vmatpush1.msra.mxu0 0.0
          %7046 = vmatprep.mubr.f32.mxu0 0.0
          %7047 = vmatmul.mubr.f32.gmra.mrb[0].mxu0 %v6341
          %v7048 = vpop.f32.mrb[0].mxu0
          %v7049 = vadd.f32 0.0, %v7048
          %v7050 = vpop.f32.mrb[0].mxu0
          %v7051 = vadd.f32 0.0, %v7050
          %7052 = vdwg.mxu0
          %7053 = vmatprep.subr.mxu0 %v1678
          %7054 = vmatpush1.msra.mxu0 %v1677
          %7055 = vmatprep.subr.mxu0 %v1710
          %7056 = vmatpush1.msra.mxu0 %v1709
          %7057 = vmatprep.subr.mxu0 %v1742
          %7058 = vmatpush1.msra.mxu0 %v1741
          %7059 = vmatprep.subr.mxu0 %v1774
          %7060 = vmatpush1.msra.mxu0 %v1773
          %7061 = vmatprep.subr.mxu0 0.0
          %7062 = vmatpush1.msra.mxu0 0.0
          %7063 = vmatprep.subr.mxu0 0.0
          %7064 = vmatpush1.msra.mxu0 0.0
          %7065 = vmatprep.subr.mxu0 0.0
          %7066 = vmatpush1.msra.mxu0 0.0
          %7067 = vmatprep.subr.mxu0 0.0
          %7068 = vmatpush1.msra.mxu0 0.0
          %7069 = vmatprep.subr.mxu0 0.0
          %7070 = vmatpush1.msra.mxu0 0.0
          %7071 = vmatprep.subr.mxu0 0.0
          %7072 = vmatpush1.msra.mxu0 0.0
          %7073 = vmatprep.subr.mxu0 0.0
          %7074 = vmatpush1.msra.mxu0 0.0
          %7075 = vmatprep.subr.mxu0 0.0
          %7076 = vmatpush1.msra.mxu0 0.0
          %7077 = vmatprep.subr.mxu0 0.0
          %7078 = vmatpush1.msra.mxu0 0.0
          %7079 = vmatprep.subr.mxu0 0.0
          %7080 = vmatpush1.msra.mxu0 0.0
          %7081 = vmatprep.subr.mxu0 0.0
          %7082 = vmatpush1.msra.mxu0 0.0
          %7083 = vmatprep.subr.mxu0 0.0
          %7084 = vmatpush1.msra.mxu0 0.0
          %7085 = vmatprep.subr.mxu0 0.0
          %7086 = vmatpush1.msra.mxu0 0.0
          %7087 = vmatprep.subr.mxu0 0.0
          %7088 = vmatpush1.msra.mxu0 0.0
          %7089 = vmatprep.subr.mxu0 0.0
          %7090 = vmatpush1.msra.mxu0 0.0
          %7091 = vmatprep.subr.mxu0 0.0
          %7092 = vmatpush1.msra.mxu0 0.0
          %7093 = vmatprep.subr.mxu0 0.0
          %7094 = vmatpush1.msra.mxu0 0.0
          %7095 = vmatprep.subr.mxu0 0.0
          %7096 = vmatpush1.msra.mxu0 0.0
          %7097 = vmatprep.subr.mxu0 0.0
          %7098 = vmatpush1.msra.mxu0 0.0
          %7099 = vmatprep.subr.mxu0 0.0
          %7100 = vmatpush1.msra.mxu0 0.0
          %7101 = vmatprep.subr.mxu0 0.0
          %7102 = vmatpush1.msra.mxu0 0.0
          %7103 = vmatprep.subr.mxu0 0.0
          %7104 = vmatpush1.msra.mxu0 0.0
          %7105 = vmatprep.subr.mxu0 0.0
          %7106 = vmatpush1.msra.mxu0 0.0
          %7107 = vmatprep.subr.mxu0 0.0
          %7108 = vmatpush1.msra.mxu0 0.0
          %7109 = vmatprep.subr.mxu0 0.0
          %7110 = vmatpush1.msra.mxu0 0.0
          %7111 = vmatprep.subr.mxu0 0.0
          %7112 = vmatpush1.msra.mxu0 0.0
          %7113 = vmatprep.subr.mxu0 0.0
          %7114 = vmatpush1.msra.mxu0 0.0
          %7115 = vmatprep.subr.mxu0 0.0
          %7116 = vmatpush1.msra.mxu0 0.0
          %7117 = vmatprep.mubr.f32.mxu0 0.0
          %7118 = vmatmul.mubr.f32.gmra.mrb[0].mxu0 %v6341
          %v7119 = vpop.f32.mrb[0].mxu0
          %v7120 = vadd.f32 0.0, %v7119
          %v7121 = vpop.f32.mrb[0].mxu0
          %v7122 = vadd.f32 0.0, %v7121
          %7123 = vdwg.mxu0
          %7124 = vmatprep.subr.mxu0 %v1680
          %7125 = vmatpush1.msra.mxu0 %v1679
          %7126 = vmatprep.subr.mxu0 %v1712
          %7127 = vmatpush1.msra.mxu0 %v1711
          %7128 = vmatprep.subr.mxu0 %v1744
          %7129 = vmatpush1.msra.mxu0 %v1743
          %7130 = vmatprep.subr.mxu0 %v1776
          %7131 = vmatpush1.msra.mxu0 %v1775
          %7132 = vmatprep.subr.mxu0 0.0
          %7133 = vmatpush1.msra.mxu0 0.0
          %7134 = vmatprep.subr.mxu0 0.0
          %7135 = vmatpush1.msra.mxu0 0.0
          %7136 = vmatprep.subr.mxu0 0.0
          %7137 = vmatpush1.msra.mxu0 0.0
          %7138 = vmatprep.subr.mxu0 0.0
          %7139 = vmatpush1.msra.mxu0 0.0
          %7140 = vmatprep.subr.mxu0 0.0
          %7141 = vmatpush1.msra.mxu0 0.0
          %7142 = vmatprep.subr.mxu0 0.0
          %7143 = vmatpush1.msra.mxu0 0.0
          %7144 = vmatprep.subr.mxu0 0.0
          %7145 = vmatpush1.msra.mxu0 0.0
          %7146 = vmatprep.subr.mxu0 0.0
          %7147 = vmatpush1.msra.mxu0 0.0
          %7148 = vmatprep.subr.mxu0 0.0
          %7149 = vmatpush1.msra.mxu0 0.0
          %7150 = vmatprep.subr.mxu0 0.0
          %7151 = vmatpush1.msra.mxu0 0.0
          %7152 = vmatprep.subr.mxu0 0.0
          %7153 = vmatpush1.msra.mxu0 0.0
          %7154 = vmatprep.subr.mxu0 0.0
          %7155 = vmatpush1.msra.mxu0 0.0
          %7156 = vmatprep.subr.mxu0 0.0
          %7157 = vmatpush1.msra.mxu0 0.0
          %7158 = vmatprep.subr.mxu0 0.0
          %7159 = vmatpush1.msra.mxu0 0.0
          %7160 = vmatprep.subr.mxu0 0.0
          %7161 = vmatpush1.msra.mxu0 0.0
          %7162 = vmatprep.subr.mxu0 0.0
          %7163 = vmatpush1.msra.mxu0 0.0
          %7164 = vmatprep.subr.mxu0 0.0
          %7165 = vmatpush1.msra.mxu0 0.0
          %7166 = vmatprep.subr.mxu0 0.0
          %7167 = vmatpush1.msra.mxu0 0.0
          %7168 = vmatprep.subr.mxu0 0.0
          %7169 = vmatpush1.msra.mxu0 0.0
          %7170 = vmatprep.subr.mxu0 0.0
          %7171 = vmatpush1.msra.mxu0 0.0
          %7172 = vmatprep.subr.mxu0 0.0
          %7173 = vmatpush1.msra.mxu0 0.0
          %7174 = vmatprep.subr.mxu0 0.0
          %7175 = vmatpush1.msra.mxu0 0.0
          %7176 = vmatprep.subr.mxu0 0.0
          %7177 = vmatpush1.msra.mxu0 0.0
          %7178 = vmatprep.subr.mxu0 0.0
          %7179 = vmatpush1.msra.mxu0 0.0
          %7180 = vmatprep.subr.mxu0 0.0
          %7181 = vmatpush1.msra.mxu0 0.0
          %7182 = vmatprep.subr.mxu0 0.0
          %7183 = vmatpush1.msra.mxu0 0.0
          %7184 = vmatprep.subr.mxu0 0.0
          %7185 = vmatpush1.msra.mxu0 0.0
          %7186 = vmatprep.subr.mxu0 0.0
          %7187 = vmatpush1.msra.mxu0 0.0
          %7188 = vmatprep.mubr.f32.mxu0 0.0
          %7189 = vmatmul.mubr.f32.gmra.mrb[0].mxu0 %v6341
          %v7190 = vpop.f32.mrb[0].mxu0
          %v7191 = vadd.f32 0.0, %v7190
          %v7192 = vpop.f32.mrb[0].mxu0
          %v7193 = vadd.f32 0.0, %v7192
          %7194 = vdwg.mxu0
          %7195 = vmatprep.subr.mxu0 %v1682
          %7196 = vmatpush1.msra.mxu0 %v1681
          %7197 = vmatprep.subr.mxu0 %v1714
          %7198 = vmatpush1.msra.mxu0 %v1713
          %7199 = vmatprep.subr.mxu0 %v1746
          %7200 = vmatpush1.msra.mxu0 %v1745
          %7201 = vmatprep.subr.mxu0 %v1778
          %7202 = vmatpush1.msra.mxu0 %v1777
          %7203 = vmatprep.subr.mxu0 0.0
          %7204 = vmatpush1.msra.mxu0 0.0
          %7205 = vmatprep.subr.mxu0 0.0
          %7206 = vmatpush1.msra.mxu0 0.0
          %7207 = vmatprep.subr.mxu0 0.0
          %7208 = vmatpush1.msra.mxu0 0.0
          %7209 = vmatprep.subr.mxu0 0.0
          %7210 = vmatpush1.msra.mxu0 0.0
          %7211 = vmatprep.subr.mxu0 0.0
          %7212 = vmatpush1.msra.mxu0 0.0
          %7213 = vmatprep.subr.mxu0 0.0
          %7214 = vmatpush1.msra.mxu0 0.0
          %7215 = vmatprep.subr.mxu0 0.0
          %7216 = vmatpush1.msra.mxu0 0.0
          %7217 = vmatprep.subr.mxu0 0.0
          %7218 = vmatpush1.msra.mxu0 0.0
          %7219 = vmatprep.subr.mxu0 0.0
          %7220 = vmatpush1.msra.mxu0 0.0
          %7221 = vmatprep.subr.mxu0 0.0
          %7222 = vmatpush1.msra.mxu0 0.0
          %7223 = vmatprep.subr.mxu0 0.0
          %7224 = vmatpush1.msra.mxu0 0.0
          %7225 = vmatprep.subr.mxu0 0.0
          %7226 = vmatpush1.msra.mxu0 0.0
          %7227 = vmatprep.subr.mxu0 0.0
          %7228 = vmatpush1.msra.mxu0 0.0
          %7229 = vmatprep.subr.mxu0 0.0
          %7230 = vmatpush1.msra.mxu0 0.0
          %7231 = vmatprep.subr.mxu0 0.0
          %7232 = vmatpush1.msra.mxu0 0.0
          %7233 = vmatprep.subr.mxu0 0.0
          %7234 = vmatpush1.msra.mxu0 0.0
          %7235 = vmatprep.subr.mxu0 0.0
          %7236 = vmatpush1.msra.mxu0 0.0
          %7237 = vmatprep.subr.mxu0 0.0
          %7238 = vmatpush1.msra.mxu0 0.0
          %7239 = vmatprep.subr.mxu0 0.0
          %7240 = vmatpush1.msra.mxu0 0.0
          %7241 = vmatprep.subr.mxu0 0.0
          %7242 = vmatpush1.msra.mxu0 0.0
          %7243 = vmatprep.subr.mxu0 0.0
          %7244 = vmatpush1.msra.mxu0 0.0
          %7245 = vmatprep.subr.mxu0 0.0
          %7246 = vmatpush1.msra.mxu0 0.0
          %7247 = vmatprep.subr.mxu0 0.0
          %7248 = vmatpush1.msra.mxu0 0.0
          %7249 = vmatprep.subr.mxu0 0.0
          %7250 = vmatpush1.msra.mxu0 0.0
          %7251 = vmatprep.subr.mxu0 0.0
          %7252 = vmatpush1.msra.mxu0 0.0
          %7253 = vmatprep.subr.mxu0 0.0
          %7254 = vmatpush1.msra.mxu0 0.0
          %7255 = vmatprep.subr.mxu0 0.0
          %7256 = vmatpush1.msra.mxu0 0.0
          %7257 = vmatprep.subr.mxu0 0.0
          %7258 = vmatpush1.msra.mxu0 0.0
          %7259 = vmatprep.mubr.f32.mxu0 0.0
          %7260 = vmatmul.mubr.f32.gmra.mrb[0].mxu0 %v6341
          %v7261 = vpop.f32.mrb[0].mxu0
          %v7262 = vadd.f32 0.0, %v7261
          %v7263 = vpop.f32.mrb[0].mxu0
          %v7264 = vadd.f32 0.0, %v7263
          %7265 = vdwg.mxu0
          %7266 = vmatprep.subr.mxu0 %v1684
          %7267 = vmatpush1.msra.mxu0 %v1683
          %7268 = vmatprep.subr.mxu0 %v1716
          %7269 = vmatpush1.msra.mxu0 %v1715
          %7270 = vmatprep.subr.mxu0 %v1748
          %7271 = vmatpush1.msra.mxu0 %v1747
          %7272 = vmatprep.subr.mxu0 %v1780
          %7273 = vmatpush1.msra.mxu0 %v1779
          %7274 = vmatprep.subr.mxu0 0.0
          %7275 = vmatpush1.msra.mxu0 0.0
          %7276 = vmatprep.subr.mxu0 0.0
          %7277 = vmatpush1.msra.mxu0 0.0
          %7278 = vmatprep.subr.mxu0 0.0
          %7279 = vmatpush1.msra.mxu0 0.0
          %7280 = vmatprep.subr.mxu0 0.0
          %7281 = vmatpush1.msra.mxu0 0.0
          %7282 = vmatprep.subr.mxu0 0.0
          %7283 = vmatpush1.msra.mxu0 0.0
          %7284 = vmatprep.subr.mxu0 0.0
          %7285 = vmatpush1.msra.mxu0 0.0
          %7286 = vmatprep.subr.mxu0 0.0
          %7287 = vmatpush1.msra.mxu0 0.0
          %7288 = vmatprep.subr.mxu0 0.0
          %7289 = vmatpush1.msra.mxu0 0.0
          %7290 = vmatprep.subr.mxu0 0.0
          %7291 = vmatpush1.msra.mxu0 0.0
          %7292 = vmatprep.subr.mxu0 0.0
          %7293 = vmatpush1.msra.mxu0 0.0
          %7294 = vmatprep.subr.mxu0 0.0
          %7295 = vmatpush1.msra.mxu0 0.0
          %7296 = vmatprep.subr.mxu0 0.0
          %7297 = vmatpush1.msra.mxu0 0.0
          %7298 = vmatprep.subr.mxu0 0.0
          %7299 = vmatpush1.msra.mxu0 0.0
          %7300 = vmatprep.subr.mxu0 0.0
          %7301 = vmatpush1.msra.mxu0 0.0
          %7302 = vmatprep.subr.mxu0 0.0
          %7303 = vmatpush1.msra.mxu0 0.0
          %7304 = vmatprep.subr.mxu0 0.0
          %7305 = vmatpush1.msra.mxu0 0.0
          %7306 = vmatprep.subr.mxu0 0.0
          %7307 = vmatpush1.msra.mxu0 0.0
          %7308 = vmatprep.subr.mxu0 0.0
          %7309 = vmatpush1.msra.mxu0 0.0
          %7310 = vmatprep.subr.mxu0 0.0
          %7311 = vmatpush1.msra.mxu0 0.0
          %7312 = vmatprep.subr.mxu0 0.0
          %7313 = vmatpush1.msra.mxu0 0.0
          %7314 = vmatprep.subr.mxu0 0.0
          %7315 = vmatpush1.msra.mxu0 0.0
          %7316 = vmatprep.subr.mxu0 0.0
          %7317 = vmatpush1.msra.mxu0 0.0
          %7318 = vmatprep.subr.mxu0 0.0
          %7319 = vmatpush1.msra.mxu0 0.0
          %7320 = vmatprep.subr.mxu0 0.0
          %7321 = vmatpush1.msra.mxu0 0.0
          %7322 = vmatprep.subr.mxu0 0.0
          %7323 = vmatpush1.msra.mxu0 0.0
          %7324 = vmatprep.subr.mxu0 0.0
          %7325 = vmatpush1.msra.mxu0 0.0
          %7326 = vmatprep.subr.mxu0 0.0
          %7327 = vmatpush1.msra.mxu0 0.0
          %7328 = vmatprep.subr.mxu0 0.0
          %7329 = vmatpush1.msra.mxu0 0.0
          %7330 = vmatprep.mubr.f32.mxu0 0.0
          %7331 = vmatmul.mubr.f32.gmra.mrb[0].mxu0 %v6341
          %v7332 = vpop.f32.mrb[0].mxu0
          %v7333 = vadd.f32 0.0, %v7332
          %v7334 = vpop.f32.mrb[0].mxu0
          %v7335 = vadd.f32 0.0, %v7334
          %7336 = vdwg.mxu0
          %7337 = vmatprep.subr.mxu0 %v1686
          %7338 = vmatpush1.msra.mxu0 %v1685
          %7339 = vmatprep.subr.mxu0 %v1718
          %7340 = vmatpush1.msra.mxu0 %v1717
          %7341 = vmatprep.subr.mxu0 %v1750
          %7342 = vmatpush1.msra.mxu0 %v1749
          %7343 = vmatprep.subr.mxu0 %v1782
          %7344 = vmatpush1.msra.mxu0 %v1781
          %7345 = vmatprep.subr.mxu0 0.0
          %7346 = vmatpush1.msra.mxu0 0.0
          %7347 = vmatprep.subr.mxu0 0.0
          %7348 = vmatpush1.msra.mxu0 0.0
          %7349 = vmatprep.subr.mxu0 0.0
          %7350 = vmatpush1.msra.mxu0 0.0
          %7351 = vmatprep.subr.mxu0 0.0
          %7352 = vmatpush1.msra.mxu0 0.0
          %7353 = vmatprep.subr.mxu0 0.0
          %7354 = vmatpush1.msra.mxu0 0.0
          %7355 = vmatprep.subr.mxu0 0.0
          %7356 = vmatpush1.msra.mxu0 0.0
          %7357 = vmatprep.subr.mxu0 0.0
          %7358 = vmatpush1.msra.mxu0 0.0
          %7359 = vmatprep.subr.mxu0 0.0
          %7360 = vmatpush1.msra.mxu0 0.0
          %7361 = vmatprep.subr.mxu0 0.0
          %7362 = vmatpush1.msra.mxu0 0.0
          %7363 = vmatprep.subr.mxu0 0.0
          %7364 = vmatpush1.msra.mxu0 0.0
          %7365 = vmatprep.subr.mxu0 0.0
          %7366 = vmatpush1.msra.mxu0 0.0
          %7367 = vmatprep.subr.mxu0 0.0
          %7368 = vmatpush1.msra.mxu0 0.0
          %7369 = vmatprep.subr.mxu0 0.0
          %7370 = vmatpush1.msra.mxu0 0.0
          %7371 = vmatprep.subr.mxu0 0.0
          %7372 = vmatpush1.msra.mxu0 0.0
          %7373 = vmatprep.subr.mxu0 0.0
          %7374 = vmatpush1.msra.mxu0 0.0
          %7375 = vmatprep.subr.mxu0 0.0
          %7376 = vmatpush1.msra.mxu0 0.0
          %7377 = vmatprep.subr.mxu0 0.0
          %7378 = vmatpush1.msra.mxu0 0.0
          %7379 = vmatprep.subr.mxu0 0.0
          %7380 = vmatpush1.msra.mxu0 0.0
          %7381 = vmatprep.subr.mxu0 0.0
          %7382 = vmatpush1.msra.mxu0 0.0
          %7383 = vmatprep.subr.mxu0 0.0
          %7384 = vmatpush1.msra.mxu0 0.0
          %7385 = vmatprep.subr.mxu0 0.0
          %7386 = vmatpush1.msra.mxu0 0.0
          %7387 = vmatprep.subr.mxu0 0.0
          %7388 = vmatpush1.msra.mxu0 0.0
          %7389 = vmatprep.subr.mxu0 0.0
          %7390 = vmatpush1.msra.mxu0 0.0
          %7391 = vmatprep.subr.mxu0 0.0
          %7392 = vmatpush1.msra.mxu0 0.0
          %7393 = vmatprep.subr.mxu0 0.0
          %7394 = vmatpush1.msra.mxu0 0.0
          %7395 = vmatprep.subr.mxu0 0.0
          %7396 = vmatpush1.msra.mxu0 0.0
          %7397 = vmatprep.subr.mxu0 0.0
          %7398 = vmatpush1.msra.mxu0 0.0
          %7399 = vmatprep.subr.mxu0 0.0
          %7400 = vmatpush1.msra.mxu0 0.0
          %7401 = vmatprep.mubr.f32.mxu0 0.0
          %7402 = vmatmul.mubr.f32.gmra.mrb[0].mxu0 %v6341
          %v7403 = vpop.f32.mrb[0].mxu0
          %v7404 = vadd.f32 0.0, %v7403
          %v7405 = vpop.f32.mrb[0].mxu0
          %v7406 = vadd.f32 0.0, %v7405
          %7407 = vdwg.mxu0
          %7408 = vmatprep.subr.mxu0 %v1688
          %7409 = vmatpush1.msra.mxu0 %v1687
          %7410 = vmatprep.subr.mxu0 %v1720
          %7411 = vmatpush1.msra.mxu0 %v1719
          %7412 = vmatprep.subr.mxu0 %v1752
          %7413 = vmatpush1.msra.mxu0 %v1751
          %7414 = vmatprep.subr.mxu0 %v1784
          %7415 = vmatpush1.msra.mxu0 %v1783
          %7416 = vmatprep.subr.mxu0 0.0
          %7417 = vmatpush1.msra.mxu0 0.0
          %7418 = vmatprep.subr.mxu0 0.0
          %7419 = vmatpush1.msra.mxu0 0.0
          %7420 = vmatprep.subr.mxu0 0.0
          %7421 = vmatpush1.msra.mxu0 0.0
          %7422 = vmatprep.subr.mxu0 0.0
          %7423 = vmatpush1.msra.mxu0 0.0
          %7424 = vmatprep.subr.mxu0 0.0
          %7425 = vmatpush1.msra.mxu0 0.0
          %7426 = vmatprep.subr.mxu0 0.0
          %7427 = vmatpush1.msra.mxu0 0.0
          %7428 = vmatprep.subr.mxu0 0.0
          %7429 = vmatpush1.msra.mxu0 0.0
          %7430 = vmatprep.subr.mxu0 0.0
          %7431 = vmatpush1.msra.mxu0 0.0
          %7432 = vmatprep.subr.mxu0 0.0
          %7433 = vmatpush1.msra.mxu0 0.0
          %7434 = vmatprep.subr.mxu0 0.0
          %7435 = vmatpush1.msra.mxu0 0.0
          %7436 = vmatprep.subr.mxu0 0.0
          %7437 = vmatpush1.msra.mxu0 0.0
          %7438 = vmatprep.subr.mxu0 0.0
          %7439 = vmatpush1.msra.mxu0 0.0
          %7440 = vmatprep.subr.mxu0 0.0
          %7441 = vmatpush1.msra.mxu0 0.0
          %7442 = vmatprep.subr.mxu0 0.0
          %7443 = vmatpush1.msra.mxu0 0.0
          %7444 = vmatprep.subr.mxu0 0.0
          %7445 = vmatpush1.msra.mxu0 0.0
          %7446 = vmatprep.subr.mxu0 0.0
          %7447 = vmatpush1.msra.mxu0 0.0
          %7448 = vmatprep.subr.mxu0 0.0
          %7449 = vmatpush1.msra.mxu0 0.0
          %7450 = vmatprep.subr.mxu0 0.0
          %7451 = vmatpush1.msra.mxu0 0.0
          %7452 = vmatprep.subr.mxu0 0.0
          %7453 = vmatpush1.msra.mxu0 0.0
          %7454 = vmatprep.subr.mxu0 0.0
          %7455 = vmatpush1.msra.mxu0 0.0
          %7456 = vmatprep.subr.mxu0 0.0
          %7457 = vmatpush1.msra.mxu0 0.0
          %7458 = vmatprep.subr.mxu0 0.0
          %7459 = vmatpush1.msra.mxu0 0.0
          %7460 = vmatprep.subr.mxu0 0.0
          %7461 = vmatpush1.msra.mxu0 0.0
          %7462 = vmatprep.subr.mxu0 0.0
          %7463 = vmatpush1.msra.mxu0 0.0
          %7464 = vmatprep.subr.mxu0 0.0
          %7465 = vmatpush1.msra.mxu0 0.0
          %7466 = vmatprep.subr.mxu0 0.0
          %7467 = vmatpush1.msra.mxu0 0.0
          %7468 = vmatprep.subr.mxu0 0.0
          %7469 = vmatpush1.msra.mxu0 0.0
          %7470 = vmatprep.subr.mxu0 0.0
          %7471 = vmatpush1.msra.mxu0 0.0
          %7472 = vmatprep.mubr.f32.mxu0 0.0
          %7473 = vmatmul.mubr.f32.gmra.mrb[0].mxu0 %v6341
          %v7474 = vpop.f32.mrb[0].mxu0
          %v7475 = vadd.f32 0.0, %v7474
          %v7476 = vpop.f32.mrb[0].mxu0
          %v7477 = vadd.f32 0.0, %v7476
          %7478 = vdwg.mxu0
          %v7479 = vmul.f32 %v6410, %v1060
          %v7480 = vmul.f32 %v6412, %v1060
          %v7481 = vmul.f32 %v6481, %v1060
          %v7482 = vmul.f32 %v6483, %v1060
          %v7483 = vmul.f32 %v6552, %v1060
          %v7484 = vmul.f32 %v6554, %v1060
          %v7485 = vmul.f32 %v6623, %v1060
          %v7486 = vmul.f32 %v6625, %v1060
          %v7487 = vmul.f32 %v6694, %v1060
          %v7488 = vmul.f32 %v6696, %v1060
          %v7489 = vmul.f32 %v6765, %v1060
          %v7490 = vmul.f32 %v6767, %v1060
          %v7491 = vmul.f32 %v6836, %v1060
          %v7492 = vmul.f32 %v6838, %v1060
          %v7493 = vmul.f32 %v6907, %v1060
          %v7494 = vmul.f32 %v6909, %v1060
          %v7495 = vmul.f32 %v6978, %v1060
          %v7496 = vmul.f32 %v6980, %v1060
          %v7497 = vmul.f32 %v7049, %v1060
          %v7498 = vmul.f32 %v7051, %v1060
          %v7499 = vmul.f32 %v7120, %v1060
          %v7500 = vmul.f32 %v7122, %v1060
          %v7501 = vmul.f32 %v7191, %v1060
          %v7502 = vmul.f32 %v7193, %v1060
          %v7503 = vmul.f32 %v7262, %v1060
          %v7504 = vmul.f32 %v7264, %v1060
          %v7505 = vmul.f32 %v7333, %v1060
          %v7506 = vmul.f32 %v7335, %v1060
          %v7507 = vmul.f32 %v7404, %v1060
          %v7508 = vmul.f32 %v7406, %v1060
          %v7509 = vmul.f32 %v7475, %v1060
          %v7510 = vmul.f32 %v7477, %v1060
          %v7543 = vcombine.low %v7479, %v7480
          %v7544 = vcombine.low %v7481, %v7482
          %v7546 = vunpack.c.l.s4 1983009808
          %v7547 = vunpack.c.0.s8 %v7546
          %v7548 = vlaneseq
          %v7549 = vshrl.u32 %v7548, 7
          %v7550 = vsub.s32 %v7547, %v7549
          %v7551 = vrot.slane %v7543, %v7550
          %v7553 = vunpack.c.l.s4 1983009808
          %v7554 = vunpack.c.0.s8 %v7553
          %v7555 = vlaneseq
          %v7556 = vshrl.u32 %v7555, 7
          %v7557 = vsub.s32 %v7554, %v7556
          %v7558 = vrot.slane %v7544, %v7557
          %v7559 = vcombine.low %v7551, %v7558
          %v7560 = vcombine.low %v7483, %v7484
          %v7561 = vcombine.low %v7485, %v7486
          %v7563 = vunpack.c.l.s4 1983009808
          %v7564 = vunpack.c.0.s8 %v7563
          %v7565 = vlaneseq
          %v7566 = vshrl.u32 %v7565, 7
          %v7567 = vsub.s32 %v7564, %v7566
          %v7568 = vrot.slane %v7560, %v7567
          %v7570 = vunpack.c.l.s4 1983009808
          %v7571 = vunpack.c.0.s8 %v7570
          %v7572 = vlaneseq
          %v7573 = vshrl.u32 %v7572, 7
          %v7574 = vsub.s32 %v7571, %v7573
          %v7575 = vrot.slane %v7561, %v7574
          %v7576 = vcombine.low %v7568, %v7575
          %v7577 = vcombine.low %v7487, %v7488
          %v7578 = vcombine.low %v7489, %v7490
          %v7580 = vunpack.c.l.s4 1983009808
          %v7581 = vunpack.c.0.s8 %v7580
          %v7582 = vlaneseq
          %v7583 = vshrl.u32 %v7582, 7
          %v7584 = vsub.s32 %v7581, %v7583
          %v7585 = vrot.slane %v7577, %v7584
          %v7587 = vunpack.c.l.s4 1983009808
          %v7588 = vunpack.c.0.s8 %v7587
          %v7589 = vlaneseq
          %v7590 = vshrl.u32 %v7589, 7
          %v7591 = vsub.s32 %v7588, %v7590
          %v7592 = vrot.slane %v7578, %v7591
          %v7593 = vcombine.low %v7585, %v7592
          %v7594 = vcombine.low %v7491, %v7492
          %v7595 = vcombine.low %v7493, %v7494
          %v7597 = vunpack.c.l.s4 1983009808
          %v7598 = vunpack.c.0.s8 %v7597
          %v7599 = vlaneseq
          %v7600 = vshrl.u32 %v7599, 7
          %v7601 = vsub.s32 %v7598, %v7600
          %v7602 = vrot.slane %v7594, %v7601
          %v7604 = vunpack.c.l.s4 1983009808
          %v7605 = vunpack.c.0.s8 %v7604
          %v7606 = vlaneseq
          %v7607 = vshrl.u32 %v7606, 7
          %v7608 = vsub.s32 %v7605, %v7607
          %v7609 = vrot.slane %v7595, %v7608
          %v7610 = vcombine.low %v7602, %v7609
          %v7611 = vcombine.low %v7495, %v7496
          %v7612 = vcombine.low %v7497, %v7498
          %v7614 = vunpack.c.l.s4 1983009808
          %v7615 = vunpack.c.0.s8 %v7614
          %v7616 = vlaneseq
          %v7617 = vshrl.u32 %v7616, 7
          %v7618 = vsub.s32 %v7615, %v7617
          %v7619 = vrot.slane %v7611, %v7618
          %v7621 = vunpack.c.l.s4 1983009808
          %v7622 = vunpack.c.0.s8 %v7621
          %v7623 = vlaneseq
          %v7624 = vshrl.u32 %v7623, 7
          %v7625 = vsub.s32 %v7622, %v7624
          %v7626 = vrot.slane %v7612, %v7625
          %v7627 = vcombine.low %v7619, %v7626
          %v7628 = vcombine.low %v7499, %v7500
          %v7629 = vcombine.low %v7501, %v7502
          %v7631 = vunpack.c.l.s4 1983009808
          %v7632 = vunpack.c.0.s8 %v7631
          %v7633 = vlaneseq
          %v7634 = vshrl.u32 %v7633, 7
          %v7635 = vsub.s32 %v7632, %v7634
          %v7636 = vrot.slane %v7628, %v7635
          %v7638 = vunpack.c.l.s4 1983009808
          %v7639 = vunpack.c.0.s8 %v7638
          %v7640 = vlaneseq
          %v7641 = vshrl.u32 %v7640, 7
          %v7642 = vsub.s32 %v7639, %v7641
          %v7643 = vrot.slane %v7629, %v7642
          %v7644 = vcombine.low %v7636, %v7643
          %v7645 = vcombine.low %v7503, %v7504
          %v7646 = vcombine.low %v7505, %v7506
          %v7648 = vunpack.c.l.s4 1983009808
          %v7649 = vunpack.c.0.s8 %v7648
          %v7650 = vlaneseq
          %v7651 = vshrl.u32 %v7650, 7
          %v7652 = vsub.s32 %v7649, %v7651
          %v7653 = vrot.slane %v7645, %v7652
          %v7655 = vunpack.c.l.s4 1983009808
          %v7656 = vunpack.c.0.s8 %v7655
          %v7657 = vlaneseq
          %v7658 = vshrl.u32 %v7657, 7
          %v7659 = vsub.s32 %v7656, %v7658
          %v7660 = vrot.slane %v7646, %v7659
          %v7661 = vcombine.low %v7653, %v7660
          %v7662 = vcombine.low %v7507, %v7508
          %v7663 = vcombine.low %v7509, %v7510
          %v7665 = vunpack.c.l.s4 1983009808
          %v7666 = vunpack.c.0.s8 %v7665
          %v7667 = vlaneseq
          %v7668 = vshrl.u32 %v7667, 7
          %v7669 = vsub.s32 %v7666, %v7668
          %v7670 = vrot.slane %v7662, %v7669
          %v7672 = vunpack.c.l.s4 1983009808
          %v7673 = vunpack.c.0.s8 %v7672
          %v7674 = vlaneseq
          %v7675 = vshrl.u32 %v7674, 7
          %v7676 = vsub.s32 %v7673, %v7675
          %v7677 = vrot.slane %v7663, %v7676
          %v7678 = vcombine.low %v7670, %v7677
          %s7687 = scalar_lea.vmem [#allocation2], 192
          %7688 = vst [vmem:[%s7687] sm:$0xff] %v7559
          %7689 = vst [vmem:[%s7687 + $0x8] sm:$0xff] %v7576
          %7690 = vst [vmem:[%s7687 + $0x10] sm:$0xff] %v7593
          %7691 = vst [vmem:[%s7687 + $0x18] sm:$0xff] %v7610
          %7692 = vst [vmem:[%s7687 + $0x20] sm:$0xff] %v7627
          %7693 = vst [vmem:[%s7687 + $0x28] sm:$0xff] %v7644
          %7694 = vst [vmem:[%s7687 + $0x30] sm:$0xff] %v7661
          %7695 = vst [vmem:[%s7687 + $0x38] sm:$0xff] %v7678
          %7696 = vst [vmem:[#allocation3] sm:$0x3] 0.0
        $region104: #{_lambda_.1} parent=59 // pred_fallthru
          _
        %v7697 = vld [vmem:[#allocation3] sm:$0x3]
        %s7698 = smul.u32 %s27, 32
        %s7699 = smul.addr %s7698, 2
        %s7700 = scalar_lea.vmem [#allocation2], %s7699
        %v7701 = vld [vmem:[%s7700] sm:$0xff]
        %v7702 = vld [vmem:[%s7700 + $0x8] sm:$0xff]
        %v7703 = vld [vmem:[%s7700 + $0x10] sm:$0xff]
        %v7704 = vld [vmem:[%s7700 + $0x18] sm:$0xff]
        %v7705 = vld [vmem:[%s7700 + $0x20] sm:$0xff]
        %v7706 = vld [vmem:[%s7700 + $0x28] sm:$0xff]
        %v7707 = vld [vmem:[%s7700 + $0x30] sm:$0xff]
        %v7708 = vld [vmem:[%s7700 + $0x38] sm:$0xff]
        %v7709 = vld [vmem:[%s432] sm:$0xff]
        %v7710 = vld [vmem:[%s432 + $0x8] sm:$0xff]
        %v7711 = vld [vmem:[%s432 + $0x10] sm:$0xff]
        %v7712 = vld [vmem:[%s432 + $0x18] sm:$0xff]
        %v7713 = vld [vmem:[%s432 + $0x20] sm:$0xff]
        %v7714 = vld [vmem:[%s432 + $0x28] sm:$0xff]
        %v7715 = vld [vmem:[%s432 + $0x30] sm:$0xff]
        %v7716 = vld [vmem:[%s432 + $0x38] sm:$0xff]
        %v7717 = vld [vmem:[%s432 + $0x40] sm:$0xff]
        %v7718 = vld [vmem:[%s432 + $0x48] sm:$0xff]
        %v7719 = vld [vmem:[%s432 + $0x50] sm:$0xff]
        %v7720 = vld [vmem:[%s432 + $0x58] sm:$0xff]
        %v7721 = vld [vmem:[%s432 + $0x60] sm:$0xff]
        %v7722 = vld [vmem:[%s432 + $0x68] sm:$0xff]
        %v7723 = vld [vmem:[%s432 + $0x70] sm:$0xff]
        %v7724 = vld [vmem:[%s432 + $0x78] sm:$0xff]
        %v7725 = vld [vmem:[%s432 + $0x80] sm:$0xff]
        %v7726 = vld [vmem:[%s432 + $0x88] sm:$0xff]
        %v7727 = vld [vmem:[%s432 + $0x90] sm:$0xff]
        %v7728 = vld [vmem:[%s432 + $0x98] sm:$0xff]
        %v7729 = vld [vmem:[%s432 + $0xa0] sm:$0xff]
        %v7730 = vld [vmem:[%s432 + $0xa8] sm:$0xff]
        %v7731 = vld [vmem:[%s432 + $0xb0] sm:$0xff]
        %v7732 = vld [vmem:[%s432 + $0xb8] sm:$0xff]
        %v7733 = vld [vmem:[%s432 + $0xc0] sm:$0xff]
        %v7734 = vld [vmem:[%s432 + $0xc8] sm:$0xff]
        %v7735 = vld [vmem:[%s432 + $0xd0] sm:$0xff]
        %v7736 = vld [vmem:[%s432 + $0xd8] sm:$0xff]
        %v7737 = vld [vmem:[%s432 + $0xe0] sm:$0xff]
        %v7738 = vld [vmem:[%s432 + $0xe8] sm:$0xff]
        %v7739 = vld [vmem:[%s432 + $0xf0] sm:$0xff]
        %v7740 = vld [vmem:[%s432 + $0xf8] sm:$0xff]
        %v7741 = vld [vmem:[%s432 + $0x100] sm:$0xff]
        %v7742 = vld [vmem:[%s432 + $0x108] sm:$0xff]
        %v7743 = vld [vmem:[%s432 + $0x110] sm:$0xff]
        %v7744 = vld [vmem:[%s432 + $0x118] sm:$0xff]
        %v7745 = vld [vmem:[%s432 + $0x120] sm:$0xff]
        %v7746 = vld [vmem:[%s432 + $0x128] sm:$0xff]
        %v7747 = vld [vmem:[%s432 + $0x130] sm:$0xff]
        %v7748 = vld [vmem:[%s432 + $0x138] sm:$0xff]
        %v7749 = vld [vmem:[%s432 + $0x140] sm:$0xff]
        %v7750 = vld [vmem:[%s432 + $0x148] sm:$0xff]
        %v7751 = vld [vmem:[%s432 + $0x150] sm:$0xff]
        %v7752 = vld [vmem:[%s432 + $0x158] sm:$0xff]
        %v7753 = vld [vmem:[%s432 + $0x160] sm:$0xff]
        %v7754 = vld [vmem:[%s432 + $0x168] sm:$0xff]
        %v7755 = vld [vmem:[%s432 + $0x170] sm:$0xff]
        %v7756 = vld [vmem:[%s432 + $0x178] sm:$0xff]
        %v7757 = vld [vmem:[%s432 + $0x180] sm:$0xff]
        %v7758 = vld [vmem:[%s432 + $0x188] sm:$0xff]
        %v7759 = vld [vmem:[%s432 + $0x190] sm:$0xff]
        %v7760 = vld [vmem:[%s432 + $0x198] sm:$0xff]
        %v7761 = vld [vmem:[%s432 + $0x1a0] sm:$0xff]
        %v7762 = vld [vmem:[%s432 + $0x1a8] sm:$0xff]
        %v7763 = vld [vmem:[%s432 + $0x1b0] sm:$0xff]
        %v7764 = vld [vmem:[%s432 + $0x1b8] sm:$0xff]
        %v7765 = vld [vmem:[%s432 + $0x1c0] sm:$0xff]
        %v7766 = vld [vmem:[%s432 + $0x1c8] sm:$0xff]
        %v7767 = vld [vmem:[%s432 + $0x1d0] sm:$0xff]
        %v7768 = vld [vmem:[%s432 + $0x1d8] sm:$0xff]
        %v7769 = vld [vmem:[%s432 + $0x1e0] sm:$0xff]
        %v7770 = vld [vmem:[%s432 + $0x1e8] sm:$0xff]
        %v7771 = vld [vmem:[%s432 + $0x1f0] sm:$0xff]
        %v7772 = vld [vmem:[%s432 + $0x1f8] sm:$0xff]
        %v7773 = vld [vmem:[%s432 + $0x200] sm:$0xff]
        %v7774 = vld [vmem:[%s432 + $0x208] sm:$0xff]
        %v7775 = vld [vmem:[%s432 + $0x210] sm:$0xff]
        %v7776 = vld [vmem:[%s432 + $0x218] sm:$0xff]
        %v7777 = vld [vmem:[%s432 + $0x220] sm:$0xff]
        %v7778 = vld [vmem:[%s432 + $0x228] sm:$0xff]
        %v7779 = vld [vmem:[%s432 + $0x230] sm:$0xff]
        %v7780 = vld [vmem:[%s432 + $0x238] sm:$0xff]
        %v7781 = vld [vmem:[%s432 + $0x240] sm:$0xff]
        %v7782 = vld [vmem:[%s432 + $0x248] sm:$0xff]
        %v7783 = vld [vmem:[%s432 + $0x250] sm:$0xff]
        %v7784 = vld [vmem:[%s432 + $0x258] sm:$0xff]
        %v7785 = vld [vmem:[%s432 + $0x260] sm:$0xff]
        %v7786 = vld [vmem:[%s432 + $0x268] sm:$0xff]
        %v7787 = vld [vmem:[%s432 + $0x270] sm:$0xff]
        %v7788 = vld [vmem:[%s432 + $0x278] sm:$0xff]
        %v7789 = vld [vmem:[%s432 + $0x280] sm:$0xff]
        %v7790 = vld [vmem:[%s432 + $0x288] sm:$0xff]
        %v7791 = vld [vmem:[%s432 + $0x290] sm:$0xff]
        %v7792 = vld [vmem:[%s432 + $0x298] sm:$0xff]
        %v7793 = vld [vmem:[%s432 + $0x2a0] sm:$0xff]
        %v7794 = vld [vmem:[%s432 + $0x2a8] sm:$0xff]
        %v7795 = vld [vmem:[%s432 + $0x2b0] sm:$0xff]
        %v7796 = vld [vmem:[%s432 + $0x2b8] sm:$0xff]
        %v7797 = vld [vmem:[%s432 + $0x2c0] sm:$0xff]
        %v7798 = vld [vmem:[%s432 + $0x2c8] sm:$0xff]
        %v7799 = vld [vmem:[%s432 + $0x2d0] sm:$0xff]
        %v7800 = vld [vmem:[%s432 + $0x2d8] sm:$0xff]
        %v7801 = vld [vmem:[%s432 + $0x2e0] sm:$0xff]
        %v7802 = vld [vmem:[%s432 + $0x2e8] sm:$0xff]
        %v7803 = vld [vmem:[%s432 + $0x2f0] sm:$0xff]
        %v7804 = vld [vmem:[%s432 + $0x2f8] sm:$0xff]
        %v7805 = vld [vmem:[%s432 + $0x300] sm:$0xff]
        %v7806 = vld [vmem:[%s432 + $0x308] sm:$0xff]
        %v7807 = vld [vmem:[%s432 + $0x310] sm:$0xff]
        %v7808 = vld [vmem:[%s432 + $0x318] sm:$0xff]
        %v7809 = vld [vmem:[%s432 + $0x320] sm:$0xff]
        %v7810 = vld [vmem:[%s432 + $0x328] sm:$0xff]
        %v7811 = vld [vmem:[%s432 + $0x330] sm:$0xff]
        %v7812 = vld [vmem:[%s432 + $0x338] sm:$0xff]
        %v7813 = vld [vmem:[%s432 + $0x340] sm:$0xff]
        %v7814 = vld [vmem:[%s432 + $0x348] sm:$0xff]
        %v7815 = vld [vmem:[%s432 + $0x350] sm:$0xff]
        %v7816 = vld [vmem:[%s432 + $0x358] sm:$0xff]
        %v7817 = vld [vmem:[%s432 + $0x360] sm:$0xff]
        %v7818 = vld [vmem:[%s432 + $0x368] sm:$0xff]
        %v7819 = vld [vmem:[%s432 + $0x370] sm:$0xff]
        %v7820 = vld [vmem:[%s432 + $0x378] sm:$0xff]
        %v7821 = vld [vmem:[%s432 + $0x380] sm:$0xff]
        %v7822 = vld [vmem:[%s432 + $0x388] sm:$0xff]
        %v7823 = vld [vmem:[%s432 + $0x390] sm:$0xff]
        %v7824 = vld [vmem:[%s432 + $0x398] sm:$0xff]
        %v7825 = vld [vmem:[%s432 + $0x3a0] sm:$0xff]
        %v7826 = vld [vmem:[%s432 + $0x3a8] sm:$0xff]
        %v7827 = vld [vmem:[%s432 + $0x3b0] sm:$0xff]
        %v7828 = vld [vmem:[%s432 + $0x3b8] sm:$0xff]
        %v7829 = vld [vmem:[%s432 + $0x3c0] sm:$0xff]
        %v7830 = vld [vmem:[%s432 + $0x3c8] sm:$0xff]
        %v7831 = vld [vmem:[%s432 + $0x3d0] sm:$0xff]
        %v7832 = vld [vmem:[%s432 + $0x3d8] sm:$0xff]
        %v7833 = vld [vmem:[%s432 + $0x3e0] sm:$0xff]
        %v7834 = vld [vmem:[%s432 + $0x3e8] sm:$0xff]
        %v7835 = vld [vmem:[%s432 + $0x3f0] sm:$0xff]
        %v7836 = vld [vmem:[%s432 + $0x3f8] sm:$0xff]
        %v7837 = vld [vmem:[%s432 + $0x400] sm:$0xff]
        %v7838 = vld [vmem:[%s432 + $0x408] sm:$0xff]
        %v7839 = vld [vmem:[%s432 + $0x410] sm:$0xff]
        %v7840 = vld [vmem:[%s432 + $0x418] sm:$0xff]
        %v7841 = vld [vmem:[%s432 + $0x420] sm:$0xff]
        %v7842 = vld [vmem:[%s432 + $0x428] sm:$0xff]
        %v7843 = vld [vmem:[%s432 + $0x430] sm:$0xff]
        %v7844 = vld [vmem:[%s432 + $0x438] sm:$0xff]
        %v7845 = vld [vmem:[%s432 + $0x440] sm:$0xff]
        %v7846 = vld [vmem:[%s432 + $0x448] sm:$0xff]
        %v7847 = vld [vmem:[%s432 + $0x450] sm:$0xff]
        %v7848 = vld [vmem:[%s432 + $0x458] sm:$0xff]
        %v7849 = vld [vmem:[%s432 + $0x460] sm:$0xff]
        %v7850 = vld [vmem:[%s432 + $0x468] sm:$0xff]
        %v7851 = vld [vmem:[%s432 + $0x470] sm:$0xff]
        %v7852 = vld [vmem:[%s432 + $0x478] sm:$0xff]
        %v7853 = vld [vmem:[%s432 + $0x480] sm:$0xff]
        %v7854 = vld [vmem:[%s432 + $0x488] sm:$0xff]
        %v7855 = vld [vmem:[%s432 + $0x490] sm:$0xff]
        %v7856 = vld [vmem:[%s432 + $0x498] sm:$0xff]
        %v7857 = vld [vmem:[%s432 + $0x4a0] sm:$0xff]
        %v7858 = vld [vmem:[%s432 + $0x4a8] sm:$0xff]
        %v7859 = vld [vmem:[%s432 + $0x4b0] sm:$0xff]
        %v7860 = vld [vmem:[%s432 + $0x4b8] sm:$0xff]
        %v7861 = vld [vmem:[%s432 + $0x4c0] sm:$0xff]
        %v7862 = vld [vmem:[%s432 + $0x4c8] sm:$0xff]
        %v7863 = vld [vmem:[%s432 + $0x4d0] sm:$0xff]
        %v7864 = vld [vmem:[%s432 + $0x4d8] sm:$0xff]
        %v7865 = vld [vmem:[%s432 + $0x4e0] sm:$0xff]
        %v7866 = vld [vmem:[%s432 + $0x4e8] sm:$0xff]
        %v7867 = vld [vmem:[%s432 + $0x4f0] sm:$0xff]
        %v7868 = vld [vmem:[%s432 + $0x4f8] sm:$0xff]
        %v7869 = vld [vmem:[%s432 + $0x500] sm:$0xff]
        %v7870 = vld [vmem:[%s432 + $0x508] sm:$0xff]
        %v7871 = vld [vmem:[%s432 + $0x510] sm:$0xff]
        %v7872 = vld [vmem:[%s432 + $0x518] sm:$0xff]
        %v7873 = vld [vmem:[%s432 + $0x520] sm:$0xff]
        %v7874 = vld [vmem:[%s432 + $0x528] sm:$0xff]
        %v7875 = vld [vmem:[%s432 + $0x530] sm:$0xff]
        %v7876 = vld [vmem:[%s432 + $0x538] sm:$0xff]
        %v7877 = vld [vmem:[%s432 + $0x540] sm:$0xff]
        %v7878 = vld [vmem:[%s432 + $0x548] sm:$0xff]
        %v7879 = vld [vmem:[%s432 + $0x550] sm:$0xff]
        %v7880 = vld [vmem:[%s432 + $0x558] sm:$0xff]
        %v7881 = vld [vmem:[%s432 + $0x560] sm:$0xff]
        %v7882 = vld [vmem:[%s432 + $0x568] sm:$0xff]
        %v7883 = vld [vmem:[%s432 + $0x570] sm:$0xff]
        %v7884 = vld [vmem:[%s432 + $0x578] sm:$0xff]
        %v7885 = vld [vmem:[%s432 + $0x580] sm:$0xff]
        %v7886 = vld [vmem:[%s432 + $0x588] sm:$0xff]
        %v7887 = vld [vmem:[%s432 + $0x590] sm:$0xff]
        %v7888 = vld [vmem:[%s432 + $0x598] sm:$0xff]
        %v7889 = vld [vmem:[%s432 + $0x5a0] sm:$0xff]
        %v7890 = vld [vmem:[%s432 + $0x5a8] sm:$0xff]
        %v7891 = vld [vmem:[%s432 + $0x5b0] sm:$0xff]
        %v7892 = vld [vmem:[%s432 + $0x5b8] sm:$0xff]
        %v7893 = vld [vmem:[%s432 + $0x5c0] sm:$0xff]
        %v7894 = vld [vmem:[%s432 + $0x5c8] sm:$0xff]
        %v7895 = vld [vmem:[%s432 + $0x5d0] sm:$0xff]
        %v7896 = vld [vmem:[%s432 + $0x5d8] sm:$0xff]
        %v7897 = vld [vmem:[%s432 + $0x5e0] sm:$0xff]
        %v7898 = vld [vmem:[%s432 + $0x5e8] sm:$0xff]
        %v7899 = vld [vmem:[%s432 + $0x5f0] sm:$0xff]
        %v7900 = vld [vmem:[%s432 + $0x5f8] sm:$0xff]
        %v7901 = vld [vmem:[%s432 + $0x600] sm:$0xff]
        %v7902 = vld [vmem:[%s432 + $0x608] sm:$0xff]
        %v7903 = vld [vmem:[%s432 + $0x610] sm:$0xff]
        %v7904 = vld [vmem:[%s432 + $0x618] sm:$0xff]
        %v7905 = vld [vmem:[%s432 + $0x620] sm:$0xff]
        %v7906 = vld [vmem:[%s432 + $0x628] sm:$0xff]
        %v7907 = vld [vmem:[%s432 + $0x630] sm:$0xff]
        %v7908 = vld [vmem:[%s432 + $0x638] sm:$0xff]
        %v7909 = vld [vmem:[%s432 + $0x640] sm:$0xff]
        %v7910 = vld [vmem:[%s432 + $0x648] sm:$0xff]
        %v7911 = vld [vmem:[%s432 + $0x650] sm:$0xff]
        %v7912 = vld [vmem:[%s432 + $0x658] sm:$0xff]
        %v7913 = vld [vmem:[%s432 + $0x660] sm:$0xff]
        %v7914 = vld [vmem:[%s432 + $0x668] sm:$0xff]
        %v7915 = vld [vmem:[%s432 + $0x670] sm:$0xff]
        %v7916 = vld [vmem:[%s432 + $0x678] sm:$0xff]
        %v7917 = vld [vmem:[%s432 + $0x680] sm:$0xff]
        %v7918 = vld [vmem:[%s432 + $0x688] sm:$0xff]
        %v7919 = vld [vmem:[%s432 + $0x690] sm:$0xff]
        %v7920 = vld [vmem:[%s432 + $0x698] sm:$0xff]
        %v7921 = vld [vmem:[%s432 + $0x6a0] sm:$0xff]
        %v7922 = vld [vmem:[%s432 + $0x6a8] sm:$0xff]
        %v7923 = vld [vmem:[%s432 + $0x6b0] sm:$0xff]
        %v7924 = vld [vmem:[%s432 + $0x6b8] sm:$0xff]
        %v7925 = vld [vmem:[%s432 + $0x6c0] sm:$0xff]
        %v7926 = vld [vmem:[%s432 + $0x6c8] sm:$0xff]
        %v7927 = vld [vmem:[%s432 + $0x6d0] sm:$0xff]
        %v7928 = vld [vmem:[%s432 + $0x6d8] sm:$0xff]
        %v7929 = vld [vmem:[%s432 + $0x6e0] sm:$0xff]
        %v7930 = vld [vmem:[%s432 + $0x6e8] sm:$0xff]
        %v7931 = vld [vmem:[%s432 + $0x6f0] sm:$0xff]
        %v7932 = vld [vmem:[%s432 + $0x6f8] sm:$0xff]
        %v7933 = vld [vmem:[%s432 + $0x700] sm:$0xff]
        %v7934 = vld [vmem:[%s432 + $0x708] sm:$0xff]
        %v7935 = vld [vmem:[%s432 + $0x710] sm:$0xff]
        %v7936 = vld [vmem:[%s432 + $0x718] sm:$0xff]
        %v7937 = vld [vmem:[%s432 + $0x720] sm:$0xff]
        %v7938 = vld [vmem:[%s432 + $0x728] sm:$0xff]
        %v7939 = vld [vmem:[%s432 + $0x730] sm:$0xff]
        %v7940 = vld [vmem:[%s432 + $0x738] sm:$0xff]
        %v7941 = vld [vmem:[%s432 + $0x740] sm:$0xff]
        %v7942 = vld [vmem:[%s432 + $0x748] sm:$0xff]
        %v7943 = vld [vmem:[%s432 + $0x750] sm:$0xff]
        %v7944 = vld [vmem:[%s432 + $0x758] sm:$0xff]
        %v7945 = vld [vmem:[%s432 + $0x760] sm:$0xff]
        %v7946 = vld [vmem:[%s432 + $0x768] sm:$0xff]
        %v7947 = vld [vmem:[%s432 + $0x770] sm:$0xff]
        %v7948 = vld [vmem:[%s432 + $0x778] sm:$0xff]
        %v7949 = vld [vmem:[%s432 + $0x780] sm:$0xff]
        %v7950 = vld [vmem:[%s432 + $0x788] sm:$0xff]
        %v7951 = vld [vmem:[%s432 + $0x790] sm:$0xff]
        %v7952 = vld [vmem:[%s432 + $0x798] sm:$0xff]
        %v7953 = vld [vmem:[%s432 + $0x7a0] sm:$0xff]
        %v7954 = vld [vmem:[%s432 + $0x7a8] sm:$0xff]
        %v7955 = vld [vmem:[%s432 + $0x7b0] sm:$0xff]
        %v7956 = vld [vmem:[%s432 + $0x7b8] sm:$0xff]
        %v7957 = vld [vmem:[%s432 + $0x7c0] sm:$0xff]
        %v7958 = vld [vmem:[%s432 + $0x7c8] sm:$0xff]
        %v7959 = vld [vmem:[%s432 + $0x7d0] sm:$0xff]
        %v7960 = vld [vmem:[%s432 + $0x7d8] sm:$0xff]
        %v7961 = vld [vmem:[%s432 + $0x7e0] sm:$0xff]
        %v7962 = vld [vmem:[%s432 + $0x7e8] sm:$0xff]
        %v7963 = vld [vmem:[%s432 + $0x7f0] sm:$0xff]
        %v7964 = vld [vmem:[%s432 + $0x7f8] sm:$0xff]
        %v7965 = vld [vmem:[%s432 + $0x800] sm:$0xff]
        %v7966 = vld [vmem:[%s432 + $0x808] sm:$0xff]
        %v7967 = vld [vmem:[%s432 + $0x810] sm:$0xff]
        %v7968 = vld [vmem:[%s432 + $0x818] sm:$0xff]
        %v7969 = vld [vmem:[%s432 + $0x820] sm:$0xff]
        %v7970 = vld [vmem:[%s432 + $0x828] sm:$0xff]
        %v7971 = vld [vmem:[%s432 + $0x830] sm:$0xff]
        %v7972 = vld [vmem:[%s432 + $0x838] sm:$0xff]
        %v7973 = vld [vmem:[%s432 + $0x840] sm:$0xff]
        %v7974 = vld [vmem:[%s432 + $0x848] sm:$0xff]
        %v7975 = vld [vmem:[%s432 + $0x850] sm:$0xff]
        %v7976 = vld [vmem:[%s432 + $0x858] sm:$0xff]
        %v7977 = vld [vmem:[%s432 + $0x860] sm:$0xff]
        %v7978 = vld [vmem:[%s432 + $0x868] sm:$0xff]
        %v7979 = vld [vmem:[%s432 + $0x870] sm:$0xff]
        %v7980 = vld [vmem:[%s432 + $0x878] sm:$0xff]
        %v7981 = vld [vmem:[%s432 + $0x880] sm:$0xff]
        %v7982 = vld [vmem:[%s432 + $0x888] sm:$0xff]
        %v7983 = vld [vmem:[%s432 + $0x890] sm:$0xff]
        %v7984 = vld [vmem:[%s432 + $0x898] sm:$0xff]
        %v7985 = vld [vmem:[%s432 + $0x8a0] sm:$0xff]
        %v7986 = vld [vmem:[%s432 + $0x8a8] sm:$0xff]
        %v7987 = vld [vmem:[%s432 + $0x8b0] sm:$0xff]
        %v7988 = vld [vmem:[%s432 + $0x8b8] sm:$0xff]
        %v7989 = vld [vmem:[%s432 + $0x8c0] sm:$0xff]
        %v7990 = vld [vmem:[%s432 + $0x8c8] sm:$0xff]
        %v7991 = vld [vmem:[%s432 + $0x8d0] sm:$0xff]
        %v7992 = vld [vmem:[%s432 + $0x8d8] sm:$0xff]
        %v7993 = vld [vmem:[%s432 + $0x8e0] sm:$0xff]
        %v7994 = vld [vmem:[%s432 + $0x8e8] sm:$0xff]
        %v7995 = vld [vmem:[%s432 + $0x8f0] sm:$0xff]
        %v7996 = vld [vmem:[%s432 + $0x8f8] sm:$0xff]
        %v7997 = vld [vmem:[%s432 + $0x900] sm:$0xff]
        %v7998 = vld [vmem:[%s432 + $0x908] sm:$0xff]
        %v7999 = vld [vmem:[%s432 + $0x910] sm:$0xff]
        %v8000 = vld [vmem:[%s432 + $0x918] sm:$0xff]
        %v8001 = vld [vmem:[%s432 + $0x920] sm:$0xff]
        %v8002 = vld [vmem:[%s432 + $0x928] sm:$0xff]
        %v8003 = vld [vmem:[%s432 + $0x930] sm:$0xff]
        %v8004 = vld [vmem:[%s432 + $0x938] sm:$0xff]
        %v8005 = vld [vmem:[%s432 + $0x940] sm:$0xff]
        %v8006 = vld [vmem:[%s432 + $0x948] sm:$0xff]
        %v8007 = vld [vmem:[%s432 + $0x950] sm:$0xff]
        %v8008 = vld [vmem:[%s432 + $0x958] sm:$0xff]
        %v8009 = vld [vmem:[%s432 + $0x960] sm:$0xff]
        %v8010 = vld [vmem:[%s432 + $0x968] sm:$0xff]
        %v8011 = vld [vmem:[%s432 + $0x970] sm:$0xff]
        %v8012 = vld [vmem:[%s432 + $0x978] sm:$0xff]
        %v8013 = vld [vmem:[%s432 + $0x980] sm:$0xff]
        %v8014 = vld [vmem:[%s432 + $0x988] sm:$0xff]
        %v8015 = vld [vmem:[%s432 + $0x990] sm:$0xff]
        %v8016 = vld [vmem:[%s432 + $0x998] sm:$0xff]
        %v8017 = vld [vmem:[%s432 + $0x9a0] sm:$0xff]
        %v8018 = vld [vmem:[%s432 + $0x9a8] sm:$0xff]
        %v8019 = vld [vmem:[%s432 + $0x9b0] sm:$0xff]
        %v8020 = vld [vmem:[%s432 + $0x9b8] sm:$0xff]
        %v8021 = vld [vmem:[%s432 + $0x9c0] sm:$0xff]
        %v8022 = vld [vmem:[%s432 + $0x9c8] sm:$0xff]
        %v8023 = vld [vmem:[%s432 + $0x9d0] sm:$0xff]
        %v8024 = vld [vmem:[%s432 + $0x9d8] sm:$0xff]
        %v8025 = vld [vmem:[%s432 + $0x9e0] sm:$0xff]
        %v8026 = vld [vmem:[%s432 + $0x9e8] sm:$0xff]
        %v8027 = vld [vmem:[%s432 + $0x9f0] sm:$0xff]
        %v8028 = vld [vmem:[%s432 + $0x9f8] sm:$0xff]
        %v8029 = vld [vmem:[%s432 + $0xa00] sm:$0xff]
        %v8030 = vld [vmem:[%s432 + $0xa08] sm:$0xff]
        %v8031 = vld [vmem:[%s432 + $0xa10] sm:$0xff]
        %v8032 = vld [vmem:[%s432 + $0xa18] sm:$0xff]
        %v8033 = vld [vmem:[%s432 + $0xa20] sm:$0xff]
        %v8034 = vld [vmem:[%s432 + $0xa28] sm:$0xff]
        %v8035 = vld [vmem:[%s432 + $0xa30] sm:$0xff]
        %v8036 = vld [vmem:[%s432 + $0xa38] sm:$0xff]
        %v8037 = vld [vmem:[%s432 + $0xa40] sm:$0xff]
        %v8038 = vld [vmem:[%s432 + $0xa48] sm:$0xff]
        %v8039 = vld [vmem:[%s432 + $0xa50] sm:$0xff]
        %v8040 = vld [vmem:[%s432 + $0xa58] sm:$0xff]
        %v8041 = vld [vmem:[%s432 + $0xa60] sm:$0xff]
        %v8042 = vld [vmem:[%s432 + $0xa68] sm:$0xff]
        %v8043 = vld [vmem:[%s432 + $0xa70] sm:$0xff]
        %v8044 = vld [vmem:[%s432 + $0xa78] sm:$0xff]
        %v8045 = vld [vmem:[%s432 + $0xa80] sm:$0xff]
        %v8046 = vld [vmem:[%s432 + $0xa88] sm:$0xff]
        %v8047 = vld [vmem:[%s432 + $0xa90] sm:$0xff]
        %v8048 = vld [vmem:[%s432 + $0xa98] sm:$0xff]
        %v8049 = vld [vmem:[%s432 + $0xaa0] sm:$0xff]
        %v8050 = vld [vmem:[%s432 + $0xaa8] sm:$0xff]
        %v8051 = vld [vmem:[%s432 + $0xab0] sm:$0xff]
        %v8052 = vld [vmem:[%s432 + $0xab8] sm:$0xff]
        %v8053 = vld [vmem:[%s432 + $0xac0] sm:$0xff]
        %v8054 = vld [vmem:[%s432 + $0xac8] sm:$0xff]
        %v8055 = vld [vmem:[%s432 + $0xad0] sm:$0xff]
        %v8056 = vld [vmem:[%s432 + $0xad8] sm:$0xff]
        %v8057 = vld [vmem:[%s432 + $0xae0] sm:$0xff]
        %v8058 = vld [vmem:[%s432 + $0xae8] sm:$0xff]
        %v8059 = vld [vmem:[%s432 + $0xaf0] sm:$0xff]
        %v8060 = vld [vmem:[%s432 + $0xaf8] sm:$0xff]
        %v8061 = vld [vmem:[%s432 + $0xb00] sm:$0xff]
        %v8062 = vld [vmem:[%s432 + $0xb08] sm:$0xff]
        %v8063 = vld [vmem:[%s432 + $0xb10] sm:$0xff]
        %v8064 = vld [vmem:[%s432 + $0xb18] sm:$0xff]
        %v8065 = vld [vmem:[%s432 + $0xb20] sm:$0xff]
        %v8066 = vld [vmem:[%s432 + $0xb28] sm:$0xff]
        %v8067 = vld [vmem:[%s432 + $0xb30] sm:$0xff]
        %v8068 = vld [vmem:[%s432 + $0xb38] sm:$0xff]
        %v8069 = vld [vmem:[%s432 + $0xb40] sm:$0xff]
        %v8070 = vld [vmem:[%s432 + $0xb48] sm:$0xff]
        %v8071 = vld [vmem:[%s432 + $0xb50] sm:$0xff]
        %v8072 = vld [vmem:[%s432 + $0xb58] sm:$0xff]
        %v8073 = vld [vmem:[%s432 + $0xb60] sm:$0xff]
        %v8074 = vld [vmem:[%s432 + $0xb68] sm:$0xff]
        %v8075 = vld [vmem:[%s432 + $0xb70] sm:$0xff]
        %v8076 = vld [vmem:[%s432 + $0xb78] sm:$0xff]
        %v8077 = vld [vmem:[%s432 + $0xb80] sm:$0xff]
        %v8078 = vld [vmem:[%s432 + $0xb88] sm:$0xff]
        %v8079 = vld [vmem:[%s432 + $0xb90] sm:$0xff]
        %v8080 = vld [vmem:[%s432 + $0xb98] sm:$0xff]
        %v8081 = vld [vmem:[%s432 + $0xba0] sm:$0xff]
        %v8082 = vld [vmem:[%s432 + $0xba8] sm:$0xff]
        %v8083 = vld [vmem:[%s432 + $0xbb0] sm:$0xff]
        %v8084 = vld [vmem:[%s432 + $0xbb8] sm:$0xff]
        %v8085 = vld [vmem:[%s432 + $0xbc0] sm:$0xff]
        %v8086 = vld [vmem:[%s432 + $0xbc8] sm:$0xff]
        %v8087 = vld [vmem:[%s432 + $0xbd0] sm:$0xff]
        %v8088 = vld [vmem:[%s432 + $0xbd8] sm:$0xff]
        %v8089 = vld [vmem:[%s432 + $0xbe0] sm:$0xff]
        %v8090 = vld [vmem:[%s432 + $0xbe8] sm:$0xff]
        %v8091 = vld [vmem:[%s432 + $0xbf0] sm:$0xff]
        %v8092 = vld [vmem:[%s432 + $0xbf8] sm:$0xff]
        %v8093 = vld [vmem:[%s432 + $0xc00] sm:$0xff]
        %v8094 = vld [vmem:[%s432 + $0xc08] sm:$0xff]
        %v8095 = vld [vmem:[%s432 + $0xc10] sm:$0xff]
        %v8096 = vld [vmem:[%s432 + $0xc18] sm:$0xff]
        %v8097 = vld [vmem:[%s432 + $0xc20] sm:$0xff]
        %v8098 = vld [vmem:[%s432 + $0xc28] sm:$0xff]
        %v8099 = vld [vmem:[%s432 + $0xc30] sm:$0xff]
        %v8100 = vld [vmem:[%s432 + $0xc38] sm:$0xff]
        %v8101 = vld [vmem:[%s432 + $0xc40] sm:$0xff]
        %v8102 = vld [vmem:[%s432 + $0xc48] sm:$0xff]
        %v8103 = vld [vmem:[%s432 + $0xc50] sm:$0xff]
        %v8104 = vld [vmem:[%s432 + $0xc58] sm:$0xff]
        %v8105 = vld [vmem:[%s432 + $0xc60] sm:$0xff]
        %v8106 = vld [vmem:[%s432 + $0xc68] sm:$0xff]
        %v8107 = vld [vmem:[%s432 + $0xc70] sm:$0xff]
        %v8108 = vld [vmem:[%s432 + $0xc78] sm:$0xff]
        %v8109 = vld [vmem:[%s432 + $0xc80] sm:$0xff]
        %v8110 = vld [vmem:[%s432 + $0xc88] sm:$0xff]
        %v8111 = vld [vmem:[%s432 + $0xc90] sm:$0xff]
        %v8112 = vld [vmem:[%s432 + $0xc98] sm:$0xff]
        %v8113 = vld [vmem:[%s432 + $0xca0] sm:$0xff]
        %v8114 = vld [vmem:[%s432 + $0xca8] sm:$0xff]
        %v8115 = vld [vmem:[%s432 + $0xcb0] sm:$0xff]
        %v8116 = vld [vmem:[%s432 + $0xcb8] sm:$0xff]
        %v8117 = vld [vmem:[%s432 + $0xcc0] sm:$0xff]
        %v8118 = vld [vmem:[%s432 + $0xcc8] sm:$0xff]
        %v8119 = vld [vmem:[%s432 + $0xcd0] sm:$0xff]
        %v8120 = vld [vmem:[%s432 + $0xcd8] sm:$0xff]
        %v8121 = vld [vmem:[%s432 + $0xce0] sm:$0xff]
        %v8122 = vld [vmem:[%s432 + $0xce8] sm:$0xff]
        %v8123 = vld [vmem:[%s432 + $0xcf0] sm:$0xff]
        %v8124 = vld [vmem:[%s432 + $0xcf8] sm:$0xff]
        %v8125 = vld [vmem:[%s432 + $0xd00] sm:$0xff]
        %v8126 = vld [vmem:[%s432 + $0xd08] sm:$0xff]
        %v8127 = vld [vmem:[%s432 + $0xd10] sm:$0xff]
        %v8128 = vld [vmem:[%s432 + $0xd18] sm:$0xff]
        %v8129 = vld [vmem:[%s432 + $0xd20] sm:$0xff]
        %v8130 = vld [vmem:[%s432 + $0xd28] sm:$0xff]
        %v8131 = vld [vmem:[%s432 + $0xd30] sm:$0xff]
        %v8132 = vld [vmem:[%s432 + $0xd38] sm:$0xff]
        %v8133 = vld [vmem:[%s432 + $0xd40] sm:$0xff]
        %v8134 = vld [vmem:[%s432 + $0xd48] sm:$0xff]
        %v8135 = vld [vmem:[%s432 + $0xd50] sm:$0xff]
        %v8136 = vld [vmem:[%s432 + $0xd58] sm:$0xff]
        %v8137 = vld [vmem:[%s432 + $0xd60] sm:$0xff]
        %v8138 = vld [vmem:[%s432 + $0xd68] sm:$0xff]
        %v8139 = vld [vmem:[%s432 + $0xd70] sm:$0xff]
        %v8140 = vld [vmem:[%s432 + $0xd78] sm:$0xff]
        %v8141 = vld [vmem:[%s432 + $0xd80] sm:$0xff]
        %v8142 = vld [vmem:[%s432 + $0xd88] sm:$0xff]
        %v8143 = vld [vmem:[%s432 + $0xd90] sm:$0xff]
        %v8144 = vld [vmem:[%s432 + $0xd98] sm:$0xff]
        %v8145 = vld [vmem:[%s432 + $0xda0] sm:$0xff]
        %v8146 = vld [vmem:[%s432 + $0xda8] sm:$0xff]
        %v8147 = vld [vmem:[%s432 + $0xdb0] sm:$0xff]
        %v8148 = vld [vmem:[%s432 + $0xdb8] sm:$0xff]
        %v8149 = vld [vmem:[%s432 + $0xdc0] sm:$0xff]
        %v8150 = vld [vmem:[%s432 + $0xdc8] sm:$0xff]
        %v8151 = vld [vmem:[%s432 + $0xdd0] sm:$0xff]
        %v8152 = vld [vmem:[%s432 + $0xdd8] sm:$0xff]
        %v8153 = vld [vmem:[%s432 + $0xde0] sm:$0xff]
        %v8154 = vld [vmem:[%s432 + $0xde8] sm:$0xff]
        %v8155 = vld [vmem:[%s432 + $0xdf0] sm:$0xff]
        %v8156 = vld [vmem:[%s432 + $0xdf8] sm:$0xff]
        %v8157 = vld [vmem:[%s432 + $0xe00] sm:$0xff]
        %v8158 = vld [vmem:[%s432 + $0xe08] sm:$0xff]
        %v8159 = vld [vmem:[%s432 + $0xe10] sm:$0xff]
        %v8160 = vld [vmem:[%s432 + $0xe18] sm:$0xff]
        %v8161 = vld [vmem:[%s432 + $0xe20] sm:$0xff]
        %v8162 = vld [vmem:[%s432 + $0xe28] sm:$0xff]
        %v8163 = vld [vmem:[%s432 + $0xe30] sm:$0xff]
        %v8164 = vld [vmem:[%s432 + $0xe38] sm:$0xff]
        %v8165 = vld [vmem:[%s432 + $0xe40] sm:$0xff]
        %v8166 = vld [vmem:[%s432 + $0xe48] sm:$0xff]
        %v8167 = vld [vmem:[%s432 + $0xe50] sm:$0xff]
        %v8168 = vld [vmem:[%s432 + $0xe58] sm:$0xff]
        %v8169 = vld [vmem:[%s432 + $0xe60] sm:$0xff]
        %v8170 = vld [vmem:[%s432 + $0xe68] sm:$0xff]
        %v8171 = vld [vmem:[%s432 + $0xe70] sm:$0xff]
        %v8172 = vld [vmem:[%s432 + $0xe78] sm:$0xff]
        %v8173 = vld [vmem:[%s432 + $0xe80] sm:$0xff]
        %v8174 = vld [vmem:[%s432 + $0xe88] sm:$0xff]
        %v8175 = vld [vmem:[%s432 + $0xe90] sm:$0xff]
        %v8176 = vld [vmem:[%s432 + $0xe98] sm:$0xff]
        %v8177 = vld [vmem:[%s432 + $0xea0] sm:$0xff]
        %v8178 = vld [vmem:[%s432 + $0xea8] sm:$0xff]
        %v8179 = vld [vmem:[%s432 + $0xeb0] sm:$0xff]
        %v8180 = vld [vmem:[%s432 + $0xeb8] sm:$0xff]
        %v8181 = vld [vmem:[%s432 + $0xec0] sm:$0xff]
        %v8182 = vld [vmem:[%s432 + $0xec8] sm:$0xff]
        %v8183 = vld [vmem:[%s432 + $0xed0] sm:$0xff]
        %v8184 = vld [vmem:[%s432 + $0xed8] sm:$0xff]
        %v8185 = vld [vmem:[%s432 + $0xee0] sm:$0xff]
        %v8186 = vld [vmem:[%s432 + $0xee8] sm:$0xff]
        %v8187 = vld [vmem:[%s432 + $0xef0] sm:$0xff]
        %v8188 = vld [vmem:[%s432 + $0xef8] sm:$0xff]
        %v8189 = vld [vmem:[%s432 + $0xf00] sm:$0xff]
        %v8190 = vld [vmem:[%s432 + $0xf08] sm:$0xff]
        %v8191 = vld [vmem:[%s432 + $0xf10] sm:$0xff]
        %v8192 = vld [vmem:[%s432 + $0xf18] sm:$0xff]
        %v8193 = vld [vmem:[%s432 + $0xf20] sm:$0xff]
        %v8194 = vld [vmem:[%s432 + $0xf28] sm:$0xff]
        %v8195 = vld [vmem:[%s432 + $0xf30] sm:$0xff]
        %v8196 = vld [vmem:[%s432 + $0xf38] sm:$0xff]
        %v8197 = vld [vmem:[%s432 + $0xf40] sm:$0xff]
        %v8198 = vld [vmem:[%s432 + $0xf48] sm:$0xff]
        %v8199 = vld [vmem:[%s432 + $0xf50] sm:$0xff]
        %v8200 = vld [vmem:[%s432 + $0xf58] sm:$0xff]
        %v8201 = vld [vmem:[%s432 + $0xf60] sm:$0xff]
        %v8202 = vld [vmem:[%s432 + $0xf68] sm:$0xff]
        %v8203 = vld [vmem:[%s432 + $0xf70] sm:$0xff]
        %v8204 = vld [vmem:[%s432 + $0xf78] sm:$0xff]
        %v8205 = vld [vmem:[%s432 + $0xf80] sm:$0xff]
        %v8206 = vld [vmem:[%s432 + $0xf88] sm:$0xff]
        %v8207 = vld [vmem:[%s432 + $0xf90] sm:$0xff]
        %v8208 = vld [vmem:[%s432 + $0xf98] sm:$0xff]
        %v8209 = vld [vmem:[%s432 + $0xfa0] sm:$0xff]
        %v8210 = vld [vmem:[%s432 + $0xfa8] sm:$0xff]
        %v8211 = vld [vmem:[%s432 + $0xfb0] sm:$0xff]
        %v8212 = vld [vmem:[%s432 + $0xfb8] sm:$0xff]
        %v8213 = vld [vmem:[%s432 + $0xfc0] sm:$0xff]
        %v8214 = vld [vmem:[%s432 + $0xfc8] sm:$0xff]
        %v8215 = vld [vmem:[%s432 + $0xfd0] sm:$0xff]
        %v8216 = vld [vmem:[%s432 + $0xfd8] sm:$0xff]
        %v8217 = vld [vmem:[%s432 + $0xfe0] sm:$0xff]
        %v8218 = vld [vmem:[%s432 + $0xfe8] sm:$0xff]
        %v8219 = vld [vmem:[%s432 + $0xff0] sm:$0xff]
        %v8220 = vld [vmem:[%s432 + $0xff8] sm:$0xff]
        %v8229 = vcombine.high %v7701, %v7701
        %v8231 = vunpack.c.l.s4 1983009808
        %v8232 = vunpack.c.0.s8 %v8231
        %v8233 = vlaneseq
        %v8234 = vshrl.u32 %v8233, 7
        %v8235 = vsub.s32 %v8232, %v8234
        %v8236 = vrot.slane %v7701, %v8235
        %v8238 = vunpack.c.l.s4 1983009808
        %v8239 = vunpack.c.0.s8 %v8238
        %v8240 = vlaneseq
        %v8241 = vshrl.u32 %v8240, 7
        %v8242 = vsub.s32 %v8239, %v8241
        %v8243 = vrot.slane %v8229, %v8242
        %v8244 = vcombine.high %v8236, %v8236
        %v8245 = vcombine.high %v8243, %v8243
        %v8246 = vcombine.high %v7702, %v7702
        %v8248 = vunpack.c.l.s4 1983009808
        %v8249 = vunpack.c.0.s8 %v8248
        %v8250 = vlaneseq
        %v8251 = vshrl.u32 %v8250, 7
        %v8252 = vsub.s32 %v8249, %v8251
        %v8253 = vrot.slane %v7702, %v8252
        %v8255 = vunpack.c.l.s4 1983009808
        %v8256 = vunpack.c.0.s8 %v8255
        %v8257 = vlaneseq
        %v8258 = vshrl.u32 %v8257, 7
        %v8259 = vsub.s32 %v8256, %v8258
        %v8260 = vrot.slane %v8246, %v8259
        %v8261 = vcombine.high %v8253, %v8253
        %v8262 = vcombine.high %v8260, %v8260
        %v8263 = vcombine.high %v7703, %v7703
        %v8265 = vunpack.c.l.s4 1983009808
        %v8266 = vunpack.c.0.s8 %v8265
        %v8267 = vlaneseq
        %v8268 = vshrl.u32 %v8267, 7
        %v8269 = vsub.s32 %v8266, %v8268
        %v8270 = vrot.slane %v7703, %v8269
        %v8272 = vunpack.c.l.s4 1983009808
        %v8273 = vunpack.c.0.s8 %v8272
        %v8274 = vlaneseq
        %v8275 = vshrl.u32 %v8274, 7
        %v8276 = vsub.s32 %v8273, %v8275
        %v8277 = vrot.slane %v8263, %v8276
        %v8278 = vcombine.high %v8270, %v8270
        %v8279 = vcombine.high %v8277, %v8277
        %v8280 = vcombine.high %v7704, %v7704
        %v8282 = vunpack.c.l.s4 1983009808
        %v8283 = vunpack.c.0.s8 %v8282
        %v8284 = vlaneseq
        %v8285 = vshrl.u32 %v8284, 7
        %v8286 = vsub.s32 %v8283, %v8285
        %v8287 = vrot.slane %v7704, %v8286
        %v8289 = vunpack.c.l.s4 1983009808
        %v8290 = vunpack.c.0.s8 %v8289
        %v8291 = vlaneseq
        %v8292 = vshrl.u32 %v8291, 7
        %v8293 = vsub.s32 %v8290, %v8292
        %v8294 = vrot.slane %v8280, %v8293
        %v8295 = vcombine.high %v8287, %v8287
        %v8296 = vcombine.high %v8294, %v8294
        %v8297 = vcombine.high %v7705, %v7705
        %v8299 = vunpack.c.l.s4 1983009808
        %v8300 = vunpack.c.0.s8 %v8299
        %v8301 = vlaneseq
        %v8302 = vshrl.u32 %v8301, 7
        %v8303 = vsub.s32 %v8300, %v8302
        %v8304 = vrot.slane %v7705, %v8303
        %v8306 = vunpack.c.l.s4 1983009808
        %v8307 = vunpack.c.0.s8 %v8306
        %v8308 = vlaneseq
        %v8309 = vshrl.u32 %v8308, 7
        %v8310 = vsub.s32 %v8307, %v8309
        %v8311 = vrot.slane %v8297, %v8310
        %v8312 = vcombine.high %v8304, %v8304
        %v8313 = vcombine.high %v8311, %v8311
        %v8314 = vcombine.high %v7706, %v7706
        %v8316 = vunpack.c.l.s4 1983009808
        %v8317 = vunpack.c.0.s8 %v8316
        %v8318 = vlaneseq
        %v8319 = vshrl.u32 %v8318, 7
        %v8320 = vsub.s32 %v8317, %v8319
        %v8321 = vrot.slane %v7706, %v8320
        %v8323 = vunpack.c.l.s4 1983009808
        %v8324 = vunpack.c.0.s8 %v8323
        %v8325 = vlaneseq
        %v8326 = vshrl.u32 %v8325, 7
        %v8327 = vsub.s32 %v8324, %v8326
        %v8328 = vrot.slane %v8314, %v8327
        %v8329 = vcombine.high %v8321, %v8321
        %v8330 = vcombine.high %v8328, %v8328
        %v8331 = vcombine.high %v7707, %v7707
        %v8333 = vunpack.c.l.s4 1983009808
        %v8334 = vunpack.c.0.s8 %v8333
        %v8335 = vlaneseq
        %v8336 = vshrl.u32 %v8335, 7
        %v8337 = vsub.s32 %v8334, %v8336
        %v8338 = vrot.slane %v7707, %v8337
        %v8340 = vunpack.c.l.s4 1983009808
        %v8341 = vunpack.c.0.s8 %v8340
        %v8342 = vlaneseq
        %v8343 = vshrl.u32 %v8342, 7
        %v8344 = vsub.s32 %v8341, %v8343
        %v8345 = vrot.slane %v8331, %v8344
        %v8346 = vcombine.high %v8338, %v8338
        %v8347 = vcombine.high %v8345, %v8345
        %v8348 = vcombine.high %v7708, %v7708
        %v8350 = vunpack.c.l.s4 1983009808
        %v8351 = vunpack.c.0.s8 %v8350
        %v8352 = vlaneseq
        %v8353 = vshrl.u32 %v8352, 7
        %v8354 = vsub.s32 %v8351, %v8353
        %v8355 = vrot.slane %v7708, %v8354
        %v8357 = vunpack.c.l.s4 1983009808
        %v8358 = vunpack.c.0.s8 %v8357
        %v8359 = vlaneseq
        %v8360 = vshrl.u32 %v8359, 7
        %v8361 = vsub.s32 %v8358, %v8360
        %v8362 = vrot.slane %v8348, %v8361
        %v8363 = vcombine.high %v8355, %v8355
        %v8364 = vcombine.high %v8362, %v8362
        %8397 = vmatprep.subr.mxu0 0.0
        %8398 = vmatpush1.msra.mxu0 %v7709
        %8399 = vmatprep.subr.mxu0 0.0
        %8400 = vmatpush1.msra.mxu0 %v7710
        %8401 = vmatprep.subr.mxu0 0.0
        %8402 = vmatpush1.msra.mxu0 %v7711
        %8403 = vmatprep.subr.mxu0 0.0
        %8404 = vmatpush1.msra.mxu0 %v7712
        %8405 = vmatprep.subr.mxu0 0.0
        %8406 = vmatpush1.msra.mxu0 %v7713
        %8407 = vmatprep.subr.mxu0 0.0
        %8408 = vmatpush1.msra.mxu0 %v7714
        %8409 = vmatprep.subr.mxu0 0.0
        %8410 = vmatpush1.msra.mxu0 %v7715
        %8411 = vmatprep.subr.mxu0 0.0
        %8412 = vmatpush1.msra.mxu0 %v7716
        %8413 = vmatprep.subr.mxu0 0.0
        %8414 = vmatpush1.msra.mxu0 %v7717
        %8415 = vmatprep.subr.mxu0 0.0
        %8416 = vmatpush1.msra.mxu0 %v7718
        %8417 = vmatprep.subr.mxu0 0.0
        %8418 = vmatpush1.msra.mxu0 %v7719
        %8419 = vmatprep.subr.mxu0 0.0
        %8420 = vmatpush1.msra.mxu0 %v7720
        %8421 = vmatprep.subr.mxu0 0.0
        %8422 = vmatpush1.msra.mxu0 %v7721
        %8423 = vmatprep.subr.mxu0 0.0
        %8424 = vmatpush1.msra.mxu0 %v7722
        %8425 = vmatprep.subr.mxu0 0.0
        %8426 = vmatpush1.msra.mxu0 %v7723
        %8427 = vmatprep.subr.mxu0 0.0
        %8428 = vmatpush1.msra.mxu0 %v7724
        %8429 = vmatprep.subr.mxu0 0.0
        %8430 = vmatpush1.msra.mxu0 %v7725
        %8431 = vmatprep.subr.mxu0 0.0
        %8432 = vmatpush1.msra.mxu0 %v7726
        %8433 = vmatprep.subr.mxu0 0.0
        %8434 = vmatpush1.msra.mxu0 %v7727
        %8435 = vmatprep.subr.mxu0 0.0
        %8436 = vmatpush1.msra.mxu0 %v7728
        %8437 = vmatprep.subr.mxu0 0.0
        %8438 = vmatpush1.msra.mxu0 %v7729
        %8439 = vmatprep.subr.mxu0 0.0
        %8440 = vmatpush1.msra.mxu0 %v7730
        %8441 = vmatprep.subr.mxu0 0.0
        %8442 = vmatpush1.msra.mxu0 %v7731
        %8443 = vmatprep.subr.mxu0 0.0
        %8444 = vmatpush1.msra.mxu0 %v7732
        %8445 = vmatprep.subr.mxu0 0.0
        %8446 = vmatpush1.msra.mxu0 %v7733
        %8447 = vmatprep.subr.mxu0 0.0
        %8448 = vmatpush1.msra.mxu0 %v7734
        %8449 = vmatprep.subr.mxu0 0.0
        %8450 = vmatpush1.msra.mxu0 %v7735
        %8451 = vmatprep.subr.mxu0 0.0
        %8452 = vmatpush1.msra.mxu0 %v7736
        %8453 = vmatprep.subr.mxu0 0.0
        %8454 = vmatpush1.msra.mxu0 %v7737
        %8455 = vmatprep.subr.mxu0 0.0
        %8456 = vmatpush1.msra.mxu0 %v7738
        %8457 = vmatprep.subr.mxu0 0.0
        %8458 = vmatpush1.msra.mxu0 %v7739
        %8459 = vmatprep.subr.mxu0 0.0
        %8460 = vmatpush1.msra.mxu0 %v7740
        %8461 = vmatprep.mubr.f32.mxu0 %v8244
        %8462 = vmatmul.mubr.f32.gmra.mrb[0].mxu0 %v8236
        %v8463 = vpop.f32.mrb[0].mxu0
        %v8464 = vadd.f32 0.0, %v8463
        %v8465 = vpop.f32.mrb[0].mxu0
        %8466 = vdwg.mxu0
        %8467 = vmatprep.subr.mxu0 0.0
        %8468 = vmatpush1.msra.mxu0 %v7741
        %8469 = vmatprep.subr.mxu0 0.0
        %8470 = vmatpush1.msra.mxu0 %v7742
        %8471 = vmatprep.subr.mxu0 0.0
        %8472 = vmatpush1.msra.mxu0 %v7743
        %8473 = vmatprep.subr.mxu0 0.0
        %8474 = vmatpush1.msra.mxu0 %v7744
        %8475 = vmatprep.subr.mxu0 0.0
        %8476 = vmatpush1.msra.mxu0 %v7745
        %8477 = vmatprep.subr.mxu0 0.0
        %8478 = vmatpush1.msra.mxu0 %v7746
        %8479 = vmatprep.subr.mxu0 0.0
        %8480 = vmatpush1.msra.mxu0 %v7747
        %8481 = vmatprep.subr.mxu0 0.0
        %8482 = vmatpush1.msra.mxu0 %v7748
        %8483 = vmatprep.subr.mxu0 0.0
        %8484 = vmatpush1.msra.mxu0 %v7749
        %8485 = vmatprep.subr.mxu0 0.0
        %8486 = vmatpush1.msra.mxu0 %v7750
        %8487 = vmatprep.subr.mxu0 0.0
        %8488 = vmatpush1.msra.mxu0 %v7751
        %8489 = vmatprep.subr.mxu0 0.0
        %8490 = vmatpush1.msra.mxu0 %v7752
        %8491 = vmatprep.subr.mxu0 0.0
        %8492 = vmatpush1.msra.mxu0 %v7753
        %8493 = vmatprep.subr.mxu0 0.0
        %8494 = vmatpush1.msra.mxu0 %v7754
        %8495 = vmatprep.subr.mxu0 0.0
        %8496 = vmatpush1.msra.mxu0 %v7755
        %8497 = vmatprep.subr.mxu0 0.0
        %8498 = vmatpush1.msra.mxu0 %v7756
        %8499 = vmatprep.subr.mxu0 0.0
        %8500 = vmatpush1.msra.mxu0 %v7757
        %8501 = vmatprep.subr.mxu0 0.0
        %8502 = vmatpush1.msra.mxu0 %v7758
        %8503 = vmatprep.subr.mxu0 0.0
        %8504 = vmatpush1.msra.mxu0 %v7759
        %8505 = vmatprep.subr.mxu0 0.0
        %8506 = vmatpush1.msra.mxu0 %v7760
        %8507 = vmatprep.subr.mxu0 0.0
        %8508 = vmatpush1.msra.mxu0 %v7761
        %8509 = vmatprep.subr.mxu0 0.0
        %8510 = vmatpush1.msra.mxu0 %v7762
        %8511 = vmatprep.subr.mxu0 0.0
        %8512 = vmatpush1.msra.mxu0 %v7763
        %8513 = vmatprep.subr.mxu0 0.0
        %8514 = vmatpush1.msra.mxu0 %v7764
        %8515 = vmatprep.subr.mxu0 0.0
        %8516 = vmatpush1.msra.mxu0 %v7765
        %8517 = vmatprep.subr.mxu0 0.0
        %8518 = vmatpush1.msra.mxu0 %v7766
        %8519 = vmatprep.subr.mxu0 0.0
        %8520 = vmatpush1.msra.mxu0 %v7767
        %8521 = vmatprep.subr.mxu0 0.0
        %8522 = vmatpush1.msra.mxu0 %v7768
        %8523 = vmatprep.subr.mxu0 0.0
        %8524 = vmatpush1.msra.mxu0 %v7769
        %8525 = vmatprep.subr.mxu0 0.0
        %8526 = vmatpush1.msra.mxu0 %v7770
        %8527 = vmatprep.subr.mxu0 0.0
        %8528 = vmatpush1.msra.mxu0 %v7771
        %8529 = vmatprep.subr.mxu0 0.0
        %8530 = vmatpush1.msra.mxu0 %v7772
        %8531 = vmatprep.mubr.f32.mxu0 %v8245
        %8532 = vmatmul.mubr.f32.gmra.mrb[0].mxu0 %v8243
        %v8533 = vpop.f32.mrb[0].mxu0
        %v8534 = vadd.f32 %v8464, %v8533
        %v8535 = vpop.f32.mrb[0].mxu0
        %8536 = vdwg.mxu0
        %8537 = vmatprep.subr.mxu0 0.0
        %8538 = vmatpush1.msra.mxu0 %v7773
        %8539 = vmatprep.subr.mxu0 0.0
        %8540 = vmatpush1.msra.mxu0 %v7774
        %8541 = vmatprep.subr.mxu0 0.0
        %8542 = vmatpush1.msra.mxu0 %v7775
        %8543 = vmatprep.subr.mxu0 0.0
        %8544 = vmatpush1.msra.mxu0 %v7776
        %8545 = vmatprep.subr.mxu0 0.0
        %8546 = vmatpush1.msra.mxu0 %v7777
        %8547 = vmatprep.subr.mxu0 0.0
        %8548 = vmatpush1.msra.mxu0 %v7778
        %8549 = vmatprep.subr.mxu0 0.0
        %8550 = vmatpush1.msra.mxu0 %v7779
        %8551 = vmatprep.subr.mxu0 0.0
        %8552 = vmatpush1.msra.mxu0 %v7780
        %8553 = vmatprep.subr.mxu0 0.0
        %8554 = vmatpush1.msra.mxu0 %v7781
        %8555 = vmatprep.subr.mxu0 0.0
        %8556 = vmatpush1.msra.mxu0 %v7782
        %8557 = vmatprep.subr.mxu0 0.0
        %8558 = vmatpush1.msra.mxu0 %v7783
        %8559 = vmatprep.subr.mxu0 0.0
        %8560 = vmatpush1.msra.mxu0 %v7784
        %8561 = vmatprep.subr.mxu0 0.0
        %8562 = vmatpush1.msra.mxu0 %v7785
        %8563 = vmatprep.subr.mxu0 0.0
        %8564 = vmatpush1.msra.mxu0 %v7786
        %8565 = vmatprep.subr.mxu0 0.0
        %8566 = vmatpush1.msra.mxu0 %v7787
        %8567 = vmatprep.subr.mxu0 0.0
        %8568 = vmatpush1.msra.mxu0 %v7788
        %8569 = vmatprep.subr.mxu0 0.0
        %8570 = vmatpush1.msra.mxu0 %v7789
        %8571 = vmatprep.subr.mxu0 0.0
        %8572 = vmatpush1.msra.mxu0 %v7790
        %8573 = vmatprep.subr.mxu0 0.0
        %8574 = vmatpush1.msra.mxu0 %v7791
        %8575 = vmatprep.subr.mxu0 0.0
        %8576 = vmatpush1.msra.mxu0 %v7792
        %8577 = vmatprep.subr.mxu0 0.0
        %8578 = vmatpush1.msra.mxu0 %v7793
        %8579 = vmatprep.subr.mxu0 0.0
        %8580 = vmatpush1.msra.mxu0 %v7794
        %8581 = vmatprep.subr.mxu0 0.0
        %8582 = vmatpush1.msra.mxu0 %v7795
        %8583 = vmatprep.subr.mxu0 0.0
        %8584 = vmatpush1.msra.mxu0 %v7796
        %8585 = vmatprep.subr.mxu0 0.0
        %8586 = vmatpush1.msra.mxu0 %v7797
        %8587 = vmatprep.subr.mxu0 0.0
        %8588 = vmatpush1.msra.mxu0 %v7798
        %8589 = vmatprep.subr.mxu0 0.0
        %8590 = vmatpush1.msra.mxu0 %v7799
        %8591 = vmatprep.subr.mxu0 0.0
        %8592 = vmatpush1.msra.mxu0 %v7800
        %8593 = vmatprep.subr.mxu0 0.0
        %8594 = vmatpush1.msra.mxu0 %v7801
        %8595 = vmatprep.subr.mxu0 0.0
        %8596 = vmatpush1.msra.mxu0 %v7802
        %8597 = vmatprep.subr.mxu0 0.0
        %8598 = vmatpush1.msra.mxu0 %v7803
        %8599 = vmatprep.subr.mxu0 0.0
        %8600 = vmatpush1.msra.mxu0 %v7804
        %8601 = vmatprep.mubr.f32.mxu0 %v8261
        %8602 = vmatmul.mubr.f32.gmra.mrb[0].mxu0 %v8253
        %v8603 = vpop.f32.mrb[0].mxu0
        %v8604 = vadd.f32 %v8534, %v8603
        %v8605 = vpop.f32.mrb[0].mxu0
        %8606 = vdwg.mxu0
        %8607 = vmatprep.subr.mxu0 0.0
        %8608 = vmatpush1.msra.mxu0 %v7805
        %8609 = vmatprep.subr.mxu0 0.0
        %8610 = vmatpush1.msra.mxu0 %v7806
        %8611 = vmatprep.subr.mxu0 0.0
        %8612 = vmatpush1.msra.mxu0 %v7807
        %8613 = vmatprep.subr.mxu0 0.0
        %8614 = vmatpush1.msra.mxu0 %v7808
        %8615 = vmatprep.subr.mxu0 0.0
        %8616 = vmatpush1.msra.mxu0 %v7809
        %8617 = vmatprep.subr.mxu0 0.0
        %8618 = vmatpush1.msra.mxu0 %v7810
        %8619 = vmatprep.subr.mxu0 0.0
        %8620 = vmatpush1.msra.mxu0 %v7811
        %8621 = vmatprep.subr.mxu0 0.0
        %8622 = vmatpush1.msra.mxu0 %v7812
        %8623 = vmatprep.subr.mxu0 0.0
        %8624 = vmatpush1.msra.mxu0 %v7813
        %8625 = vmatprep.subr.mxu0 0.0
        %8626 = vmatpush1.msra.mxu0 %v7814
        %8627 = vmatprep.subr.mxu0 0.0
        %8628 = vmatpush1.msra.mxu0 %v7815
        %8629 = vmatprep.subr.mxu0 0.0
        %8630 = vmatpush1.msra.mxu0 %v7816
        %8631 = vmatprep.subr.mxu0 0.0
        %8632 = vmatpush1.msra.mxu0 %v7817
        %8633 = vmatprep.subr.mxu0 0.0
        %8634 = vmatpush1.msra.mxu0 %v7818
        %8635 = vmatprep.subr.mxu0 0.0
        %8636 = vmatpush1.msra.mxu0 %v7819
        %8637 = vmatprep.subr.mxu0 0.0
        %8638 = vmatpush1.msra.mxu0 %v7820
        %8639 = vmatprep.subr.mxu0 0.0
        %8640 = vmatpush1.msra.mxu0 %v7821
        %8641 = vmatprep.subr.mxu0 0.0
        %8642 = vmatpush1.msra.mxu0 %v7822
        %8643 = vmatprep.subr.mxu0 0.0
        %8644 = vmatpush1.msra.mxu0 %v7823
        %8645 = vmatprep.subr.mxu0 0.0
        %8646 = vmatpush1.msra.mxu0 %v7824
        %8647 = vmatprep.subr.mxu0 0.0
        %8648 = vmatpush1.msra.mxu0 %v7825
        %8649 = vmatprep.subr.mxu0 0.0
        %8650 = vmatpush1.msra.mxu0 %v7826
        %8651 = vmatprep.subr.mxu0 0.0
        %8652 = vmatpush1.msra.mxu0 %v7827
        %8653 = vmatprep.subr.mxu0 0.0
        %8654 = vmatpush1.msra.mxu0 %v7828
        %8655 = vmatprep.subr.mxu0 0.0
        %8656 = vmatpush1.msra.mxu0 %v7829
        %8657 = vmatprep.subr.mxu0 0.0
        %8658 = vmatpush1.msra.mxu0 %v7830
        %8659 = vmatprep.subr.mxu0 0.0
        %8660 = vmatpush1.msra.mxu0 %v7831
        %8661 = vmatprep.subr.mxu0 0.0
        %8662 = vmatpush1.msra.mxu0 %v7832
        %8663 = vmatprep.subr.mxu0 0.0
        %8664 = vmatpush1.msra.mxu0 %v7833
        %8665 = vmatprep.subr.mxu0 0.0
        %8666 = vmatpush1.msra.mxu0 %v7834
        %8667 = vmatprep.subr.mxu0 0.0
        %8668 = vmatpush1.msra.mxu0 %v7835
        %8669 = vmatprep.subr.mxu0 0.0
        %8670 = vmatpush1.msra.mxu0 %v7836
        %8671 = vmatprep.mubr.f32.mxu0 %v8262
        %8672 = vmatmul.mubr.f32.gmra.mrb[0].mxu0 %v8260
        %v8673 = vpop.f32.mrb[0].mxu0
        %v8674 = vadd.f32 %v8604, %v8673
        %v8675 = vpop.f32.mrb[0].mxu0
        %8676 = vdwg.mxu0
        %8677 = vmatprep.subr.mxu0 0.0
        %8678 = vmatpush1.msra.mxu0 %v7837
        %8679 = vmatprep.subr.mxu0 0.0
        %8680 = vmatpush1.msra.mxu0 %v7838
        %8681 = vmatprep.subr.mxu0 0.0
        %8682 = vmatpush1.msra.mxu0 %v7839
        %8683 = vmatprep.subr.mxu0 0.0
        %8684 = vmatpush1.msra.mxu0 %v7840
        %8685 = vmatprep.subr.mxu0 0.0
        %8686 = vmatpush1.msra.mxu0 %v7841
        %8687 = vmatprep.subr.mxu0 0.0
        %8688 = vmatpush1.msra.mxu0 %v7842
        %8689 = vmatprep.subr.mxu0 0.0
        %8690 = vmatpush1.msra.mxu0 %v7843
        %8691 = vmatprep.subr.mxu0 0.0
        %8692 = vmatpush1.msra.mxu0 %v7844
        %8693 = vmatprep.subr.mxu0 0.0
        %8694 = vmatpush1.msra.mxu0 %v7845
        %8695 = vmatprep.subr.mxu0 0.0
        %8696 = vmatpush1.msra.mxu0 %v7846
        %8697 = vmatprep.subr.mxu0 0.0
        %8698 = vmatpush1.msra.mxu0 %v7847
        %8699 = vmatprep.subr.mxu0 0.0
        %8700 = vmatpush1.msra.mxu0 %v7848
        %8701 = vmatprep.subr.mxu0 0.0
        %8702 = vmatpush1.msra.mxu0 %v7849
        %8703 = vmatprep.subr.mxu0 0.0
        %8704 = vmatpush1.msra.mxu0 %v7850
        %8705 = vmatprep.subr.mxu0 0.0
        %8706 = vmatpush1.msra.mxu0 %v7851
        %8707 = vmatprep.subr.mxu0 0.0
        %8708 = vmatpush1.msra.mxu0 %v7852
        %8709 = vmatprep.subr.mxu0 0.0
        %8710 = vmatpush1.msra.mxu0 %v7853
        %8711 = vmatprep.subr.mxu0 0.0
        %8712 = vmatpush1.msra.mxu0 %v7854
        %8713 = vmatprep.subr.mxu0 0.0
        %8714 = vmatpush1.msra.mxu0 %v7855
        %8715 = vmatprep.subr.mxu0 0.0
        %8716 = vmatpush1.msra.mxu0 %v7856
        %8717 = vmatprep.subr.mxu0 0.0
        %8718 = vmatpush1.msra.mxu0 %v7857
        %8719 = vmatprep.subr.mxu0 0.0
        %8720 = vmatpush1.msra.mxu0 %v7858
        %8721 = vmatprep.subr.mxu0 0.0
        %8722 = vmatpush1.msra.mxu0 %v7859
        %8723 = vmatprep.subr.mxu0 0.0
        %8724 = vmatpush1.msra.mxu0 %v7860
        %8725 = vmatprep.subr.mxu0 0.0
        %8726 = vmatpush1.msra.mxu0 %v7861
        %8727 = vmatprep.subr.mxu0 0.0
        %8728 = vmatpush1.msra.mxu0 %v7862
        %8729 = vmatprep.subr.mxu0 0.0
        %8730 = vmatpush1.msra.mxu0 %v7863
        %8731 = vmatprep.subr.mxu0 0.0
        %8732 = vmatpush1.msra.mxu0 %v7864
        %8733 = vmatprep.subr.mxu0 0.0
        %8734 = vmatpush1.msra.mxu0 %v7865
        %8735 = vmatprep.subr.mxu0 0.0
        %8736 = vmatpush1.msra.mxu0 %v7866
        %8737 = vmatprep.subr.mxu0 0.0
        %8738 = vmatpush1.msra.mxu0 %v7867
        %8739 = vmatprep.subr.mxu0 0.0
        %8740 = vmatpush1.msra.mxu0 %v7868
        %8741 = vmatprep.mubr.f32.mxu0 %v8278
        %8742 = vmatmul.mubr.f32.gmra.mrb[0].mxu0 %v8270
        %v8743 = vpop.f32.mrb[0].mxu0
        %v8744 = vadd.f32 %v8674, %v8743
        %v8745 = vpop.f32.mrb[0].mxu0
        %8746 = vdwg.mxu0
        %8747 = vmatprep.subr.mxu0 0.0
        %8748 = vmatpush1.msra.mxu0 %v7869
        %8749 = vmatprep.subr.mxu0 0.0
        %8750 = vmatpush1.msra.mxu0 %v7870
        %8751 = vmatprep.subr.mxu0 0.0
        %8752 = vmatpush1.msra.mxu0 %v7871
        %8753 = vmatprep.subr.mxu0 0.0
        %8754 = vmatpush1.msra.mxu0 %v7872
        %8755 = vmatprep.subr.mxu0 0.0
        %8756 = vmatpush1.msra.mxu0 %v7873
        %8757 = vmatprep.subr.mxu0 0.0
        %8758 = vmatpush1.msra.mxu0 %v7874
        %8759 = vmatprep.subr.mxu0 0.0
        %8760 = vmatpush1.msra.mxu0 %v7875
        %8761 = vmatprep.subr.mxu0 0.0
        %8762 = vmatpush1.msra.mxu0 %v7876
        %8763 = vmatprep.subr.mxu0 0.0
        %8764 = vmatpush1.msra.mxu0 %v7877
        %8765 = vmatprep.subr.mxu0 0.0
        %8766 = vmatpush1.msra.mxu0 %v7878
        %8767 = vmatprep.subr.mxu0 0.0
        %8768 = vmatpush1.msra.mxu0 %v7879
        %8769 = vmatprep.subr.mxu0 0.0
        %8770 = vmatpush1.msra.mxu0 %v7880
        %8771 = vmatprep.subr.mxu0 0.0
        %8772 = vmatpush1.msra.mxu0 %v7881
        %8773 = vmatprep.subr.mxu0 0.0
        %8774 = vmatpush1.msra.mxu0 %v7882
        %8775 = vmatprep.subr.mxu0 0.0
        %8776 = vmatpush1.msra.mxu0 %v7883
        %8777 = vmatprep.subr.mxu0 0.0
        %8778 = vmatpush1.msra.mxu0 %v7884
        %8779 = vmatprep.subr.mxu0 0.0
        %8780 = vmatpush1.msra.mxu0 %v7885
        %8781 = vmatprep.subr.mxu0 0.0
        %8782 = vmatpush1.msra.mxu0 %v7886
        %8783 = vmatprep.subr.mxu0 0.0
        %8784 = vmatpush1.msra.mxu0 %v7887
        %8785 = vmatprep.subr.mxu0 0.0
        %8786 = vmatpush1.msra.mxu0 %v7888
        %8787 = vmatprep.subr.mxu0 0.0
        %8788 = vmatpush1.msra.mxu0 %v7889
        %8789 = vmatprep.subr.mxu0 0.0
        %8790 = vmatpush1.msra.mxu0 %v7890
        %8791 = vmatprep.subr.mxu0 0.0
        %8792 = vmatpush1.msra.mxu0 %v7891
        %8793 = vmatprep.subr.mxu0 0.0
        %8794 = vmatpush1.msra.mxu0 %v7892
        %8795 = vmatprep.subr.mxu0 0.0
        %8796 = vmatpush1.msra.mxu0 %v7893
        %8797 = vmatprep.subr.mxu0 0.0
        %8798 = vmatpush1.msra.mxu0 %v7894
        %8799 = vmatprep.subr.mxu0 0.0
        %8800 = vmatpush1.msra.mxu0 %v7895
        %8801 = vmatprep.subr.mxu0 0.0
        %8802 = vmatpush1.msra.mxu0 %v7896
        %8803 = vmatprep.subr.mxu0 0.0
        %8804 = vmatpush1.msra.mxu0 %v7897
        %8805 = vmatprep.subr.mxu0 0.0
        %8806 = vmatpush1.msra.mxu0 %v7898
        %8807 = vmatprep.subr.mxu0 0.0
        %8808 = vmatpush1.msra.mxu0 %v7899
        %8809 = vmatprep.subr.mxu0 0.0
        %8810 = vmatpush1.msra.mxu0 %v7900
        %8811 = vmatprep.mubr.f32.mxu0 %v8279
        %8812 = vmatmul.mubr.f32.gmra.mrb[0].mxu0 %v8277
        %v8813 = vpop.f32.mrb[0].mxu0
        %v8814 = vadd.f32 %v8744, %v8813
        %v8815 = vpop.f32.mrb[0].mxu0
        %8816 = vdwg.mxu0
        %8817 = vmatprep.subr.mxu0 0.0
        %8818 = vmatpush1.msra.mxu0 %v7901
        %8819 = vmatprep.subr.mxu0 0.0
        %8820 = vmatpush1.msra.mxu0 %v7902
        %8821 = vmatprep.subr.mxu0 0.0
        %8822 = vmatpush1.msra.mxu0 %v7903
        %8823 = vmatprep.subr.mxu0 0.0
        %8824 = vmatpush1.msra.mxu0 %v7904
        %8825 = vmatprep.subr.mxu0 0.0
        %8826 = vmatpush1.msra.mxu0 %v7905
        %8827 = vmatprep.subr.mxu0 0.0
        %8828 = vmatpush1.msra.mxu0 %v7906
        %8829 = vmatprep.subr.mxu0 0.0
        %8830 = vmatpush1.msra.mxu0 %v7907
        %8831 = vmatprep.subr.mxu0 0.0
        %8832 = vmatpush1.msra.mxu0 %v7908
        %8833 = vmatprep.subr.mxu0 0.0
        %8834 = vmatpush1.msra.mxu0 %v7909
        %8835 = vmatprep.subr.mxu0 0.0
        %8836 = vmatpush1.msra.mxu0 %v7910
        %8837 = vmatprep.subr.mxu0 0.0
        %8838 = vmatpush1.msra.mxu0 %v7911
        %8839 = vmatprep.subr.mxu0 0.0
        %8840 = vmatpush1.msra.mxu0 %v7912
        %8841 = vmatprep.subr.mxu0 0.0
        %8842 = vmatpush1.msra.mxu0 %v7913
        %8843 = vmatprep.subr.mxu0 0.0
        %8844 = vmatpush1.msra.mxu0 %v7914
        %8845 = vmatprep.subr.mxu0 0.0
        %8846 = vmatpush1.msra.mxu0 %v7915
        %8847 = vmatprep.subr.mxu0 0.0
        %8848 = vmatpush1.msra.mxu0 %v7916
        %8849 = vmatprep.subr.mxu0 0.0
        %8850 = vmatpush1.msra.mxu0 %v7917
        %8851 = vmatprep.subr.mxu0 0.0
        %8852 = vmatpush1.msra.mxu0 %v7918
        %8853 = vmatprep.subr.mxu0 0.0
        %8854 = vmatpush1.msra.mxu0 %v7919
        %8855 = vmatprep.subr.mxu0 0.0
        %8856 = vmatpush1.msra.mxu0 %v7920
        %8857 = vmatprep.subr.mxu0 0.0
        %8858 = vmatpush1.msra.mxu0 %v7921
        %8859 = vmatprep.subr.mxu0 0.0
        %8860 = vmatpush1.msra.mxu0 %v7922
        %8861 = vmatprep.subr.mxu0 0.0
        %8862 = vmatpush1.msra.mxu0 %v7923
        %8863 = vmatprep.subr.mxu0 0.0
        %8864 = vmatpush1.msra.mxu0 %v7924
        %8865 = vmatprep.subr.mxu0 0.0
        %8866 = vmatpush1.msra.mxu0 %v7925
        %8867 = vmatprep.subr.mxu0 0.0
        %8868 = vmatpush1.msra.mxu0 %v7926
        %8869 = vmatprep.subr.mxu0 0.0
        %8870 = vmatpush1.msra.mxu0 %v7927
        %8871 = vmatprep.subr.mxu0 0.0
        %8872 = vmatpush1.msra.mxu0 %v7928
        %8873 = vmatprep.subr.mxu0 0.0
        %8874 = vmatpush1.msra.mxu0 %v7929
        %8875 = vmatprep.subr.mxu0 0.0
        %8876 = vmatpush1.msra.mxu0 %v7930
        %8877 = vmatprep.subr.mxu0 0.0
        %8878 = vmatpush1.msra.mxu0 %v7931
        %8879 = vmatprep.subr.mxu0 0.0
        %8880 = vmatpush1.msra.mxu0 %v7932
        %8881 = vmatprep.mubr.f32.mxu0 %v8295
        %8882 = vmatmul.mubr.f32.gmra.mrb[0].mxu0 %v8287
        %v8883 = vpop.f32.mrb[0].mxu0
        %v8884 = vadd.f32 %v8814, %v8883
        %v8885 = vpop.f32.mrb[0].mxu0
        %8886 = vdwg.mxu0
        %8887 = vmatprep.subr.mxu0 0.0
        %8888 = vmatpush1.msra.mxu0 %v7933
        %8889 = vmatprep.subr.mxu0 0.0
        %8890 = vmatpush1.msra.mxu0 %v7934
        %8891 = vmatprep.subr.mxu0 0.0
        %8892 = vmatpush1.msra.mxu0 %v7935
        %8893 = vmatprep.subr.mxu0 0.0
        %8894 = vmatpush1.msra.mxu0 %v7936
        %8895 = vmatprep.subr.mxu0 0.0
        %8896 = vmatpush1.msra.mxu0 %v7937
        %8897 = vmatprep.subr.mxu0 0.0
        %8898 = vmatpush1.msra.mxu0 %v7938
        %8899 = vmatprep.subr.mxu0 0.0
        %8900 = vmatpush1.msra.mxu0 %v7939
        %8901 = vmatprep.subr.mxu0 0.0
        %8902 = vmatpush1.msra.mxu0 %v7940
        %8903 = vmatprep.subr.mxu0 0.0
        %8904 = vmatpush1.msra.mxu0 %v7941
        %8905 = vmatprep.subr.mxu0 0.0
        %8906 = vmatpush1.msra.mxu0 %v7942
        %8907 = vmatprep.subr.mxu0 0.0
        %8908 = vmatpush1.msra.mxu0 %v7943
        %8909 = vmatprep.subr.mxu0 0.0
        %8910 = vmatpush1.msra.mxu0 %v7944
        %8911 = vmatprep.subr.mxu0 0.0
        %8912 = vmatpush1.msra.mxu0 %v7945
        %8913 = vmatprep.subr.mxu0 0.0
        %8914 = vmatpush1.msra.mxu0 %v7946
        %8915 = vmatprep.subr.mxu0 0.0
        %8916 = vmatpush1.msra.mxu0 %v7947
        %8917 = vmatprep.subr.mxu0 0.0
        %8918 = vmatpush1.msra.mxu0 %v7948
        %8919 = vmatprep.subr.mxu0 0.0
        %8920 = vmatpush1.msra.mxu0 %v7949
        %8921 = vmatprep.subr.mxu0 0.0
        %8922 = vmatpush1.msra.mxu0 %v7950
        %8923 = vmatprep.subr.mxu0 0.0
        %8924 = vmatpush1.msra.mxu0 %v7951
        %8925 = vmatprep.subr.mxu0 0.0
        %8926 = vmatpush1.msra.mxu0 %v7952
        %8927 = vmatprep.subr.mxu0 0.0
        %8928 = vmatpush1.msra.mxu0 %v7953
        %8929 = vmatprep.subr.mxu0 0.0
        %8930 = vmatpush1.msra.mxu0 %v7954
        %8931 = vmatprep.subr.mxu0 0.0
        %8932 = vmatpush1.msra.mxu0 %v7955
        %8933 = vmatprep.subr.mxu0 0.0
        %8934 = vmatpush1.msra.mxu0 %v7956
        %8935 = vmatprep.subr.mxu0 0.0
        %8936 = vmatpush1.msra.mxu0 %v7957
        %8937 = vmatprep.subr.mxu0 0.0
        %8938 = vmatpush1.msra.mxu0 %v7958
        %8939 = vmatprep.subr.mxu0 0.0
        %8940 = vmatpush1.msra.mxu0 %v7959
        %8941 = vmatprep.subr.mxu0 0.0
        %8942 = vmatpush1.msra.mxu0 %v7960
        %8943 = vmatprep.subr.mxu0 0.0
        %8944 = vmatpush1.msra.mxu0 %v7961
        %8945 = vmatprep.subr.mxu0 0.0
        %8946 = vmatpush1.msra.mxu0 %v7962
        %8947 = vmatprep.subr.mxu0 0.0
        %8948 = vmatpush1.msra.mxu0 %v7963
        %8949 = vmatprep.subr.mxu0 0.0
        %8950 = vmatpush1.msra.mxu0 %v7964
        %8951 = vmatprep.mubr.f32.mxu0 %v8296
        %8952 = vmatmul.mubr.f32.gmra.mrb[0].mxu0 %v8294
        %v8953 = vpop.f32.mrb[0].mxu0
        %v8954 = vadd.f32 %v8884, %v8953
        %v8955 = vpop.f32.mrb[0].mxu0
        %8956 = vdwg.mxu0
        %8957 = vmatprep.subr.mxu0 0.0
        %8958 = vmatpush1.msra.mxu0 %v7965
        %8959 = vmatprep.subr.mxu0 0.0
        %8960 = vmatpush1.msra.mxu0 %v7966
        %8961 = vmatprep.subr.mxu0 0.0
        %8962 = vmatpush1.msra.mxu0 %v7967
        %8963 = vmatprep.subr.mxu0 0.0
        %8964 = vmatpush1.msra.mxu0 %v7968
        %8965 = vmatprep.subr.mxu0 0.0
        %8966 = vmatpush1.msra.mxu0 %v7969
        %8967 = vmatprep.subr.mxu0 0.0
        %8968 = vmatpush1.msra.mxu0 %v7970
        %8969 = vmatprep.subr.mxu0 0.0
        %8970 = vmatpush1.msra.mxu0 %v7971
        %8971 = vmatprep.subr.mxu0 0.0
        %8972 = vmatpush1.msra.mxu0 %v7972
        %8973 = vmatprep.subr.mxu0 0.0
        %8974 = vmatpush1.msra.mxu0 %v7973
        %8975 = vmatprep.subr.mxu0 0.0
        %8976 = vmatpush1.msra.mxu0 %v7974
        %8977 = vmatprep.subr.mxu0 0.0
        %8978 = vmatpush1.msra.mxu0 %v7975
        %8979 = vmatprep.subr.mxu0 0.0
        %8980 = vmatpush1.msra.mxu0 %v7976
        %8981 = vmatprep.subr.mxu0 0.0
        %8982 = vmatpush1.msra.mxu0 %v7977
        %8983 = vmatprep.subr.mxu0 0.0
        %8984 = vmatpush1.msra.mxu0 %v7978
        %8985 = vmatprep.subr.mxu0 0.0
        %8986 = vmatpush1.msra.mxu0 %v7979
        %8987 = vmatprep.subr.mxu0 0.0
        %8988 = vmatpush1.msra.mxu0 %v7980
        %8989 = vmatprep.subr.mxu0 0.0
        %8990 = vmatpush1.msra.mxu0 %v7981
        %8991 = vmatprep.subr.mxu0 0.0
        %8992 = vmatpush1.msra.mxu0 %v7982
        %8993 = vmatprep.subr.mxu0 0.0
        %8994 = vmatpush1.msra.mxu0 %v7983
        %8995 = vmatprep.subr.mxu0 0.0
        %8996 = vmatpush1.msra.mxu0 %v7984
        %8997 = vmatprep.subr.mxu0 0.0
        %8998 = vmatpush1.msra.mxu0 %v7985
        %8999 = vmatprep.subr.mxu0 0.0
        %9000 = vmatpush1.msra.mxu0 %v7986
        %9001 = vmatprep.subr.mxu0 0.0
        %9002 = vmatpush1.msra.mxu0 %v7987
        %9003 = vmatprep.subr.mxu0 0.0
        %9004 = vmatpush1.msra.mxu0 %v7988
        %9005 = vmatprep.subr.mxu0 0.0
        %9006 = vmatpush1.msra.mxu0 %v7989
        %9007 = vmatprep.subr.mxu0 0.0
        %9008 = vmatpush1.msra.mxu0 %v7990
        %9009 = vmatprep.subr.mxu0 0.0
        %9010 = vmatpush1.msra.mxu0 %v7991
        %9011 = vmatprep.subr.mxu0 0.0
        %9012 = vmatpush1.msra.mxu0 %v7992
        %9013 = vmatprep.subr.mxu0 0.0
        %9014 = vmatpush1.msra.mxu0 %v7993
        %9015 = vmatprep.subr.mxu0 0.0
        %9016 = vmatpush1.msra.mxu0 %v7994
        %9017 = vmatprep.subr.mxu0 0.0
        %9018 = vmatpush1.msra.mxu0 %v7995
        %9019 = vmatprep.subr.mxu0 0.0
        %9020 = vmatpush1.msra.mxu0 %v7996
        %9021 = vmatprep.mubr.f32.mxu0 %v8312
        %9022 = vmatmul.mubr.f32.gmra.mrb[0].mxu0 %v8304
        %v9023 = vpop.f32.mrb[0].mxu0
        %v9024 = vadd.f32 %v8954, %v9023
        %v9025 = vpop.f32.mrb[0].mxu0
        %9026 = vdwg.mxu0
        %9027 = vmatprep.subr.mxu0 0.0
        %9028 = vmatpush1.msra.mxu0 %v7997
        %9029 = vmatprep.subr.mxu0 0.0
        %9030 = vmatpush1.msra.mxu0 %v7998
        %9031 = vmatprep.subr.mxu0 0.0
        %9032 = vmatpush1.msra.mxu0 %v7999
        %9033 = vmatprep.subr.mxu0 0.0
        %9034 = vmatpush1.msra.mxu0 %v8000
        %9035 = vmatprep.subr.mxu0 0.0
        %9036 = vmatpush1.msra.mxu0 %v8001
        %9037 = vmatprep.subr.mxu0 0.0
        %9038 = vmatpush1.msra.mxu0 %v8002
        %9039 = vmatprep.subr.mxu0 0.0
        %9040 = vmatpush1.msra.mxu0 %v8003
        %9041 = vmatprep.subr.mxu0 0.0
        %9042 = vmatpush1.msra.mxu0 %v8004
        %9043 = vmatprep.subr.mxu0 0.0
        %9044 = vmatpush1.msra.mxu0 %v8005
        %9045 = vmatprep.subr.mxu0 0.0
        %9046 = vmatpush1.msra.mxu0 %v8006
        %9047 = vmatprep.subr.mxu0 0.0
        %9048 = vmatpush1.msra.mxu0 %v8007
        %9049 = vmatprep.subr.mxu0 0.0
        %9050 = vmatpush1.msra.mxu0 %v8008
        %9051 = vmatprep.subr.mxu0 0.0
        %9052 = vmatpush1.msra.mxu0 %v8009
        %9053 = vmatprep.subr.mxu0 0.0
        %9054 = vmatpush1.msra.mxu0 %v8010
        %9055 = vmatprep.subr.mxu0 0.0
        %9056 = vmatpush1.msra.mxu0 %v8011
        %9057 = vmatprep.subr.mxu0 0.0
        %9058 = vmatpush1.msra.mxu0 %v8012
        %9059 = vmatprep.subr.mxu0 0.0
        %9060 = vmatpush1.msra.mxu0 %v8013
        %9061 = vmatprep.subr.mxu0 0.0
        %9062 = vmatpush1.msra.mxu0 %v8014
        %9063 = vmatprep.subr.mxu0 0.0
        %9064 = vmatpush1.msra.mxu0 %v8015
        %9065 = vmatprep.subr.mxu0 0.0
        %9066 = vmatpush1.msra.mxu0 %v8016
        %9067 = vmatprep.subr.mxu0 0.0
        %9068 = vmatpush1.msra.mxu0 %v8017
        %9069 = vmatprep.subr.mxu0 0.0
        %9070 = vmatpush1.msra.mxu0 %v8018
        %9071 = vmatprep.subr.mxu0 0.0
        %9072 = vmatpush1.msra.mxu0 %v8019
        %9073 = vmatprep.subr.mxu0 0.0
        %9074 = vmatpush1.msra.mxu0 %v8020
        %9075 = vmatprep.subr.mxu0 0.0
        %9076 = vmatpush1.msra.mxu0 %v8021
        %9077 = vmatprep.subr.mxu0 0.0
        %9078 = vmatpush1.msra.mxu0 %v8022
        %9079 = vmatprep.subr.mxu0 0.0
        %9080 = vmatpush1.msra.mxu0 %v8023
        %9081 = vmatprep.subr.mxu0 0.0
        %9082 = vmatpush1.msra.mxu0 %v8024
        %9083 = vmatprep.subr.mxu0 0.0
        %9084 = vmatpush1.msra.mxu0 %v8025
        %9085 = vmatprep.subr.mxu0 0.0
        %9086 = vmatpush1.msra.mxu0 %v8026
        %9087 = vmatprep.subr.mxu0 0.0
        %9088 = vmatpush1.msra.mxu0 %v8027
        %9089 = vmatprep.subr.mxu0 0.0
        %9090 = vmatpush1.msra.mxu0 %v8028
        %9091 = vmatprep.mubr.f32.mxu0 %v8313
        %9092 = vmatmul.mubr.f32.gmra.mrb[0].mxu0 %v8311
        %v9093 = vpop.f32.mrb[0].mxu0
        %v9094 = vadd.f32 %v9024, %v9093
        %v9095 = vpop.f32.mrb[0].mxu0
        %9096 = vdwg.mxu0
        %9097 = vmatprep.subr.mxu0 0.0
        %9098 = vmatpush1.msra.mxu0 %v8029
        %9099 = vmatprep.subr.mxu0 0.0
        %9100 = vmatpush1.msra.mxu0 %v8030
        %9101 = vmatprep.subr.mxu0 0.0
        %9102 = vmatpush1.msra.mxu0 %v8031
        %9103 = vmatprep.subr.mxu0 0.0
        %9104 = vmatpush1.msra.mxu0 %v8032
        %9105 = vmatprep.subr.mxu0 0.0
        %9106 = vmatpush1.msra.mxu0 %v8033
        %9107 = vmatprep.subr.mxu0 0.0
        %9108 = vmatpush1.msra.mxu0 %v8034
        %9109 = vmatprep.subr.mxu0 0.0
        %9110 = vmatpush1.msra.mxu0 %v8035
        %9111 = vmatprep.subr.mxu0 0.0
        %9112 = vmatpush1.msra.mxu0 %v8036
        %9113 = vmatprep.subr.mxu0 0.0
        %9114 = vmatpush1.msra.mxu0 %v8037
        %9115 = vmatprep.subr.mxu0 0.0
        %9116 = vmatpush1.msra.mxu0 %v8038
        %9117 = vmatprep.subr.mxu0 0.0
        %9118 = vmatpush1.msra.mxu0 %v8039
        %9119 = vmatprep.subr.mxu0 0.0
        %9120 = vmatpush1.msra.mxu0 %v8040
        %9121 = vmatprep.subr.mxu0 0.0
        %9122 = vmatpush1.msra.mxu0 %v8041
        %9123 = vmatprep.subr.mxu0 0.0
        %9124 = vmatpush1.msra.mxu0 %v8042
        %9125 = vmatprep.subr.mxu0 0.0
        %9126 = vmatpush1.msra.mxu0 %v8043
        %9127 = vmatprep.subr.mxu0 0.0
        %9128 = vmatpush1.msra.mxu0 %v8044
        %9129 = vmatprep.subr.mxu0 0.0
        %9130 = vmatpush1.msra.mxu0 %v8045
        %9131 = vmatprep.subr.mxu0 0.0
        %9132 = vmatpush1.msra.mxu0 %v8046
        %9133 = vmatprep.subr.mxu0 0.0
        %9134 = vmatpush1.msra.mxu0 %v8047
        %9135 = vmatprep.subr.mxu0 0.0
        %9136 = vmatpush1.msra.mxu0 %v8048
        %9137 = vmatprep.subr.mxu0 0.0
        %9138 = vmatpush1.msra.mxu0 %v8049
        %9139 = vmatprep.subr.mxu0 0.0
        %9140 = vmatpush1.msra.mxu0 %v8050
        %9141 = vmatprep.subr.mxu0 0.0
        %9142 = vmatpush1.msra.mxu0 %v8051
        %9143 = vmatprep.subr.mxu0 0.0
        %9144 = vmatpush1.msra.mxu0 %v8052
        %9145 = vmatprep.subr.mxu0 0.0
        %9146 = vmatpush1.msra.mxu0 %v8053
        %9147 = vmatprep.subr.mxu0 0.0
        %9148 = vmatpush1.msra.mxu0 %v8054
        %9149 = vmatprep.subr.mxu0 0.0
        %9150 = vmatpush1.msra.mxu0 %v8055
        %9151 = vmatprep.subr.mxu0 0.0
        %9152 = vmatpush1.msra.mxu0 %v8056
        %9153 = vmatprep.subr.mxu0 0.0
        %9154 = vmatpush1.msra.mxu0 %v8057
        %9155 = vmatprep.subr.mxu0 0.0
        %9156 = vmatpush1.msra.mxu0 %v8058
        %9157 = vmatprep.subr.mxu0 0.0
        %9158 = vmatpush1.msra.mxu0 %v8059
        %9159 = vmatprep.subr.mxu0 0.0
        %9160 = vmatpush1.msra.mxu0 %v8060
        %9161 = vmatprep.mubr.f32.mxu0 %v8329
        %9162 = vmatmul.mubr.f32.gmra.mrb[0].mxu0 %v8321
        %v9163 = vpop.f32.mrb[0].mxu0
        %v9164 = vadd.f32 %v9094, %v9163
        %v9165 = vpop.f32.mrb[0].mxu0
        %9166 = vdwg.mxu0
        %9167 = vmatprep.subr.mxu0 0.0
        %9168 = vmatpush1.msra.mxu0 %v8061
        %9169 = vmatprep.subr.mxu0 0.0
        %9170 = vmatpush1.msra.mxu0 %v8062
        %9171 = vmatprep.subr.mxu0 0.0
        %9172 = vmatpush1.msra.mxu0 %v8063
        %9173 = vmatprep.subr.mxu0 0.0
        %9174 = vmatpush1.msra.mxu0 %v8064
        %9175 = vmatprep.subr.mxu0 0.0
        %9176 = vmatpush1.msra.mxu0 %v8065
        %9177 = vmatprep.subr.mxu0 0.0
        %9178 = vmatpush1.msra.mxu0 %v8066
        %9179 = vmatprep.subr.mxu0 0.0
        %9180 = vmatpush1.msra.mxu0 %v8067
        %9181 = vmatprep.subr.mxu0 0.0
        %9182 = vmatpush1.msra.mxu0 %v8068
        %9183 = vmatprep.subr.mxu0 0.0
        %9184 = vmatpush1.msra.mxu0 %v8069
        %9185 = vmatprep.subr.mxu0 0.0
        %9186 = vmatpush1.msra.mxu0 %v8070
        %9187 = vmatprep.subr.mxu0 0.0
        %9188 = vmatpush1.msra.mxu0 %v8071
        %9189 = vmatprep.subr.mxu0 0.0
        %9190 = vmatpush1.msra.mxu0 %v8072
        %9191 = vmatprep.subr.mxu0 0.0
        %9192 = vmatpush1.msra.mxu0 %v8073
        %9193 = vmatprep.subr.mxu0 0.0
        %9194 = vmatpush1.msra.mxu0 %v8074
        %9195 = vmatprep.subr.mxu0 0.0
        %9196 = vmatpush1.msra.mxu0 %v8075
        %9197 = vmatprep.subr.mxu0 0.0
        %9198 = vmatpush1.msra.mxu0 %v8076
        %9199 = vmatprep.subr.mxu0 0.0
        %9200 = vmatpush1.msra.mxu0 %v8077
        %9201 = vmatprep.subr.mxu0 0.0
        %9202 = vmatpush1.msra.mxu0 %v8078
        %9203 = vmatprep.subr.mxu0 0.0
        %9204 = vmatpush1.msra.mxu0 %v8079
        %9205 = vmatprep.subr.mxu0 0.0
        %9206 = vmatpush1.msra.mxu0 %v8080
        %9207 = vmatprep.subr.mxu0 0.0
        %9208 = vmatpush1.msra.mxu0 %v8081
        %9209 = vmatprep.subr.mxu0 0.0
        %9210 = vmatpush1.msra.mxu0 %v8082
        %9211 = vmatprep.subr.mxu0 0.0
        %9212 = vmatpush1.msra.mxu0 %v8083
        %9213 = vmatprep.subr.mxu0 0.0
        %9214 = vmatpush1.msra.mxu0 %v8084
        %9215 = vmatprep.subr.mxu0 0.0
        %9216 = vmatpush1.msra.mxu0 %v8085
        %9217 = vmatprep.subr.mxu0 0.0
        %9218 = vmatpush1.msra.mxu0 %v8086
        %9219 = vmatprep.subr.mxu0 0.0
        %9220 = vmatpush1.msra.mxu0 %v8087
        %9221 = vmatprep.subr.mxu0 0.0
        %9222 = vmatpush1.msra.mxu0 %v8088
        %9223 = vmatprep.subr.mxu0 0.0
        %9224 = vmatpush1.msra.mxu0 %v8089
        %9225 = vmatprep.subr.mxu0 0.0
        %9226 = vmatpush1.msra.mxu0 %v8090
        %9227 = vmatprep.subr.mxu0 0.0
        %9228 = vmatpush1.msra.mxu0 %v8091
        %9229 = vmatprep.subr.mxu0 0.0
        %9230 = vmatpush1.msra.mxu0 %v8092
        %9231 = vmatprep.mubr.f32.mxu0 %v8330
        %9232 = vmatmul.mubr.f32.gmra.mrb[0].mxu0 %v8328
        %v9233 = vpop.f32.mrb[0].mxu0
        %v9234 = vadd.f32 %v9164, %v9233
        %v9235 = vpop.f32.mrb[0].mxu0
        %9236 = vdwg.mxu0
        %9237 = vmatprep.subr.mxu0 0.0
        %9238 = vmatpush1.msra.mxu0 %v8093
        %9239 = vmatprep.subr.mxu0 0.0
        %9240 = vmatpush1.msra.mxu0 %v8094
        %9241 = vmatprep.subr.mxu0 0.0
        %9242 = vmatpush1.msra.mxu0 %v8095
        %9243 = vmatprep.subr.mxu0 0.0
        %9244 = vmatpush1.msra.mxu0 %v8096
        %9245 = vmatprep.subr.mxu0 0.0
        %9246 = vmatpush1.msra.mxu0 %v8097
        %9247 = vmatprep.subr.mxu0 0.0
        %9248 = vmatpush1.msra.mxu0 %v8098
        %9249 = vmatprep.subr.mxu0 0.0
        %9250 = vmatpush1.msra.mxu0 %v8099
        %9251 = vmatprep.subr.mxu0 0.0
        %9252 = vmatpush1.msra.mxu0 %v8100
        %9253 = vmatprep.subr.mxu0 0.0
        %9254 = vmatpush1.msra.mxu0 %v8101
        %9255 = vmatprep.subr.mxu0 0.0
        %9256 = vmatpush1.msra.mxu0 %v8102
        %9257 = vmatprep.subr.mxu0 0.0
        %9258 = vmatpush1.msra.mxu0 %v8103
        %9259 = vmatprep.subr.mxu0 0.0
        %9260 = vmatpush1.msra.mxu0 %v8104
        %9261 = vmatprep.subr.mxu0 0.0
        %9262 = vmatpush1.msra.mxu0 %v8105
        %9263 = vmatprep.subr.mxu0 0.0
        %9264 = vmatpush1.msra.mxu0 %v8106
        %9265 = vmatprep.subr.mxu0 0.0
        %9266 = vmatpush1.msra.mxu0 %v8107
        %9267 = vmatprep.subr.mxu0 0.0
        %9268 = vmatpush1.msra.mxu0 %v8108
        %9269 = vmatprep.subr.mxu0 0.0
        %9270 = vmatpush1.msra.mxu0 %v8109
        %9271 = vmatprep.subr.mxu0 0.0
        %9272 = vmatpush1.msra.mxu0 %v8110
        %9273 = vmatprep.subr.mxu0 0.0
        %9274 = vmatpush1.msra.mxu0 %v8111
        %9275 = vmatprep.subr.mxu0 0.0
        %9276 = vmatpush1.msra.mxu0 %v8112
        %9277 = vmatprep.subr.mxu0 0.0
        %9278 = vmatpush1.msra.mxu0 %v8113
        %9279 = vmatprep.subr.mxu0 0.0
        %9280 = vmatpush1.msra.mxu0 %v8114
        %9281 = vmatprep.subr.mxu0 0.0
        %9282 = vmatpush1.msra.mxu0 %v8115
        %9283 = vmatprep.subr.mxu0 0.0
        %9284 = vmatpush1.msra.mxu0 %v8116
        %9285 = vmatprep.subr.mxu0 0.0
        %9286 = vmatpush1.msra.mxu0 %v8117
        %9287 = vmatprep.subr.mxu0 0.0
        %9288 = vmatpush1.msra.mxu0 %v8118
        %9289 = vmatprep.subr.mxu0 0.0
        %9290 = vmatpush1.msra.mxu0 %v8119
        %9291 = vmatprep.subr.mxu0 0.0
        %9292 = vmatpush1.msra.mxu0 %v8120
        %9293 = vmatprep.subr.mxu0 0.0
        %9294 = vmatpush1.msra.mxu0 %v8121
        %9295 = vmatprep.subr.mxu0 0.0
        %9296 = vmatpush1.msra.mxu0 %v8122
        %9297 = vmatprep.subr.mxu0 0.0
        %9298 = vmatpush1.msra.mxu0 %v8123
        %9299 = vmatprep.subr.mxu0 0.0
        %9300 = vmatpush1.msra.mxu0 %v8124
        %9301 = vmatprep.mubr.f32.mxu0 %v8346
        %9302 = vmatmul.mubr.f32.gmra.mrb[0].mxu0 %v8338
        %v9303 = vpop.f32.mrb[0].mxu0
        %v9304 = vadd.f32 %v9234, %v9303
        %v9305 = vpop.f32.mrb[0].mxu0
        %9306 = vdwg.mxu0
        %9307 = vmatprep.subr.mxu0 0.0
        %9308 = vmatpush1.msra.mxu0 %v8125
        %9309 = vmatprep.subr.mxu0 0.0
        %9310 = vmatpush1.msra.mxu0 %v8126
        %9311 = vmatprep.subr.mxu0 0.0
        %9312 = vmatpush1.msra.mxu0 %v8127
        %9313 = vmatprep.subr.mxu0 0.0
        %9314 = vmatpush1.msra.mxu0 %v8128
        %9315 = vmatprep.subr.mxu0 0.0
        %9316 = vmatpush1.msra.mxu0 %v8129
        %9317 = vmatprep.subr.mxu0 0.0
        %9318 = vmatpush1.msra.mxu0 %v8130
        %9319 = vmatprep.subr.mxu0 0.0
        %9320 = vmatpush1.msra.mxu0 %v8131
        %9321 = vmatprep.subr.mxu0 0.0
        %9322 = vmatpush1.msra.mxu0 %v8132
        %9323 = vmatprep.subr.mxu0 0.0
        %9324 = vmatpush1.msra.mxu0 %v8133
        %9325 = vmatprep.subr.mxu0 0.0
        %9326 = vmatpush1.msra.mxu0 %v8134
        %9327 = vmatprep.subr.mxu0 0.0
        %9328 = vmatpush1.msra.mxu0 %v8135
        %9329 = vmatprep.subr.mxu0 0.0
        %9330 = vmatpush1.msra.mxu0 %v8136
        %9331 = vmatprep.subr.mxu0 0.0
        %9332 = vmatpush1.msra.mxu0 %v8137
        %9333 = vmatprep.subr.mxu0 0.0
        %9334 = vmatpush1.msra.mxu0 %v8138
        %9335 = vmatprep.subr.mxu0 0.0
        %9336 = vmatpush1.msra.mxu0 %v8139
        %9337 = vmatprep.subr.mxu0 0.0
        %9338 = vmatpush1.msra.mxu0 %v8140
        %9339 = vmatprep.subr.mxu0 0.0
        %9340 = vmatpush1.msra.mxu0 %v8141
        %9341 = vmatprep.subr.mxu0 0.0
        %9342 = vmatpush1.msra.mxu0 %v8142
        %9343 = vmatprep.subr.mxu0 0.0
        %9344 = vmatpush1.msra.mxu0 %v8143
        %9345 = vmatprep.subr.mxu0 0.0
        %9346 = vmatpush1.msra.mxu0 %v8144
        %9347 = vmatprep.subr.mxu0 0.0
        %9348 = vmatpush1.msra.mxu0 %v8145
        %9349 = vmatprep.subr.mxu0 0.0
        %9350 = vmatpush1.msra.mxu0 %v8146
        %9351 = vmatprep.subr.mxu0 0.0
        %9352 = vmatpush1.msra.mxu0 %v8147
        %9353 = vmatprep.subr.mxu0 0.0
        %9354 = vmatpush1.msra.mxu0 %v8148
        %9355 = vmatprep.subr.mxu0 0.0
        %9356 = vmatpush1.msra.mxu0 %v8149
        %9357 = vmatprep.subr.mxu0 0.0
        %9358 = vmatpush1.msra.mxu0 %v8150
        %9359 = vmatprep.subr.mxu0 0.0
        %9360 = vmatpush1.msra.mxu0 %v8151
        %9361 = vmatprep.subr.mxu0 0.0
        %9362 = vmatpush1.msra.mxu0 %v8152
        %9363 = vmatprep.subr.mxu0 0.0
        %9364 = vmatpush1.msra.mxu0 %v8153
        %9365 = vmatprep.subr.mxu0 0.0
        %9366 = vmatpush1.msra.mxu0 %v8154
        %9367 = vmatprep.subr.mxu0 0.0
        %9368 = vmatpush1.msra.mxu0 %v8155
        %9369 = vmatprep.subr.mxu0 0.0
        %9370 = vmatpush1.msra.mxu0 %v8156
        %9371 = vmatprep.mubr.f32.mxu0 %v8347
        %9372 = vmatmul.mubr.f32.gmra.mrb[0].mxu0 %v8345
        %v9373 = vpop.f32.mrb[0].mxu0
        %v9374 = vadd.f32 %v9304, %v9373
        %v9375 = vpop.f32.mrb[0].mxu0
        %9376 = vdwg.mxu0
        %9377 = vmatprep.subr.mxu0 0.0
        %9378 = vmatpush1.msra.mxu0 %v8157
        %9379 = vmatprep.subr.mxu0 0.0
        %9380 = vmatpush1.msra.mxu0 %v8158
        %9381 = vmatprep.subr.mxu0 0.0
        %9382 = vmatpush1.msra.mxu0 %v8159
        %9383 = vmatprep.subr.mxu0 0.0
        %9384 = vmatpush1.msra.mxu0 %v8160
        %9385 = vmatprep.subr.mxu0 0.0
        %9386 = vmatpush1.msra.mxu0 %v8161
        %9387 = vmatprep.subr.mxu0 0.0
        %9388 = vmatpush1.msra.mxu0 %v8162
        %9389 = vmatprep.subr.mxu0 0.0
        %9390 = vmatpush1.msra.mxu0 %v8163
        %9391 = vmatprep.subr.mxu0 0.0
        %9392 = vmatpush1.msra.mxu0 %v8164
        %9393 = vmatprep.subr.mxu0 0.0
        %9394 = vmatpush1.msra.mxu0 %v8165
        %9395 = vmatprep.subr.mxu0 0.0
        %9396 = vmatpush1.msra.mxu0 %v8166
        %9397 = vmatprep.subr.mxu0 0.0
        %9398 = vmatpush1.msra.mxu0 %v8167
        %9399 = vmatprep.subr.mxu0 0.0
        %9400 = vmatpush1.msra.mxu0 %v8168
        %9401 = vmatprep.subr.mxu0 0.0
        %9402 = vmatpush1.msra.mxu0 %v8169
        %9403 = vmatprep.subr.mxu0 0.0
        %9404 = vmatpush1.msra.mxu0 %v8170
        %9405 = vmatprep.subr.mxu0 0.0
        %9406 = vmatpush1.msra.mxu0 %v8171
        %9407 = vmatprep.subr.mxu0 0.0
        %9408 = vmatpush1.msra.mxu0 %v8172
        %9409 = vmatprep.subr.mxu0 0.0
        %9410 = vmatpush1.msra.mxu0 %v8173
        %9411 = vmatprep.subr.mxu0 0.0
        %9412 = vmatpush1.msra.mxu0 %v8174
        %9413 = vmatprep.subr.mxu0 0.0
        %9414 = vmatpush1.msra.mxu0 %v8175
        %9415 = vmatprep.subr.mxu0 0.0
        %9416 = vmatpush1.msra.mxu0 %v8176
        %9417 = vmatprep.subr.mxu0 0.0
        %9418 = vmatpush1.msra.mxu0 %v8177
        %9419 = vmatprep.subr.mxu0 0.0
        %9420 = vmatpush1.msra.mxu0 %v8178
        %9421 = vmatprep.subr.mxu0 0.0
        %9422 = vmatpush1.msra.mxu0 %v8179
        %9423 = vmatprep.subr.mxu0 0.0
        %9424 = vmatpush1.msra.mxu0 %v8180
        %9425 = vmatprep.subr.mxu0 0.0
        %9426 = vmatpush1.msra.mxu0 %v8181
        %9427 = vmatprep.subr.mxu0 0.0
        %9428 = vmatpush1.msra.mxu0 %v8182
        %9429 = vmatprep.subr.mxu0 0.0
        %9430 = vmatpush1.msra.mxu0 %v8183
        %9431 = vmatprep.subr.mxu0 0.0
        %9432 = vmatpush1.msra.mxu0 %v8184
        %9433 = vmatprep.subr.mxu0 0.0
        %9434 = vmatpush1.msra.mxu0 %v8185
        %9435 = vmatprep.subr.mxu0 0.0
        %9436 = vmatpush1.msra.mxu0 %v8186
        %9437 = vmatprep.subr.mxu0 0.0
        %9438 = vmatpush1.msra.mxu0 %v8187
        %9439 = vmatprep.subr.mxu0 0.0
        %9440 = vmatpush1.msra.mxu0 %v8188
        %9441 = vmatprep.mubr.f32.mxu0 %v8363
        %9442 = vmatmul.mubr.f32.gmra.mrb[0].mxu0 %v8355
        %v9443 = vpop.f32.mrb[0].mxu0
        %v9444 = vadd.f32 %v9374, %v9443
        %v9445 = vpop.f32.mrb[0].mxu0
        %9446 = vdwg.mxu0
        %9447 = vmatprep.subr.mxu0 0.0
        %9448 = vmatpush1.msra.mxu0 %v8189
        %9449 = vmatprep.subr.mxu0 0.0
        %9450 = vmatpush1.msra.mxu0 %v8190
        %9451 = vmatprep.subr.mxu0 0.0
        %9452 = vmatpush1.msra.mxu0 %v8191
        %9453 = vmatprep.subr.mxu0 0.0
        %9454 = vmatpush1.msra.mxu0 %v8192
        %9455 = vmatprep.subr.mxu0 0.0
        %9456 = vmatpush1.msra.mxu0 %v8193
        %9457 = vmatprep.subr.mxu0 0.0
        %9458 = vmatpush1.msra.mxu0 %v8194
        %9459 = vmatprep.subr.mxu0 0.0
        %9460 = vmatpush1.msra.mxu0 %v8195
        %9461 = vmatprep.subr.mxu0 0.0
        %9462 = vmatpush1.msra.mxu0 %v8196
        %9463 = vmatprep.subr.mxu0 0.0
        %9464 = vmatpush1.msra.mxu0 %v8197
        %9465 = vmatprep.subr.mxu0 0.0
        %9466 = vmatpush1.msra.mxu0 %v8198
        %9467 = vmatprep.subr.mxu0 0.0
        %9468 = vmatpush1.msra.mxu0 %v8199
        %9469 = vmatprep.subr.mxu0 0.0
        %9470 = vmatpush1.msra.mxu0 %v8200
        %9471 = vmatprep.subr.mxu0 0.0
        %9472 = vmatpush1.msra.mxu0 %v8201
        %9473 = vmatprep.subr.mxu0 0.0
        %9474 = vmatpush1.msra.mxu0 %v8202
        %9475 = vmatprep.subr.mxu0 0.0
        %9476 = vmatpush1.msra.mxu0 %v8203
        %9477 = vmatprep.subr.mxu0 0.0
        %9478 = vmatpush1.msra.mxu0 %v8204
        %9479 = vmatprep.subr.mxu0 0.0
        %9480 = vmatpush1.msra.mxu0 %v8205
        %9481 = vmatprep.subr.mxu0 0.0
        %9482 = vmatpush1.msra.mxu0 %v8206
        %9483 = vmatprep.subr.mxu0 0.0
        %9484 = vmatpush1.msra.mxu0 %v8207
        %9485 = vmatprep.subr.mxu0 0.0
        %9486 = vmatpush1.msra.mxu0 %v8208
        %9487 = vmatprep.subr.mxu0 0.0
        %9488 = vmatpush1.msra.mxu0 %v8209
        %9489 = vmatprep.subr.mxu0 0.0
        %9490 = vmatpush1.msra.mxu0 %v8210
        %9491 = vmatprep.subr.mxu0 0.0
        %9492 = vmatpush1.msra.mxu0 %v8211
        %9493 = vmatprep.subr.mxu0 0.0
        %9494 = vmatpush1.msra.mxu0 %v8212
        %9495 = vmatprep.subr.mxu0 0.0
        %9496 = vmatpush1.msra.mxu0 %v8213
        %9497 = vmatprep.subr.mxu0 0.0
        %9498 = vmatpush1.msra.mxu0 %v8214
        %9499 = vmatprep.subr.mxu0 0.0
        %9500 = vmatpush1.msra.mxu0 %v8215
        %9501 = vmatprep.subr.mxu0 0.0
        %9502 = vmatpush1.msra.mxu0 %v8216
        %9503 = vmatprep.subr.mxu0 0.0
        %9504 = vmatpush1.msra.mxu0 %v8217
        %9505 = vmatprep.subr.mxu0 0.0
        %9506 = vmatpush1.msra.mxu0 %v8218
        %9507 = vmatprep.subr.mxu0 0.0
        %9508 = vmatpush1.msra.mxu0 %v8219
        %9509 = vmatprep.subr.mxu0 0.0
        %9510 = vmatpush1.msra.mxu0 %v8220
        %9511 = vmatprep.mubr.f32.mxu0 %v8364
        %9512 = vmatmul.mubr.f32.gmra.mrb[0].mxu0 %v8362
        %v9513 = vpop.f32.mrb[0].mxu0
        %v9514 = vadd.f32 %v9444, %v9513
        %v9515 = vpop.f32.mrb[0].mxu0
        %9516 = vdwg.mxu0
        %v9517 = vadd.f32 %v7697, %v9514
        %9518 = vst [vmem:[#allocation3] sm:$0x3] %v9517
        %p9519 = scmp.eq.s32.totalorder %s27, 3
        // Predicated region
        $region105: #{_lambda_.1} parent=59 // pred_check
          %p9520 = pneg %p9519
        $region106: #{_lambda_.1} parent=59 // pred_check_branch
          %9522 = sbr.rel (%p9520) target = $region108
        $region107: #{_lambda_.1} parent=59 // pred_region
          %v9523 = vld [vmem:[#allocation3] sm:$0x3]
          %v9524 = vld [vmem:[#allocation13] sm:$0x1]
          %v9526 = vlaneseq
          %v9527 = vshrl.u32 %v9526, 7
          %v9528 = vsub.s32 0, %v9527
          %v9529 = vrot.slane %v9524, %v9528
          %v9531 = vadd.f32 %v9523, %v9529
          %v9532 = vmax.f32 %v9531, 0.0
          %v9533 = vld [vmem:[#allocation14] sm:$0xff]
          %v9534 = vld [vmem:[#allocation14 + $0x8] sm:$0xff]
          %v9535 = vld [vmem:[#allocation14 + $0x10] sm:$0xff]
          %v9536 = vld [vmem:[#allocation14 + $0x18] sm:$0xff]
          %v9537 = vld [vmem:[#allocation14 + $0x20] sm:$0xff]
          %v9538 = vld [vmem:[#allocation14 + $0x28] sm:$0xff]
          %v9539 = vld [vmem:[#allocation14 + $0x30] sm:$0xff]
          %v9540 = vld [vmem:[#allocation14 + $0x38] sm:$0xff]
          %v9541 = vld [vmem:[#allocation14 + $0x40] sm:$0xff]
          %v9542 = vld [vmem:[#allocation14 + $0x48] sm:$0xff]
          %v9543 = vld [vmem:[#allocation14 + $0x50] sm:$0xff]
          %v9544 = vld [vmem:[#allocation14 + $0x58] sm:$0xff]
          %v9545 = vld [vmem:[#allocation14 + $0x60] sm:$0xff]
          %v9546 = vld [vmem:[#allocation14 + $0x68] sm:$0xff]
          %v9547 = vld [vmem:[#allocation14 + $0x70] sm:$0xff]
          %v9548 = vld [vmem:[#allocation14 + $0x78] sm:$0xff]
          %v9549 = vld [vmem:[#allocation15] sm:$0x1]
          %v9551 = vlaneseq
          %v9552 = vshrl.u32 %v9551, 7
          %v9553 = vsub.s32 0, %v9552
          %v9554 = vrot.slane %v9549, %v9553
          %9556 = vmatprep.subr.mxu0 0.0
          %9557 = vmatpush1.msra.mxu0 %v9533
          %9558 = vmatprep.subr.mxu0 0.0
          %9559 = vmatpush1.msra.mxu0 %v9534
          %9560 = vmatprep.subr.mxu0 0.0
          %9561 = vmatpush1.msra.mxu0 %v9535
          %9562 = vmatprep.subr.mxu0 0.0
          %9563 = vmatpush1.msra.mxu0 %v9536
          %9564 = vmatprep.subr.mxu0 0.0
          %9565 = vmatpush1.msra.mxu0 %v9537
          %9566 = vmatprep.subr.mxu0 0.0
          %9567 = vmatpush1.msra.mxu0 %v9538
          %9568 = vmatprep.subr.mxu0 0.0
          %9569 = vmatpush1.msra.mxu0 %v9539
          %9570 = vmatprep.subr.mxu0 0.0
          %9571 = vmatpush1.msra.mxu0 %v9540
          %9572 = vmatprep.subr.mxu0 0.0
          %9573 = vmatpush1.msra.mxu0 %v9541
          %9574 = vmatprep.subr.mxu0 0.0
          %9575 = vmatpush1.msra.mxu0 %v9542
          %9576 = vmatprep.subr.mxu0 0.0
          %9577 = vmatpush1.msra.mxu0 %v9543
          %9578 = vmatprep.subr.mxu0 0.0
          %9579 = vmatpush1.msra.mxu0 %v9544
          %9580 = vmatprep.subr.mxu0 0.0
          %9581 = vmatpush1.msra.mxu0 %v9545
          %9582 = vmatprep.subr.mxu0 0.0
          %9583 = vmatpush1.msra.mxu0 %v9546
          %9584 = vmatprep.subr.mxu0 0.0
          %9585 = vmatpush1.msra.mxu0 %v9547
          %9586 = vmatprep.subr.mxu0 0.0
          %9587 = vmatpush1.msra.mxu0 %v9548
          %9588 = vmatprep.subr.mxu0 0.0
          %9589 = vmatpush1.msra.mxu0 0.0
          %9590 = vmatprep.subr.mxu0 0.0
          %9591 = vmatpush1.msra.mxu0 0.0
          %9592 = vmatprep.subr.mxu0 0.0
          %9593 = vmatpush1.msra.mxu0 0.0
          %9594 = vmatprep.subr.mxu0 0.0
          %9595 = vmatpush1.msra.mxu0 0.0
          %9596 = vmatprep.subr.mxu0 0.0
          %9597 = vmatpush1.msra.mxu0 0.0
          %9598 = vmatprep.subr.mxu0 0.0
          %9599 = vmatpush1.msra.mxu0 0.0
          %9600 = vmatprep.subr.mxu0 0.0
          %9601 = vmatpush1.msra.mxu0 0.0
          %9602 = vmatprep.subr.mxu0 0.0
          %9603 = vmatpush1.msra.mxu0 0.0
          %9604 = vmatprep.subr.mxu0 0.0
          %9605 = vmatpush1.msra.mxu0 0.0
          %9606 = vmatprep.subr.mxu0 0.0
          %9607 = vmatpush1.msra.mxu0 0.0
          %9608 = vmatprep.subr.mxu0 0.0
          %9609 = vmatpush1.msra.mxu0 0.0
          %9610 = vmatprep.subr.mxu0 0.0
          %9611 = vmatpush1.msra.mxu0 0.0
          %9612 = vmatprep.subr.mxu0 0.0
          %9613 = vmatpush1.msra.mxu0 0.0
          %9614 = vmatprep.subr.mxu0 0.0
          %9615 = vmatpush1.msra.mxu0 0.0
          %9616 = vmatprep.subr.mxu0 0.0
          %9617 = vmatpush1.msra.mxu0 0.0
          %9618 = vmatprep.subr.mxu0 0.0
          %9619 = vmatpush1.msra.mxu0 0.0
          %9620 = vmatprep.mubr.f32.mxu0 0.0
          %9621 = vmatmul.mubr.f32.gmra.mrb[0].mxu0 %v9532
          %v9622 = vpop.f32.mrb[0].mxu0
          %v9623 = vadd.f32 %v9554, %v9622
          %v9624 = vpop.f32.mrb[0].mxu0
          %9625 = vdwg.mxu0
          %v9626 = vmax.f32 %v9623, 0.0
          %v9627 = vld [vmem:[#allocation17] sm:$0xff]
          %v9628 = vld [vmem:[#allocation17 + $0x8] sm:$0xff]
          %v9629 = vld [vmem:[#allocation17 + $0x10] sm:$0xff]
          %v9630 = vld [vmem:[#allocation17 + $0x18] sm:$0xff]
          %v9631 = vld [vmem:[#allocation17 + $0x20] sm:$0xff]
          %v9632 = vld [vmem:[#allocation17 + $0x28] sm:$0xff]
          %v9633 = vld [vmem:[#allocation17 + $0x30] sm:$0xff]
          %v9634 = vld [vmem:[#allocation17 + $0x38] sm:$0xff]
          %v9635 = vld [vmem:[#allocation17 + $0x40] sm:$0xff]
          %v9636 = vld [vmem:[#allocation17 + $0x48] sm:$0xff]
          %v9637 = vld [vmem:[#allocation17 + $0x50] sm:$0xff]
          %v9638 = vld [vmem:[#allocation17 + $0x58] sm:$0xff]
          %v9639 = vld [vmem:[#allocation17 + $0x60] sm:$0xff]
          %v9640 = vld [vmem:[#allocation17 + $0x68] sm:$0xff]
          %v9641 = vld [vmem:[#allocation17 + $0x70] sm:$0xff]
          %v9642 = vld [vmem:[#allocation17 + $0x78] sm:$0xff]
          %v9643 = vld [vmem:[#allocation18] sm:$0x1]
          %v9645 = vlaneseq
          %v9646 = vshrl.u32 %v9645, 7
          %v9647 = vsub.s32 0, %v9646
          %v9648 = vrot.slane %v9643, %v9647
          %9650 = vmatprep.subr.mxu0 0.0
          %9651 = vmatpush1.msra.mxu0 %v9627
          %9652 = vmatprep.subr.mxu0 0.0
          %9653 = vmatpush1.msra.mxu0 %v9628
          %9654 = vmatprep.subr.mxu0 0.0
          %9655 = vmatpush1.msra.mxu0 %v9629
          %9656 = vmatprep.subr.mxu0 0.0
          %9657 = vmatpush1.msra.mxu0 %v9630
          %9658 = vmatprep.subr.mxu0 0.0
          %9659 = vmatpush1.msra.mxu0 %v9631
          %9660 = vmatprep.subr.mxu0 0.0
          %9661 = vmatpush1.msra.mxu0 %v9632
          %9662 = vmatprep.subr.mxu0 0.0
          %9663 = vmatpush1.msra.mxu0 %v9633
          %9664 = vmatprep.subr.mxu0 0.0
          %9665 = vmatpush1.msra.mxu0 %v9634
          %9666 = vmatprep.subr.mxu0 0.0
          %9667 = vmatpush1.msra.mxu0 %v9635
          %9668 = vmatprep.subr.mxu0 0.0
          %9669 = vmatpush1.msra.mxu0 %v9636
          %9670 = vmatprep.subr.mxu0 0.0
          %9671 = vmatpush1.msra.mxu0 %v9637
          %9672 = vmatprep.subr.mxu0 0.0
          %9673 = vmatpush1.msra.mxu0 %v9638
          %9674 = vmatprep.subr.mxu0 0.0
          %9675 = vmatpush1.msra.mxu0 %v9639
          %9676 = vmatprep.subr.mxu0 0.0
          %9677 = vmatpush1.msra.mxu0 %v9640
          %9678 = vmatprep.subr.mxu0 0.0
          %9679 = vmatpush1.msra.mxu0 %v9641
          %9680 = vmatprep.subr.mxu0 0.0
          %9681 = vmatpush1.msra.mxu0 %v9642
          %9682 = vmatprep.subr.mxu0 0.0
          %9683 = vmatpush1.msra.mxu0 0.0
          %9684 = vmatprep.subr.mxu0 0.0
          %9685 = vmatpush1.msra.mxu0 0.0
          %9686 = vmatprep.subr.mxu0 0.0
          %9687 = vmatpush1.msra.mxu0 0.0
          %9688 = vmatprep.subr.mxu0 0.0
          %9689 = vmatpush1.msra.mxu0 0.0
          %9690 = vmatprep.subr.mxu0 0.0
          %9691 = vmatpush1.msra.mxu0 0.0
          %9692 = vmatprep.subr.mxu0 0.0
          %9693 = vmatpush1.msra.mxu0 0.0
          %9694 = vmatprep.subr.mxu0 0.0
          %9695 = vmatpush1.msra.mxu0 0.0
          %9696 = vmatprep.subr.mxu0 0.0
          %9697 = vmatpush1.msra.mxu0 0.0
          %9698 = vmatprep.subr.mxu0 0.0
          %9699 = vmatpush1.msra.mxu0 0.0
          %9700 = vmatprep.subr.mxu0 0.0
          %9701 = vmatpush1.msra.mxu0 0.0
          %9702 = vmatprep.subr.mxu0 0.0
          %9703 = vmatpush1.msra.mxu0 0.0
          %9704 = vmatprep.subr.mxu0 0.0
          %9705 = vmatpush1.msra.mxu0 0.0
          %9706 = vmatprep.subr.mxu0 0.0
          %9707 = vmatpush1.msra.mxu0 0.0
          %9708 = vmatprep.subr.mxu0 0.0
          %9709 = vmatpush1.msra.mxu0 0.0
          %9710 = vmatprep.subr.mxu0 0.0
          %9711 = vmatpush1.msra.mxu0 0.0
          %9712 = vmatprep.subr.mxu0 0.0
          %9713 = vmatpush1.msra.mxu0 0.0
          %9714 = vmatprep.mubr.f32.mxu0 0.0
          %9715 = vmatmul.mubr.f32.gmra.mrb[0].mxu0 %v9626
          %v9716 = vpop.f32.mrb[0].mxu0
          %v9717 = vadd.f32 %v9648, %v9716
          %v9718 = vpop.f32.mrb[0].mxu0
          %9719 = vdwg.mxu0
          %9720 = vst [vmem:[#allocation20] sm:$0x3] %v9717
        $region108: #{_lambda_.1} parent=59 // pred_fallthru
          _
        // Predicated region
        $region109: #{_lambda_.1} parent=59 // pred_check
          %p9721 = pneg %p255
        $region110: #{_lambda_.1} parent=59 // pred_check_branch
          %9723 = sbr.rel (%p9721) target = $region112
        $region111: #{_lambda_.1} parent=59 // pred_region
          %s9725 = ssub.s32 32, 32
          %9726 = vsyncadd [#allocation6], %s9725
          %s9728 = sshll.u32 [#allocation20], 4
          %s9729 = int_to_ptr.vmem [resolvable:$true] %s9728
          %9731 = dma.vmem_to_hbm [thread:$0]  %s9729, 32, %s10, [#allocation6]
        $region112: #{_lambda_.1} parent=59 // pred_fallthru
          _
        // Predicated region
        $region113: #{_lambda_.1} parent=59 // pred_check
          %p9732 = pneg %p255
        $region114: #{_lambda_.1} parent=59 // pred_check_branch
          %9734 = sbr.rel (%p9732) target = $region116
        $region115: #{_lambda_.1} parent=59 // pred_region
          %9735 = dma.done [#allocation6], 32
        $region116: #{_lambda_.1} parent=59 // pred_fallthru
          _
      $region60: #{_lambda_.1} parent=5 // pred_fallthru
        _
      %p9736 = scmp.le.s32.totalorder 2, %s22
      // Predicated region
      $region117: #{_lambda_.1} parent=5 // pred_check
        %p9737 = pneg %p9736
      $region118: #{_lambda_.1} parent=5 // pred_check_branch
        %9739 = sbr.rel (%p9737) target = $region120
      $region119: #{_lambda_.1} parent=5 // pred_region
        %s9740 = ssub.s32 %s22, 2
      $region120: #{_lambda_.1} parent=5 // pred_fallthru
        _
    $region6: #{_lambda_.1} parent=1 // loop_footer
      %s26 = sadd.s32 1, %s22
    $region7: #{_lambda_.1} parent=1 // loop_footer_branch
      %21 = sbr.rel target = $region3
    $region8: #{_lambda_.1} parent=1 // loop_exit
      _
    %9741 = vsyncpa [#allocation5], 1
    %s9742 = scalar_lea.sflag [#allocation5], 1
    %9743 = vsyncpa %s9742, 1
    %9744 = vsyncpa [#allocation8], 1
    %9745 = vsyncpa [#allocation11], 1
    %9746 = vsyncpa [#allocation16], 1
    %9747 = vsyncpa [#allocation19], 1
    %9748 = vsyncpa [#allocation6], 1
    %s9749 = scalar_lea.sflag [#allocation6], 1
    %9750 = vsyncpa %s9749, 1

</llo_original>
